<compile_context>
chip_gen: v7x
topology: tpu7x:2x2x1
jax: 0.10.0
libtpu: 0.0.40
codegen_flags: <defaults>
</compile_context>

<pallas_src>
import functools

import jax
import jax.numpy as jnp
import numpy as np
from jax.experimental import pallas as pl
from jax.experimental.pallas import tpu as pltpu


def _layernorm(x, gamma, beta, eps=1e-5):
    mu = jnp.mean(x, axis=-1, keepdims=True)
    var = jnp.mean((x - mu) ** 2, axis=-1, keepdims=True)
    return (x - mu) * jax.lax.rsqrt(var + eps) * gamma + beta


def block_kernel(x_ref, mask_ref,
                 ln1g_ref, ln1b_ref,
                 wq_ref, wk_ref, wv_ref,
                 wproj_ref, bproj_ref,
                 ln2g_ref, ln2b_ref,
                 w1_ref, b1_ref, w2_ref, b2_ref,
                 o_ref,
                 *, n_head, head_size):
    Bt, T, C = x_ref.shape
    N = Bt * T

    # (Bt, T, C) -> (Bt*T, C): layout-compatible merge (C is a multiple of 128).
    x = x_ref[...].astype(jnp.float32).reshape(N, C)

    # ---- x1 = ln1(x) ----
    x1 = _layernorm(x, ln1g_ref[...], ln1b_ref[...])                  # (N, C)

    def mm(a, w_ref):
        w = w_ref[...]
        return jnp.dot(a.astype(w.dtype), w, preferred_element_type=jnp.float32)

    # ---- QKV for ALL heads at once: three (N, C) @ (C, C) MXU matmuls ----
    q = mm(x1, wq_ref).reshape(Bt, T, C)
    k = mm(x1, wk_ref).reshape(Bt, T, C)
    v = mm(x1, wv_ref).reshape(Bt, T, C)

    # Key-padding mask, hoisted out of the head loop (computed once).
    km = mask_ref[...] > 0.5                                          # (Bt, 1, T)
    scale = 1.0 / float(head_size) ** 0.5
    neg = jnp.float32(-1e30)

    head_outs = []
    for h in range(n_head):
        sl = slice(h * head_size, (h + 1) * head_size)
        qh, kh, vh = q[:, :, sl], k[:, :, sl], v[:, :, sl]            # (Bt, T, hs)
        s = jnp.einsum('bqd,bkd->bqk', qh, kh,
                       preferred_element_type=jnp.float32) * scale    # (Bt, T, T)
        s = jnp.where(km, s, neg)
        s = s - jnp.max(s, axis=-1, keepdims=True)
        p = jnp.exp(s)
        # Exact reciprocal keeps f32 parity with the reference; switch to
        # approx=True (EUP slot) when ~1e-3 relative error is acceptable.
        p = p * pl.reciprocal(jnp.sum(p, axis=-1, keepdims=True), approx=False)
        head_outs.append(jnp.einsum('bqk,bkd->bqd', p, vh,
                                    preferred_element_type=jnp.float32))

    # concat(heads) @ Wproj + bproj as ONE (N, C) @ (C, C) matmul (bias folded).
    att = jnp.concatenate(head_outs, axis=-1).reshape(N, C)
    sa = mm(att, wproj_ref) + bproj_ref[...]

    # ---- residual, ln2, feed-forward, residual ----
    x2 = x1 + sa
    x3 = _layernorm(x2, ln2g_ref[...], ln2b_ref[...])

    h1 = jnp.maximum(mm(x3, w1_ref) + b1_ref[...], 0.0)
    ff = mm(h1, w2_ref) + b2_ref[...]

    o_ref[...] = (x3 + ff).reshape(Bt, T, C).astype(o_ref.dtype)


def transformer_block(x, mask, params, n_head, *, batch_block=None,
                      weight_dtype=None):
    """x: (B, T, C) f32, mask: (B, 1, T) f32 (1 = keep, 0 = mask).

    params use the per-head stacked layout of the PyTorch module:
      (ln1g, ln1b, Wq(h,C,hs), Wk(h,C,hs), Wv(h,C,hs), Wproj(C,C), bproj(1,C),
       ln2g, ln2b, W1(C,4C), b1(1,4C), W2(4C,C), b2(1,C))
    """
    B, T, C = x.shape
    head_size = C // n_head
    H4 = 4 * C
    if batch_block is None:
        batch_block = B                      # one fat grid step for the toy sizes
    assert B % batch_block == 0, "batch_block must divide B"

    (ln1g, ln1b, wq, wk, wv, wproj, bproj,
     ln2g, ln2b, w1, b1, w2, b2) = params

    # Stack the per-head QKV weights into (C, n_head*hs) == (C, C) so the kernel
    # can run one fat matmul per projection instead of n_head tiny ones.
    wq_cat = jnp.transpose(wq, (1, 0, 2)).reshape(C, C)
    wk_cat = jnp.transpose(wk, (1, 0, 2)).reshape(C, C)
    wv_cat = jnp.transpose(wv, (1, 0, 2)).reshape(C, C)

    if weight_dtype is not None:
        # bf16 weights halve HBM traffic / VMEM residency on v6e/v7x
        # (accumulation stays f32 via preferred_element_type in the kernel).
        wq_cat = wq_cat.astype(weight_dtype)
        wk_cat = wk_cat.astype(weight_dtype)
        wv_cat = wv_cat.astype(weight_dtype)
        wproj_c = wproj.astype(weight_dtype)
        w1_c = w1.astype(weight_dtype)
        w2_c = w2.astype(weight_dtype)
    else:
        wproj_c, w1_c, w2_c = wproj, w1, w2

    kernel = functools.partial(block_kernel, n_head=n_head, head_size=head_size)

    def const(shape):
        return pl.BlockSpec(shape, lambda b: (0,) * len(shape))

    in_specs = [
        pl.BlockSpec((batch_block, T, C), lambda b: (b, 0, 0)),   # x
        pl.BlockSpec((batch_block, 1, T), lambda b: (b, 0, 0)),   # mask
        const((1, C)), const((1, C)),                             # ln1 gamma, beta
        const((C, C)), const((C, C)), const((C, C)),              # Wq, Wk, Wv (concat)
        const((C, C)), const((1, C)),                             # proj W, b
        const((1, C)), const((1, C)),                             # ln2 gamma, beta
        const((C, H4)), const((1, H4)),                           # ffn W1, b1
        const((H4, C)), const((1, C)),                            # ffn W2, b2
    ]

    inputs = (x, mask, ln1g, ln1b, wq_cat, wk_cat, wv_cat, wproj_c, bproj,
              ln2g, ln2b, w1_c, b1, w2_c, b2)

    # Advisory cost estimate so XLA schedules surrounding ops/prefetch sensibly.
    n_tok = B * T
    flops = (2 * n_tok * C * C * 4            # QKV (3 matmuls) + output proj (1)
             + 4 * B * T * T * C              # scores + PV over all heads
             + 4 * n_tok * C * H4)            # FFN (two matmuls)
    bytes_accessed = (sum(a.size * a.dtype.itemsize for a in inputs)
                      + x.size * x.dtype.itemsize)
    cost = pl.CostEstimate(flops=flops,
                           transcendentals=B * n_head * T * T,
                           bytes_accessed=bytes_accessed)

    return pl.pallas_call(
        kernel,
        out_shape=jax.ShapeDtypeStruct((B, T, C), x.dtype),
        grid=(B // batch_block,),
        in_specs=in_specs,
        out_specs=pl.BlockSpec((batch_block, T, C), lambda b: (b, 0, 0)),
        compiler_params=pltpu.CompilerParams(
            dimension_semantics=("parallel",),     # v7x: shard batch over both TCs
            vmem_limit_bytes=32 * 1024 * 1024),
        cost_estimate=cost,
    )(*inputs)


def ref_block(x, mask2d, params, n_head):
    """Pure-JAX reference (matches PyTorch Block forward in eval mode)."""
    ln1g, ln1b, wq, wk, wv, wproj, bproj, ln2g, ln2b, w1, b1, w2, b2 = params
    B, T, C = x.shape
    hs = C // n_head

    def ln(z, g, b):
        mu = z.mean(-1, keepdims=True)
        var = ((z - mu) ** 2).mean(-1, keepdims=True)
        return (z - mu) / jnp.sqrt(var + 1e-5) * g[0] + b[0]

    x1 = ln(x, ln1g, ln1b)
    q = jnp.einsum('btc,hcd->bhtd', x1, wq)
    k = jnp.einsum('btc,hcd->bhtd', x1, wk)
    v = jnp.einsum('btc,hcd->bhtd', x1, wv)
    s = jnp.einsum('bhtd,bhsd->bhts', q, k) / jnp.sqrt(float(hs))
    s = jnp.where(mask2d[:, None, None, :] > 0.5, s, -1e30)
    p = jax.nn.softmax(s, axis=-1)
    o = jnp.einsum('bhts,bhsd->bhtd', p, v)
    o = o.transpose(0, 2, 1, 3).reshape(B, T, C)
    sa = o @ wproj + bproj[0]
    x2 = x1 + sa
    x3 = ln(x2, ln2g, ln2b)
    ff = jnp.maximum(x3 @ w1 + b1[0], 0.0) @ w2 + b2[0]
    return x3 + ff


if __name__ == "__main__":
    # Shapes from the module spec: n_embd=384, n_head=6 (C is a multiple of 128
    # -> lane-dense); small batch/sequence for the smoke test.
    B, T = 2, 8
    n_head = 6
    n_embd = 384
    head_size = n_embd // n_head

    key = jax.random.PRNGKey(0)
    ks = jax.random.split(key, 16)

    x = jax.random.normal(ks[0], (B, T, n_embd), dtype=jnp.float32)

    # boolean key-padding mask (B, T); guarantee at least one valid key per row.
    mask_bool = jax.random.uniform(ks[1], (B, T)) > 0.2
    mask_bool = mask_bool.at[:, 0].set(True)
    mask2d = mask_bool.astype(jnp.float32)
    mask = mask2d.reshape(B, 1, T)

    s = 0.05
    params = (
        1.0 + s * jax.random.normal(ks[2], (1, n_embd)),             # ln1 gamma
        s * jax.random.normal(ks[3], (1, n_embd)),                   # ln1 beta
        s * jax.random.normal(ks[4], (n_head, n_embd, head_size)),   # Wq
        s * jax.random.normal(ks[5], (n_head, n_embd, head_size)),   # Wk
        s * jax.random.normal(ks[6], (n_head, n_embd, head_size)),   # Wv
        s * jax.random.normal(ks[7], (n_embd, n_embd)),              # proj W
        s * jax.random.normal(ks[8], (1, n_embd)),                   # proj b
        1.0 + s * jax.random.normal(ks[9], (1, n_embd)),             # ln2 gamma
        s * jax.random.normal(ks[10], (1, n_embd)),                  # ln2 beta
        s * jax.random.normal(ks[11], (n_embd, 4 * n_embd)),         # ffn W1
        s * jax.random.normal(ks[12], (1, 4 * n_embd)),              # ffn b1
        s * jax.random.normal(ks[13], (4 * n_embd, n_embd)),         # ffn W2
        s * jax.random.normal(ks[14], (1, n_embd)),                  # ffn b2
    )
    params = tuple(p.astype(jnp.float32) for p in params)

    out = transformer_block(x, mask, params, n_head)
    out = jax.block_until_ready(out)

    with jax.default_matmul_precision("highest"):
        ref = jax.block_until_ready(ref_block(x, mask2d, params, n_head))

    # f32 multi-pass MXU matmuls vs the XLA highest-precision reference.
    np.testing.assert_allclose(np.asarray(out), np.asarray(ref),
                               rtol=5e-4, atol=5e-4)

    print("KERNEL_OK")
</pallas_src>

<mosaic_0001>
module attributes {stable_mosaic.version = 11 : i64} {
  func.func @block_kernel(%arg0: i32, %arg1: memref<2x8x384xf32, #tpu.memory_space<vmem>>, %arg2: memref<2x1x8xf32, #tpu.memory_space<vmem>>, %arg3: memref<1x384xf32, #tpu.memory_space<vmem>>, %arg4: memref<1x384xf32, #tpu.memory_space<vmem>>, %arg5: memref<384x384xf32, #tpu.memory_space<vmem>>, %arg6: memref<384x384xf32, #tpu.memory_space<vmem>>, %arg7: memref<384x384xf32, #tpu.memory_space<vmem>>, %arg8: memref<384x384xf32, #tpu.memory_space<vmem>>, %arg9: memref<1x384xf32, #tpu.memory_space<vmem>>, %arg10: memref<1x384xf32, #tpu.memory_space<vmem>>, %arg11: memref<1x384xf32, #tpu.memory_space<vmem>>, %arg12: memref<384x1536xf32, #tpu.memory_space<vmem>>, %arg13: memref<1x1536xf32, #tpu.memory_space<vmem>>, %arg14: memref<1536x384xf32, #tpu.memory_space<vmem>>, %arg15: memref<1x384xf32, #tpu.memory_space<vmem>>, %arg16: memref<2x8x384xf32, #tpu.memory_space<vmem>>) attributes {dimension_semantics = [#tpu.dimension_semantics<parallel>], iteration_bounds = array<i64: 1>, scalar_prefetch = 0 : i64, scratch_operands = 0 : i64, tpu.core_type = #tpu.core_type<tc>, window_params = [{transform_indices = @transform_0, window_bounds = array<i64: 2, 8, 384>}, {transform_indices = @transform_1, window_bounds = array<i64: 2, 1, 8>}, {pipeline_mode = #tpu.pipeline_mode<synchronous>, transform_indices = @transform_2, window_bounds = array<i64: 1, 384>}, {pipeline_mode = #tpu.pipeline_mode<synchronous>, transform_indices = @transform_3, window_bounds = array<i64: 1, 384>}, {pipeline_mode = #tpu.pipeline_mode<synchronous>, transform_indices = @transform_4, window_bounds = array<i64: 384, 384>}, {pipeline_mode = #tpu.pipeline_mode<synchronous>, transform_indices = @transform_5, window_bounds = array<i64: 384, 384>}, {pipeline_mode = #tpu.pipeline_mode<synchronous>, transform_indices = @transform_6, window_bounds = array<i64: 384, 384>}, {pipeline_mode = #tpu.pipeline_mode<synchronous>, transform_indices = @transform_7, window_bounds = array<i64: 384, 384>}, {pipeline_mode = #tpu.pipeline_mode<synchronous>, transform_indices = @transform_8, window_bounds = array<i64: 1, 384>}, {pipeline_mode = #tpu.pipeline_mode<synchronous>, transform_indices = @transform_9, window_bounds = array<i64: 1, 384>}, {pipeline_mode = #tpu.pipeline_mode<synchronous>, transform_indices = @transform_10, window_bounds = array<i64: 1, 384>}, {pipeline_mode = #tpu.pipeline_mode<synchronous>, transform_indices = @transform_11, window_bounds = array<i64: 384, 1536>}, {pipeline_mode = #tpu.pipeline_mode<synchronous>, transform_indices = @transform_12, window_bounds = array<i64: 1, 1536>}, {pipeline_mode = #tpu.pipeline_mode<synchronous>, transform_indices = @transform_13, window_bounds = array<i64: 1536, 384>}, {pipeline_mode = #tpu.pipeline_mode<synchronous>, transform_indices = @transform_14, window_bounds = array<i64: 1, 384>}, {transform_indices = @transform_15, window_bounds = array<i64: 2, 8, 384>}]} {
    %c0 = arith.constant 0 : index
    %c0_0 = arith.constant 0 : index
    %c0_1 = arith.constant 0 : index
    %0 = vector.load %arg1[%c0, %c0_0, %c0_1] : memref<2x8x384xf32, #tpu.memory_space<vmem>>, vector<2x8x384xf32>
    %1 = vector.shape_cast %0 : vector<2x8x384xf32> to vector<16x384xf32>
    %c0_2 = arith.constant 0 : index
    %c0_3 = arith.constant 0 : index
    %2 = vector.load %arg3[%c0_2, %c0_3] : memref<1x384xf32, #tpu.memory_space<vmem>>, vector<1x384xf32>
    %c0_4 = arith.constant 0 : index
    %c0_5 = arith.constant 0 : index
    %3 = vector.load %arg4[%c0_4, %c0_5] : memref<1x384xf32, #tpu.memory_space<vmem>>, vector<1x384xf32>
    %cst = arith.constant dense<0.000000e+00> : vector<16xf32>
    %4 = vector.multi_reduction <add>, %1, %cst [1] : vector<16x384xf32> to vector<16xf32>
    %5 = vector.shape_cast %4 : vector<16xf32> to vector<16x1xf32>
    %cst_6 = arith.constant 3.840000e+02 : f32
    %6 = vector.broadcast %cst_6 : f32 to vector<16x1xf32>
    %7 = arith.divf %5, %6 : vector<16x1xf32>
    %8 = vector.broadcast %7 : vector<16x1xf32> to vector<16x384xf32>
    %9 = arith.subf %1, %8 : vector<16x384xf32>
    %10 = arith.mulf %9, %9 : vector<16x384xf32>
    %cst_7 = arith.constant dense<0.000000e+00> : vector<16xf32>
    %11 = vector.multi_reduction <add>, %10, %cst_7 [1] : vector<16x384xf32> to vector<16xf32>
    %12 = vector.shape_cast %11 : vector<16xf32> to vector<16x1xf32>
    %cst_8 = arith.constant 3.840000e+02 : f32
    %13 = vector.broadcast %cst_8 : f32 to vector<16x1xf32>
    %14 = arith.divf %12, %13 : vector<16x1xf32>
    %15 = vector.broadcast %7 : vector<16x1xf32> to vector<16x384xf32>
    %16 = arith.subf %1, %15 : vector<16x384xf32>
    %cst_9 = arith.constant 9.99999974E-6 : f32
    %17 = vector.broadcast %cst_9 : f32 to vector<16x1xf32>
    %18 = arith.addf %14, %17 : vector<16x1xf32>
    %19 = math.rsqrt %18 : vector<16x1xf32>
    %20 = vector.broadcast %19 : vector<16x1xf32> to vector<16x384xf32>
    %21 = arith.mulf %16, %20 : vector<16x384xf32>
    %22 = vector.broadcast %2 : vector<1x384xf32> to vector<16x384xf32>
    %23 = arith.mulf %21, %22 : vector<16x384xf32>
    %24 = vector.broadcast %3 : vector<1x384xf32> to vector<16x384xf32>
    %25 = arith.addf %23, %24 : vector<16x384xf32>
    %c0_10 = arith.constant 0 : index
    %c0_11 = arith.constant 0 : index
    %26 = vector.load %arg5[%c0_10, %c0_11] : memref<384x384xf32, #tpu.memory_space<vmem>>, vector<384x384xf32>
    %cst_12 = arith.constant dense<0.000000e+00> : vector<16x384xf32>
    %27 = tpu.matmul %25, %26, %cst_12 {dimension_numbers = #tpu.dot_dimension_numbers<[1], [0], [0], [1], [0, 0, 1, 1], [], []>} : vector<16x384xf32>, vector<384x384xf32>, vector<16x384xf32> -> vector<16x384xf32>
    %28 = vector.shape_cast %27 : vector<16x384xf32> to vector<2x8x384xf32>
    %c0_13 = arith.constant 0 : index
    %c0_14 = arith.constant 0 : index
    %29 = vector.load %arg6[%c0_13, %c0_14] : memref<384x384xf32, #tpu.memory_space<vmem>>, vector<384x384xf32>
    %cst_15 = arith.constant dense<0.000000e+00> : vector<16x384xf32>
    %30 = tpu.matmul %25, %29, %cst_15 {dimension_numbers = #tpu.dot_dimension_numbers<[1], [0], [0], [1], [0, 0, 1, 1], [], []>} : vector<16x384xf32>, vector<384x384xf32>, vector<16x384xf32> -> vector<16x384xf32>
    %31 = vector.shape_cast %30 : vector<16x384xf32> to vector<2x8x384xf32>
    %c0_16 = arith.constant 0 : index
    %c0_17 = arith.constant 0 : index
    %32 = vector.load %arg7[%c0_16, %c0_17] : memref<384x384xf32, #tpu.memory_space<vmem>>, vector<384x384xf32>
    %cst_18 = arith.constant dense<0.000000e+00> : vector<16x384xf32>
    %33 = tpu.matmul %25, %32, %cst_18 {dimension_numbers = #tpu.dot_dimension_numbers<[1], [0], [0], [1], [0, 0, 1, 1], [], []>} : vector<16x384xf32>, vector<384x384xf32>, vector<16x384xf32> -> vector<16x384xf32>
    %34 = vector.shape_cast %33 : vector<16x384xf32> to vector<2x8x384xf32>
    %c0_19 = arith.constant 0 : index
    %c0_20 = arith.constant 0 : index
    %c0_21 = arith.constant 0 : index
    %35 = vector.load %arg2[%c0_19, %c0_20, %c0_21] : memref<2x1x8xf32, #tpu.memory_space<vmem>>, vector<2x1x8xf32>
    %cst_22 = arith.constant 5.000000e-01 : f32
    %36 = vector.broadcast %cst_22 : f32 to vector<2x1x8xf32>
    %37 = arith.cmpf ogt, %35, %36 : vector<2x1x8xf32>
    %38 = vector.extract_strided_slice %28 {offsets = [0, 0, 0], sizes = [2, 8, 64], strides = [1, 1, 1]} : vector<2x8x384xf32> to vector<2x8x64xf32>
    %39 = vector.extract_strided_slice %31 {offsets = [0, 0, 0], sizes = [2, 8, 64], strides = [1, 1, 1]} : vector<2x8x384xf32> to vector<2x8x64xf32>
    %40 = vector.extract_strided_slice %34 {offsets = [0, 0, 0], sizes = [2, 8, 64], strides = [1, 1, 1]} : vector<2x8x384xf32> to vector<2x8x64xf32>
    "tpu.trace_start"() <{level = 10 : i32, message = "bqd,bkd->bqk"}> : () -> ()
    %cst_23 = arith.constant dense<0.000000e+00> : vector<2x8x8xf32>
    %41 = tpu.matmul %38, %39, %cst_23 {dimension_numbers = #tpu.dot_dimension_numbers<[2], [2], [1], [1], [0, 0, 0, 1, 1, 1], [0], [0]>} : vector<2x8x64xf32>, vector<2x8x64xf32>, vector<2x8x8xf32> -> vector<2x8x8xf32>
    "tpu.trace_stop"() : () -> ()
    %cst_24 = arith.constant 1.250000e-01 : f32
    %42 = vector.broadcast %cst_24 : f32 to vector<2x8x8xf32>
    %43 = arith.mulf %41, %42 : vector<2x8x8xf32>
    %cst_25 = arith.constant -1.000000e+30 : f32
    %44 = vector.shape_cast %37 : vector<2x1x8xi1> to vector<2x1x8xi1>
    %45 = vector.broadcast %44 : vector<2x1x8xi1> to vector<2x8x8xi1>
    %46 = vector.broadcast %cst_25 : f32 to vector<2x8x8xf32>
    %47 = arith.select %45, %43, %46 : vector<2x8x8xi1>, vector<2x8x8xf32>
    %cst_26 = arith.constant dense<0xFF800000> : vector<2x8xf32>
    %48 = vector.multi_reduction <maximumf>, %47, %cst_26 [2] : vector<2x8x8xf32> to vector<2x8xf32>
    %49 = vector.shape_cast %48 : vector<2x8xf32> to vector<2x8x1xf32>
    %50 = vector.broadcast %49 : vector<2x8x1xf32> to vector<2x8x8xf32>
    %51 = arith.subf %47, %50 : vector<2x8x8xf32>
    %52 = math.exp %51 : vector<2x8x8xf32>
    %cst_27 = arith.constant dense<0.000000e+00> : vector<2x8xf32>
    %53 = vector.multi_reduction <add>, %52, %cst_27 [2] : vector<2x8x8xf32> to vector<2x8xf32>
    %54 = vector.shape_cast %53 : vector<2x8xf32> to vector<2x8x1xf32>
    %55 = tpu.reciprocal %54 : vector<2x8x1xf32> -> vector<2x8x1xf32>
    %56 = vector.broadcast %55 : vector<2x8x1xf32> to vector<2x8x8xf32>
    %57 = arith.mulf %52, %56 : vector<2x8x8xf32>
    "tpu.trace_start"() <{level = 10 : i32, message = "bqk,bkd->bqd"}> : () -> ()
    %cst_28 = arith.constant dense<0.000000e+00> : vector<2x8x64xf32>
    %58 = tpu.matmul %57, %40, %cst_28 {dimension_numbers = #tpu.dot_dimension_numbers<[2], [1], [1], [2], [0, 0, 0, 1, 1, 2], [0], [0]>} : vector<2x8x8xf32>, vector<2x8x64xf32>, vector<2x8x64xf32> -> vector<2x8x64xf32>
    "tpu.trace_stop"() : () -> ()
    %59 = vector.extract_strided_slice %28 {offsets = [0, 0, 64], sizes = [2, 8, 64], strides = [1, 1, 1]} : vector<2x8x384xf32> to vector<2x8x64xf32>
    %60 = vector.extract_strided_slice %31 {offsets = [0, 0, 64], sizes = [2, 8, 64], strides = [1, 1, 1]} : vector<2x8x384xf32> to vector<2x8x64xf32>
    %61 = vector.extract_strided_slice %34 {offsets = [0, 0, 64], sizes = [2, 8, 64], strides = [1, 1, 1]} : vector<2x8x384xf32> to vector<2x8x64xf32>
    "tpu.trace_start"() <{level = 10 : i32, message = "bqd,bkd->bqk"}> : () -> ()
    %cst_29 = arith.constant dense<0.000000e+00> : vector<2x8x8xf32>
    %62 = tpu.matmul %59, %60, %cst_29 {dimension_numbers = #tpu.dot_dimension_numbers<[2], [2], [1], [1], [0, 0, 0, 1, 1, 1], [0], [0]>} : vector<2x8x64xf32>, vector<2x8x64xf32>, vector<2x8x8xf32> -> vector<2x8x8xf32>
    "tpu.trace_stop"() : () -> ()
    %cst_30 = arith.constant 1.250000e-01 : f32
    %63 = vector.broadcast %cst_30 : f32 to vector<2x8x8xf32>
    %64 = arith.mulf %62, %63 : vector<2x8x8xf32>
    %cst_31 = arith.constant -1.000000e+30 : f32
    %65 = vector.shape_cast %37 : vector<2x1x8xi1> to vector<2x1x8xi1>
    %66 = vector.broadcast %65 : vector<2x1x8xi1> to vector<2x8x8xi1>
    %67 = vector.broadcast %cst_31 : f32 to vector<2x8x8xf32>
    %68 = arith.select %66, %64, %67 : vector<2x8x8xi1>, vector<2x8x8xf32>
    %cst_32 = arith.constant dense<0xFF800000> : vector<2x8xf32>
    %69 = vector.multi_reduction <maximumf>, %68, %cst_32 [2] : vector<2x8x8xf32> to vector<2x8xf32>
    %70 = vector.shape_cast %69 : vector<2x8xf32> to vector<2x8x1xf32>
    %71 = vector.broadcast %70 : vector<2x8x1xf32> to vector<2x8x8xf32>
    %72 = arith.subf %68, %71 : vector<2x8x8xf32>
    %73 = math.exp %72 : vector<2x8x8xf32>
    %cst_33 = arith.constant dense<0.000000e+00> : vector<2x8xf32>
    %74 = vector.multi_reduction <add>, %73, %cst_33 [2] : vector<2x8x8xf32> to vector<2x8xf32>
    %75 = vector.shape_cast %74 : vector<2x8xf32> to vector<2x8x1xf32>
    %76 = tpu.reciprocal %75 : vector<2x8x1xf32> -> vector<2x8x1xf32>
    %77 = vector.broadcast %76 : vector<2x8x1xf32> to vector<2x8x8xf32>
    %78 = arith.mulf %73, %77 : vector<2x8x8xf32>
    "tpu.trace_start"() <{level = 10 : i32, message = "bqk,bkd->bqd"}> : () -> ()
    %cst_34 = arith.constant dense<0.000000e+00> : vector<2x8x64xf32>
    %79 = tpu.matmul %78, %61, %cst_34 {dimension_numbers = #tpu.dot_dimension_numbers<[2], [1], [1], [2], [0, 0, 0, 1, 1, 2], [0], [0]>} : vector<2x8x8xf32>, vector<2x8x64xf32>, vector<2x8x64xf32> -> vector<2x8x64xf32>
    "tpu.trace_stop"() : () -> ()
    %80 = vector.extract_strided_slice %28 {offsets = [0, 0, 128], sizes = [2, 8, 64], strides = [1, 1, 1]} : vector<2x8x384xf32> to vector<2x8x64xf32>
    %81 = vector.extract_strided_slice %31 {offsets = [0, 0, 128], sizes = [2, 8, 64], strides = [1, 1, 1]} : vector<2x8x384xf32> to vector<2x8x64xf32>
    %82 = vector.extract_strided_slice %34 {offsets = [0, 0, 128], sizes = [2, 8, 64], strides = [1, 1, 1]} : vector<2x8x384xf32> to vector<2x8x64xf32>
    "tpu.trace_start"() <{level = 10 : i32, message = "bqd,bkd->bqk"}> : () -> ()
    %cst_35 = arith.constant dense<0.000000e+00> : vector<2x8x8xf32>
    %83 = tpu.matmul %80, %81, %cst_35 {dimension_numbers = #tpu.dot_dimension_numbers<[2], [2], [1], [1], [0, 0, 0, 1, 1, 1], [0], [0]>} : vector<2x8x64xf32>, vector<2x8x64xf32>, vector<2x8x8xf32> -> vector<2x8x8xf32>
    "tpu.trace_stop"() : () -> ()
    %cst_36 = arith.constant 1.250000e-01 : f32
    %84 = vector.broadcast %cst_36 : f32 to vector<2x8x8xf32>
    %85 = arith.mulf %83, %84 : vector<2x8x8xf32>
    %cst_37 = arith.constant -1.000000e+30 : f32
    %86 = vector.shape_cast %37 : vector<2x1x8xi1> to vector<2x1x8xi1>
    %87 = vector.broadcast %86 : vector<2x1x8xi1> to vector<2x8x8xi1>
    %88 = vector.broadcast %cst_37 : f32 to vector<2x8x8xf32>
    %89 = arith.select %87, %85, %88 : vector<2x8x8xi1>, vector<2x8x8xf32>
    %cst_38 = arith.constant dense<0xFF800000> : vector<2x8xf32>
    %90 = vector.multi_reduction <maximumf>, %89, %cst_38 [2] : vector<2x8x8xf32> to vector<2x8xf32>
    %91 = vector.shape_cast %90 : vector<2x8xf32> to vector<2x8x1xf32>
    %92 = vector.broadcast %91 : vector<2x8x1xf32> to vector<2x8x8xf32>
    %93 = arith.subf %89, %92 : vector<2x8x8xf32>
    %94 = math.exp %93 : vector<2x8x8xf32>
    %cst_39 = arith.constant dense<0.000000e+00> : vector<2x8xf32>
    %95 = vector.multi_reduction <add>, %94, %cst_39 [2] : vector<2x8x8xf32> to vector<2x8xf32>
    %96 = vector.shape_cast %95 : vector<2x8xf32> to vector<2x8x1xf32>
    %97 = tpu.reciprocal %96 : vector<2x8x1xf32> -> vector<2x8x1xf32>
    %98 = vector.broadcast %97 : vector<2x8x1xf32> to vector<2x8x8xf32>
    %99 = arith.mulf %94, %98 : vector<2x8x8xf32>
    "tpu.trace_start"() <{level = 10 : i32, message = "bqk,bkd->bqd"}> : () -> ()
    %cst_40 = arith.constant dense<0.000000e+00> : vector<2x8x64xf32>
    %100 = tpu.matmul %99, %82, %cst_40 {dimension_numbers = #tpu.dot_dimension_numbers<[2], [1], [1], [2], [0, 0, 0, 1, 1, 2], [0], [0]>} : vector<2x8x8xf32>, vector<2x8x64xf32>, vector<2x8x64xf32> -> vector<2x8x64xf32>
    "tpu.trace_stop"() : () -> ()
    %101 = vector.extract_strided_slice %28 {offsets = [0, 0, 192], sizes = [2, 8, 64], strides = [1, 1, 1]} : vector<2x8x384xf32> to vector<2x8x64xf32>
    %102 = vector.extract_strided_slice %31 {offsets = [0, 0, 192], sizes = [2, 8, 64], strides = [1, 1, 1]} : vector<2x8x384xf32> to vector<2x8x64xf32>
    %103 = vector.extract_strided_slice %34 {offsets = [0, 0, 192], sizes = [2, 8, 64], strides = [1, 1, 1]} : vector<2x8x384xf32> to vector<2x8x64xf32>
    "tpu.trace_start"() <{level = 10 : i32, message = "bqd,bkd->bqk"}> : () -> ()
    %cst_41 = arith.constant dense<0.000000e+00> : vector<2x8x8xf32>
    %104 = tpu.matmul %101, %102, %cst_41 {dimension_numbers = #tpu.dot_dimension_numbers<[2], [2], [1], [1], [0, 0, 0, 1, 1, 1], [0], [0]>} : vector<2x8x64xf32>, vector<2x8x64xf32>, vector<2x8x8xf32> -> vector<2x8x8xf32>
    "tpu.trace_stop"() : () -> ()
    %cst_42 = arith.constant 1.250000e-01 : f32
    %105 = vector.broadcast %cst_42 : f32 to vector<2x8x8xf32>
    %106 = arith.mulf %104, %105 : vector<2x8x8xf32>
    %cst_43 = arith.constant -1.000000e+30 : f32
    %107 = vector.shape_cast %37 : vector<2x1x8xi1> to vector<2x1x8xi1>
    %108 = vector.broadcast %107 : vector<2x1x8xi1> to vector<2x8x8xi1>
    %109 = vector.broadcast %cst_43 : f32 to vector<2x8x8xf32>
    %110 = arith.select %108, %106, %109 : vector<2x8x8xi1>, vector<2x8x8xf32>
    %cst_44 = arith.constant dense<0xFF800000> : vector<2x8xf32>
    %111 = vector.multi_reduction <maximumf>, %110, %cst_44 [2] : vector<2x8x8xf32> to vector<2x8xf32>
    %112 = vector.shape_cast %111 : vector<2x8xf32> to vector<2x8x1xf32>
    %113 = vector.broadcast %112 : vector<2x8x1xf32> to vector<2x8x8xf32>
    %114 = arith.subf %110, %113 : vector<2x8x8xf32>
    %115 = math.exp %114 : vector<2x8x8xf32>
    %cst_45 = arith.constant dense<0.000000e+00> : vector<2x8xf32>
    %116 = vector.multi_reduction <add>, %115, %cst_45 [2] : vector<2x8x8xf32> to vector<2x8xf32>
    %117 = vector.shape_cast %116 : vector<2x8xf32> to vector<2x8x1xf32>
    %118 = tpu.reciprocal %117 : vector<2x8x1xf32> -> vector<2x8x1xf32>
    %119 = vector.broadcast %118 : vector<2x8x1xf32> to vector<2x8x8xf32>
    %120 = arith.mulf %115, %119 : vector<2x8x8xf32>
    "tpu.trace_start"() <{level = 10 : i32, message = "bqk,bkd->bqd"}> : () -> ()
    %cst_46 = arith.constant dense<0.000000e+00> : vector<2x8x64xf32>
    %121 = tpu.matmul %120, %103, %cst_46 {dimension_numbers = #tpu.dot_dimension_numbers<[2], [1], [1], [2], [0, 0, 0, 1, 1, 2], [0], [0]>} : vector<2x8x8xf32>, vector<2x8x64xf32>, vector<2x8x64xf32> -> vector<2x8x64xf32>
    "tpu.trace_stop"() : () -> ()
    %122 = vector.extract_strided_slice %28 {offsets = [0, 0, 256], sizes = [2, 8, 64], strides = [1, 1, 1]} : vector<2x8x384xf32> to vector<2x8x64xf32>
    %123 = vector.extract_strided_slice %31 {offsets = [0, 0, 256], sizes = [2, 8, 64], strides = [1, 1, 1]} : vector<2x8x384xf32> to vector<2x8x64xf32>
    %124 = vector.extract_strided_slice %34 {offsets = [0, 0, 256], sizes = [2, 8, 64], strides = [1, 1, 1]} : vector<2x8x384xf32> to vector<2x8x64xf32>
    "tpu.trace_start"() <{level = 10 : i32, message = "bqd,bkd->bqk"}> : () -> ()
    %cst_47 = arith.constant dense<0.000000e+00> : vector<2x8x8xf32>
    %125 = tpu.matmul %122, %123, %cst_47 {dimension_numbers = #tpu.dot_dimension_numbers<[2], [2], [1], [1], [0, 0, 0, 1, 1, 1], [0], [0]>} : vector<2x8x64xf32>, vector<2x8x64xf32>, vector<2x8x8xf32> -> vector<2x8x8xf32>
    "tpu.trace_stop"() : () -> ()
    %cst_48 = arith.constant 1.250000e-01 : f32
    %126 = vector.broadcast %cst_48 : f32 to vector<2x8x8xf32>
    %127 = arith.mulf %125, %126 : vector<2x8x8xf32>
    %cst_49 = arith.constant -1.000000e+30 : f32
    %128 = vector.shape_cast %37 : vector<2x1x8xi1> to vector<2x1x8xi1>
    %129 = vector.broadcast %128 : vector<2x1x8xi1> to vector<2x8x8xi1>
    %130 = vector.broadcast %cst_49 : f32 to vector<2x8x8xf32>
    %131 = arith.select %129, %127, %130 : vector<2x8x8xi1>, vector<2x8x8xf32>
    %cst_50 = arith.constant dense<0xFF800000> : vector<2x8xf32>
    %132 = vector.multi_reduction <maximumf>, %131, %cst_50 [2] : vector<2x8x8xf32> to vector<2x8xf32>
    %133 = vector.shape_cast %132 : vector<2x8xf32> to vector<2x8x1xf32>
    %134 = vector.broadcast %133 : vector<2x8x1xf32> to vector<2x8x8xf32>
    %135 = arith.subf %131, %134 : vector<2x8x8xf32>
    %136 = math.exp %135 : vector<2x8x8xf32>
    %cst_51 = arith.constant dense<0.000000e+00> : vector<2x8xf32>
    %137 = vector.multi_reduction <add>, %136, %cst_51 [2] : vector<2x8x8xf32> to vector<2x8xf32>
    %138 = vector.shape_cast %137 : vector<2x8xf32> to vector<2x8x1xf32>
    %139 = tpu.reciprocal %138 : vector<2x8x1xf32> -> vector<2x8x1xf32>
    %140 = vector.broadcast %139 : vector<2x8x1xf32> to vector<2x8x8xf32>
    %141 = arith.mulf %136, %140 : vector<2x8x8xf32>
    "tpu.trace_start"() <{level = 10 : i32, message = "bqk,bkd->bqd"}> : () -> ()
    %cst_52 = arith.constant dense<0.000000e+00> : vector<2x8x64xf32>
    %142 = tpu.matmul %141, %124, %cst_52 {dimension_numbers = #tpu.dot_dimension_numbers<[2], [1], [1], [2], [0, 0, 0, 1, 1, 2], [0], [0]>} : vector<2x8x8xf32>, vector<2x8x64xf32>, vector<2x8x64xf32> -> vector<2x8x64xf32>
    "tpu.trace_stop"() : () -> ()
    %143 = vector.extract_strided_slice %28 {offsets = [0, 0, 320], sizes = [2, 8, 64], strides = [1, 1, 1]} : vector<2x8x384xf32> to vector<2x8x64xf32>
    %144 = vector.extract_strided_slice %31 {offsets = [0, 0, 320], sizes = [2, 8, 64], strides = [1, 1, 1]} : vector<2x8x384xf32> to vector<2x8x64xf32>
    %145 = vector.extract_strided_slice %34 {offsets = [0, 0, 320], sizes = [2, 8, 64], strides = [1, 1, 1]} : vector<2x8x384xf32> to vector<2x8x64xf32>
    "tpu.trace_start"() <{level = 10 : i32, message = "bqd,bkd->bqk"}> : () -> ()
    %cst_53 = arith.constant dense<0.000000e+00> : vector<2x8x8xf32>
    %146 = tpu.matmul %143, %144, %cst_53 {dimension_numbers = #tpu.dot_dimension_numbers<[2], [2], [1], [1], [0, 0, 0, 1, 1, 1], [0], [0]>} : vector<2x8x64xf32>, vector<2x8x64xf32>, vector<2x8x8xf32> -> vector<2x8x8xf32>
    "tpu.trace_stop"() : () -> ()
    %cst_54 = arith.constant 1.250000e-01 : f32
    %147 = vector.broadcast %cst_54 : f32 to vector<2x8x8xf32>
    %148 = arith.mulf %146, %147 : vector<2x8x8xf32>
    %cst_55 = arith.constant -1.000000e+30 : f32
    %149 = vector.shape_cast %37 : vector<2x1x8xi1> to vector<2x1x8xi1>
    %150 = vector.broadcast %149 : vector<2x1x8xi1> to vector<2x8x8xi1>
    %151 = vector.broadcast %cst_55 : f32 to vector<2x8x8xf32>
    %152 = arith.select %150, %148, %151 : vector<2x8x8xi1>, vector<2x8x8xf32>
    %cst_56 = arith.constant dense<0xFF800000> : vector<2x8xf32>
    %153 = vector.multi_reduction <maximumf>, %152, %cst_56 [2] : vector<2x8x8xf32> to vector<2x8xf32>
    %154 = vector.shape_cast %153 : vector<2x8xf32> to vector<2x8x1xf32>
    %155 = vector.broadcast %154 : vector<2x8x1xf32> to vector<2x8x8xf32>
    %156 = arith.subf %152, %155 : vector<2x8x8xf32>
    %157 = math.exp %156 : vector<2x8x8xf32>
    %cst_57 = arith.constant dense<0.000000e+00> : vector<2x8xf32>
    %158 = vector.multi_reduction <add>, %157, %cst_57 [2] : vector<2x8x8xf32> to vector<2x8xf32>
    %159 = vector.shape_cast %158 : vector<2x8xf32> to vector<2x8x1xf32>
    %160 = tpu.reciprocal %159 : vector<2x8x1xf32> -> vector<2x8x1xf32>
    %161 = vector.broadcast %160 : vector<2x8x1xf32> to vector<2x8x8xf32>
    %162 = arith.mulf %157, %161 : vector<2x8x8xf32>
    "tpu.trace_start"() <{level = 10 : i32, message = "bqk,bkd->bqd"}> : () -> ()
    %cst_58 = arith.constant dense<0.000000e+00> : vector<2x8x64xf32>
    %163 = tpu.matmul %162, %145, %cst_58 {dimension_numbers = #tpu.dot_dimension_numbers<[2], [1], [1], [2], [0, 0, 0, 1, 1, 2], [0], [0]>} : vector<2x8x8xf32>, vector<2x8x64xf32>, vector<2x8x64xf32> -> vector<2x8x64xf32>
    "tpu.trace_stop"() : () -> ()
    %164 = tpu.concatenate %58, %79, %100, %121, %142, %163 in 2 : vector<2x8x64xf32>, vector<2x8x64xf32>, vector<2x8x64xf32>, vector<2x8x64xf32>, vector<2x8x64xf32>, vector<2x8x64xf32> -> vector<2x8x384xf32>
    %165 = vector.shape_cast %164 : vector<2x8x384xf32> to vector<16x384xf32>
    %c0_59 = arith.constant 0 : index
    %c0_60 = arith.constant 0 : index
    %166 = vector.load %arg8[%c0_59, %c0_60] : memref<384x384xf32, #tpu.memory_space<vmem>>, vector<384x384xf32>
    %cst_61 = arith.constant dense<0.000000e+00> : vector<16x384xf32>
    %167 = tpu.matmul %165, %166, %cst_61 {dimension_numbers = #tpu.dot_dimension_numbers<[1], [0], [0], [1], [0, 0, 1, 1], [], []>} : vector<16x384xf32>, vector<384x384xf32>, vector<16x384xf32> -> vector<16x384xf32>
    %c0_62 = arith.constant 0 : index
    %c0_63 = arith.constant 0 : index
    %168 = vector.load %arg9[%c0_62, %c0_63] : memref<1x384xf32, #tpu.memory_space<vmem>>, vector<1x384xf32>
    %169 = vector.broadcast %168 : vector<1x384xf32> to vector<16x384xf32>
    %170 = arith.addf %167, %169 : vector<16x384xf32>
    %171 = arith.addf %25, %170 : vector<16x384xf32>
    %c0_64 = arith.constant 0 : index
    %c0_65 = arith.constant 0 : index
    %172 = vector.load %arg10[%c0_64, %c0_65] : memref<1x384xf32, #tpu.memory_space<vmem>>, vector<1x384xf32>
    %c0_66 = arith.constant 0 : index
    %c0_67 = arith.constant 0 : index
    %173 = vector.load %arg11[%c0_66, %c0_67] : memref<1x384xf32, #tpu.memory_space<vmem>>, vector<1x384xf32>
    %cst_68 = arith.constant dense<0.000000e+00> : vector<16xf32>
    %174 = vector.multi_reduction <add>, %171, %cst_68 [1] : vector<16x384xf32> to vector<16xf32>
    %175 = vector.shape_cast %174 : vector<16xf32> to vector<16x1xf32>
    %cst_69 = arith.constant 3.840000e+02 : f32
    %176 = vector.broadcast %cst_69 : f32 to vector<16x1xf32>
    %177 = arith.divf %175, %176 : vector<16x1xf32>
    %178 = vector.broadcast %177 : vector<16x1xf32> to vector<16x384xf32>
    %179 = arith.subf %171, %178 : vector<16x384xf32>
    %180 = arith.mulf %179, %179 : vector<16x384xf32>
    %cst_70 = arith.constant dense<0.000000e+00> : vector<16xf32>
    %181 = vector.multi_reduction <add>, %180, %cst_70 [1] : vector<16x384xf32> to vector<16xf32>
    %182 = vector.shape_cast %181 : vector<16xf32> to vector<16x1xf32>
    %cst_71 = arith.constant 3.840000e+02 : f32
    %183 = vector.broadcast %cst_71 : f32 to vector<16x1xf32>
    %184 = arith.divf %182, %183 : vector<16x1xf32>
    %185 = vector.broadcast %177 : vector<16x1xf32> to vector<16x384xf32>
    %186 = arith.subf %171, %185 : vector<16x384xf32>
    %cst_72 = arith.constant 9.99999974E-6 : f32
    %187 = vector.broadcast %cst_72 : f32 to vector<16x1xf32>
    %188 = arith.addf %184, %187 : vector<16x1xf32>
    %189 = math.rsqrt %188 : vector<16x1xf32>
    %190 = vector.broadcast %189 : vector<16x1xf32> to vector<16x384xf32>
    %191 = arith.mulf %186, %190 : vector<16x384xf32>
    %192 = vector.broadcast %172 : vector<1x384xf32> to vector<16x384xf32>
    %193 = arith.mulf %191, %192 : vector<16x384xf32>
    %194 = vector.broadcast %173 : vector<1x384xf32> to vector<16x384xf32>
    %195 = arith.addf %193, %194 : vector<16x384xf32>
    %c0_73 = arith.constant 0 : index
    %c0_74 = arith.constant 0 : index
    %196 = vector.load %arg12[%c0_73, %c0_74] : memref<384x1536xf32, #tpu.memory_space<vmem>>, vector<384x1536xf32>
    %cst_75 = arith.constant dense<0.000000e+00> : vector<16x1536xf32>
    %197 = tpu.matmul %195, %196, %cst_75 {dimension_numbers = #tpu.dot_dimension_numbers<[1], [0], [0], [1], [0, 0, 1, 1], [], []>} : vector<16x384xf32>, vector<384x1536xf32>, vector<16x1536xf32> -> vector<16x1536xf32>
    %c0_76 = arith.constant 0 : index
    %c0_77 = arith.constant 0 : index
    %198 = vector.load %arg13[%c0_76, %c0_77] : memref<1x1536xf32, #tpu.memory_space<vmem>>, vector<1x1536xf32>
    %199 = vector.broadcast %198 : vector<1x1536xf32> to vector<16x1536xf32>
    %200 = arith.addf %197, %199 : vector<16x1536xf32>
    %cst_78 = arith.constant 0.000000e+00 : f32
    %201 = vector.broadcast %cst_78 : f32 to vector<16x1536xf32>
    %202 = arith.maximumf %200, %201 : vector<16x1536xf32>
    %c0_79 = arith.constant 0 : index
    %c0_80 = arith.constant 0 : index
    %203 = vector.load %arg14[%c0_79, %c0_80] : memref<1536x384xf32, #tpu.memory_space<vmem>>, vector<1536x384xf32>
    %cst_81 = arith.constant dense<0.000000e+00> : vector<16x384xf32>
    %204 = tpu.matmul %202, %203, %cst_81 {dimension_numbers = #tpu.dot_dimension_numbers<[1], [0], [0], [1], [0, 0, 1, 1], [], []>} : vector<16x1536xf32>, vector<1536x384xf32>, vector<16x384xf32> -> vector<16x384xf32>
    %c0_82 = arith.constant 0 : index
    %c0_83 = arith.constant 0 : index
    %205 = vector.load %arg15[%c0_82, %c0_83] : memref<1x384xf32, #tpu.memory_space<vmem>>, vector<1x384xf32>
    %206 = vector.broadcast %205 : vector<1x384xf32> to vector<16x384xf32>
    %207 = arith.addf %204, %206 : vector<16x384xf32>
    %208 = arith.addf %195, %207 : vector<16x384xf32>
    %209 = vector.shape_cast %208 : vector<16x384xf32> to vector<2x8x384xf32>
    %c0_84 = arith.constant 0 : index
    %c0_85 = arith.constant 0 : index
    %c0_86 = arith.constant 0 : index
    %210 = vector.load %arg16[%c0_84, %c0_85, %c0_86] : memref<2x8x384xf32, #tpu.memory_space<vmem>>, vector<2x8x384xf32>
    tpu.vector_store %arg16[%c0_84, %c0_85, %c0_86], %209 {strides = array<i32>} : memref<2x8x384xf32, #tpu.memory_space<vmem>>, vector<2x8x384xf32>,
    return
  }
  func.func @transform_0(%arg0: i32) -> (i32, i32, i32) {
    %c0_i32 = arith.constant 0 : i32
    %c0_i32_0 = arith.constant 0 : i32
    %c0_i32_1 = arith.constant 0 : i32
    return %arg0, %c0_i32, %c0_i32_0 : i32, i32, i32
  }
  func.func @transform_1(%arg0: i32) -> (i32, i32, i32) {
    %c0_i32 = arith.constant 0 : i32
    %c0_i32_0 = arith.constant 0 : i32
    %c0_i32_1 = arith.constant 0 : i32
    return %arg0, %c0_i32, %c0_i32_0 : i32, i32, i32
  }
  func.func @transform_2(%arg0: i32) -> (i32, i32) {
    %c0_i32 = arith.constant 0 : i32
    %c0_i32_0 = arith.constant 0 : i32
    %c0_i32_1 = arith.constant 0 : i32
    return %c0_i32, %c0_i32_0 : i32, i32
  }
  func.func @transform_3(%arg0: i32) -> (i32, i32) {
    %c0_i32 = arith.constant 0 : i32
    %c0_i32_0 = arith.constant 0 : i32
    %c0_i32_1 = arith.constant 0 : i32
    return %c0_i32, %c0_i32_0 : i32, i32
  }
  func.func @transform_4(%arg0: i32) -> (i32, i32) {
    %c0_i32 = arith.constant 0 : i32
    %c0_i32_0 = arith.constant 0 : i32
    %c0_i32_1 = arith.constant 0 : i32
    return %c0_i32, %c0_i32_0 : i32, i32
  }
  func.func @transform_5(%arg0: i32) -> (i32, i32) {
    %c0_i32 = arith.constant 0 : i32
    %c0_i32_0 = arith.constant 0 : i32
    %c0_i32_1 = arith.constant 0 : i32
    return %c0_i32, %c0_i32_0 : i32, i32
  }
  func.func @transform_6(%arg0: i32) -> (i32, i32) {
    %c0_i32 = arith.constant 0 : i32
    %c0_i32_0 = arith.constant 0 : i32
    %c0_i32_1 = arith.constant 0 : i32
    return %c0_i32, %c0_i32_0 : i32, i32
  }
  func.func @transform_7(%arg0: i32) -> (i32, i32) {
    %c0_i32 = arith.constant 0 : i32
    %c0_i32_0 = arith.constant 0 : i32
    %c0_i32_1 = arith.constant 0 : i32
    return %c0_i32, %c0_i32_0 : i32, i32
  }
  func.func @transform_8(%arg0: i32) -> (i32, i32) {
    %c0_i32 = arith.constant 0 : i32
    %c0_i32_0 = arith.constant 0 : i32
    %c0_i32_1 = arith.constant 0 : i32
    return %c0_i32, %c0_i32_0 : i32, i32
  }
  func.func @transform_9(%arg0: i32) -> (i32, i32) {
    %c0_i32 = arith.constant 0 : i32
    %c0_i32_0 = arith.constant 0 : i32
    %c0_i32_1 = arith.constant 0 : i32
    return %c0_i32, %c0_i32_0 : i32, i32
  }
  func.func @transform_10(%arg0: i32) -> (i32, i32) {
    %c0_i32 = arith.constant 0 : i32
    %c0_i32_0 = arith.constant 0 : i32
    %c0_i32_1 = arith.constant 0 : i32
    return %c0_i32, %c0_i32_0 : i32, i32
  }
  func.func @transform_11(%arg0: i32) -> (i32, i32) {
    %c0_i32 = arith.constant 0 : i32
    %c0_i32_0 = arith.constant 0 : i32
    %c0_i32_1 = arith.constant 0 : i32
    return %c0_i32, %c0_i32_0 : i32, i32
  }
  func.func @transform_12(%arg0: i32) -> (i32, i32) {
    %c0_i32 = arith.constant 0 : i32
    %c0_i32_0 = arith.constant 0 : i32
    %c0_i32_1 = arith.constant 0 : i32
    return %c0_i32, %c0_i32_0 : i32, i32
  }
  func.func @transform_13(%arg0: i32) -> (i32, i32) {
    %c0_i32 = arith.constant 0 : i32
    %c0_i32_0 = arith.constant 0 : i32
    %c0_i32_1 = arith.constant 0 : i32
    return %c0_i32, %c0_i32_0 : i32, i32
  }
  func.func @transform_14(%arg0: i32) -> (i32, i32) {
    %c0_i32 = arith.constant 0 : i32
    %c0_i32_0 = arith.constant 0 : i32
    %c0_i32_1 = arith.constant 0 : i32
    return %c0_i32, %c0_i32_0 : i32, i32
  }
  func.func @transform_15(%arg0: i32) -> (i32, i32, i32) {
    %c0_i32 = arith.constant 0 : i32
    %c0_i32_0 = arith.constant 0 : i32
    %c0_i32_1 = arith.constant 0 : i32
    return %arg0, %c0_i32, %c0_i32_0 : i32, i32, i32
  }
}

</mosaic_0001>

<llo_original>
// kernel: tpu_custom_call.1
$region0: #{tpu_custom_call.1}
  #allocation0 [shape = 'u32[]', space=smem, size = 0x4, offset = 0x4, fixed_abs, tag = 'smem constant byte address 0x4 - core index']
  #allocation1 [shape = 'u32[144,128]{1,0:T(1,128)}', space=vmem, size = 0x12000, scoped, tag = 'internal scratch']
  %s0 = inlined_call_operand.hbm [shape: f32[2,8,384], index: 0, kind: input, shape index: {}]
  %s1 = inlined_call_operand.hbm [shape: f32[2,1,8], index: 1, kind: input, shape index: {}]
  %s2 = inlined_call_operand.hbm [shape: f32[1,384], index: 2, kind: input, shape index: {}]
  %s3 = inlined_call_operand.hbm [shape: f32[1,384], index: 3, kind: input, shape index: {}]
  %s4 = inlined_call_operand.hbm [shape: f32[384,384], index: 4, kind: input, shape index: {}]
  %s5 = inlined_call_operand.hbm [shape: f32[384,384], index: 5, kind: input, shape index: {}]
  %s6 = inlined_call_operand.hbm [shape: f32[384,384], index: 6, kind: input, shape index: {}]
  %s7 = inlined_call_operand.hbm [shape: f32[384,384], index: 7, kind: input, shape index: {}]
  %s8 = inlined_call_operand.hbm [shape: f32[1,384], index: 8, kind: input, shape index: {}]
  %s9 = inlined_call_operand.hbm [shape: f32[1,384], index: 9, kind: input, shape index: {}]
  %s10 = inlined_call_operand.hbm [shape: f32[1,384], index: 10, kind: input, shape index: {}]
  %s11 = inlined_call_operand.hbm [shape: f32[384,1536], index: 11, kind: input, shape index: {}]
  %s12 = inlined_call_operand.hbm [shape: f32[1,1536], index: 12, kind: input, shape index: {}]
  %s13 = inlined_call_operand.hbm [shape: f32[1536,384], index: 13, kind: input, shape index: {}]
  %s14 = inlined_call_operand.hbm [shape: f32[1,384], index: 14, kind: input, shape index: {}]
  %s15 = inlined_call_operand.hbm [shape: f32[2,8,384], index: 15, kind: output, shape index: {}]
  %s16 = sld [smem:[#allocation0]]
  $region130: #{tpu_custom_call.1} parent=0
    _
  %s18 = ssub.s32 1, %s16
  %s19 = scalar_select 0, %s18, %s16
  $region1: #{tpu_custom_call.1} parent=0
    #allocation2 [shape = 'u8[24576]{0}', space=vmem, size = 0x6000, scoped, tag = 'input window, operand 0, single buffered']
    #allocation3 [shape = 's32[1]{0}', space=sflag, size = 0x4, scoped, tag = 'scoped memory for tpu_custom_call.1']
    #allocation4 [shape = 's32[1]{0}', space=sflag, size = 0x4, scoped, tag = 'scoped memory for tpu_custom_call.1']
    #allocation5 [shape = 'u8[1024]{0}', space=vmem, size = 0x400, scoped, tag = 'input window, operand 1, single buffered']
    #allocation6 [shape = 's32[1]{0}', space=sflag, size = 0x4, scoped, tag = 'scoped memory for tpu_custom_call.1']
    #allocation7 [shape = 'u8[1536]{0}', space=vmem, size = 0x800, scoped, tag = 'input window, operand 2, single buffered']
    #allocation8 [shape = 'u8[1536]{0}', space=vmem, size = 0x800, scoped, tag = 'input window, operand 3, single buffered']
    #allocation9 [shape = 's32[1]{0}', space=sflag, size = 0x4, scoped, tag = 'scoped memory for tpu_custom_call.1']
    #allocation10 [shape = 'u8[589824]{0}', space=vmem, size = 0x90000, scoped, tag = 'input window, operand 4, single buffered']
    #allocation11 [shape = 'u8[589824]{0}', space=vmem, size = 0x90000, scoped, tag = 'input window, operand 5, single buffered']
    #allocation12 [shape = 's32[1]{0}', space=sflag, size = 0x4, scoped, tag = 'scoped memory for tpu_custom_call.1']
    #allocation13 [shape = 'u8[589824]{0}', space=vmem, size = 0x90000, scoped, tag = 'input window, operand 6, single buffered']
    #allocation14 [shape = 'u8[589824]{0}', space=vmem, size = 0x90000, scoped, tag = 'input window, operand 7, single buffered']
    #allocation15 [shape = 's32[1]{0}', space=sflag, size = 0x4, scoped, tag = 'scoped memory for tpu_custom_call.1']
    #allocation16 [shape = 'u8[1536]{0}', space=vmem, size = 0x800, scoped, tag = 'input window, operand 8, single buffered']
    #allocation17 [shape = 'u8[1536]{0}', space=vmem, size = 0x800, scoped, tag = 'input window, operand 9, single buffered']
    #allocation18 [shape = 's32[1]{0}', space=sflag, size = 0x4, scoped, tag = 'scoped memory for tpu_custom_call.1']
    #allocation19 [shape = 'u8[1536]{0}', space=vmem, size = 0x800, scoped, tag = 'input window, operand 10, single buffered']
    #allocation20 [shape = 'u8[2359296]{0}', space=vmem, size = 0x240000, scoped, tag = 'input window, operand 11, single buffered']
    #allocation21 [shape = 's32[1]{0}', space=sflag, size = 0x4, scoped, tag = 'scoped memory for tpu_custom_call.1']
    #allocation22 [shape = 'u8[6144]{0}', space=vmem, size = 0x1800, scoped, tag = 'input window, operand 12, single buffered']
    #allocation23 [shape = 'u8[2359296]{0}', space=vmem, size = 0x240000, scoped, tag = 'input window, operand 13, single buffered']
    #allocation24 [shape = 's32[1]{0}', space=sflag, size = 0x4, scoped, tag = 'scoped memory for tpu_custom_call.1']
    #allocation25 [shape = 'u8[1536]{0}', space=vmem, size = 0x800, scoped, tag = 'input window, operand 14, single buffered']
    #allocation26 [shape = 'u8[24576]{0}', space=vmem, size = 0x6000, scoped, tag = 'output window, operand 0, single buffered']
    %20 = vsyncpa [#allocation3], 0
    %21 = vsyncpa [#allocation6], 0
    %22 = vsyncpa [#allocation9], 0
    %23 = vsyncpa [#allocation12], 0
    %24 = vsyncpa [#allocation15], 0
    %25 = vsyncpa [#allocation18], 0
    %26 = vsyncpa [#allocation21], 0
    %27 = vsyncpa [#allocation24], 0
    %28 = vsyncpa [#allocation4], 0
    // Predicated region
    $region2: #{tpu_custom_call.1} parent=1 // pred_check
      _
    $region3: #{tpu_custom_call.1} parent=1 // pred_check_branch
      %30 = sbr.rel (0) target = $region5
    $region4: #{tpu_custom_call.1} parent=1 // pred_region
      %s32 = ssub.s32 768, 768
      %33 = vsyncadd [#allocation3], %s32
      %s34 = sshll.u32 [#allocation2], 4
      %s35 = int_to_ptr.vmem [resolvable:$true] %s34
      %40 = dma.hbm_to_vmem [thread:$0]  %s0, 768, %s35, [#allocation3], 384, 384, 24
    $region5: #{tpu_custom_call.1} parent=1 // pred_fallthru
      _
    // Predicated region
    $region6: #{tpu_custom_call.1} parent=1 // pred_check
      _
    $region7: #{tpu_custom_call.1} parent=1 // pred_check_branch
      %42 = sbr.rel (0) target = $region9
    $region8: #{tpu_custom_call.1} parent=1 // pred_region
      %s44 = ssub.s32 32, 32
      %45 = vsyncadd [#allocation6], %s44
      %s46 = sshll.u32 [#allocation5], 4
      %s47 = int_to_ptr.vmem [resolvable:$true] %s46
      %52 = dma.hbm_to_vmem [thread:$0]  %s1, 32, %s47, [#allocation6], 16, 16, 1
    $region9: #{tpu_custom_call.1} parent=1 // pred_fallthru
      _
    // Predicated region
    $region10: #{tpu_custom_call.1} parent=1 // pred_check
      _
    $region11: #{tpu_custom_call.1} parent=1 // pred_check_branch
      %54 = sbr.rel (0) target = $region13
    $region12: #{tpu_custom_call.1} parent=1 // pred_region
      %s56 = ssub.s32 48, 48
      %57 = vsyncadd [#allocation6], %s56
      %s59 = sshll.u32 [#allocation7], 4
      %s60 = int_to_ptr.vmem [resolvable:$true] %s59
      %62 = dma.hbm_to_vmem [thread:$0]  %s2, 48, %s60, [#allocation6]
    $region13: #{tpu_custom_call.1} parent=1 // pred_fallthru
      _
    // Predicated region
    $region14: #{tpu_custom_call.1} parent=1 // pred_check
      _
    $region15: #{tpu_custom_call.1} parent=1 // pred_check_branch
      %64 = sbr.rel (0) target = $region17
    $region16: #{tpu_custom_call.1} parent=1 // pred_region
      %s66 = ssub.s32 48, 48
      %67 = vsyncadd [#allocation9], %s66
      %s69 = sshll.u32 [#allocation8], 4
      %s70 = int_to_ptr.vmem [resolvable:$true] %s69
      %72 = dma.hbm_to_vmem [thread:$0]  %s3, 48, %s70, [#allocation9]
    $region17: #{tpu_custom_call.1} parent=1 // pred_fallthru
      _
    // Predicated region
    $region18: #{tpu_custom_call.1} parent=1 // pred_check
      _
    $region19: #{tpu_custom_call.1} parent=1 // pred_check_branch
      %74 = sbr.rel (0) target = $region21
    $region20: #{tpu_custom_call.1} parent=1 // pred_region
      %s76 = ssub.s32 18432, 18432
      %77 = vsyncadd [#allocation9], %s76
      %s78 = sshll.u32 [#allocation10], 4
      %s79 = int_to_ptr.vmem [resolvable:$true] %s78
      %84 = dma.hbm_to_vmem [thread:$0]  %s4, 18432, %s79, [#allocation9], 384, 384, 24
    $region21: #{tpu_custom_call.1} parent=1 // pred_fallthru
      _
    // Predicated region
    $region22: #{tpu_custom_call.1} parent=1 // pred_check
      _
    $region23: #{tpu_custom_call.1} parent=1 // pred_check_branch
      %86 = sbr.rel (0) target = $region25
    $region24: #{tpu_custom_call.1} parent=1 // pred_region
      %s88 = ssub.s32 18432, 18432
      %89 = vsyncadd [#allocation12], %s88
      %s90 = sshll.u32 [#allocation11], 4
      %s91 = int_to_ptr.vmem [resolvable:$true] %s90
      %96 = dma.hbm_to_vmem [thread:$0]  %s5, 18432, %s91, [#allocation12], 384, 384, 24
    $region25: #{tpu_custom_call.1} parent=1 // pred_fallthru
      _
    // Predicated region
    $region26: #{tpu_custom_call.1} parent=1 // pred_check
      _
    $region27: #{tpu_custom_call.1} parent=1 // pred_check_branch
      %98 = sbr.rel (0) target = $region29
    $region28: #{tpu_custom_call.1} parent=1 // pred_region
      %s100 = ssub.s32 18432, 18432
      %101 = vsyncadd [#allocation12], %s100
      %s102 = sshll.u32 [#allocation13], 4
      %s103 = int_to_ptr.vmem [resolvable:$true] %s102
      %108 = dma.hbm_to_vmem [thread:$0]  %s6, 18432, %s103, [#allocation12], 384, 384, 24
    $region29: #{tpu_custom_call.1} parent=1 // pred_fallthru
      _
    // Predicated region
    $region30: #{tpu_custom_call.1} parent=1 // pred_check
      _
    $region31: #{tpu_custom_call.1} parent=1 // pred_check_branch
      %110 = sbr.rel (0) target = $region33
    $region32: #{tpu_custom_call.1} parent=1 // pred_region
      %s112 = ssub.s32 18432, 18432
      %113 = vsyncadd [#allocation15], %s112
      %s114 = sshll.u32 [#allocation14], 4
      %s115 = int_to_ptr.vmem [resolvable:$true] %s114
      %120 = dma.hbm_to_vmem [thread:$0]  %s7, 18432, %s115, [#allocation15], 384, 384, 24
    $region33: #{tpu_custom_call.1} parent=1 // pred_fallthru
      _
    // Predicated region
    $region34: #{tpu_custom_call.1} parent=1 // pred_check
      _
    $region35: #{tpu_custom_call.1} parent=1 // pred_check_branch
      %122 = sbr.rel (0) target = $region37
    $region36: #{tpu_custom_call.1} parent=1 // pred_region
      %s124 = ssub.s32 48, 48
      %125 = vsyncadd [#allocation15], %s124
      %s127 = sshll.u32 [#allocation16], 4
      %s128 = int_to_ptr.vmem [resolvable:$true] %s127
      %130 = dma.hbm_to_vmem [thread:$0]  %s8, 48, %s128, [#allocation15]
    $region37: #{tpu_custom_call.1} parent=1 // pred_fallthru
      _
    // Predicated region
    $region38: #{tpu_custom_call.1} parent=1 // pred_check
      _
    $region39: #{tpu_custom_call.1} parent=1 // pred_check_branch
      %132 = sbr.rel (0) target = $region41
    $region40: #{tpu_custom_call.1} parent=1 // pred_region
      %s134 = ssub.s32 48, 48
      %135 = vsyncadd [#allocation18], %s134
      %s137 = sshll.u32 [#allocation17], 4
      %s138 = int_to_ptr.vmem [resolvable:$true] %s137
      %140 = dma.hbm_to_vmem [thread:$0]  %s9, 48, %s138, [#allocation18]
    $region41: #{tpu_custom_call.1} parent=1 // pred_fallthru
      _
    // Predicated region
    $region42: #{tpu_custom_call.1} parent=1 // pred_check
      _
    $region43: #{tpu_custom_call.1} parent=1 // pred_check_branch
      %142 = sbr.rel (0) target = $region45
    $region44: #{tpu_custom_call.1} parent=1 // pred_region
      %s144 = ssub.s32 48, 48
      %145 = vsyncadd [#allocation18], %s144
      %s147 = sshll.u32 [#allocation19], 4
      %s148 = int_to_ptr.vmem [resolvable:$true] %s147
      %150 = dma.hbm_to_vmem [thread:$0]  %s10, 48, %s148, [#allocation18]
    $region45: #{tpu_custom_call.1} parent=1 // pred_fallthru
      _
    // Predicated region
    $region46: #{tpu_custom_call.1} parent=1 // pred_check
      _
    $region47: #{tpu_custom_call.1} parent=1 // pred_check_branch
      %152 = sbr.rel (0) target = $region49
    $region48: #{tpu_custom_call.1} parent=1 // pred_region
      %s154 = ssub.s32 73728, 73728
      %155 = vsyncadd [#allocation21], %s154
      %s156 = sshll.u32 [#allocation20], 4
      %s157 = int_to_ptr.vmem [resolvable:$true] %s156
      %162 = dma.hbm_to_vmem [thread:$0]  %s11, 73728, %s157, [#allocation21], 1536, 1536, 96
    $region49: #{tpu_custom_call.1} parent=1 // pred_fallthru
      _
    // Predicated region
    $region50: #{tpu_custom_call.1} parent=1 // pred_check
      _
    $region51: #{tpu_custom_call.1} parent=1 // pred_check_branch
      %164 = sbr.rel (0) target = $region53
    $region52: #{tpu_custom_call.1} parent=1 // pred_region
      %s166 = ssub.s32 192, 192
      %167 = vsyncadd [#allocation21], %s166
      %s169 = sshll.u32 [#allocation22], 4
      %s170 = int_to_ptr.vmem [resolvable:$true] %s169
      %172 = dma.hbm_to_vmem [thread:$0]  %s12, 192, %s170, [#allocation21]
    $region53: #{tpu_custom_call.1} parent=1 // pred_fallthru
      _
    // Predicated region
    $region54: #{tpu_custom_call.1} parent=1 // pred_check
      _
    $region55: #{tpu_custom_call.1} parent=1 // pred_check_branch
      %174 = sbr.rel (0) target = $region57
    $region56: #{tpu_custom_call.1} parent=1 // pred_region
      %s176 = ssub.s32 73728, 73728
      %177 = vsyncadd [#allocation24], %s176
      %s178 = sshll.u32 [#allocation23], 4
      %s179 = int_to_ptr.vmem [resolvable:$true] %s178
      %184 = dma.hbm_to_vmem [thread:$0]  %s13, 73728, %s179, [#allocation24], 384, 384, 24
    $region57: #{tpu_custom_call.1} parent=1 // pred_fallthru
      _
    // Predicated region
    $region58: #{tpu_custom_call.1} parent=1 // pred_check
      _
    $region59: #{tpu_custom_call.1} parent=1 // pred_check_branch
      %186 = sbr.rel (0) target = $region61
    $region60: #{tpu_custom_call.1} parent=1 // pred_region
      %s188 = ssub.s32 48, 48
      %189 = vsyncadd [#allocation24], %s188
      %s191 = sshll.u32 [#allocation25], 4
      %s192 = int_to_ptr.vmem [resolvable:$true] %s191
      %194 = dma.hbm_to_vmem [thread:$0]  %s14, 48, %s192, [#allocation24]
    $region61: #{tpu_custom_call.1} parent=1 // pred_fallthru
      _
    // Predicated region
    $region62: #{tpu_custom_call.1} parent=1 // pred_check
      _
    $region63: #{tpu_custom_call.1} parent=1 // pred_check_branch
      %196 = sbr.rel (0) target = $region65
    $region64: #{tpu_custom_call.1} parent=1 // pred_region
      %197 = dma.done [#allocation3], 768
    $region65: #{tpu_custom_call.1} parent=1 // pred_fallthru
      _
    // Predicated region
    $region66: #{tpu_custom_call.1} parent=1 // pred_check
      _
    $region67: #{tpu_custom_call.1} parent=1 // pred_check_branch
      %199 = sbr.rel (0) target = $region69
    $region68: #{tpu_custom_call.1} parent=1 // pred_region
      %200 = dma.done [#allocation6], 32
    $region69: #{tpu_custom_call.1} parent=1 // pred_fallthru
      _
    // Predicated region
    $region70: #{tpu_custom_call.1} parent=1 // pred_check
      _
    $region71: #{tpu_custom_call.1} parent=1 // pred_check_branch
      %202 = sbr.rel (0) target = $region73
    $region72: #{tpu_custom_call.1} parent=1 // pred_region
      %203 = dma.done [#allocation6], 48
    $region73: #{tpu_custom_call.1} parent=1 // pred_fallthru
      _
    // Predicated region
    $region74: #{tpu_custom_call.1} parent=1 // pred_check
      _
    $region75: #{tpu_custom_call.1} parent=1 // pred_check_branch
      %205 = sbr.rel (0) target = $region77
    $region76: #{tpu_custom_call.1} parent=1 // pred_region
      %206 = dma.done [#allocation9], 48
    $region77: #{tpu_custom_call.1} parent=1 // pred_fallthru
      _
    // Predicated region
    $region78: #{tpu_custom_call.1} parent=1 // pred_check
      _
    $region79: #{tpu_custom_call.1} parent=1 // pred_check_branch
      %208 = sbr.rel (0) target = $region81
    $region80: #{tpu_custom_call.1} parent=1 // pred_region
      %209 = dma.done [#allocation9], 18432
    $region81: #{tpu_custom_call.1} parent=1 // pred_fallthru
      _
    // Predicated region
    $region82: #{tpu_custom_call.1} parent=1 // pred_check
      _
    $region83: #{tpu_custom_call.1} parent=1 // pred_check_branch
      %211 = sbr.rel (0) target = $region85
    $region84: #{tpu_custom_call.1} parent=1 // pred_region
      %212 = dma.done [#allocation12], 18432
    $region85: #{tpu_custom_call.1} parent=1 // pred_fallthru
      _
    // Predicated region
    $region86: #{tpu_custom_call.1} parent=1 // pred_check
      _
    $region87: #{tpu_custom_call.1} parent=1 // pred_check_branch
      %214 = sbr.rel (0) target = $region89
    $region88: #{tpu_custom_call.1} parent=1 // pred_region
      %215 = dma.done [#allocation12], 18432
    $region89: #{tpu_custom_call.1} parent=1 // pred_fallthru
      _
    // Predicated region
    $region90: #{tpu_custom_call.1} parent=1 // pred_check
      _
    $region91: #{tpu_custom_call.1} parent=1 // pred_check_branch
      %217 = sbr.rel (0) target = $region93
    $region92: #{tpu_custom_call.1} parent=1 // pred_region
      %218 = dma.done [#allocation15], 18432
    $region93: #{tpu_custom_call.1} parent=1 // pred_fallthru
      _
    // Predicated region
    $region94: #{tpu_custom_call.1} parent=1 // pred_check
      _
    $region95: #{tpu_custom_call.1} parent=1 // pred_check_branch
      %220 = sbr.rel (0) target = $region97
    $region96: #{tpu_custom_call.1} parent=1 // pred_region
      %221 = dma.done [#allocation15], 48
    $region97: #{tpu_custom_call.1} parent=1 // pred_fallthru
      _
    // Predicated region
    $region98: #{tpu_custom_call.1} parent=1 // pred_check
      _
    $region99: #{tpu_custom_call.1} parent=1 // pred_check_branch
      %223 = sbr.rel (0) target = $region101
    $region100: #{tpu_custom_call.1} parent=1 // pred_region
      %224 = dma.done [#allocation18], 48
    $region101: #{tpu_custom_call.1} parent=1 // pred_fallthru
      _
    // Predicated region
    $region102: #{tpu_custom_call.1} parent=1 // pred_check
      _
    $region103: #{tpu_custom_call.1} parent=1 // pred_check_branch
      %226 = sbr.rel (0) target = $region105
    $region104: #{tpu_custom_call.1} parent=1 // pred_region
      %227 = dma.done [#allocation18], 48
    $region105: #{tpu_custom_call.1} parent=1 // pred_fallthru
      _
    // Predicated region
    $region106: #{tpu_custom_call.1} parent=1 // pred_check
      _
    $region107: #{tpu_custom_call.1} parent=1 // pred_check_branch
      %229 = sbr.rel (0) target = $region109
    $region108: #{tpu_custom_call.1} parent=1 // pred_region
      %230 = dma.done [#allocation21], 73728
    $region109: #{tpu_custom_call.1} parent=1 // pred_fallthru
      _
    // Predicated region
    $region110: #{tpu_custom_call.1} parent=1 // pred_check
      _
    $region111: #{tpu_custom_call.1} parent=1 // pred_check_branch
      %232 = sbr.rel (0) target = $region113
    $region112: #{tpu_custom_call.1} parent=1 // pred_region
      %233 = dma.done [#allocation21], 192
    $region113: #{tpu_custom_call.1} parent=1 // pred_fallthru
      _
    // Predicated region
    $region114: #{tpu_custom_call.1} parent=1 // pred_check
      _
    $region115: #{tpu_custom_call.1} parent=1 // pred_check_branch
      %235 = sbr.rel (0) target = $region117
    $region116: #{tpu_custom_call.1} parent=1 // pred_region
      %236 = dma.done [#allocation24], 73728
    $region117: #{tpu_custom_call.1} parent=1 // pred_fallthru
      _
    // Predicated region
    $region118: #{tpu_custom_call.1} parent=1 // pred_check
      _
    $region119: #{tpu_custom_call.1} parent=1 // pred_check_branch
      %238 = sbr.rel (0) target = $region121
    $region120: #{tpu_custom_call.1} parent=1 // pred_region
      %239 = dma.done [#allocation24], 48
    $region121: #{tpu_custom_call.1} parent=1 // pred_fallthru
      _
    %v240 = vld [vmem:[#allocation2] sm:$0xff]
    %v241 = vld [vmem:[#allocation2 + $0x8] sm:$0xff]
    %v242 = vld [vmem:[#allocation2 + $0x10] sm:$0xff]
    %v243 = vld [vmem:[#allocation2 + $0x18] sm:$0xff]
    %v244 = vld [vmem:[#allocation2 + $0x20] sm:$0xff]
    %v245 = vld [vmem:[#allocation2 + $0x28] sm:$0xff]
    %v246 = vld [vmem:[#allocation7] sm:$0x7]
    %v247 = vld [vmem:[#allocation8] sm:$0x7]
    %v248 = vadd.f32 %v240, %v241
    %v249 = vadd.f32 %v248, %v242
    %250 = vadd.xlane.f32.xlu0 %v249
    %v251 = vpop.xlane.xlu0 %250
    %v252 = vadd.f32 %v243, %v244
    %v253 = vadd.f32 %v252, %v245
    %254 = vadd.xlane.f32.xlu0 %v253
    %v255 = vpop.xlane.xlu0 %254
    %v256 = vrcp.pop 384.0
    %v257 = vmul.f32 %v251, %v256
    %v258 = vmul.f32 %v255, %v256
    %v259 = vsub.f32 %v240, %v257
    %v260 = vsub.f32 %v241, %v257
    %v261 = vsub.f32 %v242, %v257
    %v262 = vsub.f32 %v243, %v258
    %v263 = vsub.f32 %v244, %v258
    %v264 = vsub.f32 %v245, %v258
    %v265 = vmul.f32 %v259, %v259
    %v266 = vmul.f32 %v260, %v260
    %v267 = vmul.f32 %v261, %v261
    %v268 = vmul.f32 %v262, %v262
    %v269 = vmul.f32 %v263, %v263
    %v270 = vmul.f32 %v264, %v264
    %v271 = vadd.f32 %v265, %v266
    %v272 = vadd.f32 %v271, %v267
    %273 = vadd.xlane.f32.xlu0 %v272
    %v274 = vpop.xlane.xlu0 %273
    %v275 = vadd.f32 %v268, %v269
    %v276 = vadd.f32 %v275, %v270
    %277 = vadd.xlane.f32.xlu0 %v276
    %v278 = vpop.xlane.xlu0 %277
    %v279 = vmul.f32 %v274, %v256
    %v280 = vmul.f32 %v278, %v256
    %v281 = vadd.f32 %v279, 1e-05
    %v282 = vadd.f32 %v280, 1e-05
    %v283 = vrsqrt.pop %v281
    %v284 = vrsqrt.pop %v282
    %v285 = vmul.f32 %v259, %v283
    %v286 = vmul.f32 %v260, %v283
    %v287 = vmul.f32 %v261, %v283
    %v288 = vmul.f32 %v262, %v284
    %v289 = vmul.f32 %v263, %v284
    %v290 = vmul.f32 %v264, %v284
    %v292 = vlaneseq
    %v293 = vshrl.u32 %v292, 7
    %v294 = vsub.s32 0, %v293
    %v295 = vrot.slane %v246, %v294
    %v296 = vlaneseq
    %v297 = vshrl.u32 %v296, 7
    %v298 = vsub.s32 1, %v297
    %v299 = vrot.slane %v246, %v298
    %v300 = vlaneseq
    %v301 = vshrl.u32 %v300, 7
    %v302 = vsub.s32 2, %v301
    %v303 = vrot.slane %v246, %v302
    %v307 = vmul.f32 %v285, %v295
    %v308 = vmul.f32 %v286, %v299
    %v309 = vmul.f32 %v287, %v303
    %v310 = vmul.f32 %v288, %v295
    %v311 = vmul.f32 %v289, %v299
    %v312 = vmul.f32 %v290, %v303
    %v314 = vlaneseq
    %v315 = vshrl.u32 %v314, 7
    %v316 = vsub.s32 0, %v315
    %v317 = vrot.slane %v247, %v316
    %v318 = vlaneseq
    %v319 = vshrl.u32 %v318, 7
    %v320 = vsub.s32 1, %v319
    %v321 = vrot.slane %v247, %v320
    %v322 = vlaneseq
    %v323 = vshrl.u32 %v322, 7
    %v324 = vsub.s32 2, %v323
    %v325 = vrot.slane %v247, %v324
    %v329 = vadd.f32 %v307, %v317
    %v330 = vadd.f32 %v308, %v321
    %v331 = vadd.f32 %v309, %v325
    %v332 = vadd.f32 %v310, %v317
    %v333 = vadd.f32 %v311, %v321
    %v334 = vadd.f32 %v312, %v325
    %v335 = vld [vmem:[#allocation10] sm:$0xff]
    %v336 = vld [vmem:[#allocation10 + $0x8] sm:$0xff]
    %v337 = vld [vmem:[#allocation10 + $0x10] sm:$0xff]
    %v338 = vld [vmem:[#allocation10 + $0x18] sm:$0xff]
    %v339 = vld [vmem:[#allocation10 + $0x20] sm:$0xff]
    %v340 = vld [vmem:[#allocation10 + $0x28] sm:$0xff]
    %v341 = vld [vmem:[#allocation10 + $0x30] sm:$0xff]
    %v342 = vld [vmem:[#allocation10 + $0x38] sm:$0xff]
    %v343 = vld [vmem:[#allocation10 + $0x40] sm:$0xff]
    %v344 = vld [vmem:[#allocation10 + $0x48] sm:$0xff]
    %v345 = vld [vmem:[#allocation10 + $0x50] sm:$0xff]
    %v346 = vld [vmem:[#allocation10 + $0x58] sm:$0xff]
    %v347 = vld [vmem:[#allocation10 + $0x60] sm:$0xff]
    %v348 = vld [vmem:[#allocation10 + $0x68] sm:$0xff]
    %v349 = vld [vmem:[#allocation10 + $0x70] sm:$0xff]
    %v350 = vld [vmem:[#allocation10 + $0x78] sm:$0xff]
    %v351 = vld [vmem:[#allocation10 + $0x80] sm:$0xff]
    %v352 = vld [vmem:[#allocation10 + $0x88] sm:$0xff]
    %v353 = vld [vmem:[#allocation10 + $0x90] sm:$0xff]
    %v354 = vld [vmem:[#allocation10 + $0x98] sm:$0xff]
    %v355 = vld [vmem:[#allocation10 + $0xa0] sm:$0xff]
    %v356 = vld [vmem:[#allocation10 + $0xa8] sm:$0xff]
    %v357 = vld [vmem:[#allocation10 + $0xb0] sm:$0xff]
    %v358 = vld [vmem:[#allocation10 + $0xb8] sm:$0xff]
    %v359 = vld [vmem:[#allocation10 + $0xc0] sm:$0xff]
    %v360 = vld [vmem:[#allocation10 + $0xc8] sm:$0xff]
    %v361 = vld [vmem:[#allocation10 + $0xd0] sm:$0xff]
    %v362 = vld [vmem:[#allocation10 + $0xd8] sm:$0xff]
    %v363 = vld [vmem:[#allocation10 + $0xe0] sm:$0xff]
    %v364 = vld [vmem:[#allocation10 + $0xe8] sm:$0xff]
    %v365 = vld [vmem:[#allocation10 + $0xf0] sm:$0xff]
    %v366 = vld [vmem:[#allocation10 + $0xf8] sm:$0xff]
    %v367 = vld [vmem:[#allocation10 + $0x100] sm:$0xff]
    %v368 = vld [vmem:[#allocation10 + $0x108] sm:$0xff]
    %v369 = vld [vmem:[#allocation10 + $0x110] sm:$0xff]
    %v370 = vld [vmem:[#allocation10 + $0x118] sm:$0xff]
    %v371 = vld [vmem:[#allocation10 + $0x120] sm:$0xff]
    %v372 = vld [vmem:[#allocation10 + $0x128] sm:$0xff]
    %v373 = vld [vmem:[#allocation10 + $0x130] sm:$0xff]
    %v374 = vld [vmem:[#allocation10 + $0x138] sm:$0xff]
    %v375 = vld [vmem:[#allocation10 + $0x140] sm:$0xff]
    %v376 = vld [vmem:[#allocation10 + $0x148] sm:$0xff]
    %v377 = vld [vmem:[#allocation10 + $0x150] sm:$0xff]
    %v378 = vld [vmem:[#allocation10 + $0x158] sm:$0xff]
    %v379 = vld [vmem:[#allocation10 + $0x160] sm:$0xff]
    %v380 = vld [vmem:[#allocation10 + $0x168] sm:$0xff]
    %v381 = vld [vmem:[#allocation10 + $0x170] sm:$0xff]
    %v382 = vld [vmem:[#allocation10 + $0x178] sm:$0xff]
    %v383 = vld [vmem:[#allocation10 + $0x180] sm:$0xff]
    %v384 = vld [vmem:[#allocation10 + $0x188] sm:$0xff]
    %v385 = vld [vmem:[#allocation10 + $0x190] sm:$0xff]
    %v386 = vld [vmem:[#allocation10 + $0x198] sm:$0xff]
    %v387 = vld [vmem:[#allocation10 + $0x1a0] sm:$0xff]
    %v388 = vld [vmem:[#allocation10 + $0x1a8] sm:$0xff]
    %v389 = vld [vmem:[#allocation10 + $0x1b0] sm:$0xff]
    %v390 = vld [vmem:[#allocation10 + $0x1b8] sm:$0xff]
    %v391 = vld [vmem:[#allocation10 + $0x1c0] sm:$0xff]
    %v392 = vld [vmem:[#allocation10 + $0x1c8] sm:$0xff]
    %v393 = vld [vmem:[#allocation10 + $0x1d0] sm:$0xff]
    %v394 = vld [vmem:[#allocation10 + $0x1d8] sm:$0xff]
    %v395 = vld [vmem:[#allocation10 + $0x1e0] sm:$0xff]
    %v396 = vld [vmem:[#allocation10 + $0x1e8] sm:$0xff]
    %v397 = vld [vmem:[#allocation10 + $0x1f0] sm:$0xff]
    %v398 = vld [vmem:[#allocation10 + $0x1f8] sm:$0xff]
    %v399 = vld [vmem:[#allocation10 + $0x200] sm:$0xff]
    %v400 = vld [vmem:[#allocation10 + $0x208] sm:$0xff]
    %v401 = vld [vmem:[#allocation10 + $0x210] sm:$0xff]
    %v402 = vld [vmem:[#allocation10 + $0x218] sm:$0xff]
    %v403 = vld [vmem:[#allocation10 + $0x220] sm:$0xff]
    %v404 = vld [vmem:[#allocation10 + $0x228] sm:$0xff]
    %v405 = vld [vmem:[#allocation10 + $0x230] sm:$0xff]
    %v406 = vld [vmem:[#allocation10 + $0x238] sm:$0xff]
    %v407 = vld [vmem:[#allocation10 + $0x240] sm:$0xff]
    %v408 = vld [vmem:[#allocation10 + $0x248] sm:$0xff]
    %v409 = vld [vmem:[#allocation10 + $0x250] sm:$0xff]
    %v410 = vld [vmem:[#allocation10 + $0x258] sm:$0xff]
    %v411 = vld [vmem:[#allocation10 + $0x260] sm:$0xff]
    %v412 = vld [vmem:[#allocation10 + $0x268] sm:$0xff]
    %v413 = vld [vmem:[#allocation10 + $0x270] sm:$0xff]
    %v414 = vld [vmem:[#allocation10 + $0x278] sm:$0xff]
    %v415 = vld [vmem:[#allocation10 + $0x280] sm:$0xff]
    %v416 = vld [vmem:[#allocation10 + $0x288] sm:$0xff]
    %v417 = vld [vmem:[#allocation10 + $0x290] sm:$0xff]
    %v418 = vld [vmem:[#allocation10 + $0x298] sm:$0xff]
    %v419 = vld [vmem:[#allocation10 + $0x2a0] sm:$0xff]
    %v420 = vld [vmem:[#allocation10 + $0x2a8] sm:$0xff]
    %v421 = vld [vmem:[#allocation10 + $0x2b0] sm:$0xff]
    %v422 = vld [vmem:[#allocation10 + $0x2b8] sm:$0xff]
    %v423 = vld [vmem:[#allocation10 + $0x2c0] sm:$0xff]
    %v424 = vld [vmem:[#allocation10 + $0x2c8] sm:$0xff]
    %v425 = vld [vmem:[#allocation10 + $0x2d0] sm:$0xff]
    %v426 = vld [vmem:[#allocation10 + $0x2d8] sm:$0xff]
    %v427 = vld [vmem:[#allocation10 + $0x2e0] sm:$0xff]
    %v428 = vld [vmem:[#allocation10 + $0x2e8] sm:$0xff]
    %v429 = vld [vmem:[#allocation10 + $0x2f0] sm:$0xff]
    %v430 = vld [vmem:[#allocation10 + $0x2f8] sm:$0xff]
    %v431 = vld [vmem:[#allocation10 + $0x300] sm:$0xff]
    %v432 = vld [vmem:[#allocation10 + $0x308] sm:$0xff]
    %v433 = vld [vmem:[#allocation10 + $0x310] sm:$0xff]
    %v434 = vld [vmem:[#allocation10 + $0x318] sm:$0xff]
    %v435 = vld [vmem:[#allocation10 + $0x320] sm:$0xff]
    %v436 = vld [vmem:[#allocation10 + $0x328] sm:$0xff]
    %v437 = vld [vmem:[#allocation10 + $0x330] sm:$0xff]
    %v438 = vld [vmem:[#allocation10 + $0x338] sm:$0xff]
    %v439 = vld [vmem:[#allocation10 + $0x340] sm:$0xff]
    %v440 = vld [vmem:[#allocation10 + $0x348] sm:$0xff]
    %v441 = vld [vmem:[#allocation10 + $0x350] sm:$0xff]
    %v442 = vld [vmem:[#allocation10 + $0x358] sm:$0xff]
    %v443 = vld [vmem:[#allocation10 + $0x360] sm:$0xff]
    %v444 = vld [vmem:[#allocation10 + $0x368] sm:$0xff]
    %v445 = vld [vmem:[#allocation10 + $0x370] sm:$0xff]
    %v446 = vld [vmem:[#allocation10 + $0x378] sm:$0xff]
    %v447 = vld [vmem:[#allocation10 + $0x380] sm:$0xff]
    %v448 = vld [vmem:[#allocation10 + $0x388] sm:$0xff]
    %v449 = vld [vmem:[#allocation10 + $0x390] sm:$0xff]
    %v450 = vld [vmem:[#allocation10 + $0x398] sm:$0xff]
    %v451 = vld [vmem:[#allocation10 + $0x3a0] sm:$0xff]
    %v452 = vld [vmem:[#allocation10 + $0x3a8] sm:$0xff]
    %v453 = vld [vmem:[#allocation10 + $0x3b0] sm:$0xff]
    %v454 = vld [vmem:[#allocation10 + $0x3b8] sm:$0xff]
    %v455 = vld [vmem:[#allocation10 + $0x3c0] sm:$0xff]
    %v456 = vld [vmem:[#allocation10 + $0x3c8] sm:$0xff]
    %v457 = vld [vmem:[#allocation10 + $0x3d0] sm:$0xff]
    %v458 = vld [vmem:[#allocation10 + $0x3d8] sm:$0xff]
    %v459 = vld [vmem:[#allocation10 + $0x3e0] sm:$0xff]
    %v460 = vld [vmem:[#allocation10 + $0x3e8] sm:$0xff]
    %v461 = vld [vmem:[#allocation10 + $0x3f0] sm:$0xff]
    %v462 = vld [vmem:[#allocation10 + $0x3f8] sm:$0xff]
    %v463 = vld [vmem:[#allocation10 + $0x400] sm:$0xff]
    %v464 = vld [vmem:[#allocation10 + $0x408] sm:$0xff]
    %v465 = vld [vmem:[#allocation10 + $0x410] sm:$0xff]
    %v466 = vld [vmem:[#allocation10 + $0x418] sm:$0xff]
    %v467 = vld [vmem:[#allocation10 + $0x420] sm:$0xff]
    %v468 = vld [vmem:[#allocation10 + $0x428] sm:$0xff]
    %v469 = vld [vmem:[#allocation10 + $0x430] sm:$0xff]
    %v470 = vld [vmem:[#allocation10 + $0x438] sm:$0xff]
    %v471 = vld [vmem:[#allocation10 + $0x440] sm:$0xff]
    %v472 = vld [vmem:[#allocation10 + $0x448] sm:$0xff]
    %v473 = vld [vmem:[#allocation10 + $0x450] sm:$0xff]
    %v474 = vld [vmem:[#allocation10 + $0x458] sm:$0xff]
    %v475 = vld [vmem:[#allocation10 + $0x460] sm:$0xff]
    %v476 = vld [vmem:[#allocation10 + $0x468] sm:$0xff]
    %v477 = vld [vmem:[#allocation10 + $0x470] sm:$0xff]
    %v478 = vld [vmem:[#allocation10 + $0x478] sm:$0xff]
    %479 = vmatprep.subr.mxu0 %v336
    %480 = vmatpush1.msra.mxu0 %v335
    %481 = vmatprep.subr.mxu0 %v339
    %482 = vmatpush1.msra.mxu0 %v338
    %483 = vmatprep.subr.mxu0 %v342
    %484 = vmatpush1.msra.mxu0 %v341
    %485 = vmatprep.subr.mxu0 %v345
    %486 = vmatpush1.msra.mxu0 %v344
    %487 = vmatprep.subr.mxu0 %v348
    %488 = vmatpush1.msra.mxu0 %v347
    %489 = vmatprep.subr.mxu0 %v351
    %490 = vmatpush1.msra.mxu0 %v350
    %491 = vmatprep.subr.mxu0 %v354
    %492 = vmatpush1.msra.mxu0 %v353
    %493 = vmatprep.subr.mxu0 %v357
    %494 = vmatpush1.msra.mxu0 %v356
    %495 = vmatprep.subr.mxu0 %v360
    %496 = vmatpush1.msra.mxu0 %v359
    %497 = vmatprep.subr.mxu0 %v363
    %498 = vmatpush1.msra.mxu0 %v362
    %499 = vmatprep.subr.mxu0 %v366
    %500 = vmatpush1.msra.mxu0 %v365
    %501 = vmatprep.subr.mxu0 %v369
    %502 = vmatpush1.msra.mxu0 %v368
    %503 = vmatprep.subr.mxu0 %v372
    %504 = vmatpush1.msra.mxu0 %v371
    %505 = vmatprep.subr.mxu0 %v375
    %506 = vmatpush1.msra.mxu0 %v374
    %507 = vmatprep.subr.mxu0 %v378
    %508 = vmatpush1.msra.mxu0 %v377
    %509 = vmatprep.subr.mxu0 %v381
    %510 = vmatpush1.msra.mxu0 %v380
    %511 = vmatprep.subr.mxu0 %v384
    %512 = vmatpush1.msra.mxu0 %v383
    %513 = vmatprep.subr.mxu0 %v387
    %514 = vmatpush1.msra.mxu0 %v386
    %515 = vmatprep.subr.mxu0 %v390
    %516 = vmatpush1.msra.mxu0 %v389
    %517 = vmatprep.subr.mxu0 %v393
    %518 = vmatpush1.msra.mxu0 %v392
    %519 = vmatprep.subr.mxu0 %v396
    %520 = vmatpush1.msra.mxu0 %v395
    %521 = vmatprep.subr.mxu0 %v399
    %522 = vmatpush1.msra.mxu0 %v398
    %523 = vmatprep.subr.mxu0 %v402
    %524 = vmatpush1.msra.mxu0 %v401
    %525 = vmatprep.subr.mxu0 %v405
    %526 = vmatpush1.msra.mxu0 %v404
    %527 = vmatprep.subr.mxu0 %v408
    %528 = vmatpush1.msra.mxu0 %v407
    %529 = vmatprep.subr.mxu0 %v411
    %530 = vmatpush1.msra.mxu0 %v410
    %531 = vmatprep.subr.mxu0 %v414
    %532 = vmatpush1.msra.mxu0 %v413
    %533 = vmatprep.subr.mxu0 %v417
    %534 = vmatpush1.msra.mxu0 %v416
    %535 = vmatprep.subr.mxu0 %v420
    %536 = vmatpush1.msra.mxu0 %v419
    %537 = vmatprep.subr.mxu0 %v423
    %538 = vmatpush1.msra.mxu0 %v422
    %539 = vmatprep.subr.mxu0 %v426
    %540 = vmatpush1.msra.mxu0 %v425
    %541 = vmatprep.subr.mxu0 %v429
    %542 = vmatpush1.msra.mxu0 %v428
    %543 = vmatprep.mubr.f32.mxu0 %v330
    %544 = vmatmul.mubr.f32.gmra.mrb[0].mxu0 %v329
    %v545 = vpop.f32.mrb[0].mxu0
    %v546 = vadd.f32 0.0, %v545
    %v547 = vpop.f32.mrb[0].mxu0
    %v548 = vadd.f32 0.0, %v547
    %549 = vmatprep.mubr.f32.mxu0 %v333
    %550 = vmatmul.mubr.f32.gmra.mrb[0].mxu0 %v332
    %v551 = vpop.f32.mrb[0].mxu0
    %v552 = vadd.f32 0.0, %v551
    %v553 = vpop.f32.mrb[0].mxu0
    %v554 = vadd.f32 0.0, %v553
    %555 = vdwg.mxu0
    %556 = vmatprep.subr.mxu0 %v432
    %557 = vmatpush1.msra.mxu0 %v431
    %558 = vmatprep.subr.mxu0 %v435
    %559 = vmatpush1.msra.mxu0 %v434
    %560 = vmatprep.subr.mxu0 %v438
    %561 = vmatpush1.msra.mxu0 %v437
    %562 = vmatprep.subr.mxu0 %v441
    %563 = vmatpush1.msra.mxu0 %v440
    %564 = vmatprep.subr.mxu0 %v444
    %565 = vmatpush1.msra.mxu0 %v443
    %566 = vmatprep.subr.mxu0 %v447
    %567 = vmatpush1.msra.mxu0 %v446
    %568 = vmatprep.subr.mxu0 %v450
    %569 = vmatpush1.msra.mxu0 %v449
    %570 = vmatprep.subr.mxu0 %v453
    %571 = vmatpush1.msra.mxu0 %v452
    %572 = vmatprep.subr.mxu0 %v456
    %573 = vmatpush1.msra.mxu0 %v455
    %574 = vmatprep.subr.mxu0 %v459
    %575 = vmatpush1.msra.mxu0 %v458
    %576 = vmatprep.subr.mxu0 %v462
    %577 = vmatpush1.msra.mxu0 %v461
    %578 = vmatprep.subr.mxu0 %v465
    %579 = vmatpush1.msra.mxu0 %v464
    %580 = vmatprep.subr.mxu0 %v468
    %581 = vmatpush1.msra.mxu0 %v467
    %582 = vmatprep.subr.mxu0 %v471
    %583 = vmatpush1.msra.mxu0 %v470
    %584 = vmatprep.subr.mxu0 %v474
    %585 = vmatpush1.msra.mxu0 %v473
    %586 = vmatprep.subr.mxu0 %v477
    %587 = vmatpush1.msra.mxu0 %v476
    %588 = vmatprep.subr.mxu0 0.0
    %589 = vmatpush1.msra.mxu0 0.0
    %590 = vmatprep.subr.mxu0 0.0
    %591 = vmatpush1.msra.mxu0 0.0
    %592 = vmatprep.subr.mxu0 0.0
    %593 = vmatpush1.msra.mxu0 0.0
    %594 = vmatprep.subr.mxu0 0.0
    %595 = vmatpush1.msra.mxu0 0.0
    %596 = vmatprep.subr.mxu0 0.0
    %597 = vmatpush1.msra.mxu0 0.0
    %598 = vmatprep.subr.mxu0 0.0
    %599 = vmatpush1.msra.mxu0 0.0
    %600 = vmatprep.subr.mxu0 0.0
    %601 = vmatpush1.msra.mxu0 0.0
    %602 = vmatprep.subr.mxu0 0.0
    %603 = vmatpush1.msra.mxu0 0.0
    %604 = vmatprep.subr.mxu0 0.0
    %605 = vmatpush1.msra.mxu0 0.0
    %606 = vmatprep.subr.mxu0 0.0
    %607 = vmatpush1.msra.mxu0 0.0
    %608 = vmatprep.subr.mxu0 0.0
    %609 = vmatpush1.msra.mxu0 0.0
    %610 = vmatprep.subr.mxu0 0.0
    %611 = vmatpush1.msra.mxu0 0.0
    %612 = vmatprep.subr.mxu0 0.0
    %613 = vmatpush1.msra.mxu0 0.0
    %614 = vmatprep.subr.mxu0 0.0
    %615 = vmatpush1.msra.mxu0 0.0
    %616 = vmatprep.subr.mxu0 0.0
    %617 = vmatpush1.msra.mxu0 0.0
    %618 = vmatprep.subr.mxu0 0.0
    %619 = vmatpush1.msra.mxu0 0.0
    %620 = vmatprep.mubr.f32.mxu0 0.0
    %621 = vmatmul.mubr.f32.gmra.mrb[0].mxu0 %v331
    %v622 = vpop.f32.mrb[0].mxu0
    %v623 = vadd.f32 %v546, %v622
    %v624 = vpop.f32.mrb[0].mxu0
    %v625 = vadd.f32 %v548, %v624
    %626 = vmatprep.mubr.f32.mxu0 0.0
    %627 = vmatmul.mubr.f32.gmra.mrb[0].mxu0 %v334
    %v628 = vpop.f32.mrb[0].mxu0
    %v629 = vadd.f32 %v552, %v628
    %v630 = vpop.f32.mrb[0].mxu0
    %v631 = vadd.f32 %v554, %v630
    %632 = vdwg.mxu0
    %633 = vmatprep.subr.mxu0 0.0
    %634 = vmatpush1.msra.mxu0 %v337
    %635 = vmatprep.subr.mxu0 0.0
    %636 = vmatpush1.msra.mxu0 %v340
    %637 = vmatprep.subr.mxu0 0.0
    %638 = vmatpush1.msra.mxu0 %v343
    %639 = vmatprep.subr.mxu0 0.0
    %640 = vmatpush1.msra.mxu0 %v346
    %641 = vmatprep.subr.mxu0 0.0
    %642 = vmatpush1.msra.mxu0 %v349
    %643 = vmatprep.subr.mxu0 0.0
    %644 = vmatpush1.msra.mxu0 %v352
    %645 = vmatprep.subr.mxu0 0.0
    %646 = vmatpush1.msra.mxu0 %v355
    %647 = vmatprep.subr.mxu0 0.0
    %648 = vmatpush1.msra.mxu0 %v358
    %649 = vmatprep.subr.mxu0 0.0
    %650 = vmatpush1.msra.mxu0 %v361
    %651 = vmatprep.subr.mxu0 0.0
    %652 = vmatpush1.msra.mxu0 %v364
    %653 = vmatprep.subr.mxu0 0.0
    %654 = vmatpush1.msra.mxu0 %v367
    %655 = vmatprep.subr.mxu0 0.0
    %656 = vmatpush1.msra.mxu0 %v370
    %657 = vmatprep.subr.mxu0 0.0
    %658 = vmatpush1.msra.mxu0 %v373
    %659 = vmatprep.subr.mxu0 0.0
    %660 = vmatpush1.msra.mxu0 %v376
    %661 = vmatprep.subr.mxu0 0.0
    %662 = vmatpush1.msra.mxu0 %v379
    %663 = vmatprep.subr.mxu0 0.0
    %664 = vmatpush1.msra.mxu0 %v382
    %665 = vmatprep.subr.mxu0 0.0
    %666 = vmatpush1.msra.mxu0 %v385
    %667 = vmatprep.subr.mxu0 0.0
    %668 = vmatpush1.msra.mxu0 %v388
    %669 = vmatprep.subr.mxu0 0.0
    %670 = vmatpush1.msra.mxu0 %v391
    %671 = vmatprep.subr.mxu0 0.0
    %672 = vmatpush1.msra.mxu0 %v394
    %673 = vmatprep.subr.mxu0 0.0
    %674 = vmatpush1.msra.mxu0 %v397
    %675 = vmatprep.subr.mxu0 0.0
    %676 = vmatpush1.msra.mxu0 %v400
    %677 = vmatprep.subr.mxu0 0.0
    %678 = vmatpush1.msra.mxu0 %v403
    %679 = vmatprep.subr.mxu0 0.0
    %680 = vmatpush1.msra.mxu0 %v406
    %681 = vmatprep.subr.mxu0 0.0
    %682 = vmatpush1.msra.mxu0 %v409
    %683 = vmatprep.subr.mxu0 0.0
    %684 = vmatpush1.msra.mxu0 %v412
    %685 = vmatprep.subr.mxu0 0.0
    %686 = vmatpush1.msra.mxu0 %v415
    %687 = vmatprep.subr.mxu0 0.0
    %688 = vmatpush1.msra.mxu0 %v418
    %689 = vmatprep.subr.mxu0 0.0
    %690 = vmatpush1.msra.mxu0 %v421
    %691 = vmatprep.subr.mxu0 0.0
    %692 = vmatpush1.msra.mxu0 %v424
    %693 = vmatprep.subr.mxu0 0.0
    %694 = vmatpush1.msra.mxu0 %v427
    %695 = vmatprep.subr.mxu0 0.0
    %696 = vmatpush1.msra.mxu0 %v430
    %697 = vmatprep.mubr.f32.mxu0 %v330
    %698 = vmatmul.mubr.f32.gmra.mrb[0].mxu0 %v329
    %v699 = vpop.f32.mrb[0].mxu0
    %v700 = vadd.f32 0.0, %v699
    %v701 = vpop.f32.mrb[0].mxu0
    %702 = vmatprep.mubr.f32.mxu0 %v333
    %703 = vmatmul.mubr.f32.gmra.mrb[0].mxu0 %v332
    %v704 = vpop.f32.mrb[0].mxu0
    %v705 = vadd.f32 0.0, %v704
    %v706 = vpop.f32.mrb[0].mxu0
    %707 = vdwg.mxu0
    %708 = vmatprep.subr.mxu0 0.0
    %709 = vmatpush1.msra.mxu0 %v433
    %710 = vmatprep.subr.mxu0 0.0
    %711 = vmatpush1.msra.mxu0 %v436
    %712 = vmatprep.subr.mxu0 0.0
    %713 = vmatpush1.msra.mxu0 %v439
    %714 = vmatprep.subr.mxu0 0.0
    %715 = vmatpush1.msra.mxu0 %v442
    %716 = vmatprep.subr.mxu0 0.0
    %717 = vmatpush1.msra.mxu0 %v445
    %718 = vmatprep.subr.mxu0 0.0
    %719 = vmatpush1.msra.mxu0 %v448
    %720 = vmatprep.subr.mxu0 0.0
    %721 = vmatpush1.msra.mxu0 %v451
    %722 = vmatprep.subr.mxu0 0.0
    %723 = vmatpush1.msra.mxu0 %v454
    %724 = vmatprep.subr.mxu0 0.0
    %725 = vmatpush1.msra.mxu0 %v457
    %726 = vmatprep.subr.mxu0 0.0
    %727 = vmatpush1.msra.mxu0 %v460
    %728 = vmatprep.subr.mxu0 0.0
    %729 = vmatpush1.msra.mxu0 %v463
    %730 = vmatprep.subr.mxu0 0.0
    %731 = vmatpush1.msra.mxu0 %v466
    %732 = vmatprep.subr.mxu0 0.0
    %733 = vmatpush1.msra.mxu0 %v469
    %734 = vmatprep.subr.mxu0 0.0
    %735 = vmatpush1.msra.mxu0 %v472
    %736 = vmatprep.subr.mxu0 0.0
    %737 = vmatpush1.msra.mxu0 %v475
    %738 = vmatprep.subr.mxu0 0.0
    %739 = vmatpush1.msra.mxu0 %v478
    %740 = vmatprep.subr.mxu0 0.0
    %741 = vmatpush1.msra.mxu0 0.0
    %742 = vmatprep.subr.mxu0 0.0
    %743 = vmatpush1.msra.mxu0 0.0
    %744 = vmatprep.subr.mxu0 0.0
    %745 = vmatpush1.msra.mxu0 0.0
    %746 = vmatprep.subr.mxu0 0.0
    %747 = vmatpush1.msra.mxu0 0.0
    %748 = vmatprep.subr.mxu0 0.0
    %749 = vmatpush1.msra.mxu0 0.0
    %750 = vmatprep.subr.mxu0 0.0
    %751 = vmatpush1.msra.mxu0 0.0
    %752 = vmatprep.subr.mxu0 0.0
    %753 = vmatpush1.msra.mxu0 0.0
    %754 = vmatprep.subr.mxu0 0.0
    %755 = vmatpush1.msra.mxu0 0.0
    %756 = vmatprep.subr.mxu0 0.0
    %757 = vmatpush1.msra.mxu0 0.0
    %758 = vmatprep.subr.mxu0 0.0
    %759 = vmatpush1.msra.mxu0 0.0
    %760 = vmatprep.subr.mxu0 0.0
    %761 = vmatpush1.msra.mxu0 0.0
    %762 = vmatprep.subr.mxu0 0.0
    %763 = vmatpush1.msra.mxu0 0.0
    %764 = vmatprep.subr.mxu0 0.0
    %765 = vmatpush1.msra.mxu0 0.0
    %766 = vmatprep.subr.mxu0 0.0
    %767 = vmatpush1.msra.mxu0 0.0
    %768 = vmatprep.subr.mxu0 0.0
    %769 = vmatpush1.msra.mxu0 0.0
    %770 = vmatprep.subr.mxu0 0.0
    %771 = vmatpush1.msra.mxu0 0.0
    %772 = vmatprep.mubr.f32.mxu0 0.0
    %773 = vmatmul.mubr.f32.gmra.mrb[0].mxu0 %v331
    %v774 = vpop.f32.mrb[0].mxu0
    %v775 = vadd.f32 %v700, %v774
    %v776 = vpop.f32.mrb[0].mxu0
    %777 = vmatprep.mubr.f32.mxu0 0.0
    %778 = vmatmul.mubr.f32.gmra.mrb[0].mxu0 %v334
    %v779 = vpop.f32.mrb[0].mxu0
    %v780 = vadd.f32 %v705, %v779
    %v781 = vpop.f32.mrb[0].mxu0
    %782 = vdwg.mxu0
    %v783 = vld [vmem:[#allocation11] sm:$0xff]
    %v784 = vld [vmem:[#allocation11 + $0x8] sm:$0xff]
    %v785 = vld [vmem:[#allocation11 + $0x10] sm:$0xff]
    %v786 = vld [vmem:[#allocation11 + $0x18] sm:$0xff]
    %v787 = vld [vmem:[#allocation11 + $0x20] sm:$0xff]
    %v788 = vld [vmem:[#allocation11 + $0x28] sm:$0xff]
    %v789 = vld [vmem:[#allocation11 + $0x30] sm:$0xff]
    %v790 = vld [vmem:[#allocation11 + $0x38] sm:$0xff]
    %v791 = vld [vmem:[#allocation11 + $0x40] sm:$0xff]
    %v792 = vld [vmem:[#allocation11 + $0x48] sm:$0xff]
    %v793 = vld [vmem:[#allocation11 + $0x50] sm:$0xff]
    %v794 = vld [vmem:[#allocation11 + $0x58] sm:$0xff]
    %v795 = vld [vmem:[#allocation11 + $0x60] sm:$0xff]
    %v796 = vld [vmem:[#allocation11 + $0x68] sm:$0xff]
    %v797 = vld [vmem:[#allocation11 + $0x70] sm:$0xff]
    %v798 = vld [vmem:[#allocation11 + $0x78] sm:$0xff]
    %v799 = vld [vmem:[#allocation11 + $0x80] sm:$0xff]
    %v800 = vld [vmem:[#allocation11 + $0x88] sm:$0xff]
    %v801 = vld [vmem:[#allocation11 + $0x90] sm:$0xff]
    %v802 = vld [vmem:[#allocation11 + $0x98] sm:$0xff]
    %v803 = vld [vmem:[#allocation11 + $0xa0] sm:$0xff]
    %v804 = vld [vmem:[#allocation11 + $0xa8] sm:$0xff]
    %v805 = vld [vmem:[#allocation11 + $0xb0] sm:$0xff]
    %v806 = vld [vmem:[#allocation11 + $0xb8] sm:$0xff]
    %v807 = vld [vmem:[#allocation11 + $0xc0] sm:$0xff]
    %v808 = vld [vmem:[#allocation11 + $0xc8] sm:$0xff]
    %v809 = vld [vmem:[#allocation11 + $0xd0] sm:$0xff]
    %v810 = vld [vmem:[#allocation11 + $0xd8] sm:$0xff]
    %v811 = vld [vmem:[#allocation11 + $0xe0] sm:$0xff]
    %v812 = vld [vmem:[#allocation11 + $0xe8] sm:$0xff]
    %v813 = vld [vmem:[#allocation11 + $0xf0] sm:$0xff]
    %v814 = vld [vmem:[#allocation11 + $0xf8] sm:$0xff]
    %v815 = vld [vmem:[#allocation11 + $0x100] sm:$0xff]
    %v816 = vld [vmem:[#allocation11 + $0x108] sm:$0xff]
    %v817 = vld [vmem:[#allocation11 + $0x110] sm:$0xff]
    %v818 = vld [vmem:[#allocation11 + $0x118] sm:$0xff]
    %v819 = vld [vmem:[#allocation11 + $0x120] sm:$0xff]
    %v820 = vld [vmem:[#allocation11 + $0x128] sm:$0xff]
    %v821 = vld [vmem:[#allocation11 + $0x130] sm:$0xff]
    %v822 = vld [vmem:[#allocation11 + $0x138] sm:$0xff]
    %v823 = vld [vmem:[#allocation11 + $0x140] sm:$0xff]
    %v824 = vld [vmem:[#allocation11 + $0x148] sm:$0xff]
    %v825 = vld [vmem:[#allocation11 + $0x150] sm:$0xff]
    %v826 = vld [vmem:[#allocation11 + $0x158] sm:$0xff]
    %v827 = vld [vmem:[#allocation11 + $0x160] sm:$0xff]
    %v828 = vld [vmem:[#allocation11 + $0x168] sm:$0xff]
    %v829 = vld [vmem:[#allocation11 + $0x170] sm:$0xff]
    %v830 = vld [vmem:[#allocation11 + $0x178] sm:$0xff]
    %v831 = vld [vmem:[#allocation11 + $0x180] sm:$0xff]
    %v832 = vld [vmem:[#allocation11 + $0x188] sm:$0xff]
    %v833 = vld [vmem:[#allocation11 + $0x190] sm:$0xff]
    %v834 = vld [vmem:[#allocation11 + $0x198] sm:$0xff]
    %v835 = vld [vmem:[#allocation11 + $0x1a0] sm:$0xff]
    %v836 = vld [vmem:[#allocation11 + $0x1a8] sm:$0xff]
    %v837 = vld [vmem:[#allocation11 + $0x1b0] sm:$0xff]
    %v838 = vld [vmem:[#allocation11 + $0x1b8] sm:$0xff]
    %v839 = vld [vmem:[#allocation11 + $0x1c0] sm:$0xff]
    %v840 = vld [vmem:[#allocation11 + $0x1c8] sm:$0xff]
    %v841 = vld [vmem:[#allocation11 + $0x1d0] sm:$0xff]
    %v842 = vld [vmem:[#allocation11 + $0x1d8] sm:$0xff]
    %v843 = vld [vmem:[#allocation11 + $0x1e0] sm:$0xff]
    %v844 = vld [vmem:[#allocation11 + $0x1e8] sm:$0xff]
    %v845 = vld [vmem:[#allocation11 + $0x1f0] sm:$0xff]
    %v846 = vld [vmem:[#allocation11 + $0x1f8] sm:$0xff]
    %v847 = vld [vmem:[#allocation11 + $0x200] sm:$0xff]
    %v848 = vld [vmem:[#allocation11 + $0x208] sm:$0xff]
    %v849 = vld [vmem:[#allocation11 + $0x210] sm:$0xff]
    %v850 = vld [vmem:[#allocation11 + $0x218] sm:$0xff]
    %v851 = vld [vmem:[#allocation11 + $0x220] sm:$0xff]
    %v852 = vld [vmem:[#allocation11 + $0x228] sm:$0xff]
    %v853 = vld [vmem:[#allocation11 + $0x230] sm:$0xff]
    %v854 = vld [vmem:[#allocation11 + $0x238] sm:$0xff]
    %v855 = vld [vmem:[#allocation11 + $0x240] sm:$0xff]
    %v856 = vld [vmem:[#allocation11 + $0x248] sm:$0xff]
    %v857 = vld [vmem:[#allocation11 + $0x250] sm:$0xff]
    %v858 = vld [vmem:[#allocation11 + $0x258] sm:$0xff]
    %v859 = vld [vmem:[#allocation11 + $0x260] sm:$0xff]
    %v860 = vld [vmem:[#allocation11 + $0x268] sm:$0xff]
    %v861 = vld [vmem:[#allocation11 + $0x270] sm:$0xff]
    %v862 = vld [vmem:[#allocation11 + $0x278] sm:$0xff]
    %v863 = vld [vmem:[#allocation11 + $0x280] sm:$0xff]
    %v864 = vld [vmem:[#allocation11 + $0x288] sm:$0xff]
    %v865 = vld [vmem:[#allocation11 + $0x290] sm:$0xff]
    %v866 = vld [vmem:[#allocation11 + $0x298] sm:$0xff]
    %v867 = vld [vmem:[#allocation11 + $0x2a0] sm:$0xff]
    %v868 = vld [vmem:[#allocation11 + $0x2a8] sm:$0xff]
    %v869 = vld [vmem:[#allocation11 + $0x2b0] sm:$0xff]
    %v870 = vld [vmem:[#allocation11 + $0x2b8] sm:$0xff]
    %v871 = vld [vmem:[#allocation11 + $0x2c0] sm:$0xff]
    %v872 = vld [vmem:[#allocation11 + $0x2c8] sm:$0xff]
    %v873 = vld [vmem:[#allocation11 + $0x2d0] sm:$0xff]
    %v874 = vld [vmem:[#allocation11 + $0x2d8] sm:$0xff]
    %v875 = vld [vmem:[#allocation11 + $0x2e0] sm:$0xff]
    %v876 = vld [vmem:[#allocation11 + $0x2e8] sm:$0xff]
    %v877 = vld [vmem:[#allocation11 + $0x2f0] sm:$0xff]
    %v878 = vld [vmem:[#allocation11 + $0x2f8] sm:$0xff]
    %v879 = vld [vmem:[#allocation11 + $0x300] sm:$0xff]
    %v880 = vld [vmem:[#allocation11 + $0x308] sm:$0xff]
    %v881 = vld [vmem:[#allocation11 + $0x310] sm:$0xff]
    %v882 = vld [vmem:[#allocation11 + $0x318] sm:$0xff]
    %v883 = vld [vmem:[#allocation11 + $0x320] sm:$0xff]
    %v884 = vld [vmem:[#allocation11 + $0x328] sm:$0xff]
    %v885 = vld [vmem:[#allocation11 + $0x330] sm:$0xff]
    %v886 = vld [vmem:[#allocation11 + $0x338] sm:$0xff]
    %v887 = vld [vmem:[#allocation11 + $0x340] sm:$0xff]
    %v888 = vld [vmem:[#allocation11 + $0x348] sm:$0xff]
    %v889 = vld [vmem:[#allocation11 + $0x350] sm:$0xff]
    %v890 = vld [vmem:[#allocation11 + $0x358] sm:$0xff]
    %v891 = vld [vmem:[#allocation11 + $0x360] sm:$0xff]
    %v892 = vld [vmem:[#allocation11 + $0x368] sm:$0xff]
    %v893 = vld [vmem:[#allocation11 + $0x370] sm:$0xff]
    %v894 = vld [vmem:[#allocation11 + $0x378] sm:$0xff]
    %v895 = vld [vmem:[#allocation11 + $0x380] sm:$0xff]
    %v896 = vld [vmem:[#allocation11 + $0x388] sm:$0xff]
    %v897 = vld [vmem:[#allocation11 + $0x390] sm:$0xff]
    %v898 = vld [vmem:[#allocation11 + $0x398] sm:$0xff]
    %v899 = vld [vmem:[#allocation11 + $0x3a0] sm:$0xff]
    %v900 = vld [vmem:[#allocation11 + $0x3a8] sm:$0xff]
    %v901 = vld [vmem:[#allocation11 + $0x3b0] sm:$0xff]
    %v902 = vld [vmem:[#allocation11 + $0x3b8] sm:$0xff]
    %v903 = vld [vmem:[#allocation11 + $0x3c0] sm:$0xff]
    %v904 = vld [vmem:[#allocation11 + $0x3c8] sm:$0xff]
    %v905 = vld [vmem:[#allocation11 + $0x3d0] sm:$0xff]
    %v906 = vld [vmem:[#allocation11 + $0x3d8] sm:$0xff]
    %v907 = vld [vmem:[#allocation11 + $0x3e0] sm:$0xff]
    %v908 = vld [vmem:[#allocation11 + $0x3e8] sm:$0xff]
    %v909 = vld [vmem:[#allocation11 + $0x3f0] sm:$0xff]
    %v910 = vld [vmem:[#allocation11 + $0x3f8] sm:$0xff]
    %v911 = vld [vmem:[#allocation11 + $0x400] sm:$0xff]
    %v912 = vld [vmem:[#allocation11 + $0x408] sm:$0xff]
    %v913 = vld [vmem:[#allocation11 + $0x410] sm:$0xff]
    %v914 = vld [vmem:[#allocation11 + $0x418] sm:$0xff]
    %v915 = vld [vmem:[#allocation11 + $0x420] sm:$0xff]
    %v916 = vld [vmem:[#allocation11 + $0x428] sm:$0xff]
    %v917 = vld [vmem:[#allocation11 + $0x430] sm:$0xff]
    %v918 = vld [vmem:[#allocation11 + $0x438] sm:$0xff]
    %v919 = vld [vmem:[#allocation11 + $0x440] sm:$0xff]
    %v920 = vld [vmem:[#allocation11 + $0x448] sm:$0xff]
    %v921 = vld [vmem:[#allocation11 + $0x450] sm:$0xff]
    %v922 = vld [vmem:[#allocation11 + $0x458] sm:$0xff]
    %v923 = vld [vmem:[#allocation11 + $0x460] sm:$0xff]
    %v924 = vld [vmem:[#allocation11 + $0x468] sm:$0xff]
    %v925 = vld [vmem:[#allocation11 + $0x470] sm:$0xff]
    %v926 = vld [vmem:[#allocation11 + $0x478] sm:$0xff]
    %927 = vmatprep.subr.mxu0 %v784
    %928 = vmatpush1.msra.mxu0 %v783
    %929 = vmatprep.subr.mxu0 %v787
    %930 = vmatpush1.msra.mxu0 %v786
    %931 = vmatprep.subr.mxu0 %v790
    %932 = vmatpush1.msra.mxu0 %v789
    %933 = vmatprep.subr.mxu0 %v793
    %934 = vmatpush1.msra.mxu0 %v792
    %935 = vmatprep.subr.mxu0 %v796
    %936 = vmatpush1.msra.mxu0 %v795
    %937 = vmatprep.subr.mxu0 %v799
    %938 = vmatpush1.msra.mxu0 %v798
    %939 = vmatprep.subr.mxu0 %v802
    %940 = vmatpush1.msra.mxu0 %v801
    %941 = vmatprep.subr.mxu0 %v805
    %942 = vmatpush1.msra.mxu0 %v804
    %943 = vmatprep.subr.mxu0 %v808
    %944 = vmatpush1.msra.mxu0 %v807
    %945 = vmatprep.subr.mxu0 %v811
    %946 = vmatpush1.msra.mxu0 %v810
    %947 = vmatprep.subr.mxu0 %v814
    %948 = vmatpush1.msra.mxu0 %v813
    %949 = vmatprep.subr.mxu0 %v817
    %950 = vmatpush1.msra.mxu0 %v816
    %951 = vmatprep.subr.mxu0 %v820
    %952 = vmatpush1.msra.mxu0 %v819
    %953 = vmatprep.subr.mxu0 %v823
    %954 = vmatpush1.msra.mxu0 %v822
    %955 = vmatprep.subr.mxu0 %v826
    %956 = vmatpush1.msra.mxu0 %v825
    %957 = vmatprep.subr.mxu0 %v829
    %958 = vmatpush1.msra.mxu0 %v828
    %959 = vmatprep.subr.mxu0 %v832
    %960 = vmatpush1.msra.mxu0 %v831
    %961 = vmatprep.subr.mxu0 %v835
    %962 = vmatpush1.msra.mxu0 %v834
    %963 = vmatprep.subr.mxu0 %v838
    %964 = vmatpush1.msra.mxu0 %v837
    %965 = vmatprep.subr.mxu0 %v841
    %966 = vmatpush1.msra.mxu0 %v840
    %967 = vmatprep.subr.mxu0 %v844
    %968 = vmatpush1.msra.mxu0 %v843
    %969 = vmatprep.subr.mxu0 %v847
    %970 = vmatpush1.msra.mxu0 %v846
    %971 = vmatprep.subr.mxu0 %v850
    %972 = vmatpush1.msra.mxu0 %v849
    %973 = vmatprep.subr.mxu0 %v853
    %974 = vmatpush1.msra.mxu0 %v852
    %975 = vmatprep.subr.mxu0 %v856
    %976 = vmatpush1.msra.mxu0 %v855
    %977 = vmatprep.subr.mxu0 %v859
    %978 = vmatpush1.msra.mxu0 %v858
    %979 = vmatprep.subr.mxu0 %v862
    %980 = vmatpush1.msra.mxu0 %v861
    %981 = vmatprep.subr.mxu0 %v865
    %982 = vmatpush1.msra.mxu0 %v864
    %983 = vmatprep.subr.mxu0 %v868
    %984 = vmatpush1.msra.mxu0 %v867
    %985 = vmatprep.subr.mxu0 %v871
    %986 = vmatpush1.msra.mxu0 %v870
    %987 = vmatprep.subr.mxu0 %v874
    %988 = vmatpush1.msra.mxu0 %v873
    %989 = vmatprep.subr.mxu0 %v877
    %990 = vmatpush1.msra.mxu0 %v876
    %991 = vmatprep.mubr.f32.mxu0 %v330
    %992 = vmatmul.mubr.f32.gmra.mrb[0].mxu0 %v329
    %v993 = vpop.f32.mrb[0].mxu0
    %v994 = vadd.f32 0.0, %v993
    %v995 = vpop.f32.mrb[0].mxu0
    %v996 = vadd.f32 0.0, %v995
    %997 = vmatprep.mubr.f32.mxu0 %v333
    %998 = vmatmul.mubr.f32.gmra.mrb[0].mxu0 %v332
    %v999 = vpop.f32.mrb[0].mxu0
    %v1000 = vadd.f32 0.0, %v999
    %v1001 = vpop.f32.mrb[0].mxu0
    %v1002 = vadd.f32 0.0, %v1001
    %1003 = vdwg.mxu0
    %1004 = vmatprep.subr.mxu0 %v880
    %1005 = vmatpush1.msra.mxu0 %v879
    %1006 = vmatprep.subr.mxu0 %v883
    %1007 = vmatpush1.msra.mxu0 %v882
    %1008 = vmatprep.subr.mxu0 %v886
    %1009 = vmatpush1.msra.mxu0 %v885
    %1010 = vmatprep.subr.mxu0 %v889
    %1011 = vmatpush1.msra.mxu0 %v888
    %1012 = vmatprep.subr.mxu0 %v892
    %1013 = vmatpush1.msra.mxu0 %v891
    %1014 = vmatprep.subr.mxu0 %v895
    %1015 = vmatpush1.msra.mxu0 %v894
    %1016 = vmatprep.subr.mxu0 %v898
    %1017 = vmatpush1.msra.mxu0 %v897
    %1018 = vmatprep.subr.mxu0 %v901
    %1019 = vmatpush1.msra.mxu0 %v900
    %1020 = vmatprep.subr.mxu0 %v904
    %1021 = vmatpush1.msra.mxu0 %v903
    %1022 = vmatprep.subr.mxu0 %v907
    %1023 = vmatpush1.msra.mxu0 %v906
    %1024 = vmatprep.subr.mxu0 %v910
    %1025 = vmatpush1.msra.mxu0 %v909
    %1026 = vmatprep.subr.mxu0 %v913
    %1027 = vmatpush1.msra.mxu0 %v912
    %1028 = vmatprep.subr.mxu0 %v916
    %1029 = vmatpush1.msra.mxu0 %v915
    %1030 = vmatprep.subr.mxu0 %v919
    %1031 = vmatpush1.msra.mxu0 %v918
    %1032 = vmatprep.subr.mxu0 %v922
    %1033 = vmatpush1.msra.mxu0 %v921
    %1034 = vmatprep.subr.mxu0 %v925
    %1035 = vmatpush1.msra.mxu0 %v924
    %1036 = vmatprep.subr.mxu0 0.0
    %1037 = vmatpush1.msra.mxu0 0.0
    %1038 = vmatprep.subr.mxu0 0.0
    %1039 = vmatpush1.msra.mxu0 0.0
    %1040 = vmatprep.subr.mxu0 0.0
    %1041 = vmatpush1.msra.mxu0 0.0
    %1042 = vmatprep.subr.mxu0 0.0
    %1043 = vmatpush1.msra.mxu0 0.0
    %1044 = vmatprep.subr.mxu0 0.0
    %1045 = vmatpush1.msra.mxu0 0.0
    %1046 = vmatprep.subr.mxu0 0.0
    %1047 = vmatpush1.msra.mxu0 0.0
    %1048 = vmatprep.subr.mxu0 0.0
    %1049 = vmatpush1.msra.mxu0 0.0
    %1050 = vmatprep.subr.mxu0 0.0
    %1051 = vmatpush1.msra.mxu0 0.0
    %1052 = vmatprep.subr.mxu0 0.0
    %1053 = vmatpush1.msra.mxu0 0.0
    %1054 = vmatprep.subr.mxu0 0.0
    %1055 = vmatpush1.msra.mxu0 0.0
    %1056 = vmatprep.subr.mxu0 0.0
    %1057 = vmatpush1.msra.mxu0 0.0
    %1058 = vmatprep.subr.mxu0 0.0
    %1059 = vmatpush1.msra.mxu0 0.0
    %1060 = vmatprep.subr.mxu0 0.0
    %1061 = vmatpush1.msra.mxu0 0.0
    %1062 = vmatprep.subr.mxu0 0.0
    %1063 = vmatpush1.msra.mxu0 0.0
    %1064 = vmatprep.subr.mxu0 0.0
    %1065 = vmatpush1.msra.mxu0 0.0
    %1066 = vmatprep.subr.mxu0 0.0
    %1067 = vmatpush1.msra.mxu0 0.0
    %1068 = vmatprep.mubr.f32.mxu0 0.0
    %1069 = vmatmul.mubr.f32.gmra.mrb[0].mxu0 %v331
    %v1070 = vpop.f32.mrb[0].mxu0
    %v1071 = vadd.f32 %v994, %v1070
    %v1072 = vpop.f32.mrb[0].mxu0
    %v1073 = vadd.f32 %v996, %v1072
    %1074 = vmatprep.mubr.f32.mxu0 0.0
    %1075 = vmatmul.mubr.f32.gmra.mrb[0].mxu0 %v334
    %v1076 = vpop.f32.mrb[0].mxu0
    %v1077 = vadd.f32 %v1000, %v1076
    %v1078 = vpop.f32.mrb[0].mxu0
    %v1079 = vadd.f32 %v1002, %v1078
    %1080 = vdwg.mxu0
    %1081 = vmatprep.subr.mxu0 0.0
    %1082 = vmatpush1.msra.mxu0 %v785
    %1083 = vmatprep.subr.mxu0 0.0
    %1084 = vmatpush1.msra.mxu0 %v788
    %1085 = vmatprep.subr.mxu0 0.0
    %1086 = vmatpush1.msra.mxu0 %v791
    %1087 = vmatprep.subr.mxu0 0.0
    %1088 = vmatpush1.msra.mxu0 %v794
    %1089 = vmatprep.subr.mxu0 0.0
    %1090 = vmatpush1.msra.mxu0 %v797
    %1091 = vmatprep.subr.mxu0 0.0
    %1092 = vmatpush1.msra.mxu0 %v800
    %1093 = vmatprep.subr.mxu0 0.0
    %1094 = vmatpush1.msra.mxu0 %v803
    %1095 = vmatprep.subr.mxu0 0.0
    %1096 = vmatpush1.msra.mxu0 %v806
    %1097 = vmatprep.subr.mxu0 0.0
    %1098 = vmatpush1.msra.mxu0 %v809
    %1099 = vmatprep.subr.mxu0 0.0
    %1100 = vmatpush1.msra.mxu0 %v812
    %1101 = vmatprep.subr.mxu0 0.0
    %1102 = vmatpush1.msra.mxu0 %v815
    %1103 = vmatprep.subr.mxu0 0.0
    %1104 = vmatpush1.msra.mxu0 %v818
    %1105 = vmatprep.subr.mxu0 0.0
    %1106 = vmatpush1.msra.mxu0 %v821
    %1107 = vmatprep.subr.mxu0 0.0
    %1108 = vmatpush1.msra.mxu0 %v824
    %1109 = vmatprep.subr.mxu0 0.0
    %1110 = vmatpush1.msra.mxu0 %v827
    %1111 = vmatprep.subr.mxu0 0.0
    %1112 = vmatpush1.msra.mxu0 %v830
    %1113 = vmatprep.subr.mxu0 0.0
    %1114 = vmatpush1.msra.mxu0 %v833
    %1115 = vmatprep.subr.mxu0 0.0
    %1116 = vmatpush1.msra.mxu0 %v836
    %1117 = vmatprep.subr.mxu0 0.0
    %1118 = vmatpush1.msra.mxu0 %v839
    %1119 = vmatprep.subr.mxu0 0.0
    %1120 = vmatpush1.msra.mxu0 %v842
    %1121 = vmatprep.subr.mxu0 0.0
    %1122 = vmatpush1.msra.mxu0 %v845
    %1123 = vmatprep.subr.mxu0 0.0
    %1124 = vmatpush1.msra.mxu0 %v848
    %1125 = vmatprep.subr.mxu0 0.0
    %1126 = vmatpush1.msra.mxu0 %v851
    %1127 = vmatprep.subr.mxu0 0.0
    %1128 = vmatpush1.msra.mxu0 %v854
    %1129 = vmatprep.subr.mxu0 0.0
    %1130 = vmatpush1.msra.mxu0 %v857
    %1131 = vmatprep.subr.mxu0 0.0
    %1132 = vmatpush1.msra.mxu0 %v860
    %1133 = vmatprep.subr.mxu0 0.0
    %1134 = vmatpush1.msra.mxu0 %v863
    %1135 = vmatprep.subr.mxu0 0.0
    %1136 = vmatpush1.msra.mxu0 %v866
    %1137 = vmatprep.subr.mxu0 0.0
    %1138 = vmatpush1.msra.mxu0 %v869
    %1139 = vmatprep.subr.mxu0 0.0
    %1140 = vmatpush1.msra.mxu0 %v872
    %1141 = vmatprep.subr.mxu0 0.0
    %1142 = vmatpush1.msra.mxu0 %v875
    %1143 = vmatprep.subr.mxu0 0.0
    %1144 = vmatpush1.msra.mxu0 %v878
    %1145 = vmatprep.mubr.f32.mxu0 %v330
    %1146 = vmatmul.mubr.f32.gmra.mrb[0].mxu0 %v329
    %v1147 = vpop.f32.mrb[0].mxu0
    %v1148 = vadd.f32 0.0, %v1147
    %v1149 = vpop.f32.mrb[0].mxu0
    %1150 = vmatprep.mubr.f32.mxu0 %v333
    %1151 = vmatmul.mubr.f32.gmra.mrb[0].mxu0 %v332
    %v1152 = vpop.f32.mrb[0].mxu0
    %v1153 = vadd.f32 0.0, %v1152
    %v1154 = vpop.f32.mrb[0].mxu0
    %1155 = vdwg.mxu0
    %1156 = vmatprep.subr.mxu0 0.0
    %1157 = vmatpush1.msra.mxu0 %v881
    %1158 = vmatprep.subr.mxu0 0.0
    %1159 = vmatpush1.msra.mxu0 %v884
    %1160 = vmatprep.subr.mxu0 0.0
    %1161 = vmatpush1.msra.mxu0 %v887
    %1162 = vmatprep.subr.mxu0 0.0
    %1163 = vmatpush1.msra.mxu0 %v890
    %1164 = vmatprep.subr.mxu0 0.0
    %1165 = vmatpush1.msra.mxu0 %v893
    %1166 = vmatprep.subr.mxu0 0.0
    %1167 = vmatpush1.msra.mxu0 %v896
    %1168 = vmatprep.subr.mxu0 0.0
    %1169 = vmatpush1.msra.mxu0 %v899
    %1170 = vmatprep.subr.mxu0 0.0
    %1171 = vmatpush1.msra.mxu0 %v902
    %1172 = vmatprep.subr.mxu0 0.0
    %1173 = vmatpush1.msra.mxu0 %v905
    %1174 = vmatprep.subr.mxu0 0.0
    %1175 = vmatpush1.msra.mxu0 %v908
    %1176 = vmatprep.subr.mxu0 0.0
    %1177 = vmatpush1.msra.mxu0 %v911
    %1178 = vmatprep.subr.mxu0 0.0
    %1179 = vmatpush1.msra.mxu0 %v914
    %1180 = vmatprep.subr.mxu0 0.0
    %1181 = vmatpush1.msra.mxu0 %v917
    %1182 = vmatprep.subr.mxu0 0.0
    %1183 = vmatpush1.msra.mxu0 %v920
    %1184 = vmatprep.subr.mxu0 0.0
    %1185 = vmatpush1.msra.mxu0 %v923
    %1186 = vmatprep.subr.mxu0 0.0
    %1187 = vmatpush1.msra.mxu0 %v926
    %1188 = vmatprep.subr.mxu0 0.0
    %1189 = vmatpush1.msra.mxu0 0.0
    %1190 = vmatprep.subr.mxu0 0.0
    %1191 = vmatpush1.msra.mxu0 0.0
    %1192 = vmatprep.subr.mxu0 0.0
    %1193 = vmatpush1.msra.mxu0 0.0
    %1194 = vmatprep.subr.mxu0 0.0
    %1195 = vmatpush1.msra.mxu0 0.0
    %1196 = vmatprep.subr.mxu0 0.0
    %1197 = vmatpush1.msra.mxu0 0.0
    %1198 = vmatprep.subr.mxu0 0.0
    %1199 = vmatpush1.msra.mxu0 0.0
    %1200 = vmatprep.subr.mxu0 0.0
    %1201 = vmatpush1.msra.mxu0 0.0
    %1202 = vmatprep.subr.mxu0 0.0
    %1203 = vmatpush1.msra.mxu0 0.0
    %1204 = vmatprep.subr.mxu0 0.0
    %1205 = vmatpush1.msra.mxu0 0.0
    %1206 = vmatprep.subr.mxu0 0.0
    %1207 = vmatpush1.msra.mxu0 0.0
    %1208 = vmatprep.subr.mxu0 0.0
    %1209 = vmatpush1.msra.mxu0 0.0
    %1210 = vmatprep.subr.mxu0 0.0
    %1211 = vmatpush1.msra.mxu0 0.0
    %1212 = vmatprep.subr.mxu0 0.0
    %1213 = vmatpush1.msra.mxu0 0.0
    %1214 = vmatprep.subr.mxu0 0.0
    %1215 = vmatpush1.msra.mxu0 0.0
    %1216 = vmatprep.subr.mxu0 0.0
    %1217 = vmatpush1.msra.mxu0 0.0
    %1218 = vmatprep.subr.mxu0 0.0
    %1219 = vmatpush1.msra.mxu0 0.0
    %1220 = vmatprep.mubr.f32.mxu0 0.0
    %1221 = vmatmul.mubr.f32.gmra.mrb[0].mxu0 %v331
    %v1222 = vpop.f32.mrb[0].mxu0
    %v1223 = vadd.f32 %v1148, %v1222
    %v1224 = vpop.f32.mrb[0].mxu0
    %1225 = vmatprep.mubr.f32.mxu0 0.0
    %1226 = vmatmul.mubr.f32.gmra.mrb[0].mxu0 %v334
    %v1227 = vpop.f32.mrb[0].mxu0
    %v1228 = vadd.f32 %v1153, %v1227
    %v1229 = vpop.f32.mrb[0].mxu0
    %1230 = vdwg.mxu0
    %v1231 = vld [vmem:[#allocation13] sm:$0xff]
    %v1232 = vld [vmem:[#allocation13 + $0x8] sm:$0xff]
    %v1233 = vld [vmem:[#allocation13 + $0x10] sm:$0xff]
    %v1234 = vld [vmem:[#allocation13 + $0x18] sm:$0xff]
    %v1235 = vld [vmem:[#allocation13 + $0x20] sm:$0xff]
    %v1236 = vld [vmem:[#allocation13 + $0x28] sm:$0xff]
    %v1237 = vld [vmem:[#allocation13 + $0x30] sm:$0xff]
    %v1238 = vld [vmem:[#allocation13 + $0x38] sm:$0xff]
    %v1239 = vld [vmem:[#allocation13 + $0x40] sm:$0xff]
    %v1240 = vld [vmem:[#allocation13 + $0x48] sm:$0xff]
    %v1241 = vld [vmem:[#allocation13 + $0x50] sm:$0xff]
    %v1242 = vld [vmem:[#allocation13 + $0x58] sm:$0xff]
    %v1243 = vld [vmem:[#allocation13 + $0x60] sm:$0xff]
    %v1244 = vld [vmem:[#allocation13 + $0x68] sm:$0xff]
    %v1245 = vld [vmem:[#allocation13 + $0x70] sm:$0xff]
    %v1246 = vld [vmem:[#allocation13 + $0x78] sm:$0xff]
    %v1247 = vld [vmem:[#allocation13 + $0x80] sm:$0xff]
    %v1248 = vld [vmem:[#allocation13 + $0x88] sm:$0xff]
    %v1249 = vld [vmem:[#allocation13 + $0x90] sm:$0xff]
    %v1250 = vld [vmem:[#allocation13 + $0x98] sm:$0xff]
    %v1251 = vld [vmem:[#allocation13 + $0xa0] sm:$0xff]
    %v1252 = vld [vmem:[#allocation13 + $0xa8] sm:$0xff]
    %v1253 = vld [vmem:[#allocation13 + $0xb0] sm:$0xff]
    %v1254 = vld [vmem:[#allocation13 + $0xb8] sm:$0xff]
    %v1255 = vld [vmem:[#allocation13 + $0xc0] sm:$0xff]
    %v1256 = vld [vmem:[#allocation13 + $0xc8] sm:$0xff]
    %v1257 = vld [vmem:[#allocation13 + $0xd0] sm:$0xff]
    %v1258 = vld [vmem:[#allocation13 + $0xd8] sm:$0xff]
    %v1259 = vld [vmem:[#allocation13 + $0xe0] sm:$0xff]
    %v1260 = vld [vmem:[#allocation13 + $0xe8] sm:$0xff]
    %v1261 = vld [vmem:[#allocation13 + $0xf0] sm:$0xff]
    %v1262 = vld [vmem:[#allocation13 + $0xf8] sm:$0xff]
    %v1263 = vld [vmem:[#allocation13 + $0x100] sm:$0xff]
    %v1264 = vld [vmem:[#allocation13 + $0x108] sm:$0xff]
    %v1265 = vld [vmem:[#allocation13 + $0x110] sm:$0xff]
    %v1266 = vld [vmem:[#allocation13 + $0x118] sm:$0xff]
    %v1267 = vld [vmem:[#allocation13 + $0x120] sm:$0xff]
    %v1268 = vld [vmem:[#allocation13 + $0x128] sm:$0xff]
    %v1269 = vld [vmem:[#allocation13 + $0x130] sm:$0xff]
    %v1270 = vld [vmem:[#allocation13 + $0x138] sm:$0xff]
    %v1271 = vld [vmem:[#allocation13 + $0x140] sm:$0xff]
    %v1272 = vld [vmem:[#allocation13 + $0x148] sm:$0xff]
    %v1273 = vld [vmem:[#allocation13 + $0x150] sm:$0xff]
    %v1274 = vld [vmem:[#allocation13 + $0x158] sm:$0xff]
    %v1275 = vld [vmem:[#allocation13 + $0x160] sm:$0xff]
    %v1276 = vld [vmem:[#allocation13 + $0x168] sm:$0xff]
    %v1277 = vld [vmem:[#allocation13 + $0x170] sm:$0xff]
    %v1278 = vld [vmem:[#allocation13 + $0x178] sm:$0xff]
    %v1279 = vld [vmem:[#allocation13 + $0x180] sm:$0xff]
    %v1280 = vld [vmem:[#allocation13 + $0x188] sm:$0xff]
    %v1281 = vld [vmem:[#allocation13 + $0x190] sm:$0xff]
    %v1282 = vld [vmem:[#allocation13 + $0x198] sm:$0xff]
    %v1283 = vld [vmem:[#allocation13 + $0x1a0] sm:$0xff]
    %v1284 = vld [vmem:[#allocation13 + $0x1a8] sm:$0xff]
    %v1285 = vld [vmem:[#allocation13 + $0x1b0] sm:$0xff]
    %v1286 = vld [vmem:[#allocation13 + $0x1b8] sm:$0xff]
    %v1287 = vld [vmem:[#allocation13 + $0x1c0] sm:$0xff]
    %v1288 = vld [vmem:[#allocation13 + $0x1c8] sm:$0xff]
    %v1289 = vld [vmem:[#allocation13 + $0x1d0] sm:$0xff]
    %v1290 = vld [vmem:[#allocation13 + $0x1d8] sm:$0xff]
    %v1291 = vld [vmem:[#allocation13 + $0x1e0] sm:$0xff]
    %v1292 = vld [vmem:[#allocation13 + $0x1e8] sm:$0xff]
    %v1293 = vld [vmem:[#allocation13 + $0x1f0] sm:$0xff]
    %v1294 = vld [vmem:[#allocation13 + $0x1f8] sm:$0xff]
    %v1295 = vld [vmem:[#allocation13 + $0x200] sm:$0xff]
    %v1296 = vld [vmem:[#allocation13 + $0x208] sm:$0xff]
    %v1297 = vld [vmem:[#allocation13 + $0x210] sm:$0xff]
    %v1298 = vld [vmem:[#allocation13 + $0x218] sm:$0xff]
    %v1299 = vld [vmem:[#allocation13 + $0x220] sm:$0xff]
    %v1300 = vld [vmem:[#allocation13 + $0x228] sm:$0xff]
    %v1301 = vld [vmem:[#allocation13 + $0x230] sm:$0xff]
    %v1302 = vld [vmem:[#allocation13 + $0x238] sm:$0xff]
    %v1303 = vld [vmem:[#allocation13 + $0x240] sm:$0xff]
    %v1304 = vld [vmem:[#allocation13 + $0x248] sm:$0xff]
    %v1305 = vld [vmem:[#allocation13 + $0x250] sm:$0xff]
    %v1306 = vld [vmem:[#allocation13 + $0x258] sm:$0xff]
    %v1307 = vld [vmem:[#allocation13 + $0x260] sm:$0xff]
    %v1308 = vld [vmem:[#allocation13 + $0x268] sm:$0xff]
    %v1309 = vld [vmem:[#allocation13 + $0x270] sm:$0xff]
    %v1310 = vld [vmem:[#allocation13 + $0x278] sm:$0xff]
    %v1311 = vld [vmem:[#allocation13 + $0x280] sm:$0xff]
    %v1312 = vld [vmem:[#allocation13 + $0x288] sm:$0xff]
    %v1313 = vld [vmem:[#allocation13 + $0x290] sm:$0xff]
    %v1314 = vld [vmem:[#allocation13 + $0x298] sm:$0xff]
    %v1315 = vld [vmem:[#allocation13 + $0x2a0] sm:$0xff]
    %v1316 = vld [vmem:[#allocation13 + $0x2a8] sm:$0xff]
    %v1317 = vld [vmem:[#allocation13 + $0x2b0] sm:$0xff]
    %v1318 = vld [vmem:[#allocation13 + $0x2b8] sm:$0xff]
    %v1319 = vld [vmem:[#allocation13 + $0x2c0] sm:$0xff]
    %v1320 = vld [vmem:[#allocation13 + $0x2c8] sm:$0xff]
    %v1321 = vld [vmem:[#allocation13 + $0x2d0] sm:$0xff]
    %v1322 = vld [vmem:[#allocation13 + $0x2d8] sm:$0xff]
    %v1323 = vld [vmem:[#allocation13 + $0x2e0] sm:$0xff]
    %v1324 = vld [vmem:[#allocation13 + $0x2e8] sm:$0xff]
    %v1325 = vld [vmem:[#allocation13 + $0x2f0] sm:$0xff]
    %v1326 = vld [vmem:[#allocation13 + $0x2f8] sm:$0xff]
    %v1327 = vld [vmem:[#allocation13 + $0x300] sm:$0xff]
    %v1328 = vld [vmem:[#allocation13 + $0x308] sm:$0xff]
    %v1329 = vld [vmem:[#allocation13 + $0x310] sm:$0xff]
    %v1330 = vld [vmem:[#allocation13 + $0x318] sm:$0xff]
    %v1331 = vld [vmem:[#allocation13 + $0x320] sm:$0xff]
    %v1332 = vld [vmem:[#allocation13 + $0x328] sm:$0xff]
    %v1333 = vld [vmem:[#allocation13 + $0x330] sm:$0xff]
    %v1334 = vld [vmem:[#allocation13 + $0x338] sm:$0xff]
    %v1335 = vld [vmem:[#allocation13 + $0x340] sm:$0xff]
    %v1336 = vld [vmem:[#allocation13 + $0x348] sm:$0xff]
    %v1337 = vld [vmem:[#allocation13 + $0x350] sm:$0xff]
    %v1338 = vld [vmem:[#allocation13 + $0x358] sm:$0xff]
    %v1339 = vld [vmem:[#allocation13 + $0x360] sm:$0xff]
    %v1340 = vld [vmem:[#allocation13 + $0x368] sm:$0xff]
    %v1341 = vld [vmem:[#allocation13 + $0x370] sm:$0xff]
    %v1342 = vld [vmem:[#allocation13 + $0x378] sm:$0xff]
    %v1343 = vld [vmem:[#allocation13 + $0x380] sm:$0xff]
    %v1344 = vld [vmem:[#allocation13 + $0x388] sm:$0xff]
    %v1345 = vld [vmem:[#allocation13 + $0x390] sm:$0xff]
    %v1346 = vld [vmem:[#allocation13 + $0x398] sm:$0xff]
    %v1347 = vld [vmem:[#allocation13 + $0x3a0] sm:$0xff]
    %v1348 = vld [vmem:[#allocation13 + $0x3a8] sm:$0xff]
    %v1349 = vld [vmem:[#allocation13 + $0x3b0] sm:$0xff]
    %v1350 = vld [vmem:[#allocation13 + $0x3b8] sm:$0xff]
    %v1351 = vld [vmem:[#allocation13 + $0x3c0] sm:$0xff]
    %v1352 = vld [vmem:[#allocation13 + $0x3c8] sm:$0xff]
    %v1353 = vld [vmem:[#allocation13 + $0x3d0] sm:$0xff]
    %v1354 = vld [vmem:[#allocation13 + $0x3d8] sm:$0xff]
    %v1355 = vld [vmem:[#allocation13 + $0x3e0] sm:$0xff]
    %v1356 = vld [vmem:[#allocation13 + $0x3e8] sm:$0xff]
    %v1357 = vld [vmem:[#allocation13 + $0x3f0] sm:$0xff]
    %v1358 = vld [vmem:[#allocation13 + $0x3f8] sm:$0xff]
    %v1359 = vld [vmem:[#allocation13 + $0x400] sm:$0xff]
    %v1360 = vld [vmem:[#allocation13 + $0x408] sm:$0xff]
    %v1361 = vld [vmem:[#allocation13 + $0x410] sm:$0xff]
    %v1362 = vld [vmem:[#allocation13 + $0x418] sm:$0xff]
    %v1363 = vld [vmem:[#allocation13 + $0x420] sm:$0xff]
    %v1364 = vld [vmem:[#allocation13 + $0x428] sm:$0xff]
    %v1365 = vld [vmem:[#allocation13 + $0x430] sm:$0xff]
    %v1366 = vld [vmem:[#allocation13 + $0x438] sm:$0xff]
    %v1367 = vld [vmem:[#allocation13 + $0x440] sm:$0xff]
    %v1368 = vld [vmem:[#allocation13 + $0x448] sm:$0xff]
    %v1369 = vld [vmem:[#allocation13 + $0x450] sm:$0xff]
    %v1370 = vld [vmem:[#allocation13 + $0x458] sm:$0xff]
    %v1371 = vld [vmem:[#allocation13 + $0x460] sm:$0xff]
    %v1372 = vld [vmem:[#allocation13 + $0x468] sm:$0xff]
    %v1373 = vld [vmem:[#allocation13 + $0x470] sm:$0xff]
    %v1374 = vld [vmem:[#allocation13 + $0x478] sm:$0xff]
    %1375 = vmatprep.subr.mxu0 %v1232
    %1376 = vmatpush1.msra.mxu0 %v1231
    %1377 = vmatprep.subr.mxu0 %v1235
    %1378 = vmatpush1.msra.mxu0 %v1234
    %1379 = vmatprep.subr.mxu0 %v1238
    %1380 = vmatpush1.msra.mxu0 %v1237
    %1381 = vmatprep.subr.mxu0 %v1241
    %1382 = vmatpush1.msra.mxu0 %v1240
    %1383 = vmatprep.subr.mxu0 %v1244
    %1384 = vmatpush1.msra.mxu0 %v1243
    %1385 = vmatprep.subr.mxu0 %v1247
    %1386 = vmatpush1.msra.mxu0 %v1246
    %1387 = vmatprep.subr.mxu0 %v1250
    %1388 = vmatpush1.msra.mxu0 %v1249
    %1389 = vmatprep.subr.mxu0 %v1253
    %1390 = vmatpush1.msra.mxu0 %v1252
    %1391 = vmatprep.subr.mxu0 %v1256
    %1392 = vmatpush1.msra.mxu0 %v1255
    %1393 = vmatprep.subr.mxu0 %v1259
    %1394 = vmatpush1.msra.mxu0 %v1258
    %1395 = vmatprep.subr.mxu0 %v1262
    %1396 = vmatpush1.msra.mxu0 %v1261
    %1397 = vmatprep.subr.mxu0 %v1265
    %1398 = vmatpush1.msra.mxu0 %v1264
    %1399 = vmatprep.subr.mxu0 %v1268
    %1400 = vmatpush1.msra.mxu0 %v1267
    %1401 = vmatprep.subr.mxu0 %v1271
    %1402 = vmatpush1.msra.mxu0 %v1270
    %1403 = vmatprep.subr.mxu0 %v1274
    %1404 = vmatpush1.msra.mxu0 %v1273
    %1405 = vmatprep.subr.mxu0 %v1277
    %1406 = vmatpush1.msra.mxu0 %v1276
    %1407 = vmatprep.subr.mxu0 %v1280
    %1408 = vmatpush1.msra.mxu0 %v1279
    %1409 = vmatprep.subr.mxu0 %v1283
    %1410 = vmatpush1.msra.mxu0 %v1282
    %1411 = vmatprep.subr.mxu0 %v1286
    %1412 = vmatpush1.msra.mxu0 %v1285
    %1413 = vmatprep.subr.mxu0 %v1289
    %1414 = vmatpush1.msra.mxu0 %v1288
    %1415 = vmatprep.subr.mxu0 %v1292
    %1416 = vmatpush1.msra.mxu0 %v1291
    %1417 = vmatprep.subr.mxu0 %v1295
    %1418 = vmatpush1.msra.mxu0 %v1294
    %1419 = vmatprep.subr.mxu0 %v1298
    %1420 = vmatpush1.msra.mxu0 %v1297
    %1421 = vmatprep.subr.mxu0 %v1301
    %1422 = vmatpush1.msra.mxu0 %v1300
    %1423 = vmatprep.subr.mxu0 %v1304
    %1424 = vmatpush1.msra.mxu0 %v1303
    %1425 = vmatprep.subr.mxu0 %v1307
    %1426 = vmatpush1.msra.mxu0 %v1306
    %1427 = vmatprep.subr.mxu0 %v1310
    %1428 = vmatpush1.msra.mxu0 %v1309
    %1429 = vmatprep.subr.mxu0 %v1313
    %1430 = vmatpush1.msra.mxu0 %v1312
    %1431 = vmatprep.subr.mxu0 %v1316
    %1432 = vmatpush1.msra.mxu0 %v1315
    %1433 = vmatprep.subr.mxu0 %v1319
    %1434 = vmatpush1.msra.mxu0 %v1318
    %1435 = vmatprep.subr.mxu0 %v1322
    %1436 = vmatpush1.msra.mxu0 %v1321
    %1437 = vmatprep.subr.mxu0 %v1325
    %1438 = vmatpush1.msra.mxu0 %v1324
    %1439 = vmatprep.mubr.f32.mxu0 %v330
    %1440 = vmatmul.mubr.f32.gmra.mrb[0].mxu0 %v329
    %v1441 = vpop.f32.mrb[0].mxu0
    %v1442 = vadd.f32 0.0, %v1441
    %v1443 = vpop.f32.mrb[0].mxu0
    %v1444 = vadd.f32 0.0, %v1443
    %1445 = vmatprep.mubr.f32.mxu0 %v333
    %1446 = vmatmul.mubr.f32.gmra.mrb[0].mxu0 %v332
    %v1447 = vpop.f32.mrb[0].mxu0
    %v1448 = vadd.f32 0.0, %v1447
    %v1449 = vpop.f32.mrb[0].mxu0
    %v1450 = vadd.f32 0.0, %v1449
    %1451 = vdwg.mxu0
    %1452 = vmatprep.subr.mxu0 %v1328
    %1453 = vmatpush1.msra.mxu0 %v1327
    %1454 = vmatprep.subr.mxu0 %v1331
    %1455 = vmatpush1.msra.mxu0 %v1330
    %1456 = vmatprep.subr.mxu0 %v1334
    %1457 = vmatpush1.msra.mxu0 %v1333
    %1458 = vmatprep.subr.mxu0 %v1337
    %1459 = vmatpush1.msra.mxu0 %v1336
    %1460 = vmatprep.subr.mxu0 %v1340
    %1461 = vmatpush1.msra.mxu0 %v1339
    %1462 = vmatprep.subr.mxu0 %v1343
    %1463 = vmatpush1.msra.mxu0 %v1342
    %1464 = vmatprep.subr.mxu0 %v1346
    %1465 = vmatpush1.msra.mxu0 %v1345
    %1466 = vmatprep.subr.mxu0 %v1349
    %1467 = vmatpush1.msra.mxu0 %v1348
    %1468 = vmatprep.subr.mxu0 %v1352
    %1469 = vmatpush1.msra.mxu0 %v1351
    %1470 = vmatprep.subr.mxu0 %v1355
    %1471 = vmatpush1.msra.mxu0 %v1354
    %1472 = vmatprep.subr.mxu0 %v1358
    %1473 = vmatpush1.msra.mxu0 %v1357
    %1474 = vmatprep.subr.mxu0 %v1361
    %1475 = vmatpush1.msra.mxu0 %v1360
    %1476 = vmatprep.subr.mxu0 %v1364
    %1477 = vmatpush1.msra.mxu0 %v1363
    %1478 = vmatprep.subr.mxu0 %v1367
    %1479 = vmatpush1.msra.mxu0 %v1366
    %1480 = vmatprep.subr.mxu0 %v1370
    %1481 = vmatpush1.msra.mxu0 %v1369
    %1482 = vmatprep.subr.mxu0 %v1373
    %1483 = vmatpush1.msra.mxu0 %v1372
    %1484 = vmatprep.subr.mxu0 0.0
    %1485 = vmatpush1.msra.mxu0 0.0
    %1486 = vmatprep.subr.mxu0 0.0
    %1487 = vmatpush1.msra.mxu0 0.0
    %1488 = vmatprep.subr.mxu0 0.0
    %1489 = vmatpush1.msra.mxu0 0.0
    %1490 = vmatprep.subr.mxu0 0.0
    %1491 = vmatpush1.msra.mxu0 0.0
    %1492 = vmatprep.subr.mxu0 0.0
    %1493 = vmatpush1.msra.mxu0 0.0
    %1494 = vmatprep.subr.mxu0 0.0
    %1495 = vmatpush1.msra.mxu0 0.0
    %1496 = vmatprep.subr.mxu0 0.0
    %1497 = vmatpush1.msra.mxu0 0.0
    %1498 = vmatprep.subr.mxu0 0.0
    %1499 = vmatpush1.msra.mxu0 0.0
    %1500 = vmatprep.subr.mxu0 0.0
    %1501 = vmatpush1.msra.mxu0 0.0
    %1502 = vmatprep.subr.mxu0 0.0
    %1503 = vmatpush1.msra.mxu0 0.0
    %1504 = vmatprep.subr.mxu0 0.0
    %1505 = vmatpush1.msra.mxu0 0.0
    %1506 = vmatprep.subr.mxu0 0.0
    %1507 = vmatpush1.msra.mxu0 0.0
    %1508 = vmatprep.subr.mxu0 0.0
    %1509 = vmatpush1.msra.mxu0 0.0
    %1510 = vmatprep.subr.mxu0 0.0
    %1511 = vmatpush1.msra.mxu0 0.0
    %1512 = vmatprep.subr.mxu0 0.0
    %1513 = vmatpush1.msra.mxu0 0.0
    %1514 = vmatprep.subr.mxu0 0.0
    %1515 = vmatpush1.msra.mxu0 0.0
    %1516 = vmatprep.mubr.f32.mxu0 0.0
    %1517 = vmatmul.mubr.f32.gmra.mrb[0].mxu0 %v331
    %v1518 = vpop.f32.mrb[0].mxu0
    %v1519 = vadd.f32 %v1442, %v1518
    %v1520 = vpop.f32.mrb[0].mxu0
    %v1521 = vadd.f32 %v1444, %v1520
    %1522 = vmatprep.mubr.f32.mxu0 0.0
    %1523 = vmatmul.mubr.f32.gmra.mrb[0].mxu0 %v334
    %v1524 = vpop.f32.mrb[0].mxu0
    %v1525 = vadd.f32 %v1448, %v1524
    %v1526 = vpop.f32.mrb[0].mxu0
    %v1527 = vadd.f32 %v1450, %v1526
    %1528 = vdwg.mxu0
    %1529 = vmatprep.subr.mxu0 0.0
    %1530 = vmatpush1.msra.mxu0 %v1233
    %1531 = vmatprep.subr.mxu0 0.0
    %1532 = vmatpush1.msra.mxu0 %v1236
    %1533 = vmatprep.subr.mxu0 0.0
    %1534 = vmatpush1.msra.mxu0 %v1239
    %1535 = vmatprep.subr.mxu0 0.0
    %1536 = vmatpush1.msra.mxu0 %v1242
    %1537 = vmatprep.subr.mxu0 0.0
    %1538 = vmatpush1.msra.mxu0 %v1245
    %1539 = vmatprep.subr.mxu0 0.0
    %1540 = vmatpush1.msra.mxu0 %v1248
    %1541 = vmatprep.subr.mxu0 0.0
    %1542 = vmatpush1.msra.mxu0 %v1251
    %1543 = vmatprep.subr.mxu0 0.0
    %1544 = vmatpush1.msra.mxu0 %v1254
    %1545 = vmatprep.subr.mxu0 0.0
    %1546 = vmatpush1.msra.mxu0 %v1257
    %1547 = vmatprep.subr.mxu0 0.0
    %1548 = vmatpush1.msra.mxu0 %v1260
    %1549 = vmatprep.subr.mxu0 0.0
    %1550 = vmatpush1.msra.mxu0 %v1263
    %1551 = vmatprep.subr.mxu0 0.0
    %1552 = vmatpush1.msra.mxu0 %v1266
    %1553 = vmatprep.subr.mxu0 0.0
    %1554 = vmatpush1.msra.mxu0 %v1269
    %1555 = vmatprep.subr.mxu0 0.0
    %1556 = vmatpush1.msra.mxu0 %v1272
    %1557 = vmatprep.subr.mxu0 0.0
    %1558 = vmatpush1.msra.mxu0 %v1275
    %1559 = vmatprep.subr.mxu0 0.0
    %1560 = vmatpush1.msra.mxu0 %v1278
    %1561 = vmatprep.subr.mxu0 0.0
    %1562 = vmatpush1.msra.mxu0 %v1281
    %1563 = vmatprep.subr.mxu0 0.0
    %1564 = vmatpush1.msra.mxu0 %v1284
    %1565 = vmatprep.subr.mxu0 0.0
    %1566 = vmatpush1.msra.mxu0 %v1287
    %1567 = vmatprep.subr.mxu0 0.0
    %1568 = vmatpush1.msra.mxu0 %v1290
    %1569 = vmatprep.subr.mxu0 0.0
    %1570 = vmatpush1.msra.mxu0 %v1293
    %1571 = vmatprep.subr.mxu0 0.0
    %1572 = vmatpush1.msra.mxu0 %v1296
    %1573 = vmatprep.subr.mxu0 0.0
    %1574 = vmatpush1.msra.mxu0 %v1299
    %1575 = vmatprep.subr.mxu0 0.0
    %1576 = vmatpush1.msra.mxu0 %v1302
    %1577 = vmatprep.subr.mxu0 0.0
    %1578 = vmatpush1.msra.mxu0 %v1305
    %1579 = vmatprep.subr.mxu0 0.0
    %1580 = vmatpush1.msra.mxu0 %v1308
    %1581 = vmatprep.subr.mxu0 0.0
    %1582 = vmatpush1.msra.mxu0 %v1311
    %1583 = vmatprep.subr.mxu0 0.0
    %1584 = vmatpush1.msra.mxu0 %v1314
    %1585 = vmatprep.subr.mxu0 0.0
    %1586 = vmatpush1.msra.mxu0 %v1317
    %1587 = vmatprep.subr.mxu0 0.0
    %1588 = vmatpush1.msra.mxu0 %v1320
    %1589 = vmatprep.subr.mxu0 0.0
    %1590 = vmatpush1.msra.mxu0 %v1323
    %1591 = vmatprep.subr.mxu0 0.0
    %1592 = vmatpush1.msra.mxu0 %v1326
    %1593 = vmatprep.mubr.f32.mxu0 %v330
    %1594 = vmatmul.mubr.f32.gmra.mrb[0].mxu0 %v329
    %v1595 = vpop.f32.mrb[0].mxu0
    %v1596 = vadd.f32 0.0, %v1595
    %v1597 = vpop.f32.mrb[0].mxu0
    %1598 = vmatprep.mubr.f32.mxu0 %v333
    %1599 = vmatmul.mubr.f32.gmra.mrb[0].mxu0 %v332
    %v1600 = vpop.f32.mrb[0].mxu0
    %v1601 = vadd.f32 0.0, %v1600
    %v1602 = vpop.f32.mrb[0].mxu0
    %1603 = vdwg.mxu0
    %1604 = vmatprep.subr.mxu0 0.0
    %1605 = vmatpush1.msra.mxu0 %v1329
    %1606 = vmatprep.subr.mxu0 0.0
    %1607 = vmatpush1.msra.mxu0 %v1332
    %1608 = vmatprep.subr.mxu0 0.0
    %1609 = vmatpush1.msra.mxu0 %v1335
    %1610 = vmatprep.subr.mxu0 0.0
    %1611 = vmatpush1.msra.mxu0 %v1338
    %1612 = vmatprep.subr.mxu0 0.0
    %1613 = vmatpush1.msra.mxu0 %v1341
    %1614 = vmatprep.subr.mxu0 0.0
    %1615 = vmatpush1.msra.mxu0 %v1344
    %1616 = vmatprep.subr.mxu0 0.0
    %1617 = vmatpush1.msra.mxu0 %v1347
    %1618 = vmatprep.subr.mxu0 0.0
    %1619 = vmatpush1.msra.mxu0 %v1350
    %1620 = vmatprep.subr.mxu0 0.0
    %1621 = vmatpush1.msra.mxu0 %v1353
    %1622 = vmatprep.subr.mxu0 0.0
    %1623 = vmatpush1.msra.mxu0 %v1356
    %1624 = vmatprep.subr.mxu0 0.0
    %1625 = vmatpush1.msra.mxu0 %v1359
    %1626 = vmatprep.subr.mxu0 0.0
    %1627 = vmatpush1.msra.mxu0 %v1362
    %1628 = vmatprep.subr.mxu0 0.0
    %1629 = vmatpush1.msra.mxu0 %v1365
    %1630 = vmatprep.subr.mxu0 0.0
    %1631 = vmatpush1.msra.mxu0 %v1368
    %1632 = vmatprep.subr.mxu0 0.0
    %1633 = vmatpush1.msra.mxu0 %v1371
    %1634 = vmatprep.subr.mxu0 0.0
    %1635 = vmatpush1.msra.mxu0 %v1374
    %1636 = vmatprep.subr.mxu0 0.0
    %1637 = vmatpush1.msra.mxu0 0.0
    %1638 = vmatprep.subr.mxu0 0.0
    %1639 = vmatpush1.msra.mxu0 0.0
    %1640 = vmatprep.subr.mxu0 0.0
    %1641 = vmatpush1.msra.mxu0 0.0
    %1642 = vmatprep.subr.mxu0 0.0
    %1643 = vmatpush1.msra.mxu0 0.0
    %1644 = vmatprep.subr.mxu0 0.0
    %1645 = vmatpush1.msra.mxu0 0.0
    %1646 = vmatprep.subr.mxu0 0.0
    %1647 = vmatpush1.msra.mxu0 0.0
    %1648 = vmatprep.subr.mxu0 0.0
    %1649 = vmatpush1.msra.mxu0 0.0
    %1650 = vmatprep.subr.mxu0 0.0
    %1651 = vmatpush1.msra.mxu0 0.0
    %1652 = vmatprep.subr.mxu0 0.0
    %1653 = vmatpush1.msra.mxu0 0.0
    %1654 = vmatprep.subr.mxu0 0.0
    %1655 = vmatpush1.msra.mxu0 0.0
    %1656 = vmatprep.subr.mxu0 0.0
    %1657 = vmatpush1.msra.mxu0 0.0
    %1658 = vmatprep.subr.mxu0 0.0
    %1659 = vmatpush1.msra.mxu0 0.0
    %1660 = vmatprep.subr.mxu0 0.0
    %1661 = vmatpush1.msra.mxu0 0.0
    %1662 = vmatprep.subr.mxu0 0.0
    %1663 = vmatpush1.msra.mxu0 0.0
    %1664 = vmatprep.subr.mxu0 0.0
    %1665 = vmatpush1.msra.mxu0 0.0
    %1666 = vmatprep.subr.mxu0 0.0
    %1667 = vmatpush1.msra.mxu0 0.0
    %1668 = vmatprep.mubr.f32.mxu0 0.0
    %1669 = vmatmul.mubr.f32.gmra.mrb[0].mxu0 %v331
    %v1670 = vpop.f32.mrb[0].mxu0
    %v1671 = vadd.f32 %v1596, %v1670
    %v1672 = vpop.f32.mrb[0].mxu0
    %1673 = vmatprep.mubr.f32.mxu0 0.0
    %1674 = vmatmul.mubr.f32.gmra.mrb[0].mxu0 %v334
    %v1675 = vpop.f32.mrb[0].mxu0
    %v1676 = vadd.f32 %v1601, %v1675
    %v1677 = vpop.f32.mrb[0].mxu0
    %1678 = vdwg.mxu0
    %v1679 = vld [vmem:[#allocation5] sm:$0x1]
    %v1680 = vld [vmem:[#allocation5 + $0x1] sm:$0x1]
    %vm1681 = vcmp.gt.f32.partialorder %v1679, 0.5
    %vm1682 = vcmp.gt.f32.partialorder %v1680, 0.5
    %vm1683 = vcmask 523264
    %v1685 = vsel %vm1683, %v623, 0
    %v1688 = vsel %vm1683, %v1071, 0
    %1690 = vmatprep.subr.mxu0 0.0
    %1691 = vmatpush1.xpose.msra.mxu0 %v1688
    %1692 = vmatprep.subr.mxu0 0.0
    %1693 = vmatpush1.xpose.msra.mxu0 0.0
    %1694 = vmatprep.subr.mxu0 0.0
    %1695 = vmatpush1.xpose.msra.mxu0 0.0
    %1696 = vmatprep.subr.mxu0 0.0
    %1697 = vmatpush1.xpose.msra.mxu0 0.0
    %1698 = vmatprep.subr.mxu0 0.0
    %1699 = vmatpush1.xpose.msra.mxu0 0.0
    %1700 = vmatprep.subr.mxu0 0.0
    %1701 = vmatpush1.xpose.msra.mxu0 0.0
    %1702 = vmatprep.subr.mxu0 0.0
    %1703 = vmatpush1.xpose.msra.mxu0 0.0
    %1704 = vmatprep.subr.mxu0 0.0
    %1705 = vmatpush1.xpose.msra.mxu0 0.0
    %1706 = vmatprep.subr.mxu0 0.0
    %1707 = vmatpush1.xpose.msra.mxu0 0.0
    %1708 = vmatprep.subr.mxu0 0.0
    %1709 = vmatpush1.xpose.msra.mxu0 0.0
    %1710 = vmatprep.subr.mxu0 0.0
    %1711 = vmatpush1.xpose.msra.mxu0 0.0
    %1712 = vmatprep.subr.mxu0 0.0
    %1713 = vmatpush1.xpose.msra.mxu0 0.0
    %1714 = vmatprep.subr.mxu0 0.0
    %1715 = vmatpush1.xpose.msra.mxu0 0.0
    %1716 = vmatprep.subr.mxu0 0.0
    %1717 = vmatpush1.xpose.msra.mxu0 0.0
    %1718 = vmatprep.subr.mxu0 0.0
    %1719 = vmatpush1.xpose.msra.mxu0 0.0
    %1720 = vmatprep.subr.mxu0 0.0
    %1721 = vmatpush1.xpose.msra.mxu0 0.0
    %1722 = vmatprep.subr.mxu0 0.0
    %1723 = vmatpush1.xpose.msra.mxu0 0.0
    %1724 = vmatprep.subr.mxu0 0.0
    %1725 = vmatpush1.xpose.msra.mxu0 0.0
    %1726 = vmatprep.subr.mxu0 0.0
    %1727 = vmatpush1.xpose.msra.mxu0 0.0
    %1728 = vmatprep.subr.mxu0 0.0
    %1729 = vmatpush1.xpose.msra.mxu0 0.0
    %1730 = vmatprep.subr.mxu0 0.0
    %1731 = vmatpush1.xpose.msra.mxu0 0.0
    %1732 = vmatprep.subr.mxu0 0.0
    %1733 = vmatpush1.xpose.msra.mxu0 0.0
    %1734 = vmatprep.subr.mxu0 0.0
    %1735 = vmatpush1.xpose.msra.mxu0 0.0
    %1736 = vmatprep.subr.mxu0 0.0
    %1737 = vmatpush1.xpose.msra.mxu0 0.0
    %1738 = vmatprep.subr.mxu0 0.0
    %1739 = vmatpush1.xpose.msra.mxu0 0.0
    %1740 = vmatprep.subr.mxu0 0.0
    %1741 = vmatpush1.xpose.msra.mxu0 0.0
    %1742 = vmatprep.subr.mxu0 0.0
    %1743 = vmatpush1.xpose.msra.mxu0 0.0
    %1744 = vmatprep.subr.mxu0 0.0
    %1745 = vmatpush1.xpose.msra.mxu0 0.0
    %1746 = vmatprep.subr.mxu0 0.0
    %1747 = vmatpush1.xpose.msra.mxu0 0.0
    %1748 = vmatprep.subr.mxu0 0.0
    %1749 = vmatpush1.xpose.msra.mxu0 0.0
    %1750 = vmatprep.subr.mxu0 0.0
    %1751 = vmatpush1.xpose.msra.mxu0 0.0
    %1752 = vmatprep.subr.mxu0 0.0
    %1753 = vmatpush1.xpose.msra.mxu0 0.0
    %1754 = vmatprep.mubr.f32.mxu0 0.0
    %1755 = vmatmul.mubr.f32.gmra.mrb[0].mxu0 %v1685
    %v1756 = vpop.f32.mrb[0].mxu0
    %v1757 = vadd.f32 0.0, %v1756
    %v1758 = vpop.f32.mrb[0].mxu0
    %1759 = vdwg.mxu0
    %v1761 = vsel %vm1683, %v629, 0
    %v1764 = vsel %vm1683, %v1077, 0
    %1766 = vmatprep.subr.mxu0 0.0
    %1767 = vmatpush1.xpose.msra.mxu0 %v1764
    %1768 = vmatprep.subr.mxu0 0.0
    %1769 = vmatpush1.xpose.msra.mxu0 0.0
    %1770 = vmatprep.subr.mxu0 0.0
    %1771 = vmatpush1.xpose.msra.mxu0 0.0
    %1772 = vmatprep.subr.mxu0 0.0
    %1773 = vmatpush1.xpose.msra.mxu0 0.0
    %1774 = vmatprep.subr.mxu0 0.0
    %1775 = vmatpush1.xpose.msra.mxu0 0.0
    %1776 = vmatprep.subr.mxu0 0.0
    %1777 = vmatpush1.xpose.msra.mxu0 0.0
    %1778 = vmatprep.subr.mxu0 0.0
    %1779 = vmatpush1.xpose.msra.mxu0 0.0
    %1780 = vmatprep.subr.mxu0 0.0
    %1781 = vmatpush1.xpose.msra.mxu0 0.0
    %1782 = vmatprep.subr.mxu0 0.0
    %1783 = vmatpush1.xpose.msra.mxu0 0.0
    %1784 = vmatprep.subr.mxu0 0.0
    %1785 = vmatpush1.xpose.msra.mxu0 0.0
    %1786 = vmatprep.subr.mxu0 0.0
    %1787 = vmatpush1.xpose.msra.mxu0 0.0
    %1788 = vmatprep.subr.mxu0 0.0
    %1789 = vmatpush1.xpose.msra.mxu0 0.0
    %1790 = vmatprep.subr.mxu0 0.0
    %1791 = vmatpush1.xpose.msra.mxu0 0.0
    %1792 = vmatprep.subr.mxu0 0.0
    %1793 = vmatpush1.xpose.msra.mxu0 0.0
    %1794 = vmatprep.subr.mxu0 0.0
    %1795 = vmatpush1.xpose.msra.mxu0 0.0
    %1796 = vmatprep.subr.mxu0 0.0
    %1797 = vmatpush1.xpose.msra.mxu0 0.0
    %1798 = vmatprep.subr.mxu0 0.0
    %1799 = vmatpush1.xpose.msra.mxu0 0.0
    %1800 = vmatprep.subr.mxu0 0.0
    %1801 = vmatpush1.xpose.msra.mxu0 0.0
    %1802 = vmatprep.subr.mxu0 0.0
    %1803 = vmatpush1.xpose.msra.mxu0 0.0
    %1804 = vmatprep.subr.mxu0 0.0
    %1805 = vmatpush1.xpose.msra.mxu0 0.0
    %1806 = vmatprep.subr.mxu0 0.0
    %1807 = vmatpush1.xpose.msra.mxu0 0.0
    %1808 = vmatprep.subr.mxu0 0.0
    %1809 = vmatpush1.xpose.msra.mxu0 0.0
    %1810 = vmatprep.subr.mxu0 0.0
    %1811 = vmatpush1.xpose.msra.mxu0 0.0
    %1812 = vmatprep.subr.mxu0 0.0
    %1813 = vmatpush1.xpose.msra.mxu0 0.0
    %1814 = vmatprep.subr.mxu0 0.0
    %1815 = vmatpush1.xpose.msra.mxu0 0.0
    %1816 = vmatprep.subr.mxu0 0.0
    %1817 = vmatpush1.xpose.msra.mxu0 0.0
    %1818 = vmatprep.subr.mxu0 0.0
    %1819 = vmatpush1.xpose.msra.mxu0 0.0
    %1820 = vmatprep.subr.mxu0 0.0
    %1821 = vmatpush1.xpose.msra.mxu0 0.0
    %1822 = vmatprep.subr.mxu0 0.0
    %1823 = vmatpush1.xpose.msra.mxu0 0.0
    %1824 = vmatprep.subr.mxu0 0.0
    %1825 = vmatpush1.xpose.msra.mxu0 0.0
    %1826 = vmatprep.subr.mxu0 0.0
    %1827 = vmatpush1.xpose.msra.mxu0 0.0
    %1828 = vmatprep.subr.mxu0 0.0
    %1829 = vmatpush1.xpose.msra.mxu0 0.0
    %1830 = vmatprep.mubr.f32.mxu0 0.0
    %1831 = vmatmul.mubr.f32.gmra.mrb[0].mxu0 %v1761
    %v1832 = vpop.f32.mrb[0].mxu0
    %v1833 = vadd.f32 0.0, %v1832
    %v1834 = vpop.f32.mrb[0].mxu0
    %1835 = vdwg.mxu0
    %v1836 = vmul.f32 %v1757, 0.125
    %v1837 = vmul.f32 %v1833, 0.125
    %v1838 = vsel %vm1681, 1, 0
    %v1839 = vsel %vm1682, 1, 0
    %v1840 = vlaneseq
    %v1841 = vshrl.u32 %v1840, 7
    %v1842 = vsub.s32 0, %v1841
    %v1843 = vrot.slane %v1838, %v1842
    %v1844 = vlaneseq
    %v1845 = vshrl.u32 %v1844, 7
    %v1846 = vsub.s32 0, %v1845
    %v1847 = vrot.slane %v1839, %v1846
    %vm1848 = vcmp.eq.s32.totalorder %v1843, 1
    %vm1849 = vcmp.eq.s32.totalorder %v1847, 1
    %v1850 = vsel %vm1848, %v1836, -1e+30
    %v1851 = vsel %vm1849, %v1837, -1e+30
    %vm1852 = vcmask 64512
    %v1853 = vsel %vm1852, %v1850, -inf
    %1854 = vmax.xlane.f32.xlu0 %v1853
    %v1855 = vpop.xlane.xlu0 %1854
    %v1856 = vsel %vm1852, %v1851, -inf
    %1857 = vmax.xlane.f32.xlu0 %v1856
    %v1858 = vpop.xlane.xlu0 %1857
    %v1859 = vsub.f32 %v1850, %v1855
    %v1860 = vsub.f32 %v1851, %v1858
    %v1861 = vmul.f32 %v1859, 1.442695
    %v1862 = vpow.pop %v1861
    %v1863 = vmul.f32 %v1860, 1.442695
    %v1864 = vpow.pop %v1863
    %v1865 = vsel %vm1852, %v1862, 0.0
    %1866 = vadd.xlane.f32.xlu0 %v1865
    %v1867 = vpop.xlane.xlu0 %1866
    %v1868 = vsel %vm1852, %v1864, 0.0
    %1869 = vadd.xlane.f32.xlu0 %v1868
    %v1870 = vpop.xlane.xlu0 %1869
    %v1871 = vrcp.pop %v1867
    %v1872 = vrcp.pop %v1870
    %v1873 = vmul.f32 %v1862, %v1871
    %v1874 = vmul.f32 %v1864, %v1872
    %v1876 = vsel %vm1852, %v1873, 0
    %1878 = vmatprep.subr.mxu0 0.0
    %1879 = vmatpush1.msra.mxu0 %v1519
    %1880 = vmatprep.subr.mxu0 0.0
    %1881 = vmatpush1.msra.mxu0 0.0
    %1882 = vmatprep.subr.mxu0 0.0
    %1883 = vmatpush1.msra.mxu0 0.0
    %1884 = vmatprep.subr.mxu0 0.0
    %1885 = vmatpush1.msra.mxu0 0.0
    %1886 = vmatprep.subr.mxu0 0.0
    %1887 = vmatpush1.msra.mxu0 0.0
    %1888 = vmatprep.subr.mxu0 0.0
    %1889 = vmatpush1.msra.mxu0 0.0
    %1890 = vmatprep.subr.mxu0 0.0
    %1891 = vmatpush1.msra.mxu0 0.0
    %1892 = vmatprep.subr.mxu0 0.0
    %1893 = vmatpush1.msra.mxu0 0.0
    %1894 = vmatprep.subr.mxu0 0.0
    %1895 = vmatpush1.msra.mxu0 0.0
    %1896 = vmatprep.subr.mxu0 0.0
    %1897 = vmatpush1.msra.mxu0 0.0
    %1898 = vmatprep.subr.mxu0 0.0
    %1899 = vmatpush1.msra.mxu0 0.0
    %1900 = vmatprep.subr.mxu0 0.0
    %1901 = vmatpush1.msra.mxu0 0.0
    %1902 = vmatprep.subr.mxu0 0.0
    %1903 = vmatpush1.msra.mxu0 0.0
    %1904 = vmatprep.subr.mxu0 0.0
    %1905 = vmatpush1.msra.mxu0 0.0
    %1906 = vmatprep.subr.mxu0 0.0
    %1907 = vmatpush1.msra.mxu0 0.0
    %1908 = vmatprep.subr.mxu0 0.0
    %1909 = vmatpush1.msra.mxu0 0.0
    %1910 = vmatprep.subr.mxu0 0.0
    %1911 = vmatpush1.msra.mxu0 0.0
    %1912 = vmatprep.subr.mxu0 0.0
    %1913 = vmatpush1.msra.mxu0 0.0
    %1914 = vmatprep.subr.mxu0 0.0
    %1915 = vmatpush1.msra.mxu0 0.0
    %1916 = vmatprep.subr.mxu0 0.0
    %1917 = vmatpush1.msra.mxu0 0.0
    %1918 = vmatprep.subr.mxu0 0.0
    %1919 = vmatpush1.msra.mxu0 0.0
    %1920 = vmatprep.subr.mxu0 0.0
    %1921 = vmatpush1.msra.mxu0 0.0
    %1922 = vmatprep.subr.mxu0 0.0
    %1923 = vmatpush1.msra.mxu0 0.0
    %1924 = vmatprep.subr.mxu0 0.0
    %1925 = vmatpush1.msra.mxu0 0.0
    %1926 = vmatprep.subr.mxu0 0.0
    %1927 = vmatpush1.msra.mxu0 0.0
    %1928 = vmatprep.subr.mxu0 0.0
    %1929 = vmatpush1.msra.mxu0 0.0
    %1930 = vmatprep.subr.mxu0 0.0
    %1931 = vmatpush1.msra.mxu0 0.0
    %1932 = vmatprep.subr.mxu0 0.0
    %1933 = vmatpush1.msra.mxu0 0.0
    %1934 = vmatprep.subr.mxu0 0.0
    %1935 = vmatpush1.msra.mxu0 0.0
    %1936 = vmatprep.subr.mxu0 0.0
    %1937 = vmatpush1.msra.mxu0 0.0
    %1938 = vmatprep.subr.mxu0 0.0
    %1939 = vmatpush1.msra.mxu0 0.0
    %1940 = vmatprep.subr.mxu0 0.0
    %1941 = vmatpush1.msra.mxu0 0.0
    %1942 = vmatprep.mubr.f32.mxu0 0.0
    %1943 = vmatmul.mubr.f32.gmra.mrb[0].mxu0 %v1876
    %v1944 = vpop.f32.mrb[0].mxu0
    %v1945 = vadd.f32 0.0, %v1944
    %v1946 = vpop.f32.mrb[0].mxu0
    %1947 = vdwg.mxu0
    %v1949 = vsel %vm1852, %v1874, 0
    %1951 = vmatprep.subr.mxu0 0.0
    %1952 = vmatpush1.msra.mxu0 %v1525
    %1953 = vmatprep.subr.mxu0 0.0
    %1954 = vmatpush1.msra.mxu0 0.0
    %1955 = vmatprep.subr.mxu0 0.0
    %1956 = vmatpush1.msra.mxu0 0.0
    %1957 = vmatprep.subr.mxu0 0.0
    %1958 = vmatpush1.msra.mxu0 0.0
    %1959 = vmatprep.subr.mxu0 0.0
    %1960 = vmatpush1.msra.mxu0 0.0
    %1961 = vmatprep.subr.mxu0 0.0
    %1962 = vmatpush1.msra.mxu0 0.0
    %1963 = vmatprep.subr.mxu0 0.0
    %1964 = vmatpush1.msra.mxu0 0.0
    %1965 = vmatprep.subr.mxu0 0.0
    %1966 = vmatpush1.msra.mxu0 0.0
    %1967 = vmatprep.subr.mxu0 0.0
    %1968 = vmatpush1.msra.mxu0 0.0
    %1969 = vmatprep.subr.mxu0 0.0
    %1970 = vmatpush1.msra.mxu0 0.0
    %1971 = vmatprep.subr.mxu0 0.0
    %1972 = vmatpush1.msra.mxu0 0.0
    %1973 = vmatprep.subr.mxu0 0.0
    %1974 = vmatpush1.msra.mxu0 0.0
    %1975 = vmatprep.subr.mxu0 0.0
    %1976 = vmatpush1.msra.mxu0 0.0
    %1977 = vmatprep.subr.mxu0 0.0
    %1978 = vmatpush1.msra.mxu0 0.0
    %1979 = vmatprep.subr.mxu0 0.0
    %1980 = vmatpush1.msra.mxu0 0.0
    %1981 = vmatprep.subr.mxu0 0.0
    %1982 = vmatpush1.msra.mxu0 0.0
    %1983 = vmatprep.subr.mxu0 0.0
    %1984 = vmatpush1.msra.mxu0 0.0
    %1985 = vmatprep.subr.mxu0 0.0
    %1986 = vmatpush1.msra.mxu0 0.0
    %1987 = vmatprep.subr.mxu0 0.0
    %1988 = vmatpush1.msra.mxu0 0.0
    %1989 = vmatprep.subr.mxu0 0.0
    %1990 = vmatpush1.msra.mxu0 0.0
    %1991 = vmatprep.subr.mxu0 0.0
    %1992 = vmatpush1.msra.mxu0 0.0
    %1993 = vmatprep.subr.mxu0 0.0
    %1994 = vmatpush1.msra.mxu0 0.0
    %1995 = vmatprep.subr.mxu0 0.0
    %1996 = vmatpush1.msra.mxu0 0.0
    %1997 = vmatprep.subr.mxu0 0.0
    %1998 = vmatpush1.msra.mxu0 0.0
    %1999 = vmatprep.subr.mxu0 0.0
    %2000 = vmatpush1.msra.mxu0 0.0
    %2001 = vmatprep.subr.mxu0 0.0
    %2002 = vmatpush1.msra.mxu0 0.0
    %2003 = vmatprep.subr.mxu0 0.0
    %2004 = vmatpush1.msra.mxu0 0.0
    %2005 = vmatprep.subr.mxu0 0.0
    %2006 = vmatpush1.msra.mxu0 0.0
    %2007 = vmatprep.subr.mxu0 0.0
    %2008 = vmatpush1.msra.mxu0 0.0
    %2009 = vmatprep.subr.mxu0 0.0
    %2010 = vmatpush1.msra.mxu0 0.0
    %2011 = vmatprep.subr.mxu0 0.0
    %2012 = vmatpush1.msra.mxu0 0.0
    %2013 = vmatprep.subr.mxu0 0.0
    %2014 = vmatpush1.msra.mxu0 0.0
    %2015 = vmatprep.mubr.f32.mxu0 0.0
    %2016 = vmatmul.mubr.f32.gmra.mrb[0].mxu0 %v1949
    %v2017 = vpop.f32.mrb[0].mxu0
    %v2018 = vadd.f32 0.0, %v2017
    %v2019 = vpop.f32.mrb[0].mxu0
    %2020 = vdwg.mxu0
    %2021 = vrot.lane.b32.xlu0 %v623, 64
    %v2022 = vpop.permute.xlu0 %2021
    %2023 = vrot.lane.b32.xlu0 %v1071, 64
    %v2024 = vpop.permute.xlu0 %2023
    %v2025 = vsel %vm1683, %v2022, 0
    %v2027 = vsel %vm1683, %v2024, 0
    %2029 = vmatprep.subr.mxu0 0.0
    %2030 = vmatpush1.xpose.msra.mxu0 %v2027
    %2031 = vmatprep.subr.mxu0 0.0
    %2032 = vmatpush1.xpose.msra.mxu0 0.0
    %2033 = vmatprep.subr.mxu0 0.0
    %2034 = vmatpush1.xpose.msra.mxu0 0.0
    %2035 = vmatprep.subr.mxu0 0.0
    %2036 = vmatpush1.xpose.msra.mxu0 0.0
    %2037 = vmatprep.subr.mxu0 0.0
    %2038 = vmatpush1.xpose.msra.mxu0 0.0
    %2039 = vmatprep.subr.mxu0 0.0
    %2040 = vmatpush1.xpose.msra.mxu0 0.0
    %2041 = vmatprep.subr.mxu0 0.0
    %2042 = vmatpush1.xpose.msra.mxu0 0.0
    %2043 = vmatprep.subr.mxu0 0.0
    %2044 = vmatpush1.xpose.msra.mxu0 0.0
    %2045 = vmatprep.subr.mxu0 0.0
    %2046 = vmatpush1.xpose.msra.mxu0 0.0
    %2047 = vmatprep.subr.mxu0 0.0
    %2048 = vmatpush1.xpose.msra.mxu0 0.0
    %2049 = vmatprep.subr.mxu0 0.0
    %2050 = vmatpush1.xpose.msra.mxu0 0.0
    %2051 = vmatprep.subr.mxu0 0.0
    %2052 = vmatpush1.xpose.msra.mxu0 0.0
    %2053 = vmatprep.subr.mxu0 0.0
    %2054 = vmatpush1.xpose.msra.mxu0 0.0
    %2055 = vmatprep.subr.mxu0 0.0
    %2056 = vmatpush1.xpose.msra.mxu0 0.0
    %2057 = vmatprep.subr.mxu0 0.0
    %2058 = vmatpush1.xpose.msra.mxu0 0.0
    %2059 = vmatprep.subr.mxu0 0.0
    %2060 = vmatpush1.xpose.msra.mxu0 0.0
    %2061 = vmatprep.subr.mxu0 0.0
    %2062 = vmatpush1.xpose.msra.mxu0 0.0
    %2063 = vmatprep.subr.mxu0 0.0
    %2064 = vmatpush1.xpose.msra.mxu0 0.0
    %2065 = vmatprep.subr.mxu0 0.0
    %2066 = vmatpush1.xpose.msra.mxu0 0.0
    %2067 = vmatprep.subr.mxu0 0.0
    %2068 = vmatpush1.xpose.msra.mxu0 0.0
    %2069 = vmatprep.subr.mxu0 0.0
    %2070 = vmatpush1.xpose.msra.mxu0 0.0
    %2071 = vmatprep.subr.mxu0 0.0
    %2072 = vmatpush1.xpose.msra.mxu0 0.0
    %2073 = vmatprep.subr.mxu0 0.0
    %2074 = vmatpush1.xpose.msra.mxu0 0.0
    %2075 = vmatprep.subr.mxu0 0.0
    %2076 = vmatpush1.xpose.msra.mxu0 0.0
    %2077 = vmatprep.subr.mxu0 0.0
    %2078 = vmatpush1.xpose.msra.mxu0 0.0
    %2079 = vmatprep.subr.mxu0 0.0
    %2080 = vmatpush1.xpose.msra.mxu0 0.0
    %2081 = vmatprep.subr.mxu0 0.0
    %2082 = vmatpush1.xpose.msra.mxu0 0.0
    %2083 = vmatprep.subr.mxu0 0.0
    %2084 = vmatpush1.xpose.msra.mxu0 0.0
    %2085 = vmatprep.subr.mxu0 0.0
    %2086 = vmatpush1.xpose.msra.mxu0 0.0
    %2087 = vmatprep.subr.mxu0 0.0
    %2088 = vmatpush1.xpose.msra.mxu0 0.0
    %2089 = vmatprep.subr.mxu0 0.0
    %2090 = vmatpush1.xpose.msra.mxu0 0.0
    %2091 = vmatprep.subr.mxu0 0.0
    %2092 = vmatpush1.xpose.msra.mxu0 0.0
    %2093 = vmatprep.mubr.f32.mxu0 0.0
    %2094 = vmatmul.mubr.f32.gmra.mrb[0].mxu0 %v2025
    %v2095 = vpop.f32.mrb[0].mxu0
    %v2096 = vadd.f32 0.0, %v2095
    %v2097 = vpop.f32.mrb[0].mxu0
    %2098 = vdwg.mxu0
    %2099 = vrot.lane.b32.xlu0 %v629, 64
    %v2100 = vpop.permute.xlu0 %2099
    %2101 = vrot.lane.b32.xlu0 %v1077, 64
    %v2102 = vpop.permute.xlu0 %2101
    %v2103 = vsel %vm1683, %v2100, 0
    %v2105 = vsel %vm1683, %v2102, 0
    %2107 = vmatprep.subr.mxu0 0.0
    %2108 = vmatpush1.xpose.msra.mxu0 %v2105
    %2109 = vmatprep.subr.mxu0 0.0
    %2110 = vmatpush1.xpose.msra.mxu0 0.0
    %2111 = vmatprep.subr.mxu0 0.0
    %2112 = vmatpush1.xpose.msra.mxu0 0.0
    %2113 = vmatprep.subr.mxu0 0.0
    %2114 = vmatpush1.xpose.msra.mxu0 0.0
    %2115 = vmatprep.subr.mxu0 0.0
    %2116 = vmatpush1.xpose.msra.mxu0 0.0
    %2117 = vmatprep.subr.mxu0 0.0
    %2118 = vmatpush1.xpose.msra.mxu0 0.0
    %2119 = vmatprep.subr.mxu0 0.0
    %2120 = vmatpush1.xpose.msra.mxu0 0.0
    %2121 = vmatprep.subr.mxu0 0.0
    %2122 = vmatpush1.xpose.msra.mxu0 0.0
    %2123 = vmatprep.subr.mxu0 0.0
    %2124 = vmatpush1.xpose.msra.mxu0 0.0
    %2125 = vmatprep.subr.mxu0 0.0
    %2126 = vmatpush1.xpose.msra.mxu0 0.0
    %2127 = vmatprep.subr.mxu0 0.0
    %2128 = vmatpush1.xpose.msra.mxu0 0.0
    %2129 = vmatprep.subr.mxu0 0.0
    %2130 = vmatpush1.xpose.msra.mxu0 0.0
    %2131 = vmatprep.subr.mxu0 0.0
    %2132 = vmatpush1.xpose.msra.mxu0 0.0
    %2133 = vmatprep.subr.mxu0 0.0
    %2134 = vmatpush1.xpose.msra.mxu0 0.0
    %2135 = vmatprep.subr.mxu0 0.0
    %2136 = vmatpush1.xpose.msra.mxu0 0.0
    %2137 = vmatprep.subr.mxu0 0.0
    %2138 = vmatpush1.xpose.msra.mxu0 0.0
    %2139 = vmatprep.subr.mxu0 0.0
    %2140 = vmatpush1.xpose.msra.mxu0 0.0
    %2141 = vmatprep.subr.mxu0 0.0
    %2142 = vmatpush1.xpose.msra.mxu0 0.0
    %2143 = vmatprep.subr.mxu0 0.0
    %2144 = vmatpush1.xpose.msra.mxu0 0.0
    %2145 = vmatprep.subr.mxu0 0.0
    %2146 = vmatpush1.xpose.msra.mxu0 0.0
    %2147 = vmatprep.subr.mxu0 0.0
    %2148 = vmatpush1.xpose.msra.mxu0 0.0
    %2149 = vmatprep.subr.mxu0 0.0
    %2150 = vmatpush1.xpose.msra.mxu0 0.0
    %2151 = vmatprep.subr.mxu0 0.0
    %2152 = vmatpush1.xpose.msra.mxu0 0.0
    %2153 = vmatprep.subr.mxu0 0.0
    %2154 = vmatpush1.xpose.msra.mxu0 0.0
    %2155 = vmatprep.subr.mxu0 0.0
    %2156 = vmatpush1.xpose.msra.mxu0 0.0
    %2157 = vmatprep.subr.mxu0 0.0
    %2158 = vmatpush1.xpose.msra.mxu0 0.0
    %2159 = vmatprep.subr.mxu0 0.0
    %2160 = vmatpush1.xpose.msra.mxu0 0.0
    %2161 = vmatprep.subr.mxu0 0.0
    %2162 = vmatpush1.xpose.msra.mxu0 0.0
    %2163 = vmatprep.subr.mxu0 0.0
    %2164 = vmatpush1.xpose.msra.mxu0 0.0
    %2165 = vmatprep.subr.mxu0 0.0
    %2166 = vmatpush1.xpose.msra.mxu0 0.0
    %2167 = vmatprep.subr.mxu0 0.0
    %2168 = vmatpush1.xpose.msra.mxu0 0.0
    %2169 = vmatprep.subr.mxu0 0.0
    %2170 = vmatpush1.xpose.msra.mxu0 0.0
    %2171 = vmatprep.mubr.f32.mxu0 0.0
    %2172 = vmatmul.mubr.f32.gmra.mrb[0].mxu0 %v2103
    %v2173 = vpop.f32.mrb[0].mxu0
    %v2174 = vadd.f32 0.0, %v2173
    %v2175 = vpop.f32.mrb[0].mxu0
    %2176 = vdwg.mxu0
    %v2177 = vmul.f32 %v2096, 0.125
    %v2178 = vmul.f32 %v2174, 0.125
    %v2179 = vsel %vm1848, %v2177, -1e+30
    %v2180 = vsel %vm1849, %v2178, -1e+30
    %v2181 = vsel %vm1852, %v2179, -inf
    %2182 = vmax.xlane.f32.xlu0 %v2181
    %v2183 = vpop.xlane.xlu0 %2182
    %v2184 = vsel %vm1852, %v2180, -inf
    %2185 = vmax.xlane.f32.xlu0 %v2184
    %v2186 = vpop.xlane.xlu0 %2185
    %v2187 = vsub.f32 %v2179, %v2183
    %v2188 = vsub.f32 %v2180, %v2186
    %v2189 = vmul.f32 %v2187, 1.442695
    %v2190 = vpow.pop %v2189
    %v2191 = vmul.f32 %v2188, 1.442695
    %v2192 = vpow.pop %v2191
    %v2193 = vsel %vm1852, %v2190, 0.0
    %2194 = vadd.xlane.f32.xlu0 %v2193
    %v2195 = vpop.xlane.xlu0 %2194
    %v2196 = vsel %vm1852, %v2192, 0.0
    %2197 = vadd.xlane.f32.xlu0 %v2196
    %v2198 = vpop.xlane.xlu0 %2197
    %v2199 = vrcp.pop %v2195
    %v2200 = vrcp.pop %v2198
    %v2201 = vmul.f32 %v2190, %v2199
    %v2202 = vmul.f32 %v2192, %v2200
    %2204 = vrot.lane.b32.xlu0 %v1519, 64
    %v2205 = vpop.permute.xlu0 %2204
    %v2208 = vsel %vm1852, %v2201, 0
    %2210 = vmatprep.subr.mxu0 0.0
    %2211 = vmatpush1.msra.mxu0 %v2205
    %2212 = vmatprep.subr.mxu0 0.0
    %2213 = vmatpush1.msra.mxu0 0.0
    %2214 = vmatprep.subr.mxu0 0.0
    %2215 = vmatpush1.msra.mxu0 0.0
    %2216 = vmatprep.subr.mxu0 0.0
    %2217 = vmatpush1.msra.mxu0 0.0
    %2218 = vmatprep.subr.mxu0 0.0
    %2219 = vmatpush1.msra.mxu0 0.0
    %2220 = vmatprep.subr.mxu0 0.0
    %2221 = vmatpush1.msra.mxu0 0.0
    %2222 = vmatprep.subr.mxu0 0.0
    %2223 = vmatpush1.msra.mxu0 0.0
    %2224 = vmatprep.subr.mxu0 0.0
    %2225 = vmatpush1.msra.mxu0 0.0
    %2226 = vmatprep.subr.mxu0 0.0
    %2227 = vmatpush1.msra.mxu0 0.0
    %2228 = vmatprep.subr.mxu0 0.0
    %2229 = vmatpush1.msra.mxu0 0.0
    %2230 = vmatprep.subr.mxu0 0.0
    %2231 = vmatpush1.msra.mxu0 0.0
    %2232 = vmatprep.subr.mxu0 0.0
    %2233 = vmatpush1.msra.mxu0 0.0
    %2234 = vmatprep.subr.mxu0 0.0
    %2235 = vmatpush1.msra.mxu0 0.0
    %2236 = vmatprep.subr.mxu0 0.0
    %2237 = vmatpush1.msra.mxu0 0.0
    %2238 = vmatprep.subr.mxu0 0.0
    %2239 = vmatpush1.msra.mxu0 0.0
    %2240 = vmatprep.subr.mxu0 0.0
    %2241 = vmatpush1.msra.mxu0 0.0
    %2242 = vmatprep.subr.mxu0 0.0
    %2243 = vmatpush1.msra.mxu0 0.0
    %2244 = vmatprep.subr.mxu0 0.0
    %2245 = vmatpush1.msra.mxu0 0.0
    %2246 = vmatprep.subr.mxu0 0.0
    %2247 = vmatpush1.msra.mxu0 0.0
    %2248 = vmatprep.subr.mxu0 0.0
    %2249 = vmatpush1.msra.mxu0 0.0
    %2250 = vmatprep.subr.mxu0 0.0
    %2251 = vmatpush1.msra.mxu0 0.0
    %2252 = vmatprep.subr.mxu0 0.0
    %2253 = vmatpush1.msra.mxu0 0.0
    %2254 = vmatprep.subr.mxu0 0.0
    %2255 = vmatpush1.msra.mxu0 0.0
    %2256 = vmatprep.subr.mxu0 0.0
    %2257 = vmatpush1.msra.mxu0 0.0
    %2258 = vmatprep.subr.mxu0 0.0
    %2259 = vmatpush1.msra.mxu0 0.0
    %2260 = vmatprep.subr.mxu0 0.0
    %2261 = vmatpush1.msra.mxu0 0.0
    %2262 = vmatprep.subr.mxu0 0.0
    %2263 = vmatpush1.msra.mxu0 0.0
    %2264 = vmatprep.subr.mxu0 0.0
    %2265 = vmatpush1.msra.mxu0 0.0
    %2266 = vmatprep.subr.mxu0 0.0
    %2267 = vmatpush1.msra.mxu0 0.0
    %2268 = vmatprep.subr.mxu0 0.0
    %2269 = vmatpush1.msra.mxu0 0.0
    %2270 = vmatprep.subr.mxu0 0.0
    %2271 = vmatpush1.msra.mxu0 0.0
    %2272 = vmatprep.subr.mxu0 0.0
    %2273 = vmatpush1.msra.mxu0 0.0
    %2274 = vmatprep.mubr.f32.mxu0 0.0
    %2275 = vmatmul.mubr.f32.gmra.mrb[0].mxu0 %v2208
    %v2276 = vpop.f32.mrb[0].mxu0
    %v2277 = vadd.f32 0.0, %v2276
    %v2278 = vpop.f32.mrb[0].mxu0
    %2279 = vdwg.mxu0
    %2281 = vrot.lane.b32.xlu0 %v1525, 64
    %v2282 = vpop.permute.xlu0 %2281
    %v2285 = vsel %vm1852, %v2202, 0
    %2287 = vmatprep.subr.mxu0 0.0
    %2288 = vmatpush1.msra.mxu0 %v2282
    %2289 = vmatprep.subr.mxu0 0.0
    %2290 = vmatpush1.msra.mxu0 0.0
    %2291 = vmatprep.subr.mxu0 0.0
    %2292 = vmatpush1.msra.mxu0 0.0
    %2293 = vmatprep.subr.mxu0 0.0
    %2294 = vmatpush1.msra.mxu0 0.0
    %2295 = vmatprep.subr.mxu0 0.0
    %2296 = vmatpush1.msra.mxu0 0.0
    %2297 = vmatprep.subr.mxu0 0.0
    %2298 = vmatpush1.msra.mxu0 0.0
    %2299 = vmatprep.subr.mxu0 0.0
    %2300 = vmatpush1.msra.mxu0 0.0
    %2301 = vmatprep.subr.mxu0 0.0
    %2302 = vmatpush1.msra.mxu0 0.0
    %2303 = vmatprep.subr.mxu0 0.0
    %2304 = vmatpush1.msra.mxu0 0.0
    %2305 = vmatprep.subr.mxu0 0.0
    %2306 = vmatpush1.msra.mxu0 0.0
    %2307 = vmatprep.subr.mxu0 0.0
    %2308 = vmatpush1.msra.mxu0 0.0
    %2309 = vmatprep.subr.mxu0 0.0
    %2310 = vmatpush1.msra.mxu0 0.0
    %2311 = vmatprep.subr.mxu0 0.0
    %2312 = vmatpush1.msra.mxu0 0.0
    %2313 = vmatprep.subr.mxu0 0.0
    %2314 = vmatpush1.msra.mxu0 0.0
    %2315 = vmatprep.subr.mxu0 0.0
    %2316 = vmatpush1.msra.mxu0 0.0
    %2317 = vmatprep.subr.mxu0 0.0
    %2318 = vmatpush1.msra.mxu0 0.0
    %2319 = vmatprep.subr.mxu0 0.0
    %2320 = vmatpush1.msra.mxu0 0.0
    %2321 = vmatprep.subr.mxu0 0.0
    %2322 = vmatpush1.msra.mxu0 0.0
    %2323 = vmatprep.subr.mxu0 0.0
    %2324 = vmatpush1.msra.mxu0 0.0
    %2325 = vmatprep.subr.mxu0 0.0
    %2326 = vmatpush1.msra.mxu0 0.0
    %2327 = vmatprep.subr.mxu0 0.0
    %2328 = vmatpush1.msra.mxu0 0.0
    %2329 = vmatprep.subr.mxu0 0.0
    %2330 = vmatpush1.msra.mxu0 0.0
    %2331 = vmatprep.subr.mxu0 0.0
    %2332 = vmatpush1.msra.mxu0 0.0
    %2333 = vmatprep.subr.mxu0 0.0
    %2334 = vmatpush1.msra.mxu0 0.0
    %2335 = vmatprep.subr.mxu0 0.0
    %2336 = vmatpush1.msra.mxu0 0.0
    %2337 = vmatprep.subr.mxu0 0.0
    %2338 = vmatpush1.msra.mxu0 0.0
    %2339 = vmatprep.subr.mxu0 0.0
    %2340 = vmatpush1.msra.mxu0 0.0
    %2341 = vmatprep.subr.mxu0 0.0
    %2342 = vmatpush1.msra.mxu0 0.0
    %2343 = vmatprep.subr.mxu0 0.0
    %2344 = vmatpush1.msra.mxu0 0.0
    %2345 = vmatprep.subr.mxu0 0.0
    %2346 = vmatpush1.msra.mxu0 0.0
    %2347 = vmatprep.subr.mxu0 0.0
    %2348 = vmatpush1.msra.mxu0 0.0
    %2349 = vmatprep.subr.mxu0 0.0
    %2350 = vmatpush1.msra.mxu0 0.0
    %2351 = vmatprep.mubr.f32.mxu0 0.0
    %2352 = vmatmul.mubr.f32.gmra.mrb[0].mxu0 %v2285
    %v2353 = vpop.f32.mrb[0].mxu0
    %v2354 = vadd.f32 0.0, %v2353
    %v2355 = vpop.f32.mrb[0].mxu0
    %2356 = vdwg.mxu0
    %v2358 = vsel %vm1683, %v625, 0
    %v2361 = vsel %vm1683, %v1073, 0
    %2363 = vmatprep.subr.mxu0 0.0
    %2364 = vmatpush1.xpose.msra.mxu0 %v2361
    %2365 = vmatprep.subr.mxu0 0.0
    %2366 = vmatpush1.xpose.msra.mxu0 0.0
    %2367 = vmatprep.subr.mxu0 0.0
    %2368 = vmatpush1.xpose.msra.mxu0 0.0
    %2369 = vmatprep.subr.mxu0 0.0
    %2370 = vmatpush1.xpose.msra.mxu0 0.0
    %2371 = vmatprep.subr.mxu0 0.0
    %2372 = vmatpush1.xpose.msra.mxu0 0.0
    %2373 = vmatprep.subr.mxu0 0.0
    %2374 = vmatpush1.xpose.msra.mxu0 0.0
    %2375 = vmatprep.subr.mxu0 0.0
    %2376 = vmatpush1.xpose.msra.mxu0 0.0
    %2377 = vmatprep.subr.mxu0 0.0
    %2378 = vmatpush1.xpose.msra.mxu0 0.0
    %2379 = vmatprep.subr.mxu0 0.0
    %2380 = vmatpush1.xpose.msra.mxu0 0.0
    %2381 = vmatprep.subr.mxu0 0.0
    %2382 = vmatpush1.xpose.msra.mxu0 0.0
    %2383 = vmatprep.subr.mxu0 0.0
    %2384 = vmatpush1.xpose.msra.mxu0 0.0
    %2385 = vmatprep.subr.mxu0 0.0
    %2386 = vmatpush1.xpose.msra.mxu0 0.0
    %2387 = vmatprep.subr.mxu0 0.0
    %2388 = vmatpush1.xpose.msra.mxu0 0.0
    %2389 = vmatprep.subr.mxu0 0.0
    %2390 = vmatpush1.xpose.msra.mxu0 0.0
    %2391 = vmatprep.subr.mxu0 0.0
    %2392 = vmatpush1.xpose.msra.mxu0 0.0
    %2393 = vmatprep.subr.mxu0 0.0
    %2394 = vmatpush1.xpose.msra.mxu0 0.0
    %2395 = vmatprep.subr.mxu0 0.0
    %2396 = vmatpush1.xpose.msra.mxu0 0.0
    %2397 = vmatprep.subr.mxu0 0.0
    %2398 = vmatpush1.xpose.msra.mxu0 0.0
    %2399 = vmatprep.subr.mxu0 0.0
    %2400 = vmatpush1.xpose.msra.mxu0 0.0
    %2401 = vmatprep.subr.mxu0 0.0
    %2402 = vmatpush1.xpose.msra.mxu0 0.0
    %2403 = vmatprep.subr.mxu0 0.0
    %2404 = vmatpush1.xpose.msra.mxu0 0.0
    %2405 = vmatprep.subr.mxu0 0.0
    %2406 = vmatpush1.xpose.msra.mxu0 0.0
    %2407 = vmatprep.subr.mxu0 0.0
    %2408 = vmatpush1.xpose.msra.mxu0 0.0
    %2409 = vmatprep.subr.mxu0 0.0
    %2410 = vmatpush1.xpose.msra.mxu0 0.0
    %2411 = vmatprep.subr.mxu0 0.0
    %2412 = vmatpush1.xpose.msra.mxu0 0.0
    %2413 = vmatprep.subr.mxu0 0.0
    %2414 = vmatpush1.xpose.msra.mxu0 0.0
    %2415 = vmatprep.subr.mxu0 0.0
    %2416 = vmatpush1.xpose.msra.mxu0 0.0
    %2417 = vmatprep.subr.mxu0 0.0
    %2418 = vmatpush1.xpose.msra.mxu0 0.0
    %2419 = vmatprep.subr.mxu0 0.0
    %2420 = vmatpush1.xpose.msra.mxu0 0.0
    %2421 = vmatprep.subr.mxu0 0.0
    %2422 = vmatpush1.xpose.msra.mxu0 0.0
    %2423 = vmatprep.subr.mxu0 0.0
    %2424 = vmatpush1.xpose.msra.mxu0 0.0
    %2425 = vmatprep.subr.mxu0 0.0
    %2426 = vmatpush1.xpose.msra.mxu0 0.0
    %2427 = vmatprep.mubr.f32.mxu0 0.0
    %2428 = vmatmul.mubr.f32.gmra.mrb[0].mxu0 %v2358
    %v2429 = vpop.f32.mrb[0].mxu0
    %v2430 = vadd.f32 0.0, %v2429
    %v2431 = vpop.f32.mrb[0].mxu0
    %2432 = vdwg.mxu0
    %v2434 = vsel %vm1683, %v631, 0
    %v2437 = vsel %vm1683, %v1079, 0
    %2439 = vmatprep.subr.mxu0 0.0
    %2440 = vmatpush1.xpose.msra.mxu0 %v2437
    %2441 = vmatprep.subr.mxu0 0.0
    %2442 = vmatpush1.xpose.msra.mxu0 0.0
    %2443 = vmatprep.subr.mxu0 0.0
    %2444 = vmatpush1.xpose.msra.mxu0 0.0
    %2445 = vmatprep.subr.mxu0 0.0
    %2446 = vmatpush1.xpose.msra.mxu0 0.0
    %2447 = vmatprep.subr.mxu0 0.0
    %2448 = vmatpush1.xpose.msra.mxu0 0.0
    %2449 = vmatprep.subr.mxu0 0.0
    %2450 = vmatpush1.xpose.msra.mxu0 0.0
    %2451 = vmatprep.subr.mxu0 0.0
    %2452 = vmatpush1.xpose.msra.mxu0 0.0
    %2453 = vmatprep.subr.mxu0 0.0
    %2454 = vmatpush1.xpose.msra.mxu0 0.0
    %2455 = vmatprep.subr.mxu0 0.0
    %2456 = vmatpush1.xpose.msra.mxu0 0.0
    %2457 = vmatprep.subr.mxu0 0.0
    %2458 = vmatpush1.xpose.msra.mxu0 0.0
    %2459 = vmatprep.subr.mxu0 0.0
    %2460 = vmatpush1.xpose.msra.mxu0 0.0
    %2461 = vmatprep.subr.mxu0 0.0
    %2462 = vmatpush1.xpose.msra.mxu0 0.0
    %2463 = vmatprep.subr.mxu0 0.0
    %2464 = vmatpush1.xpose.msra.mxu0 0.0
    %2465 = vmatprep.subr.mxu0 0.0
    %2466 = vmatpush1.xpose.msra.mxu0 0.0
    %2467 = vmatprep.subr.mxu0 0.0
    %2468 = vmatpush1.xpose.msra.mxu0 0.0
    %2469 = vmatprep.subr.mxu0 0.0
    %2470 = vmatpush1.xpose.msra.mxu0 0.0
    %2471 = vmatprep.subr.mxu0 0.0
    %2472 = vmatpush1.xpose.msra.mxu0 0.0
    %2473 = vmatprep.subr.mxu0 0.0
    %2474 = vmatpush1.xpose.msra.mxu0 0.0
    %2475 = vmatprep.subr.mxu0 0.0
    %2476 = vmatpush1.xpose.msra.mxu0 0.0
    %2477 = vmatprep.subr.mxu0 0.0
    %2478 = vmatpush1.xpose.msra.mxu0 0.0
    %2479 = vmatprep.subr.mxu0 0.0
    %2480 = vmatpush1.xpose.msra.mxu0 0.0
    %2481 = vmatprep.subr.mxu0 0.0
    %2482 = vmatpush1.xpose.msra.mxu0 0.0
    %2483 = vmatprep.subr.mxu0 0.0
    %2484 = vmatpush1.xpose.msra.mxu0 0.0
    %2485 = vmatprep.subr.mxu0 0.0
    %2486 = vmatpush1.xpose.msra.mxu0 0.0
    %2487 = vmatprep.subr.mxu0 0.0
    %2488 = vmatpush1.xpose.msra.mxu0 0.0
    %2489 = vmatprep.subr.mxu0 0.0
    %2490 = vmatpush1.xpose.msra.mxu0 0.0
    %2491 = vmatprep.subr.mxu0 0.0
    %2492 = vmatpush1.xpose.msra.mxu0 0.0
    %2493 = vmatprep.subr.mxu0 0.0
    %2494 = vmatpush1.xpose.msra.mxu0 0.0
    %2495 = vmatprep.subr.mxu0 0.0
    %2496 = vmatpush1.xpose.msra.mxu0 0.0
    %2497 = vmatprep.subr.mxu0 0.0
    %2498 = vmatpush1.xpose.msra.mxu0 0.0
    %2499 = vmatprep.subr.mxu0 0.0
    %2500 = vmatpush1.xpose.msra.mxu0 0.0
    %2501 = vmatprep.subr.mxu0 0.0
    %2502 = vmatpush1.xpose.msra.mxu0 0.0
    %2503 = vmatprep.mubr.f32.mxu0 0.0
    %2504 = vmatmul.mubr.f32.gmra.mrb[0].mxu0 %v2434
    %v2505 = vpop.f32.mrb[0].mxu0
    %v2506 = vadd.f32 0.0, %v2505
    %v2507 = vpop.f32.mrb[0].mxu0
    %2508 = vdwg.mxu0
    %v2509 = vmul.f32 %v2430, 0.125
    %v2510 = vmul.f32 %v2506, 0.125
    %v2511 = vsel %vm1848, %v2509, -1e+30
    %v2512 = vsel %vm1849, %v2510, -1e+30
    %v2513 = vsel %vm1852, %v2511, -inf
    %2514 = vmax.xlane.f32.xlu0 %v2513
    %v2515 = vpop.xlane.xlu0 %2514
    %v2516 = vsel %vm1852, %v2512, -inf
    %2517 = vmax.xlane.f32.xlu0 %v2516
    %v2518 = vpop.xlane.xlu0 %2517
    %v2519 = vsub.f32 %v2511, %v2515
    %v2520 = vsub.f32 %v2512, %v2518
    %v2521 = vmul.f32 %v2519, 1.442695
    %v2522 = vpow.pop %v2521
    %v2523 = vmul.f32 %v2520, 1.442695
    %v2524 = vpow.pop %v2523
    %v2525 = vsel %vm1852, %v2522, 0.0
    %2526 = vadd.xlane.f32.xlu0 %v2525
    %v2527 = vpop.xlane.xlu0 %2526
    %v2528 = vsel %vm1852, %v2524, 0.0
    %2529 = vadd.xlane.f32.xlu0 %v2528
    %v2530 = vpop.xlane.xlu0 %2529
    %v2531 = vrcp.pop %v2527
    %v2532 = vrcp.pop %v2530
    %v2533 = vmul.f32 %v2522, %v2531
    %v2534 = vmul.f32 %v2524, %v2532
    %v2536 = vsel %vm1852, %v2533, 0
    %2538 = vmatprep.subr.mxu0 0.0
    %2539 = vmatpush1.msra.mxu0 %v1521
    %2540 = vmatprep.subr.mxu0 0.0
    %2541 = vmatpush1.msra.mxu0 0.0
    %2542 = vmatprep.subr.mxu0 0.0
    %2543 = vmatpush1.msra.mxu0 0.0
    %2544 = vmatprep.subr.mxu0 0.0
    %2545 = vmatpush1.msra.mxu0 0.0
    %2546 = vmatprep.subr.mxu0 0.0
    %2547 = vmatpush1.msra.mxu0 0.0
    %2548 = vmatprep.subr.mxu0 0.0
    %2549 = vmatpush1.msra.mxu0 0.0
    %2550 = vmatprep.subr.mxu0 0.0
    %2551 = vmatpush1.msra.mxu0 0.0
    %2552 = vmatprep.subr.mxu0 0.0
    %2553 = vmatpush1.msra.mxu0 0.0
    %2554 = vmatprep.subr.mxu0 0.0
    %2555 = vmatpush1.msra.mxu0 0.0
    %2556 = vmatprep.subr.mxu0 0.0
    %2557 = vmatpush1.msra.mxu0 0.0
    %2558 = vmatprep.subr.mxu0 0.0
    %2559 = vmatpush1.msra.mxu0 0.0
    %2560 = vmatprep.subr.mxu0 0.0
    %2561 = vmatpush1.msra.mxu0 0.0
    %2562 = vmatprep.subr.mxu0 0.0
    %2563 = vmatpush1.msra.mxu0 0.0
    %2564 = vmatprep.subr.mxu0 0.0
    %2565 = vmatpush1.msra.mxu0 0.0
    %2566 = vmatprep.subr.mxu0 0.0
    %2567 = vmatpush1.msra.mxu0 0.0
    %2568 = vmatprep.subr.mxu0 0.0
    %2569 = vmatpush1.msra.mxu0 0.0
    %2570 = vmatprep.subr.mxu0 0.0
    %2571 = vmatpush1.msra.mxu0 0.0
    %2572 = vmatprep.subr.mxu0 0.0
    %2573 = vmatpush1.msra.mxu0 0.0
    %2574 = vmatprep.subr.mxu0 0.0
    %2575 = vmatpush1.msra.mxu0 0.0
    %2576 = vmatprep.subr.mxu0 0.0
    %2577 = vmatpush1.msra.mxu0 0.0
    %2578 = vmatprep.subr.mxu0 0.0
    %2579 = vmatpush1.msra.mxu0 0.0
    %2580 = vmatprep.subr.mxu0 0.0
    %2581 = vmatpush1.msra.mxu0 0.0
    %2582 = vmatprep.subr.mxu0 0.0
    %2583 = vmatpush1.msra.mxu0 0.0
    %2584 = vmatprep.subr.mxu0 0.0
    %2585 = vmatpush1.msra.mxu0 0.0
    %2586 = vmatprep.subr.mxu0 0.0
    %2587 = vmatpush1.msra.mxu0 0.0
    %2588 = vmatprep.subr.mxu0 0.0
    %2589 = vmatpush1.msra.mxu0 0.0
    %2590 = vmatprep.subr.mxu0 0.0
    %2591 = vmatpush1.msra.mxu0 0.0
    %2592 = vmatprep.subr.mxu0 0.0
    %2593 = vmatpush1.msra.mxu0 0.0
    %2594 = vmatprep.subr.mxu0 0.0
    %2595 = vmatpush1.msra.mxu0 0.0
    %2596 = vmatprep.subr.mxu0 0.0
    %2597 = vmatpush1.msra.mxu0 0.0
    %2598 = vmatprep.subr.mxu0 0.0
    %2599 = vmatpush1.msra.mxu0 0.0
    %2600 = vmatprep.subr.mxu0 0.0
    %2601 = vmatpush1.msra.mxu0 0.0
    %2602 = vmatprep.mubr.f32.mxu0 0.0
    %2603 = vmatmul.mubr.f32.gmra.mrb[0].mxu0 %v2536
    %v2604 = vpop.f32.mrb[0].mxu0
    %v2605 = vadd.f32 0.0, %v2604
    %v2606 = vpop.f32.mrb[0].mxu0
    %2607 = vdwg.mxu0
    %v2609 = vsel %vm1852, %v2534, 0
    %2611 = vmatprep.subr.mxu0 0.0
    %2612 = vmatpush1.msra.mxu0 %v1527
    %2613 = vmatprep.subr.mxu0 0.0
    %2614 = vmatpush1.msra.mxu0 0.0
    %2615 = vmatprep.subr.mxu0 0.0
    %2616 = vmatpush1.msra.mxu0 0.0
    %2617 = vmatprep.subr.mxu0 0.0
    %2618 = vmatpush1.msra.mxu0 0.0
    %2619 = vmatprep.subr.mxu0 0.0
    %2620 = vmatpush1.msra.mxu0 0.0
    %2621 = vmatprep.subr.mxu0 0.0
    %2622 = vmatpush1.msra.mxu0 0.0
    %2623 = vmatprep.subr.mxu0 0.0
    %2624 = vmatpush1.msra.mxu0 0.0
    %2625 = vmatprep.subr.mxu0 0.0
    %2626 = vmatpush1.msra.mxu0 0.0
    %2627 = vmatprep.subr.mxu0 0.0
    %2628 = vmatpush1.msra.mxu0 0.0
    %2629 = vmatprep.subr.mxu0 0.0
    %2630 = vmatpush1.msra.mxu0 0.0
    %2631 = vmatprep.subr.mxu0 0.0
    %2632 = vmatpush1.msra.mxu0 0.0
    %2633 = vmatprep.subr.mxu0 0.0
    %2634 = vmatpush1.msra.mxu0 0.0
    %2635 = vmatprep.subr.mxu0 0.0
    %2636 = vmatpush1.msra.mxu0 0.0
    %2637 = vmatprep.subr.mxu0 0.0
    %2638 = vmatpush1.msra.mxu0 0.0
    %2639 = vmatprep.subr.mxu0 0.0
    %2640 = vmatpush1.msra.mxu0 0.0
    %2641 = vmatprep.subr.mxu0 0.0
    %2642 = vmatpush1.msra.mxu0 0.0
    %2643 = vmatprep.subr.mxu0 0.0
    %2644 = vmatpush1.msra.mxu0 0.0
    %2645 = vmatprep.subr.mxu0 0.0
    %2646 = vmatpush1.msra.mxu0 0.0
    %2647 = vmatprep.subr.mxu0 0.0
    %2648 = vmatpush1.msra.mxu0 0.0
    %2649 = vmatprep.subr.mxu0 0.0
    %2650 = vmatpush1.msra.mxu0 0.0
    %2651 = vmatprep.subr.mxu0 0.0
    %2652 = vmatpush1.msra.mxu0 0.0
    %2653 = vmatprep.subr.mxu0 0.0
    %2654 = vmatpush1.msra.mxu0 0.0
    %2655 = vmatprep.subr.mxu0 0.0
    %2656 = vmatpush1.msra.mxu0 0.0
    %2657 = vmatprep.subr.mxu0 0.0
    %2658 = vmatpush1.msra.mxu0 0.0
    %2659 = vmatprep.subr.mxu0 0.0
    %2660 = vmatpush1.msra.mxu0 0.0
    %2661 = vmatprep.subr.mxu0 0.0
    %2662 = vmatpush1.msra.mxu0 0.0
    %2663 = vmatprep.subr.mxu0 0.0
    %2664 = vmatpush1.msra.mxu0 0.0
    %2665 = vmatprep.subr.mxu0 0.0
    %2666 = vmatpush1.msra.mxu0 0.0
    %2667 = vmatprep.subr.mxu0 0.0
    %2668 = vmatpush1.msra.mxu0 0.0
    %2669 = vmatprep.subr.mxu0 0.0
    %2670 = vmatpush1.msra.mxu0 0.0
    %2671 = vmatprep.subr.mxu0 0.0
    %2672 = vmatpush1.msra.mxu0 0.0
    %2673 = vmatprep.subr.mxu0 0.0
    %2674 = vmatpush1.msra.mxu0 0.0
    %2675 = vmatprep.mubr.f32.mxu0 0.0
    %2676 = vmatmul.mubr.f32.gmra.mrb[0].mxu0 %v2609
    %v2677 = vpop.f32.mrb[0].mxu0
    %v2678 = vadd.f32 0.0, %v2677
    %v2679 = vpop.f32.mrb[0].mxu0
    %2680 = vdwg.mxu0
    %2681 = vrot.lane.b32.xlu0 %v625, 64
    %v2682 = vpop.permute.xlu0 %2681
    %2683 = vrot.lane.b32.xlu0 %v1073, 64
    %v2684 = vpop.permute.xlu0 %2683
    %v2685 = vsel %vm1683, %v2682, 0
    %v2687 = vsel %vm1683, %v2684, 0
    %2689 = vmatprep.subr.mxu0 0.0
    %2690 = vmatpush1.xpose.msra.mxu0 %v2687
    %2691 = vmatprep.subr.mxu0 0.0
    %2692 = vmatpush1.xpose.msra.mxu0 0.0
    %2693 = vmatprep.subr.mxu0 0.0
    %2694 = vmatpush1.xpose.msra.mxu0 0.0
    %2695 = vmatprep.subr.mxu0 0.0
    %2696 = vmatpush1.xpose.msra.mxu0 0.0
    %2697 = vmatprep.subr.mxu0 0.0
    %2698 = vmatpush1.xpose.msra.mxu0 0.0
    %2699 = vmatprep.subr.mxu0 0.0
    %2700 = vmatpush1.xpose.msra.mxu0 0.0
    %2701 = vmatprep.subr.mxu0 0.0
    %2702 = vmatpush1.xpose.msra.mxu0 0.0
    %2703 = vmatprep.subr.mxu0 0.0
    %2704 = vmatpush1.xpose.msra.mxu0 0.0
    %2705 = vmatprep.subr.mxu0 0.0
    %2706 = vmatpush1.xpose.msra.mxu0 0.0
    %2707 = vmatprep.subr.mxu0 0.0
    %2708 = vmatpush1.xpose.msra.mxu0 0.0
    %2709 = vmatprep.subr.mxu0 0.0
    %2710 = vmatpush1.xpose.msra.mxu0 0.0
    %2711 = vmatprep.subr.mxu0 0.0
    %2712 = vmatpush1.xpose.msra.mxu0 0.0
    %2713 = vmatprep.subr.mxu0 0.0
    %2714 = vmatpush1.xpose.msra.mxu0 0.0
    %2715 = vmatprep.subr.mxu0 0.0
    %2716 = vmatpush1.xpose.msra.mxu0 0.0
    %2717 = vmatprep.subr.mxu0 0.0
    %2718 = vmatpush1.xpose.msra.mxu0 0.0
    %2719 = vmatprep.subr.mxu0 0.0
    %2720 = vmatpush1.xpose.msra.mxu0 0.0
    %2721 = vmatprep.subr.mxu0 0.0
    %2722 = vmatpush1.xpose.msra.mxu0 0.0
    %2723 = vmatprep.subr.mxu0 0.0
    %2724 = vmatpush1.xpose.msra.mxu0 0.0
    %2725 = vmatprep.subr.mxu0 0.0
    %2726 = vmatpush1.xpose.msra.mxu0 0.0
    %2727 = vmatprep.subr.mxu0 0.0
    %2728 = vmatpush1.xpose.msra.mxu0 0.0
    %2729 = vmatprep.subr.mxu0 0.0
    %2730 = vmatpush1.xpose.msra.mxu0 0.0
    %2731 = vmatprep.subr.mxu0 0.0
    %2732 = vmatpush1.xpose.msra.mxu0 0.0
    %2733 = vmatprep.subr.mxu0 0.0
    %2734 = vmatpush1.xpose.msra.mxu0 0.0
    %2735 = vmatprep.subr.mxu0 0.0
    %2736 = vmatpush1.xpose.msra.mxu0 0.0
    %2737 = vmatprep.subr.mxu0 0.0
    %2738 = vmatpush1.xpose.msra.mxu0 0.0
    %2739 = vmatprep.subr.mxu0 0.0
    %2740 = vmatpush1.xpose.msra.mxu0 0.0
    %2741 = vmatprep.subr.mxu0 0.0
    %2742 = vmatpush1.xpose.msra.mxu0 0.0
    %2743 = vmatprep.subr.mxu0 0.0
    %2744 = vmatpush1.xpose.msra.mxu0 0.0
    %2745 = vmatprep.subr.mxu0 0.0
    %2746 = vmatpush1.xpose.msra.mxu0 0.0
    %2747 = vmatprep.subr.mxu0 0.0
    %2748 = vmatpush1.xpose.msra.mxu0 0.0
    %2749 = vmatprep.subr.mxu0 0.0
    %2750 = vmatpush1.xpose.msra.mxu0 0.0
    %2751 = vmatprep.subr.mxu0 0.0
    %2752 = vmatpush1.xpose.msra.mxu0 0.0
    %2753 = vmatprep.mubr.f32.mxu0 0.0
    %2754 = vmatmul.mubr.f32.gmra.mrb[0].mxu0 %v2685
    %v2755 = vpop.f32.mrb[0].mxu0
    %v2756 = vadd.f32 0.0, %v2755
    %v2757 = vpop.f32.mrb[0].mxu0
    %2758 = vdwg.mxu0
    %2759 = vrot.lane.b32.xlu0 %v631, 64
    %v2760 = vpop.permute.xlu0 %2759
    %2761 = vrot.lane.b32.xlu0 %v1079, 64
    %v2762 = vpop.permute.xlu0 %2761
    %v2763 = vsel %vm1683, %v2760, 0
    %v2765 = vsel %vm1683, %v2762, 0
    %2767 = vmatprep.subr.mxu0 0.0
    %2768 = vmatpush1.xpose.msra.mxu0 %v2765
    %2769 = vmatprep.subr.mxu0 0.0
    %2770 = vmatpush1.xpose.msra.mxu0 0.0
    %2771 = vmatprep.subr.mxu0 0.0
    %2772 = vmatpush1.xpose.msra.mxu0 0.0
    %2773 = vmatprep.subr.mxu0 0.0
    %2774 = vmatpush1.xpose.msra.mxu0 0.0
    %2775 = vmatprep.subr.mxu0 0.0
    %2776 = vmatpush1.xpose.msra.mxu0 0.0
    %2777 = vmatprep.subr.mxu0 0.0
    %2778 = vmatpush1.xpose.msra.mxu0 0.0
    %2779 = vmatprep.subr.mxu0 0.0
    %2780 = vmatpush1.xpose.msra.mxu0 0.0
    %2781 = vmatprep.subr.mxu0 0.0
    %2782 = vmatpush1.xpose.msra.mxu0 0.0
    %2783 = vmatprep.subr.mxu0 0.0
    %2784 = vmatpush1.xpose.msra.mxu0 0.0
    %2785 = vmatprep.subr.mxu0 0.0
    %2786 = vmatpush1.xpose.msra.mxu0 0.0
    %2787 = vmatprep.subr.mxu0 0.0
    %2788 = vmatpush1.xpose.msra.mxu0 0.0
    %2789 = vmatprep.subr.mxu0 0.0
    %2790 = vmatpush1.xpose.msra.mxu0 0.0
    %2791 = vmatprep.subr.mxu0 0.0
    %2792 = vmatpush1.xpose.msra.mxu0 0.0
    %2793 = vmatprep.subr.mxu0 0.0
    %2794 = vmatpush1.xpose.msra.mxu0 0.0
    %2795 = vmatprep.subr.mxu0 0.0
    %2796 = vmatpush1.xpose.msra.mxu0 0.0
    %2797 = vmatprep.subr.mxu0 0.0
    %2798 = vmatpush1.xpose.msra.mxu0 0.0
    %2799 = vmatprep.subr.mxu0 0.0
    %2800 = vmatpush1.xpose.msra.mxu0 0.0
    %2801 = vmatprep.subr.mxu0 0.0
    %2802 = vmatpush1.xpose.msra.mxu0 0.0
    %2803 = vmatprep.subr.mxu0 0.0
    %2804 = vmatpush1.xpose.msra.mxu0 0.0
    %2805 = vmatprep.subr.mxu0 0.0
    %2806 = vmatpush1.xpose.msra.mxu0 0.0
    %2807 = vmatprep.subr.mxu0 0.0
    %2808 = vmatpush1.xpose.msra.mxu0 0.0
    %2809 = vmatprep.subr.mxu0 0.0
    %2810 = vmatpush1.xpose.msra.mxu0 0.0
    %2811 = vmatprep.subr.mxu0 0.0
    %2812 = vmatpush1.xpose.msra.mxu0 0.0
    %2813 = vmatprep.subr.mxu0 0.0
    %2814 = vmatpush1.xpose.msra.mxu0 0.0
    %2815 = vmatprep.subr.mxu0 0.0
    %2816 = vmatpush1.xpose.msra.mxu0 0.0
    %2817 = vmatprep.subr.mxu0 0.0
    %2818 = vmatpush1.xpose.msra.mxu0 0.0
    %2819 = vmatprep.subr.mxu0 0.0
    %2820 = vmatpush1.xpose.msra.mxu0 0.0
    %2821 = vmatprep.subr.mxu0 0.0
    %2822 = vmatpush1.xpose.msra.mxu0 0.0
    %2823 = vmatprep.subr.mxu0 0.0
    %2824 = vmatpush1.xpose.msra.mxu0 0.0
    %2825 = vmatprep.subr.mxu0 0.0
    %2826 = vmatpush1.xpose.msra.mxu0 0.0
    %2827 = vmatprep.subr.mxu0 0.0
    %2828 = vmatpush1.xpose.msra.mxu0 0.0
    %2829 = vmatprep.subr.mxu0 0.0
    %2830 = vmatpush1.xpose.msra.mxu0 0.0
    %2831 = vmatprep.mubr.f32.mxu0 0.0
    %2832 = vmatmul.mubr.f32.gmra.mrb[0].mxu0 %v2763
    %v2833 = vpop.f32.mrb[0].mxu0
    %v2834 = vadd.f32 0.0, %v2833
    %v2835 = vpop.f32.mrb[0].mxu0
    %2836 = vdwg.mxu0
    %v2837 = vmul.f32 %v2756, 0.125
    %v2838 = vmul.f32 %v2834, 0.125
    %v2839 = vsel %vm1848, %v2837, -1e+30
    %v2840 = vsel %vm1849, %v2838, -1e+30
    %v2841 = vsel %vm1852, %v2839, -inf
    %2842 = vmax.xlane.f32.xlu0 %v2841
    %v2843 = vpop.xlane.xlu0 %2842
    %v2844 = vsel %vm1852, %v2840, -inf
    %2845 = vmax.xlane.f32.xlu0 %v2844
    %v2846 = vpop.xlane.xlu0 %2845
    %v2847 = vsub.f32 %v2839, %v2843
    %v2848 = vsub.f32 %v2840, %v2846
    %v2849 = vmul.f32 %v2847, 1.442695
    %v2850 = vpow.pop %v2849
    %v2851 = vmul.f32 %v2848, 1.442695
    %v2852 = vpow.pop %v2851
    %v2853 = vsel %vm1852, %v2850, 0.0
    %2854 = vadd.xlane.f32.xlu0 %v2853
    %v2855 = vpop.xlane.xlu0 %2854
    %v2856 = vsel %vm1852, %v2852, 0.0
    %2857 = vadd.xlane.f32.xlu0 %v2856
    %v2858 = vpop.xlane.xlu0 %2857
    %v2859 = vrcp.pop %v2855
    %v2860 = vrcp.pop %v2858
    %v2861 = vmul.f32 %v2850, %v2859
    %v2862 = vmul.f32 %v2852, %v2860
    %2864 = vrot.lane.b32.xlu0 %v1521, 64
    %v2865 = vpop.permute.xlu0 %2864
    %v2868 = vsel %vm1852, %v2861, 0
    %2870 = vmatprep.subr.mxu0 0.0
    %2871 = vmatpush1.msra.mxu0 %v2865
    %2872 = vmatprep.subr.mxu0 0.0
    %2873 = vmatpush1.msra.mxu0 0.0
    %2874 = vmatprep.subr.mxu0 0.0
    %2875 = vmatpush1.msra.mxu0 0.0
    %2876 = vmatprep.subr.mxu0 0.0
    %2877 = vmatpush1.msra.mxu0 0.0
    %2878 = vmatprep.subr.mxu0 0.0
    %2879 = vmatpush1.msra.mxu0 0.0
    %2880 = vmatprep.subr.mxu0 0.0
    %2881 = vmatpush1.msra.mxu0 0.0
    %2882 = vmatprep.subr.mxu0 0.0
    %2883 = vmatpush1.msra.mxu0 0.0
    %2884 = vmatprep.subr.mxu0 0.0
    %2885 = vmatpush1.msra.mxu0 0.0
    %2886 = vmatprep.subr.mxu0 0.0
    %2887 = vmatpush1.msra.mxu0 0.0
    %2888 = vmatprep.subr.mxu0 0.0
    %2889 = vmatpush1.msra.mxu0 0.0
    %2890 = vmatprep.subr.mxu0 0.0
    %2891 = vmatpush1.msra.mxu0 0.0
    %2892 = vmatprep.subr.mxu0 0.0
    %2893 = vmatpush1.msra.mxu0 0.0
    %2894 = vmatprep.subr.mxu0 0.0
    %2895 = vmatpush1.msra.mxu0 0.0
    %2896 = vmatprep.subr.mxu0 0.0
    %2897 = vmatpush1.msra.mxu0 0.0
    %2898 = vmatprep.subr.mxu0 0.0
    %2899 = vmatpush1.msra.mxu0 0.0
    %2900 = vmatprep.subr.mxu0 0.0
    %2901 = vmatpush1.msra.mxu0 0.0
    %2902 = vmatprep.subr.mxu0 0.0
    %2903 = vmatpush1.msra.mxu0 0.0
    %2904 = vmatprep.subr.mxu0 0.0
    %2905 = vmatpush1.msra.mxu0 0.0
    %2906 = vmatprep.subr.mxu0 0.0
    %2907 = vmatpush1.msra.mxu0 0.0
    %2908 = vmatprep.subr.mxu0 0.0
    %2909 = vmatpush1.msra.mxu0 0.0
    %2910 = vmatprep.subr.mxu0 0.0
    %2911 = vmatpush1.msra.mxu0 0.0
    %2912 = vmatprep.subr.mxu0 0.0
    %2913 = vmatpush1.msra.mxu0 0.0
    %2914 = vmatprep.subr.mxu0 0.0
    %2915 = vmatpush1.msra.mxu0 0.0
    %2916 = vmatprep.subr.mxu0 0.0
    %2917 = vmatpush1.msra.mxu0 0.0
    %2918 = vmatprep.subr.mxu0 0.0
    %2919 = vmatpush1.msra.mxu0 0.0
    %2920 = vmatprep.subr.mxu0 0.0
    %2921 = vmatpush1.msra.mxu0 0.0
    %2922 = vmatprep.subr.mxu0 0.0
    %2923 = vmatpush1.msra.mxu0 0.0
    %2924 = vmatprep.subr.mxu0 0.0
    %2925 = vmatpush1.msra.mxu0 0.0
    %2926 = vmatprep.subr.mxu0 0.0
    %2927 = vmatpush1.msra.mxu0 0.0
    %2928 = vmatprep.subr.mxu0 0.0
    %2929 = vmatpush1.msra.mxu0 0.0
    %2930 = vmatprep.subr.mxu0 0.0
    %2931 = vmatpush1.msra.mxu0 0.0
    %2932 = vmatprep.subr.mxu0 0.0
    %2933 = vmatpush1.msra.mxu0 0.0
    %2934 = vmatprep.mubr.f32.mxu0 0.0
    %2935 = vmatmul.mubr.f32.gmra.mrb[0].mxu0 %v2868
    %v2936 = vpop.f32.mrb[0].mxu0
    %v2937 = vadd.f32 0.0, %v2936
    %v2938 = vpop.f32.mrb[0].mxu0
    %2939 = vdwg.mxu0
    %2941 = vrot.lane.b32.xlu0 %v1527, 64
    %v2942 = vpop.permute.xlu0 %2941
    %v2945 = vsel %vm1852, %v2862, 0
    %2947 = vmatprep.subr.mxu0 0.0
    %2948 = vmatpush1.msra.mxu0 %v2942
    %2949 = vmatprep.subr.mxu0 0.0
    %2950 = vmatpush1.msra.mxu0 0.0
    %2951 = vmatprep.subr.mxu0 0.0
    %2952 = vmatpush1.msra.mxu0 0.0
    %2953 = vmatprep.subr.mxu0 0.0
    %2954 = vmatpush1.msra.mxu0 0.0
    %2955 = vmatprep.subr.mxu0 0.0
    %2956 = vmatpush1.msra.mxu0 0.0
    %2957 = vmatprep.subr.mxu0 0.0
    %2958 = vmatpush1.msra.mxu0 0.0
    %2959 = vmatprep.subr.mxu0 0.0
    %2960 = vmatpush1.msra.mxu0 0.0
    %2961 = vmatprep.subr.mxu0 0.0
    %2962 = vmatpush1.msra.mxu0 0.0
    %2963 = vmatprep.subr.mxu0 0.0
    %2964 = vmatpush1.msra.mxu0 0.0
    %2965 = vmatprep.subr.mxu0 0.0
    %2966 = vmatpush1.msra.mxu0 0.0
    %2967 = vmatprep.subr.mxu0 0.0
    %2968 = vmatpush1.msra.mxu0 0.0
    %2969 = vmatprep.subr.mxu0 0.0
    %2970 = vmatpush1.msra.mxu0 0.0
    %2971 = vmatprep.subr.mxu0 0.0
    %2972 = vmatpush1.msra.mxu0 0.0
    %2973 = vmatprep.subr.mxu0 0.0
    %2974 = vmatpush1.msra.mxu0 0.0
    %2975 = vmatprep.subr.mxu0 0.0
    %2976 = vmatpush1.msra.mxu0 0.0
    %2977 = vmatprep.subr.mxu0 0.0
    %2978 = vmatpush1.msra.mxu0 0.0
    %2979 = vmatprep.subr.mxu0 0.0
    %2980 = vmatpush1.msra.mxu0 0.0
    %2981 = vmatprep.subr.mxu0 0.0
    %2982 = vmatpush1.msra.mxu0 0.0
    %2983 = vmatprep.subr.mxu0 0.0
    %2984 = vmatpush1.msra.mxu0 0.0
    %2985 = vmatprep.subr.mxu0 0.0
    %2986 = vmatpush1.msra.mxu0 0.0
    %2987 = vmatprep.subr.mxu0 0.0
    %2988 = vmatpush1.msra.mxu0 0.0
    %2989 = vmatprep.subr.mxu0 0.0
    %2990 = vmatpush1.msra.mxu0 0.0
    %2991 = vmatprep.subr.mxu0 0.0
    %2992 = vmatpush1.msra.mxu0 0.0
    %2993 = vmatprep.subr.mxu0 0.0
    %2994 = vmatpush1.msra.mxu0 0.0
    %2995 = vmatprep.subr.mxu0 0.0
    %2996 = vmatpush1.msra.mxu0 0.0
    %2997 = vmatprep.subr.mxu0 0.0
    %2998 = vmatpush1.msra.mxu0 0.0
    %2999 = vmatprep.subr.mxu0 0.0
    %3000 = vmatpush1.msra.mxu0 0.0
    %3001 = vmatprep.subr.mxu0 0.0
    %3002 = vmatpush1.msra.mxu0 0.0
    %3003 = vmatprep.subr.mxu0 0.0
    %3004 = vmatpush1.msra.mxu0 0.0
    %3005 = vmatprep.subr.mxu0 0.0
    %3006 = vmatpush1.msra.mxu0 0.0
    %3007 = vmatprep.subr.mxu0 0.0
    %3008 = vmatpush1.msra.mxu0 0.0
    %3009 = vmatprep.subr.mxu0 0.0
    %3010 = vmatpush1.msra.mxu0 0.0
    %3011 = vmatprep.mubr.f32.mxu0 0.0
    %3012 = vmatmul.mubr.f32.gmra.mrb[0].mxu0 %v2945
    %v3013 = vpop.f32.mrb[0].mxu0
    %v3014 = vadd.f32 0.0, %v3013
    %v3015 = vpop.f32.mrb[0].mxu0
    %3016 = vdwg.mxu0
    %v3018 = vsel %vm1683, %v775, 0
    %v3021 = vsel %vm1683, %v1223, 0
    %3023 = vmatprep.subr.mxu0 0.0
    %3024 = vmatpush1.xpose.msra.mxu0 %v3021
    %3025 = vmatprep.subr.mxu0 0.0
    %3026 = vmatpush1.xpose.msra.mxu0 0.0
    %3027 = vmatprep.subr.mxu0 0.0
    %3028 = vmatpush1.xpose.msra.mxu0 0.0
    %3029 = vmatprep.subr.mxu0 0.0
    %3030 = vmatpush1.xpose.msra.mxu0 0.0
    %3031 = vmatprep.subr.mxu0 0.0
    %3032 = vmatpush1.xpose.msra.mxu0 0.0
    %3033 = vmatprep.subr.mxu0 0.0
    %3034 = vmatpush1.xpose.msra.mxu0 0.0
    %3035 = vmatprep.subr.mxu0 0.0
    %3036 = vmatpush1.xpose.msra.mxu0 0.0
    %3037 = vmatprep.subr.mxu0 0.0
    %3038 = vmatpush1.xpose.msra.mxu0 0.0
    %3039 = vmatprep.subr.mxu0 0.0
    %3040 = vmatpush1.xpose.msra.mxu0 0.0
    %3041 = vmatprep.subr.mxu0 0.0
    %3042 = vmatpush1.xpose.msra.mxu0 0.0
    %3043 = vmatprep.subr.mxu0 0.0
    %3044 = vmatpush1.xpose.msra.mxu0 0.0
    %3045 = vmatprep.subr.mxu0 0.0
    %3046 = vmatpush1.xpose.msra.mxu0 0.0
    %3047 = vmatprep.subr.mxu0 0.0
    %3048 = vmatpush1.xpose.msra.mxu0 0.0
    %3049 = vmatprep.subr.mxu0 0.0
    %3050 = vmatpush1.xpose.msra.mxu0 0.0
    %3051 = vmatprep.subr.mxu0 0.0
    %3052 = vmatpush1.xpose.msra.mxu0 0.0
    %3053 = vmatprep.subr.mxu0 0.0
    %3054 = vmatpush1.xpose.msra.mxu0 0.0
    %3055 = vmatprep.subr.mxu0 0.0
    %3056 = vmatpush1.xpose.msra.mxu0 0.0
    %3057 = vmatprep.subr.mxu0 0.0
    %3058 = vmatpush1.xpose.msra.mxu0 0.0
    %3059 = vmatprep.subr.mxu0 0.0
    %3060 = vmatpush1.xpose.msra.mxu0 0.0
    %3061 = vmatprep.subr.mxu0 0.0
    %3062 = vmatpush1.xpose.msra.mxu0 0.0
    %3063 = vmatprep.subr.mxu0 0.0
    %3064 = vmatpush1.xpose.msra.mxu0 0.0
    %3065 = vmatprep.subr.mxu0 0.0
    %3066 = vmatpush1.xpose.msra.mxu0 0.0
    %3067 = vmatprep.subr.mxu0 0.0
    %3068 = vmatpush1.xpose.msra.mxu0 0.0
    %3069 = vmatprep.subr.mxu0 0.0
    %3070 = vmatpush1.xpose.msra.mxu0 0.0
    %3071 = vmatprep.subr.mxu0 0.0
    %3072 = vmatpush1.xpose.msra.mxu0 0.0
    %3073 = vmatprep.subr.mxu0 0.0
    %3074 = vmatpush1.xpose.msra.mxu0 0.0
    %3075 = vmatprep.subr.mxu0 0.0
    %3076 = vmatpush1.xpose.msra.mxu0 0.0
    %3077 = vmatprep.subr.mxu0 0.0
    %3078 = vmatpush1.xpose.msra.mxu0 0.0
    %3079 = vmatprep.subr.mxu0 0.0
    %3080 = vmatpush1.xpose.msra.mxu0 0.0
    %3081 = vmatprep.subr.mxu0 0.0
    %3082 = vmatpush1.xpose.msra.mxu0 0.0
    %3083 = vmatprep.subr.mxu0 0.0
    %3084 = vmatpush1.xpose.msra.mxu0 0.0
    %3085 = vmatprep.subr.mxu0 0.0
    %3086 = vmatpush1.xpose.msra.mxu0 0.0
    %3087 = vmatprep.mubr.f32.mxu0 0.0
    %3088 = vmatmul.mubr.f32.gmra.mrb[0].mxu0 %v3018
    %v3089 = vpop.f32.mrb[0].mxu0
    %v3090 = vadd.f32 0.0, %v3089
    %v3091 = vpop.f32.mrb[0].mxu0
    %3092 = vdwg.mxu0
    %v3094 = vsel %vm1683, %v780, 0
    %v3097 = vsel %vm1683, %v1228, 0
    %3099 = vmatprep.subr.mxu0 0.0
    %3100 = vmatpush1.xpose.msra.mxu0 %v3097
    %3101 = vmatprep.subr.mxu0 0.0
    %3102 = vmatpush1.xpose.msra.mxu0 0.0
    %3103 = vmatprep.subr.mxu0 0.0
    %3104 = vmatpush1.xpose.msra.mxu0 0.0
    %3105 = vmatprep.subr.mxu0 0.0
    %3106 = vmatpush1.xpose.msra.mxu0 0.0
    %3107 = vmatprep.subr.mxu0 0.0
    %3108 = vmatpush1.xpose.msra.mxu0 0.0
    %3109 = vmatprep.subr.mxu0 0.0
    %3110 = vmatpush1.xpose.msra.mxu0 0.0
    %3111 = vmatprep.subr.mxu0 0.0
    %3112 = vmatpush1.xpose.msra.mxu0 0.0
    %3113 = vmatprep.subr.mxu0 0.0
    %3114 = vmatpush1.xpose.msra.mxu0 0.0
    %3115 = vmatprep.subr.mxu0 0.0
    %3116 = vmatpush1.xpose.msra.mxu0 0.0
    %3117 = vmatprep.subr.mxu0 0.0
    %3118 = vmatpush1.xpose.msra.mxu0 0.0
    %3119 = vmatprep.subr.mxu0 0.0
    %3120 = vmatpush1.xpose.msra.mxu0 0.0
    %3121 = vmatprep.subr.mxu0 0.0
    %3122 = vmatpush1.xpose.msra.mxu0 0.0
    %3123 = vmatprep.subr.mxu0 0.0
    %3124 = vmatpush1.xpose.msra.mxu0 0.0
    %3125 = vmatprep.subr.mxu0 0.0
    %3126 = vmatpush1.xpose.msra.mxu0 0.0
    %3127 = vmatprep.subr.mxu0 0.0
    %3128 = vmatpush1.xpose.msra.mxu0 0.0
    %3129 = vmatprep.subr.mxu0 0.0
    %3130 = vmatpush1.xpose.msra.mxu0 0.0
    %3131 = vmatprep.subr.mxu0 0.0
    %3132 = vmatpush1.xpose.msra.mxu0 0.0
    %3133 = vmatprep.subr.mxu0 0.0
    %3134 = vmatpush1.xpose.msra.mxu0 0.0
    %3135 = vmatprep.subr.mxu0 0.0
    %3136 = vmatpush1.xpose.msra.mxu0 0.0
    %3137 = vmatprep.subr.mxu0 0.0
    %3138 = vmatpush1.xpose.msra.mxu0 0.0
    %3139 = vmatprep.subr.mxu0 0.0
    %3140 = vmatpush1.xpose.msra.mxu0 0.0
    %3141 = vmatprep.subr.mxu0 0.0
    %3142 = vmatpush1.xpose.msra.mxu0 0.0
    %3143 = vmatprep.subr.mxu0 0.0
    %3144 = vmatpush1.xpose.msra.mxu0 0.0
    %3145 = vmatprep.subr.mxu0 0.0
    %3146 = vmatpush1.xpose.msra.mxu0 0.0
    %3147 = vmatprep.subr.mxu0 0.0
    %3148 = vmatpush1.xpose.msra.mxu0 0.0
    %3149 = vmatprep.subr.mxu0 0.0
    %3150 = vmatpush1.xpose.msra.mxu0 0.0
    %3151 = vmatprep.subr.mxu0 0.0
    %3152 = vmatpush1.xpose.msra.mxu0 0.0
    %3153 = vmatprep.subr.mxu0 0.0
    %3154 = vmatpush1.xpose.msra.mxu0 0.0
    %3155 = vmatprep.subr.mxu0 0.0
    %3156 = vmatpush1.xpose.msra.mxu0 0.0
    %3157 = vmatprep.subr.mxu0 0.0
    %3158 = vmatpush1.xpose.msra.mxu0 0.0
    %3159 = vmatprep.subr.mxu0 0.0
    %3160 = vmatpush1.xpose.msra.mxu0 0.0
    %3161 = vmatprep.subr.mxu0 0.0
    %3162 = vmatpush1.xpose.msra.mxu0 0.0
    %3163 = vmatprep.mubr.f32.mxu0 0.0
    %3164 = vmatmul.mubr.f32.gmra.mrb[0].mxu0 %v3094
    %v3165 = vpop.f32.mrb[0].mxu0
    %v3166 = vadd.f32 0.0, %v3165
    %v3167 = vpop.f32.mrb[0].mxu0
    %3168 = vdwg.mxu0
    %v3169 = vmul.f32 %v3090, 0.125
    %v3170 = vmul.f32 %v3166, 0.125
    %v3171 = vsel %vm1848, %v3169, -1e+30
    %v3172 = vsel %vm1849, %v3170, -1e+30
    %v3173 = vsel %vm1852, %v3171, -inf
    %3174 = vmax.xlane.f32.xlu0 %v3173
    %v3175 = vpop.xlane.xlu0 %3174
    %v3176 = vsel %vm1852, %v3172, -inf
    %3177 = vmax.xlane.f32.xlu0 %v3176
    %v3178 = vpop.xlane.xlu0 %3177
    %v3179 = vsub.f32 %v3171, %v3175
    %v3180 = vsub.f32 %v3172, %v3178
    %v3181 = vmul.f32 %v3179, 1.442695
    %v3182 = vpow.pop %v3181
    %v3183 = vmul.f32 %v3180, 1.442695
    %v3184 = vpow.pop %v3183
    %v3185 = vsel %vm1852, %v3182, 0.0
    %3186 = vadd.xlane.f32.xlu0 %v3185
    %v3187 = vpop.xlane.xlu0 %3186
    %v3188 = vsel %vm1852, %v3184, 0.0
    %3189 = vadd.xlane.f32.xlu0 %v3188
    %v3190 = vpop.xlane.xlu0 %3189
    %v3191 = vrcp.pop %v3187
    %v3192 = vrcp.pop %v3190
    %v3193 = vmul.f32 %v3182, %v3191
    %v3194 = vmul.f32 %v3184, %v3192
    %v3196 = vsel %vm1852, %v3193, 0
    %3198 = vmatprep.subr.mxu0 0.0
    %3199 = vmatpush1.msra.mxu0 %v1671
    %3200 = vmatprep.subr.mxu0 0.0
    %3201 = vmatpush1.msra.mxu0 0.0
    %3202 = vmatprep.subr.mxu0 0.0
    %3203 = vmatpush1.msra.mxu0 0.0
    %3204 = vmatprep.subr.mxu0 0.0
    %3205 = vmatpush1.msra.mxu0 0.0
    %3206 = vmatprep.subr.mxu0 0.0
    %3207 = vmatpush1.msra.mxu0 0.0
    %3208 = vmatprep.subr.mxu0 0.0
    %3209 = vmatpush1.msra.mxu0 0.0
    %3210 = vmatprep.subr.mxu0 0.0
    %3211 = vmatpush1.msra.mxu0 0.0
    %3212 = vmatprep.subr.mxu0 0.0
    %3213 = vmatpush1.msra.mxu0 0.0
    %3214 = vmatprep.subr.mxu0 0.0
    %3215 = vmatpush1.msra.mxu0 0.0
    %3216 = vmatprep.subr.mxu0 0.0
    %3217 = vmatpush1.msra.mxu0 0.0
    %3218 = vmatprep.subr.mxu0 0.0
    %3219 = vmatpush1.msra.mxu0 0.0
    %3220 = vmatprep.subr.mxu0 0.0
    %3221 = vmatpush1.msra.mxu0 0.0
    %3222 = vmatprep.subr.mxu0 0.0
    %3223 = vmatpush1.msra.mxu0 0.0
    %3224 = vmatprep.subr.mxu0 0.0
    %3225 = vmatpush1.msra.mxu0 0.0
    %3226 = vmatprep.subr.mxu0 0.0
    %3227 = vmatpush1.msra.mxu0 0.0
    %3228 = vmatprep.subr.mxu0 0.0
    %3229 = vmatpush1.msra.mxu0 0.0
    %3230 = vmatprep.subr.mxu0 0.0
    %3231 = vmatpush1.msra.mxu0 0.0
    %3232 = vmatprep.subr.mxu0 0.0
    %3233 = vmatpush1.msra.mxu0 0.0
    %3234 = vmatprep.subr.mxu0 0.0
    %3235 = vmatpush1.msra.mxu0 0.0
    %3236 = vmatprep.subr.mxu0 0.0
    %3237 = vmatpush1.msra.mxu0 0.0
    %3238 = vmatprep.subr.mxu0 0.0
    %3239 = vmatpush1.msra.mxu0 0.0
    %3240 = vmatprep.subr.mxu0 0.0
    %3241 = vmatpush1.msra.mxu0 0.0
    %3242 = vmatprep.subr.mxu0 0.0
    %3243 = vmatpush1.msra.mxu0 0.0
    %3244 = vmatprep.subr.mxu0 0.0
    %3245 = vmatpush1.msra.mxu0 0.0
    %3246 = vmatprep.subr.mxu0 0.0
    %3247 = vmatpush1.msra.mxu0 0.0
    %3248 = vmatprep.subr.mxu0 0.0
    %3249 = vmatpush1.msra.mxu0 0.0
    %3250 = vmatprep.subr.mxu0 0.0
    %3251 = vmatpush1.msra.mxu0 0.0
    %3252 = vmatprep.subr.mxu0 0.0
    %3253 = vmatpush1.msra.mxu0 0.0
    %3254 = vmatprep.subr.mxu0 0.0
    %3255 = vmatpush1.msra.mxu0 0.0
    %3256 = vmatprep.subr.mxu0 0.0
    %3257 = vmatpush1.msra.mxu0 0.0
    %3258 = vmatprep.subr.mxu0 0.0
    %3259 = vmatpush1.msra.mxu0 0.0
    %3260 = vmatprep.subr.mxu0 0.0
    %3261 = vmatpush1.msra.mxu0 0.0
    %3262 = vmatprep.mubr.f32.mxu0 0.0
    %3263 = vmatmul.mubr.f32.gmra.mrb[0].mxu0 %v3196
    %v3264 = vpop.f32.mrb[0].mxu0
    %v3265 = vadd.f32 0.0, %v3264
    %v3266 = vpop.f32.mrb[0].mxu0
    %3267 = vdwg.mxu0
    %v3269 = vsel %vm1852, %v3194, 0
    %3271 = vmatprep.subr.mxu0 0.0
    %3272 = vmatpush1.msra.mxu0 %v1676
    %3273 = vmatprep.subr.mxu0 0.0
    %3274 = vmatpush1.msra.mxu0 0.0
    %3275 = vmatprep.subr.mxu0 0.0
    %3276 = vmatpush1.msra.mxu0 0.0
    %3277 = vmatprep.subr.mxu0 0.0
    %3278 = vmatpush1.msra.mxu0 0.0
    %3279 = vmatprep.subr.mxu0 0.0
    %3280 = vmatpush1.msra.mxu0 0.0
    %3281 = vmatprep.subr.mxu0 0.0
    %3282 = vmatpush1.msra.mxu0 0.0
    %3283 = vmatprep.subr.mxu0 0.0
    %3284 = vmatpush1.msra.mxu0 0.0
    %3285 = vmatprep.subr.mxu0 0.0
    %3286 = vmatpush1.msra.mxu0 0.0
    %3287 = vmatprep.subr.mxu0 0.0
    %3288 = vmatpush1.msra.mxu0 0.0
    %3289 = vmatprep.subr.mxu0 0.0
    %3290 = vmatpush1.msra.mxu0 0.0
    %3291 = vmatprep.subr.mxu0 0.0
    %3292 = vmatpush1.msra.mxu0 0.0
    %3293 = vmatprep.subr.mxu0 0.0
    %3294 = vmatpush1.msra.mxu0 0.0
    %3295 = vmatprep.subr.mxu0 0.0
    %3296 = vmatpush1.msra.mxu0 0.0
    %3297 = vmatprep.subr.mxu0 0.0
    %3298 = vmatpush1.msra.mxu0 0.0
    %3299 = vmatprep.subr.mxu0 0.0
    %3300 = vmatpush1.msra.mxu0 0.0
    %3301 = vmatprep.subr.mxu0 0.0
    %3302 = vmatpush1.msra.mxu0 0.0
    %3303 = vmatprep.subr.mxu0 0.0
    %3304 = vmatpush1.msra.mxu0 0.0
    %3305 = vmatprep.subr.mxu0 0.0
    %3306 = vmatpush1.msra.mxu0 0.0
    %3307 = vmatprep.subr.mxu0 0.0
    %3308 = vmatpush1.msra.mxu0 0.0
    %3309 = vmatprep.subr.mxu0 0.0
    %3310 = vmatpush1.msra.mxu0 0.0
    %3311 = vmatprep.subr.mxu0 0.0
    %3312 = vmatpush1.msra.mxu0 0.0
    %3313 = vmatprep.subr.mxu0 0.0
    %3314 = vmatpush1.msra.mxu0 0.0
    %3315 = vmatprep.subr.mxu0 0.0
    %3316 = vmatpush1.msra.mxu0 0.0
    %3317 = vmatprep.subr.mxu0 0.0
    %3318 = vmatpush1.msra.mxu0 0.0
    %3319 = vmatprep.subr.mxu0 0.0
    %3320 = vmatpush1.msra.mxu0 0.0
    %3321 = vmatprep.subr.mxu0 0.0
    %3322 = vmatpush1.msra.mxu0 0.0
    %3323 = vmatprep.subr.mxu0 0.0
    %3324 = vmatpush1.msra.mxu0 0.0
    %3325 = vmatprep.subr.mxu0 0.0
    %3326 = vmatpush1.msra.mxu0 0.0
    %3327 = vmatprep.subr.mxu0 0.0
    %3328 = vmatpush1.msra.mxu0 0.0
    %3329 = vmatprep.subr.mxu0 0.0
    %3330 = vmatpush1.msra.mxu0 0.0
    %3331 = vmatprep.subr.mxu0 0.0
    %3332 = vmatpush1.msra.mxu0 0.0
    %3333 = vmatprep.subr.mxu0 0.0
    %3334 = vmatpush1.msra.mxu0 0.0
    %3335 = vmatprep.mubr.f32.mxu0 0.0
    %3336 = vmatmul.mubr.f32.gmra.mrb[0].mxu0 %v3269
    %v3337 = vpop.f32.mrb[0].mxu0
    %v3338 = vadd.f32 0.0, %v3337
    %v3339 = vpop.f32.mrb[0].mxu0
    %3340 = vdwg.mxu0
    %3341 = vrot.lane.b32.xlu0 %v775, 64
    %v3342 = vpop.permute.xlu0 %3341
    %3343 = vrot.lane.b32.xlu0 %v1223, 64
    %v3344 = vpop.permute.xlu0 %3343
    %v3345 = vsel %vm1683, %v3342, 0
    %v3347 = vsel %vm1683, %v3344, 0
    %3349 = vmatprep.subr.mxu0 0.0
    %3350 = vmatpush1.xpose.msra.mxu0 %v3347
    %3351 = vmatprep.subr.mxu0 0.0
    %3352 = vmatpush1.xpose.msra.mxu0 0.0
    %3353 = vmatprep.subr.mxu0 0.0
    %3354 = vmatpush1.xpose.msra.mxu0 0.0
    %3355 = vmatprep.subr.mxu0 0.0
    %3356 = vmatpush1.xpose.msra.mxu0 0.0
    %3357 = vmatprep.subr.mxu0 0.0
    %3358 = vmatpush1.xpose.msra.mxu0 0.0
    %3359 = vmatprep.subr.mxu0 0.0
    %3360 = vmatpush1.xpose.msra.mxu0 0.0
    %3361 = vmatprep.subr.mxu0 0.0
    %3362 = vmatpush1.xpose.msra.mxu0 0.0
    %3363 = vmatprep.subr.mxu0 0.0
    %3364 = vmatpush1.xpose.msra.mxu0 0.0
    %3365 = vmatprep.subr.mxu0 0.0
    %3366 = vmatpush1.xpose.msra.mxu0 0.0
    %3367 = vmatprep.subr.mxu0 0.0
    %3368 = vmatpush1.xpose.msra.mxu0 0.0
    %3369 = vmatprep.subr.mxu0 0.0
    %3370 = vmatpush1.xpose.msra.mxu0 0.0
    %3371 = vmatprep.subr.mxu0 0.0
    %3372 = vmatpush1.xpose.msra.mxu0 0.0
    %3373 = vmatprep.subr.mxu0 0.0
    %3374 = vmatpush1.xpose.msra.mxu0 0.0
    %3375 = vmatprep.subr.mxu0 0.0
    %3376 = vmatpush1.xpose.msra.mxu0 0.0
    %3377 = vmatprep.subr.mxu0 0.0
    %3378 = vmatpush1.xpose.msra.mxu0 0.0
    %3379 = vmatprep.subr.mxu0 0.0
    %3380 = vmatpush1.xpose.msra.mxu0 0.0
    %3381 = vmatprep.subr.mxu0 0.0
    %3382 = vmatpush1.xpose.msra.mxu0 0.0
    %3383 = vmatprep.subr.mxu0 0.0
    %3384 = vmatpush1.xpose.msra.mxu0 0.0
    %3385 = vmatprep.subr.mxu0 0.0
    %3386 = vmatpush1.xpose.msra.mxu0 0.0
    %3387 = vmatprep.subr.mxu0 0.0
    %3388 = vmatpush1.xpose.msra.mxu0 0.0
    %3389 = vmatprep.subr.mxu0 0.0
    %3390 = vmatpush1.xpose.msra.mxu0 0.0
    %3391 = vmatprep.subr.mxu0 0.0
    %3392 = vmatpush1.xpose.msra.mxu0 0.0
    %3393 = vmatprep.subr.mxu0 0.0
    %3394 = vmatpush1.xpose.msra.mxu0 0.0
    %3395 = vmatprep.subr.mxu0 0.0
    %3396 = vmatpush1.xpose.msra.mxu0 0.0
    %3397 = vmatprep.subr.mxu0 0.0
    %3398 = vmatpush1.xpose.msra.mxu0 0.0
    %3399 = vmatprep.subr.mxu0 0.0
    %3400 = vmatpush1.xpose.msra.mxu0 0.0
    %3401 = vmatprep.subr.mxu0 0.0
    %3402 = vmatpush1.xpose.msra.mxu0 0.0
    %3403 = vmatprep.subr.mxu0 0.0
    %3404 = vmatpush1.xpose.msra.mxu0 0.0
    %3405 = vmatprep.subr.mxu0 0.0
    %3406 = vmatpush1.xpose.msra.mxu0 0.0
    %3407 = vmatprep.subr.mxu0 0.0
    %3408 = vmatpush1.xpose.msra.mxu0 0.0
    %3409 = vmatprep.subr.mxu0 0.0
    %3410 = vmatpush1.xpose.msra.mxu0 0.0
    %3411 = vmatprep.subr.mxu0 0.0
    %3412 = vmatpush1.xpose.msra.mxu0 0.0
    %3413 = vmatprep.mubr.f32.mxu0 0.0
    %3414 = vmatmul.mubr.f32.gmra.mrb[0].mxu0 %v3345
    %v3415 = vpop.f32.mrb[0].mxu0
    %v3416 = vadd.f32 0.0, %v3415
    %v3417 = vpop.f32.mrb[0].mxu0
    %3418 = vdwg.mxu0
    %3419 = vrot.lane.b32.xlu0 %v780, 64
    %v3420 = vpop.permute.xlu0 %3419
    %3421 = vrot.lane.b32.xlu0 %v1228, 64
    %v3422 = vpop.permute.xlu0 %3421
    %v3423 = vsel %vm1683, %v3420, 0
    %v3425 = vsel %vm1683, %v3422, 0
    %3427 = vmatprep.subr.mxu0 0.0
    %3428 = vmatpush1.xpose.msra.mxu0 %v3425
    %3429 = vmatprep.subr.mxu0 0.0
    %3430 = vmatpush1.xpose.msra.mxu0 0.0
    %3431 = vmatprep.subr.mxu0 0.0
    %3432 = vmatpush1.xpose.msra.mxu0 0.0
    %3433 = vmatprep.subr.mxu0 0.0
    %3434 = vmatpush1.xpose.msra.mxu0 0.0
    %3435 = vmatprep.subr.mxu0 0.0
    %3436 = vmatpush1.xpose.msra.mxu0 0.0
    %3437 = vmatprep.subr.mxu0 0.0
    %3438 = vmatpush1.xpose.msra.mxu0 0.0
    %3439 = vmatprep.subr.mxu0 0.0
    %3440 = vmatpush1.xpose.msra.mxu0 0.0
    %3441 = vmatprep.subr.mxu0 0.0
    %3442 = vmatpush1.xpose.msra.mxu0 0.0
    %3443 = vmatprep.subr.mxu0 0.0
    %3444 = vmatpush1.xpose.msra.mxu0 0.0
    %3445 = vmatprep.subr.mxu0 0.0
    %3446 = vmatpush1.xpose.msra.mxu0 0.0
    %3447 = vmatprep.subr.mxu0 0.0
    %3448 = vmatpush1.xpose.msra.mxu0 0.0
    %3449 = vmatprep.subr.mxu0 0.0
    %3450 = vmatpush1.xpose.msra.mxu0 0.0
    %3451 = vmatprep.subr.mxu0 0.0
    %3452 = vmatpush1.xpose.msra.mxu0 0.0
    %3453 = vmatprep.subr.mxu0 0.0
    %3454 = vmatpush1.xpose.msra.mxu0 0.0
    %3455 = vmatprep.subr.mxu0 0.0
    %3456 = vmatpush1.xpose.msra.mxu0 0.0
    %3457 = vmatprep.subr.mxu0 0.0
    %3458 = vmatpush1.xpose.msra.mxu0 0.0
    %3459 = vmatprep.subr.mxu0 0.0
    %3460 = vmatpush1.xpose.msra.mxu0 0.0
    %3461 = vmatprep.subr.mxu0 0.0
    %3462 = vmatpush1.xpose.msra.mxu0 0.0
    %3463 = vmatprep.subr.mxu0 0.0
    %3464 = vmatpush1.xpose.msra.mxu0 0.0
    %3465 = vmatprep.subr.mxu0 0.0
    %3466 = vmatpush1.xpose.msra.mxu0 0.0
    %3467 = vmatprep.subr.mxu0 0.0
    %3468 = vmatpush1.xpose.msra.mxu0 0.0
    %3469 = vmatprep.subr.mxu0 0.0
    %3470 = vmatpush1.xpose.msra.mxu0 0.0
    %3471 = vmatprep.subr.mxu0 0.0
    %3472 = vmatpush1.xpose.msra.mxu0 0.0
    %3473 = vmatprep.subr.mxu0 0.0
    %3474 = vmatpush1.xpose.msra.mxu0 0.0
    %3475 = vmatprep.subr.mxu0 0.0
    %3476 = vmatpush1.xpose.msra.mxu0 0.0
    %3477 = vmatprep.subr.mxu0 0.0
    %3478 = vmatpush1.xpose.msra.mxu0 0.0
    %3479 = vmatprep.subr.mxu0 0.0
    %3480 = vmatpush1.xpose.msra.mxu0 0.0
    %3481 = vmatprep.subr.mxu0 0.0
    %3482 = vmatpush1.xpose.msra.mxu0 0.0
    %3483 = vmatprep.subr.mxu0 0.0
    %3484 = vmatpush1.xpose.msra.mxu0 0.0
    %3485 = vmatprep.subr.mxu0 0.0
    %3486 = vmatpush1.xpose.msra.mxu0 0.0
    %3487 = vmatprep.subr.mxu0 0.0
    %3488 = vmatpush1.xpose.msra.mxu0 0.0
    %3489 = vmatprep.subr.mxu0 0.0
    %3490 = vmatpush1.xpose.msra.mxu0 0.0
    %3491 = vmatprep.mubr.f32.mxu0 0.0
    %3492 = vmatmul.mubr.f32.gmra.mrb[0].mxu0 %v3423
    %v3493 = vpop.f32.mrb[0].mxu0
    %v3494 = vadd.f32 0.0, %v3493
    %v3495 = vpop.f32.mrb[0].mxu0
    %3496 = vdwg.mxu0
    %v3497 = vmul.f32 %v3416, 0.125
    %v3498 = vmul.f32 %v3494, 0.125
    %v3499 = vsel %vm1848, %v3497, -1e+30
    %v3500 = vsel %vm1849, %v3498, -1e+30
    %v3501 = vsel %vm1852, %v3499, -inf
    %3502 = vmax.xlane.f32.xlu0 %v3501
    %v3503 = vpop.xlane.xlu0 %3502
    %v3504 = vsel %vm1852, %v3500, -inf
    %3505 = vmax.xlane.f32.xlu0 %v3504
    %v3506 = vpop.xlane.xlu0 %3505
    %v3507 = vsub.f32 %v3499, %v3503
    %v3508 = vsub.f32 %v3500, %v3506
    %v3509 = vmul.f32 %v3507, 1.442695
    %v3510 = vpow.pop %v3509
    %v3511 = vmul.f32 %v3508, 1.442695
    %v3512 = vpow.pop %v3511
    %v3513 = vsel %vm1852, %v3510, 0.0
    %3514 = vadd.xlane.f32.xlu0 %v3513
    %v3515 = vpop.xlane.xlu0 %3514
    %v3516 = vsel %vm1852, %v3512, 0.0
    %3517 = vadd.xlane.f32.xlu0 %v3516
    %v3518 = vpop.xlane.xlu0 %3517
    %v3519 = vrcp.pop %v3515
    %v3520 = vrcp.pop %v3518
    %v3521 = vmul.f32 %v3510, %v3519
    %v3522 = vmul.f32 %v3512, %v3520
    %3524 = vrot.lane.b32.xlu0 %v1671, 64
    %v3525 = vpop.permute.xlu0 %3524
    %v3528 = vsel %vm1852, %v3521, 0
    %3530 = vmatprep.subr.mxu0 0.0
    %3531 = vmatpush1.msra.mxu0 %v3525
    %3532 = vmatprep.subr.mxu0 0.0
    %3533 = vmatpush1.msra.mxu0 0.0
    %3534 = vmatprep.subr.mxu0 0.0
    %3535 = vmatpush1.msra.mxu0 0.0
    %3536 = vmatprep.subr.mxu0 0.0
    %3537 = vmatpush1.msra.mxu0 0.0
    %3538 = vmatprep.subr.mxu0 0.0
    %3539 = vmatpush1.msra.mxu0 0.0
    %3540 = vmatprep.subr.mxu0 0.0
    %3541 = vmatpush1.msra.mxu0 0.0
    %3542 = vmatprep.subr.mxu0 0.0
    %3543 = vmatpush1.msra.mxu0 0.0
    %3544 = vmatprep.subr.mxu0 0.0
    %3545 = vmatpush1.msra.mxu0 0.0
    %3546 = vmatprep.subr.mxu0 0.0
    %3547 = vmatpush1.msra.mxu0 0.0
    %3548 = vmatprep.subr.mxu0 0.0
    %3549 = vmatpush1.msra.mxu0 0.0
    %3550 = vmatprep.subr.mxu0 0.0
    %3551 = vmatpush1.msra.mxu0 0.0
    %3552 = vmatprep.subr.mxu0 0.0
    %3553 = vmatpush1.msra.mxu0 0.0
    %3554 = vmatprep.subr.mxu0 0.0
    %3555 = vmatpush1.msra.mxu0 0.0
    %3556 = vmatprep.subr.mxu0 0.0
    %3557 = vmatpush1.msra.mxu0 0.0
    %3558 = vmatprep.subr.mxu0 0.0
    %3559 = vmatpush1.msra.mxu0 0.0
    %3560 = vmatprep.subr.mxu0 0.0
    %3561 = vmatpush1.msra.mxu0 0.0
    %3562 = vmatprep.subr.mxu0 0.0
    %3563 = vmatpush1.msra.mxu0 0.0
    %3564 = vmatprep.subr.mxu0 0.0
    %3565 = vmatpush1.msra.mxu0 0.0
    %3566 = vmatprep.subr.mxu0 0.0
    %3567 = vmatpush1.msra.mxu0 0.0
    %3568 = vmatprep.subr.mxu0 0.0
    %3569 = vmatpush1.msra.mxu0 0.0
    %3570 = vmatprep.subr.mxu0 0.0
    %3571 = vmatpush1.msra.mxu0 0.0
    %3572 = vmatprep.subr.mxu0 0.0
    %3573 = vmatpush1.msra.mxu0 0.0
    %3574 = vmatprep.subr.mxu0 0.0
    %3575 = vmatpush1.msra.mxu0 0.0
    %3576 = vmatprep.subr.mxu0 0.0
    %3577 = vmatpush1.msra.mxu0 0.0
    %3578 = vmatprep.subr.mxu0 0.0
    %3579 = vmatpush1.msra.mxu0 0.0
    %3580 = vmatprep.subr.mxu0 0.0
    %3581 = vmatpush1.msra.mxu0 0.0
    %3582 = vmatprep.subr.mxu0 0.0
    %3583 = vmatpush1.msra.mxu0 0.0
    %3584 = vmatprep.subr.mxu0 0.0
    %3585 = vmatpush1.msra.mxu0 0.0
    %3586 = vmatprep.subr.mxu0 0.0
    %3587 = vmatpush1.msra.mxu0 0.0
    %3588 = vmatprep.subr.mxu0 0.0
    %3589 = vmatpush1.msra.mxu0 0.0
    %3590 = vmatprep.subr.mxu0 0.0
    %3591 = vmatpush1.msra.mxu0 0.0
    %3592 = vmatprep.subr.mxu0 0.0
    %3593 = vmatpush1.msra.mxu0 0.0
    %3594 = vmatprep.mubr.f32.mxu0 0.0
    %3595 = vmatmul.mubr.f32.gmra.mrb[0].mxu0 %v3528
    %v3596 = vpop.f32.mrb[0].mxu0
    %v3597 = vadd.f32 0.0, %v3596
    %v3598 = vpop.f32.mrb[0].mxu0
    %3599 = vdwg.mxu0
    %3601 = vrot.lane.b32.xlu0 %v1676, 64
    %v3602 = vpop.permute.xlu0 %3601
    %v3605 = vsel %vm1852, %v3522, 0
    %3607 = vmatprep.subr.mxu0 0.0
    %3608 = vmatpush1.msra.mxu0 %v3602
    %3609 = vmatprep.subr.mxu0 0.0
    %3610 = vmatpush1.msra.mxu0 0.0
    %3611 = vmatprep.subr.mxu0 0.0
    %3612 = vmatpush1.msra.mxu0 0.0
    %3613 = vmatprep.subr.mxu0 0.0
    %3614 = vmatpush1.msra.mxu0 0.0
    %3615 = vmatprep.subr.mxu0 0.0
    %3616 = vmatpush1.msra.mxu0 0.0
    %3617 = vmatprep.subr.mxu0 0.0
    %3618 = vmatpush1.msra.mxu0 0.0
    %3619 = vmatprep.subr.mxu0 0.0
    %3620 = vmatpush1.msra.mxu0 0.0
    %3621 = vmatprep.subr.mxu0 0.0
    %3622 = vmatpush1.msra.mxu0 0.0
    %3623 = vmatprep.subr.mxu0 0.0
    %3624 = vmatpush1.msra.mxu0 0.0
    %3625 = vmatprep.subr.mxu0 0.0
    %3626 = vmatpush1.msra.mxu0 0.0
    %3627 = vmatprep.subr.mxu0 0.0
    %3628 = vmatpush1.msra.mxu0 0.0
    %3629 = vmatprep.subr.mxu0 0.0
    %3630 = vmatpush1.msra.mxu0 0.0
    %3631 = vmatprep.subr.mxu0 0.0
    %3632 = vmatpush1.msra.mxu0 0.0
    %3633 = vmatprep.subr.mxu0 0.0
    %3634 = vmatpush1.msra.mxu0 0.0
    %3635 = vmatprep.subr.mxu0 0.0
    %3636 = vmatpush1.msra.mxu0 0.0
    %3637 = vmatprep.subr.mxu0 0.0
    %3638 = vmatpush1.msra.mxu0 0.0
    %3639 = vmatprep.subr.mxu0 0.0
    %3640 = vmatpush1.msra.mxu0 0.0
    %3641 = vmatprep.subr.mxu0 0.0
    %3642 = vmatpush1.msra.mxu0 0.0
    %3643 = vmatprep.subr.mxu0 0.0
    %3644 = vmatpush1.msra.mxu0 0.0
    %3645 = vmatprep.subr.mxu0 0.0
    %3646 = vmatpush1.msra.mxu0 0.0
    %3647 = vmatprep.subr.mxu0 0.0
    %3648 = vmatpush1.msra.mxu0 0.0
    %3649 = vmatprep.subr.mxu0 0.0
    %3650 = vmatpush1.msra.mxu0 0.0
    %3651 = vmatprep.subr.mxu0 0.0
    %3652 = vmatpush1.msra.mxu0 0.0
    %3653 = vmatprep.subr.mxu0 0.0
    %3654 = vmatpush1.msra.mxu0 0.0
    %3655 = vmatprep.subr.mxu0 0.0
    %3656 = vmatpush1.msra.mxu0 0.0
    %3657 = vmatprep.subr.mxu0 0.0
    %3658 = vmatpush1.msra.mxu0 0.0
    %3659 = vmatprep.subr.mxu0 0.0
    %3660 = vmatpush1.msra.mxu0 0.0
    %3661 = vmatprep.subr.mxu0 0.0
    %3662 = vmatpush1.msra.mxu0 0.0
    %3663 = vmatprep.subr.mxu0 0.0
    %3664 = vmatpush1.msra.mxu0 0.0
    %3665 = vmatprep.subr.mxu0 0.0
    %3666 = vmatpush1.msra.mxu0 0.0
    %3667 = vmatprep.subr.mxu0 0.0
    %3668 = vmatpush1.msra.mxu0 0.0
    %3669 = vmatprep.subr.mxu0 0.0
    %3670 = vmatpush1.msra.mxu0 0.0
    %3671 = vmatprep.mubr.f32.mxu0 0.0
    %3672 = vmatmul.mubr.f32.gmra.mrb[0].mxu0 %v3605
    %v3673 = vpop.f32.mrb[0].mxu0
    %v3674 = vadd.f32 0.0, %v3673
    %v3675 = vpop.f32.mrb[0].mxu0
    %3676 = vdwg.mxu0
    %3679 = vrot.lane.b32.xlu0 %v2277, 64
    %v3680 = vpop.permute.xlu0 %3679
    %3681 = vrot.lane.b32.xlu0 %v2354, 64
    %v3682 = vpop.permute.xlu0 %3681
    %3687 = vrot.lane.b32.xlu0 %v2937, 64
    %v3688 = vpop.permute.xlu0 %3687
    %3689 = vrot.lane.b32.xlu0 %v3014, 64
    %v3690 = vpop.permute.xlu0 %3689
    %3695 = vrot.lane.b32.xlu0 %v3597, 64
    %v3696 = vpop.permute.xlu0 %3695
    %3697 = vrot.lane.b32.xlu0 %v3674, 64
    %v3698 = vpop.permute.xlu0 %3697
    %v3701 = vsel %vm1683, %v1945, %v3680
    %v3702 = vsel %vm1683, %v2018, %v3682
    %v3703 = vsel %vm1683, %v2605, %v3688
    %v3704 = vsel %vm1683, %v2678, %v3690
    %v3705 = vsel %vm1683, %v3265, %v3696
    %v3706 = vsel %vm1683, %v3338, %v3698
    %v3707 = vld [vmem:[#allocation14] sm:$0xff]
    %v3708 = vld [vmem:[#allocation14 + $0x8] sm:$0xff]
    %v3709 = vld [vmem:[#allocation14 + $0x10] sm:$0xff]
    %v3710 = vld [vmem:[#allocation14 + $0x18] sm:$0xff]
    %v3711 = vld [vmem:[#allocation14 + $0x20] sm:$0xff]
    %v3712 = vld [vmem:[#allocation14 + $0x28] sm:$0xff]
    %v3713 = vld [vmem:[#allocation14 + $0x30] sm:$0xff]
    %v3714 = vld [vmem:[#allocation14 + $0x38] sm:$0xff]
    %v3715 = vld [vmem:[#allocation14 + $0x40] sm:$0xff]
    %v3716 = vld [vmem:[#allocation14 + $0x48] sm:$0xff]
    %v3717 = vld [vmem:[#allocation14 + $0x50] sm:$0xff]
    %v3718 = vld [vmem:[#allocation14 + $0x58] sm:$0xff]
    %v3719 = vld [vmem:[#allocation14 + $0x60] sm:$0xff]
    %v3720 = vld [vmem:[#allocation14 + $0x68] sm:$0xff]
    %v3721 = vld [vmem:[#allocation14 + $0x70] sm:$0xff]
    %v3722 = vld [vmem:[#allocation14 + $0x78] sm:$0xff]
    %v3723 = vld [vmem:[#allocation14 + $0x80] sm:$0xff]
    %v3724 = vld [vmem:[#allocation14 + $0x88] sm:$0xff]
    %v3725 = vld [vmem:[#allocation14 + $0x90] sm:$0xff]
    %v3726 = vld [vmem:[#allocation14 + $0x98] sm:$0xff]
    %v3727 = vld [vmem:[#allocation14 + $0xa0] sm:$0xff]
    %v3728 = vld [vmem:[#allocation14 + $0xa8] sm:$0xff]
    %v3729 = vld [vmem:[#allocation14 + $0xb0] sm:$0xff]
    %v3730 = vld [vmem:[#allocation14 + $0xb8] sm:$0xff]
    %v3731 = vld [vmem:[#allocation14 + $0xc0] sm:$0xff]
    %v3732 = vld [vmem:[#allocation14 + $0xc8] sm:$0xff]
    %v3733 = vld [vmem:[#allocation14 + $0xd0] sm:$0xff]
    %v3734 = vld [vmem:[#allocation14 + $0xd8] sm:$0xff]
    %v3735 = vld [vmem:[#allocation14 + $0xe0] sm:$0xff]
    %v3736 = vld [vmem:[#allocation14 + $0xe8] sm:$0xff]
    %v3737 = vld [vmem:[#allocation14 + $0xf0] sm:$0xff]
    %v3738 = vld [vmem:[#allocation14 + $0xf8] sm:$0xff]
    %v3739 = vld [vmem:[#allocation14 + $0x100] sm:$0xff]
    %v3740 = vld [vmem:[#allocation14 + $0x108] sm:$0xff]
    %v3741 = vld [vmem:[#allocation14 + $0x110] sm:$0xff]
    %v3742 = vld [vmem:[#allocation14 + $0x118] sm:$0xff]
    %v3743 = vld [vmem:[#allocation14 + $0x120] sm:$0xff]
    %v3744 = vld [vmem:[#allocation14 + $0x128] sm:$0xff]
    %v3745 = vld [vmem:[#allocation14 + $0x130] sm:$0xff]
    %v3746 = vld [vmem:[#allocation14 + $0x138] sm:$0xff]
    %v3747 = vld [vmem:[#allocation14 + $0x140] sm:$0xff]
    %v3748 = vld [vmem:[#allocation14 + $0x148] sm:$0xff]
    %v3749 = vld [vmem:[#allocation14 + $0x150] sm:$0xff]
    %v3750 = vld [vmem:[#allocation14 + $0x158] sm:$0xff]
    %v3751 = vld [vmem:[#allocation14 + $0x160] sm:$0xff]
    %v3752 = vld [vmem:[#allocation14 + $0x168] sm:$0xff]
    %v3753 = vld [vmem:[#allocation14 + $0x170] sm:$0xff]
    %v3754 = vld [vmem:[#allocation14 + $0x178] sm:$0xff]
    %v3755 = vld [vmem:[#allocation14 + $0x180] sm:$0xff]
    %v3756 = vld [vmem:[#allocation14 + $0x188] sm:$0xff]
    %v3757 = vld [vmem:[#allocation14 + $0x190] sm:$0xff]
    %v3758 = vld [vmem:[#allocation14 + $0x198] sm:$0xff]
    %v3759 = vld [vmem:[#allocation14 + $0x1a0] sm:$0xff]
    %v3760 = vld [vmem:[#allocation14 + $0x1a8] sm:$0xff]
    %v3761 = vld [vmem:[#allocation14 + $0x1b0] sm:$0xff]
    %v3762 = vld [vmem:[#allocation14 + $0x1b8] sm:$0xff]
    %v3763 = vld [vmem:[#allocation14 + $0x1c0] sm:$0xff]
    %v3764 = vld [vmem:[#allocation14 + $0x1c8] sm:$0xff]
    %v3765 = vld [vmem:[#allocation14 + $0x1d0] sm:$0xff]
    %v3766 = vld [vmem:[#allocation14 + $0x1d8] sm:$0xff]
    %v3767 = vld [vmem:[#allocation14 + $0x1e0] sm:$0xff]
    %v3768 = vld [vmem:[#allocation14 + $0x1e8] sm:$0xff]
    %v3769 = vld [vmem:[#allocation14 + $0x1f0] sm:$0xff]
    %v3770 = vld [vmem:[#allocation14 + $0x1f8] sm:$0xff]
    %v3771 = vld [vmem:[#allocation14 + $0x200] sm:$0xff]
    %v3772 = vld [vmem:[#allocation14 + $0x208] sm:$0xff]
    %v3773 = vld [vmem:[#allocation14 + $0x210] sm:$0xff]
    %v3774 = vld [vmem:[#allocation14 + $0x218] sm:$0xff]
    %v3775 = vld [vmem:[#allocation14 + $0x220] sm:$0xff]
    %v3776 = vld [vmem:[#allocation14 + $0x228] sm:$0xff]
    %v3777 = vld [vmem:[#allocation14 + $0x230] sm:$0xff]
    %v3778 = vld [vmem:[#allocation14 + $0x238] sm:$0xff]
    %v3779 = vld [vmem:[#allocation14 + $0x240] sm:$0xff]
    %v3780 = vld [vmem:[#allocation14 + $0x248] sm:$0xff]
    %v3781 = vld [vmem:[#allocation14 + $0x250] sm:$0xff]
    %v3782 = vld [vmem:[#allocation14 + $0x258] sm:$0xff]
    %v3783 = vld [vmem:[#allocation14 + $0x260] sm:$0xff]
    %v3784 = vld [vmem:[#allocation14 + $0x268] sm:$0xff]
    %v3785 = vld [vmem:[#allocation14 + $0x270] sm:$0xff]
    %v3786 = vld [vmem:[#allocation14 + $0x278] sm:$0xff]
    %v3787 = vld [vmem:[#allocation14 + $0x280] sm:$0xff]
    %v3788 = vld [vmem:[#allocation14 + $0x288] sm:$0xff]
    %v3789 = vld [vmem:[#allocation14 + $0x290] sm:$0xff]
    %v3790 = vld [vmem:[#allocation14 + $0x298] sm:$0xff]
    %v3791 = vld [vmem:[#allocation14 + $0x2a0] sm:$0xff]
    %v3792 = vld [vmem:[#allocation14 + $0x2a8] sm:$0xff]
    %v3793 = vld [vmem:[#allocation14 + $0x2b0] sm:$0xff]
    %v3794 = vld [vmem:[#allocation14 + $0x2b8] sm:$0xff]
    %v3795 = vld [vmem:[#allocation14 + $0x2c0] sm:$0xff]
    %v3796 = vld [vmem:[#allocation14 + $0x2c8] sm:$0xff]
    %v3797 = vld [vmem:[#allocation14 + $0x2d0] sm:$0xff]
    %v3798 = vld [vmem:[#allocation14 + $0x2d8] sm:$0xff]
    %v3799 = vld [vmem:[#allocation14 + $0x2e0] sm:$0xff]
    %v3800 = vld [vmem:[#allocation14 + $0x2e8] sm:$0xff]
    %v3801 = vld [vmem:[#allocation14 + $0x2f0] sm:$0xff]
    %v3802 = vld [vmem:[#allocation14 + $0x2f8] sm:$0xff]
    %v3803 = vld [vmem:[#allocation14 + $0x300] sm:$0xff]
    %v3804 = vld [vmem:[#allocation14 + $0x308] sm:$0xff]
    %v3805 = vld [vmem:[#allocation14 + $0x310] sm:$0xff]
    %v3806 = vld [vmem:[#allocation14 + $0x318] sm:$0xff]
    %v3807 = vld [vmem:[#allocation14 + $0x320] sm:$0xff]
    %v3808 = vld [vmem:[#allocation14 + $0x328] sm:$0xff]
    %v3809 = vld [vmem:[#allocation14 + $0x330] sm:$0xff]
    %v3810 = vld [vmem:[#allocation14 + $0x338] sm:$0xff]
    %v3811 = vld [vmem:[#allocation14 + $0x340] sm:$0xff]
    %v3812 = vld [vmem:[#allocation14 + $0x348] sm:$0xff]
    %v3813 = vld [vmem:[#allocation14 + $0x350] sm:$0xff]
    %v3814 = vld [vmem:[#allocation14 + $0x358] sm:$0xff]
    %v3815 = vld [vmem:[#allocation14 + $0x360] sm:$0xff]
    %v3816 = vld [vmem:[#allocation14 + $0x368] sm:$0xff]
    %v3817 = vld [vmem:[#allocation14 + $0x370] sm:$0xff]
    %v3818 = vld [vmem:[#allocation14 + $0x378] sm:$0xff]
    %v3819 = vld [vmem:[#allocation14 + $0x380] sm:$0xff]
    %v3820 = vld [vmem:[#allocation14 + $0x388] sm:$0xff]
    %v3821 = vld [vmem:[#allocation14 + $0x390] sm:$0xff]
    %v3822 = vld [vmem:[#allocation14 + $0x398] sm:$0xff]
    %v3823 = vld [vmem:[#allocation14 + $0x3a0] sm:$0xff]
    %v3824 = vld [vmem:[#allocation14 + $0x3a8] sm:$0xff]
    %v3825 = vld [vmem:[#allocation14 + $0x3b0] sm:$0xff]
    %v3826 = vld [vmem:[#allocation14 + $0x3b8] sm:$0xff]
    %v3827 = vld [vmem:[#allocation14 + $0x3c0] sm:$0xff]
    %v3828 = vld [vmem:[#allocation14 + $0x3c8] sm:$0xff]
    %v3829 = vld [vmem:[#allocation14 + $0x3d0] sm:$0xff]
    %v3830 = vld [vmem:[#allocation14 + $0x3d8] sm:$0xff]
    %v3831 = vld [vmem:[#allocation14 + $0x3e0] sm:$0xff]
    %v3832 = vld [vmem:[#allocation14 + $0x3e8] sm:$0xff]
    %v3833 = vld [vmem:[#allocation14 + $0x3f0] sm:$0xff]
    %v3834 = vld [vmem:[#allocation14 + $0x3f8] sm:$0xff]
    %v3835 = vld [vmem:[#allocation14 + $0x400] sm:$0xff]
    %v3836 = vld [vmem:[#allocation14 + $0x408] sm:$0xff]
    %v3837 = vld [vmem:[#allocation14 + $0x410] sm:$0xff]
    %v3838 = vld [vmem:[#allocation14 + $0x418] sm:$0xff]
    %v3839 = vld [vmem:[#allocation14 + $0x420] sm:$0xff]
    %v3840 = vld [vmem:[#allocation14 + $0x428] sm:$0xff]
    %v3841 = vld [vmem:[#allocation14 + $0x430] sm:$0xff]
    %v3842 = vld [vmem:[#allocation14 + $0x438] sm:$0xff]
    %v3843 = vld [vmem:[#allocation14 + $0x440] sm:$0xff]
    %v3844 = vld [vmem:[#allocation14 + $0x448] sm:$0xff]
    %v3845 = vld [vmem:[#allocation14 + $0x450] sm:$0xff]
    %v3846 = vld [vmem:[#allocation14 + $0x458] sm:$0xff]
    %v3847 = vld [vmem:[#allocation14 + $0x460] sm:$0xff]
    %v3848 = vld [vmem:[#allocation14 + $0x468] sm:$0xff]
    %v3849 = vld [vmem:[#allocation14 + $0x470] sm:$0xff]
    %v3850 = vld [vmem:[#allocation14 + $0x478] sm:$0xff]
    %v3851 = vld [vmem:[#allocation16] sm:$0x7]
    %v3853 = vlaneseq
    %v3854 = vshrl.u32 %v3853, 7
    %v3855 = vsub.s32 0, %v3854
    %v3856 = vrot.slane %v3851, %v3855
    %v3857 = vlaneseq
    %v3858 = vshrl.u32 %v3857, 7
    %v3859 = vsub.s32 1, %v3858
    %v3860 = vrot.slane %v3851, %v3859
    %v3861 = vlaneseq
    %v3862 = vshrl.u32 %v3861, 7
    %v3863 = vsub.s32 2, %v3862
    %v3864 = vrot.slane %v3851, %v3863
    %3868 = vmatprep.subr.mxu0 %v3708
    %3869 = vmatpush1.msra.mxu0 %v3707
    %3870 = vmatprep.subr.mxu0 %v3711
    %3871 = vmatpush1.msra.mxu0 %v3710
    %3872 = vmatprep.subr.mxu0 %v3714
    %3873 = vmatpush1.msra.mxu0 %v3713
    %3874 = vmatprep.subr.mxu0 %v3717
    %3875 = vmatpush1.msra.mxu0 %v3716
    %3876 = vmatprep.subr.mxu0 %v3720
    %3877 = vmatpush1.msra.mxu0 %v3719
    %3878 = vmatprep.subr.mxu0 %v3723
    %3879 = vmatpush1.msra.mxu0 %v3722
    %3880 = vmatprep.subr.mxu0 %v3726
    %3881 = vmatpush1.msra.mxu0 %v3725
    %3882 = vmatprep.subr.mxu0 %v3729
    %3883 = vmatpush1.msra.mxu0 %v3728
    %3884 = vmatprep.subr.mxu0 %v3732
    %3885 = vmatpush1.msra.mxu0 %v3731
    %3886 = vmatprep.subr.mxu0 %v3735
    %3887 = vmatpush1.msra.mxu0 %v3734
    %3888 = vmatprep.subr.mxu0 %v3738
    %3889 = vmatpush1.msra.mxu0 %v3737
    %3890 = vmatprep.subr.mxu0 %v3741
    %3891 = vmatpush1.msra.mxu0 %v3740
    %3892 = vmatprep.subr.mxu0 %v3744
    %3893 = vmatpush1.msra.mxu0 %v3743
    %3894 = vmatprep.subr.mxu0 %v3747
    %3895 = vmatpush1.msra.mxu0 %v3746
    %3896 = vmatprep.subr.mxu0 %v3750
    %3897 = vmatpush1.msra.mxu0 %v3749
    %3898 = vmatprep.subr.mxu0 %v3753
    %3899 = vmatpush1.msra.mxu0 %v3752
    %3900 = vmatprep.subr.mxu0 %v3756
    %3901 = vmatpush1.msra.mxu0 %v3755
    %3902 = vmatprep.subr.mxu0 %v3759
    %3903 = vmatpush1.msra.mxu0 %v3758
    %3904 = vmatprep.subr.mxu0 %v3762
    %3905 = vmatpush1.msra.mxu0 %v3761
    %3906 = vmatprep.subr.mxu0 %v3765
    %3907 = vmatpush1.msra.mxu0 %v3764
    %3908 = vmatprep.subr.mxu0 %v3768
    %3909 = vmatpush1.msra.mxu0 %v3767
    %3910 = vmatprep.subr.mxu0 %v3771
    %3911 = vmatpush1.msra.mxu0 %v3770
    %3912 = vmatprep.subr.mxu0 %v3774
    %3913 = vmatpush1.msra.mxu0 %v3773
    %3914 = vmatprep.subr.mxu0 %v3777
    %3915 = vmatpush1.msra.mxu0 %v3776
    %3916 = vmatprep.subr.mxu0 %v3780
    %3917 = vmatpush1.msra.mxu0 %v3779
    %3918 = vmatprep.subr.mxu0 %v3783
    %3919 = vmatpush1.msra.mxu0 %v3782
    %3920 = vmatprep.subr.mxu0 %v3786
    %3921 = vmatpush1.msra.mxu0 %v3785
    %3922 = vmatprep.subr.mxu0 %v3789
    %3923 = vmatpush1.msra.mxu0 %v3788
    %3924 = vmatprep.subr.mxu0 %v3792
    %3925 = vmatpush1.msra.mxu0 %v3791
    %3926 = vmatprep.subr.mxu0 %v3795
    %3927 = vmatpush1.msra.mxu0 %v3794
    %3928 = vmatprep.subr.mxu0 %v3798
    %3929 = vmatpush1.msra.mxu0 %v3797
    %3930 = vmatprep.subr.mxu0 %v3801
    %3931 = vmatpush1.msra.mxu0 %v3800
    %3932 = vmatprep.mubr.f32.mxu0 %v3703
    %3933 = vmatmul.mubr.f32.gmra.mrb[0].mxu0 %v3701
    %v3934 = vpop.f32.mrb[0].mxu0
    %v3935 = vadd.f32 %v3856, %v3934
    %v3936 = vpop.f32.mrb[0].mxu0
    %v3937 = vadd.f32 %v3860, %v3936
    %3938 = vmatprep.mubr.f32.mxu0 %v3704
    %3939 = vmatmul.mubr.f32.gmra.mrb[0].mxu0 %v3702
    %v3940 = vpop.f32.mrb[0].mxu0
    %v3941 = vadd.f32 %v3856, %v3940
    %v3942 = vpop.f32.mrb[0].mxu0
    %v3943 = vadd.f32 %v3860, %v3942
    %3944 = vdwg.mxu0
    %3945 = vmatprep.subr.mxu0 %v3804
    %3946 = vmatpush1.msra.mxu0 %v3803
    %3947 = vmatprep.subr.mxu0 %v3807
    %3948 = vmatpush1.msra.mxu0 %v3806
    %3949 = vmatprep.subr.mxu0 %v3810
    %3950 = vmatpush1.msra.mxu0 %v3809
    %3951 = vmatprep.subr.mxu0 %v3813
    %3952 = vmatpush1.msra.mxu0 %v3812
    %3953 = vmatprep.subr.mxu0 %v3816
    %3954 = vmatpush1.msra.mxu0 %v3815
    %3955 = vmatprep.subr.mxu0 %v3819
    %3956 = vmatpush1.msra.mxu0 %v3818
    %3957 = vmatprep.subr.mxu0 %v3822
    %3958 = vmatpush1.msra.mxu0 %v3821
    %3959 = vmatprep.subr.mxu0 %v3825
    %3960 = vmatpush1.msra.mxu0 %v3824
    %3961 = vmatprep.subr.mxu0 %v3828
    %3962 = vmatpush1.msra.mxu0 %v3827
    %3963 = vmatprep.subr.mxu0 %v3831
    %3964 = vmatpush1.msra.mxu0 %v3830
    %3965 = vmatprep.subr.mxu0 %v3834
    %3966 = vmatpush1.msra.mxu0 %v3833
    %3967 = vmatprep.subr.mxu0 %v3837
    %3968 = vmatpush1.msra.mxu0 %v3836
    %3969 = vmatprep.subr.mxu0 %v3840
    %3970 = vmatpush1.msra.mxu0 %v3839
    %3971 = vmatprep.subr.mxu0 %v3843
    %3972 = vmatpush1.msra.mxu0 %v3842
    %3973 = vmatprep.subr.mxu0 %v3846
    %3974 = vmatpush1.msra.mxu0 %v3845
    %3975 = vmatprep.subr.mxu0 %v3849
    %3976 = vmatpush1.msra.mxu0 %v3848
    %3977 = vmatprep.subr.mxu0 0.0
    %3978 = vmatpush1.msra.mxu0 0.0
    %3979 = vmatprep.subr.mxu0 0.0
    %3980 = vmatpush1.msra.mxu0 0.0
    %3981 = vmatprep.subr.mxu0 0.0
    %3982 = vmatpush1.msra.mxu0 0.0
    %3983 = vmatprep.subr.mxu0 0.0
    %3984 = vmatpush1.msra.mxu0 0.0
    %3985 = vmatprep.subr.mxu0 0.0
    %3986 = vmatpush1.msra.mxu0 0.0
    %3987 = vmatprep.subr.mxu0 0.0
    %3988 = vmatpush1.msra.mxu0 0.0
    %3989 = vmatprep.subr.mxu0 0.0
    %3990 = vmatpush1.msra.mxu0 0.0
    %3991 = vmatprep.subr.mxu0 0.0
    %3992 = vmatpush1.msra.mxu0 0.0
    %3993 = vmatprep.subr.mxu0 0.0
    %3994 = vmatpush1.msra.mxu0 0.0
    %3995 = vmatprep.subr.mxu0 0.0
    %3996 = vmatpush1.msra.mxu0 0.0
    %3997 = vmatprep.subr.mxu0 0.0
    %3998 = vmatpush1.msra.mxu0 0.0
    %3999 = vmatprep.subr.mxu0 0.0
    %4000 = vmatpush1.msra.mxu0 0.0
    %4001 = vmatprep.subr.mxu0 0.0
    %4002 = vmatpush1.msra.mxu0 0.0
    %4003 = vmatprep.subr.mxu0 0.0
    %4004 = vmatpush1.msra.mxu0 0.0
    %4005 = vmatprep.subr.mxu0 0.0
    %4006 = vmatpush1.msra.mxu0 0.0
    %4007 = vmatprep.subr.mxu0 0.0
    %4008 = vmatpush1.msra.mxu0 0.0
    %4009 = vmatprep.mubr.f32.mxu0 0.0
    %4010 = vmatmul.mubr.f32.gmra.mrb[0].mxu0 %v3705
    %v4011 = vpop.f32.mrb[0].mxu0
    %v4012 = vadd.f32 %v3935, %v4011
    %v4013 = vpop.f32.mrb[0].mxu0
    %v4014 = vadd.f32 %v3937, %v4013
    %4015 = vmatprep.mubr.f32.mxu0 0.0
    %4016 = vmatmul.mubr.f32.gmra.mrb[0].mxu0 %v3706
    %v4017 = vpop.f32.mrb[0].mxu0
    %v4018 = vadd.f32 %v3941, %v4017
    %v4019 = vpop.f32.mrb[0].mxu0
    %v4020 = vadd.f32 %v3943, %v4019
    %4021 = vdwg.mxu0
    %4022 = vmatprep.subr.mxu0 0.0
    %4023 = vmatpush1.msra.mxu0 %v3709
    %4024 = vmatprep.subr.mxu0 0.0
    %4025 = vmatpush1.msra.mxu0 %v3712
    %4026 = vmatprep.subr.mxu0 0.0
    %4027 = vmatpush1.msra.mxu0 %v3715
    %4028 = vmatprep.subr.mxu0 0.0
    %4029 = vmatpush1.msra.mxu0 %v3718
    %4030 = vmatprep.subr.mxu0 0.0
    %4031 = vmatpush1.msra.mxu0 %v3721
    %4032 = vmatprep.subr.mxu0 0.0
    %4033 = vmatpush1.msra.mxu0 %v3724
    %4034 = vmatprep.subr.mxu0 0.0
    %4035 = vmatpush1.msra.mxu0 %v3727
    %4036 = vmatprep.subr.mxu0 0.0
    %4037 = vmatpush1.msra.mxu0 %v3730
    %4038 = vmatprep.subr.mxu0 0.0
    %4039 = vmatpush1.msra.mxu0 %v3733
    %4040 = vmatprep.subr.mxu0 0.0
    %4041 = vmatpush1.msra.mxu0 %v3736
    %4042 = vmatprep.subr.mxu0 0.0
    %4043 = vmatpush1.msra.mxu0 %v3739
    %4044 = vmatprep.subr.mxu0 0.0
    %4045 = vmatpush1.msra.mxu0 %v3742
    %4046 = vmatprep.subr.mxu0 0.0
    %4047 = vmatpush1.msra.mxu0 %v3745
    %4048 = vmatprep.subr.mxu0 0.0
    %4049 = vmatpush1.msra.mxu0 %v3748
    %4050 = vmatprep.subr.mxu0 0.0
    %4051 = vmatpush1.msra.mxu0 %v3751
    %4052 = vmatprep.subr.mxu0 0.0
    %4053 = vmatpush1.msra.mxu0 %v3754
    %4054 = vmatprep.subr.mxu0 0.0
    %4055 = vmatpush1.msra.mxu0 %v3757
    %4056 = vmatprep.subr.mxu0 0.0
    %4057 = vmatpush1.msra.mxu0 %v3760
    %4058 = vmatprep.subr.mxu0 0.0
    %4059 = vmatpush1.msra.mxu0 %v3763
    %4060 = vmatprep.subr.mxu0 0.0
    %4061 = vmatpush1.msra.mxu0 %v3766
    %4062 = vmatprep.subr.mxu0 0.0
    %4063 = vmatpush1.msra.mxu0 %v3769
    %4064 = vmatprep.subr.mxu0 0.0
    %4065 = vmatpush1.msra.mxu0 %v3772
    %4066 = vmatprep.subr.mxu0 0.0
    %4067 = vmatpush1.msra.mxu0 %v3775
    %4068 = vmatprep.subr.mxu0 0.0
    %4069 = vmatpush1.msra.mxu0 %v3778
    %4070 = vmatprep.subr.mxu0 0.0
    %4071 = vmatpush1.msra.mxu0 %v3781
    %4072 = vmatprep.subr.mxu0 0.0
    %4073 = vmatpush1.msra.mxu0 %v3784
    %4074 = vmatprep.subr.mxu0 0.0
    %4075 = vmatpush1.msra.mxu0 %v3787
    %4076 = vmatprep.subr.mxu0 0.0
    %4077 = vmatpush1.msra.mxu0 %v3790
    %4078 = vmatprep.subr.mxu0 0.0
    %4079 = vmatpush1.msra.mxu0 %v3793
    %4080 = vmatprep.subr.mxu0 0.0
    %4081 = vmatpush1.msra.mxu0 %v3796
    %4082 = vmatprep.subr.mxu0 0.0
    %4083 = vmatpush1.msra.mxu0 %v3799
    %4084 = vmatprep.subr.mxu0 0.0
    %4085 = vmatpush1.msra.mxu0 %v3802
    %4086 = vmatprep.mubr.f32.mxu0 %v3703
    %4087 = vmatmul.mubr.f32.gmra.mrb[0].mxu0 %v3701
    %v4088 = vpop.f32.mrb[0].mxu0
    %v4089 = vadd.f32 %v3864, %v4088
    %v4090 = vpop.f32.mrb[0].mxu0
    %4091 = vmatprep.mubr.f32.mxu0 %v3704
    %4092 = vmatmul.mubr.f32.gmra.mrb[0].mxu0 %v3702
    %v4093 = vpop.f32.mrb[0].mxu0
    %v4094 = vadd.f32 %v3864, %v4093
    %v4095 = vpop.f32.mrb[0].mxu0
    %4096 = vdwg.mxu0
    %4097 = vmatprep.subr.mxu0 0.0
    %4098 = vmatpush1.msra.mxu0 %v3805
    %4099 = vmatprep.subr.mxu0 0.0
    %4100 = vmatpush1.msra.mxu0 %v3808
    %4101 = vmatprep.subr.mxu0 0.0
    %4102 = vmatpush1.msra.mxu0 %v3811
    %4103 = vmatprep.subr.mxu0 0.0
    %4104 = vmatpush1.msra.mxu0 %v3814
    %4105 = vmatprep.subr.mxu0 0.0
    %4106 = vmatpush1.msra.mxu0 %v3817
    %4107 = vmatprep.subr.mxu0 0.0
    %4108 = vmatpush1.msra.mxu0 %v3820
    %4109 = vmatprep.subr.mxu0 0.0
    %4110 = vmatpush1.msra.mxu0 %v3823
    %4111 = vmatprep.subr.mxu0 0.0
    %4112 = vmatpush1.msra.mxu0 %v3826
    %4113 = vmatprep.subr.mxu0 0.0
    %4114 = vmatpush1.msra.mxu0 %v3829
    %4115 = vmatprep.subr.mxu0 0.0
    %4116 = vmatpush1.msra.mxu0 %v3832
    %4117 = vmatprep.subr.mxu0 0.0
    %4118 = vmatpush1.msra.mxu0 %v3835
    %4119 = vmatprep.subr.mxu0 0.0
    %4120 = vmatpush1.msra.mxu0 %v3838
    %4121 = vmatprep.subr.mxu0 0.0
    %4122 = vmatpush1.msra.mxu0 %v3841
    %4123 = vmatprep.subr.mxu0 0.0
    %4124 = vmatpush1.msra.mxu0 %v3844
    %4125 = vmatprep.subr.mxu0 0.0
    %4126 = vmatpush1.msra.mxu0 %v3847
    %4127 = vmatprep.subr.mxu0 0.0
    %4128 = vmatpush1.msra.mxu0 %v3850
    %4129 = vmatprep.subr.mxu0 0.0
    %4130 = vmatpush1.msra.mxu0 0.0
    %4131 = vmatprep.subr.mxu0 0.0
    %4132 = vmatpush1.msra.mxu0 0.0
    %4133 = vmatprep.subr.mxu0 0.0
    %4134 = vmatpush1.msra.mxu0 0.0
    %4135 = vmatprep.subr.mxu0 0.0
    %4136 = vmatpush1.msra.mxu0 0.0
    %4137 = vmatprep.subr.mxu0 0.0
    %4138 = vmatpush1.msra.mxu0 0.0
    %4139 = vmatprep.subr.mxu0 0.0
    %4140 = vmatpush1.msra.mxu0 0.0
    %4141 = vmatprep.subr.mxu0 0.0
    %4142 = vmatpush1.msra.mxu0 0.0
    %4143 = vmatprep.subr.mxu0 0.0
    %4144 = vmatpush1.msra.mxu0 0.0
    %4145 = vmatprep.subr.mxu0 0.0
    %4146 = vmatpush1.msra.mxu0 0.0
    %4147 = vmatprep.subr.mxu0 0.0
    %4148 = vmatpush1.msra.mxu0 0.0
    %4149 = vmatprep.subr.mxu0 0.0
    %4150 = vmatpush1.msra.mxu0 0.0
    %4151 = vmatprep.subr.mxu0 0.0
    %4152 = vmatpush1.msra.mxu0 0.0
    %4153 = vmatprep.subr.mxu0 0.0
    %4154 = vmatpush1.msra.mxu0 0.0
    %4155 = vmatprep.subr.mxu0 0.0
    %4156 = vmatpush1.msra.mxu0 0.0
    %4157 = vmatprep.subr.mxu0 0.0
    %4158 = vmatpush1.msra.mxu0 0.0
    %4159 = vmatprep.subr.mxu0 0.0
    %4160 = vmatpush1.msra.mxu0 0.0
    %4161 = vmatprep.mubr.f32.mxu0 0.0
    %4162 = vmatmul.mubr.f32.gmra.mrb[0].mxu0 %v3705
    %v4163 = vpop.f32.mrb[0].mxu0
    %v4164 = vadd.f32 %v4089, %v4163
    %v4165 = vpop.f32.mrb[0].mxu0
    %4166 = vmatprep.mubr.f32.mxu0 0.0
    %4167 = vmatmul.mubr.f32.gmra.mrb[0].mxu0 %v3706
    %v4168 = vpop.f32.mrb[0].mxu0
    %v4169 = vadd.f32 %v4094, %v4168
    %v4170 = vpop.f32.mrb[0].mxu0
    %4171 = vdwg.mxu0
    %v4172 = vadd.f32 %v329, %v4012
    %v4173 = vadd.f32 %v330, %v4014
    %v4174 = vadd.f32 %v331, %v4164
    %v4175 = vadd.f32 %v332, %v4018
    %v4176 = vadd.f32 %v333, %v4020
    %v4177 = vadd.f32 %v334, %v4169
    %v4178 = vld [vmem:[#allocation17] sm:$0x7]
    %v4179 = vld [vmem:[#allocation19] sm:$0x7]
    %v4180 = vadd.f32 %v4172, %v4173
    %v4181 = vadd.f32 %v4180, %v4174
    %4182 = vadd.xlane.f32.xlu0 %v4181
    %v4183 = vpop.xlane.xlu0 %4182
    %v4184 = vadd.f32 %v4175, %v4176
    %v4185 = vadd.f32 %v4184, %v4177
    %4186 = vadd.xlane.f32.xlu0 %v4185
    %v4187 = vpop.xlane.xlu0 %4186
    %v4188 = vmul.f32 %v4183, %v256
    %v4189 = vmul.f32 %v4187, %v256
    %v4190 = vsub.f32 %v4172, %v4188
    %v4191 = vsub.f32 %v4173, %v4188
    %v4192 = vsub.f32 %v4174, %v4188
    %v4193 = vsub.f32 %v4175, %v4189
    %v4194 = vsub.f32 %v4176, %v4189
    %v4195 = vsub.f32 %v4177, %v4189
    %v4196 = vmul.f32 %v4190, %v4190
    %v4197 = vmul.f32 %v4191, %v4191
    %v4198 = vmul.f32 %v4192, %v4192
    %v4199 = vmul.f32 %v4193, %v4193
    %v4200 = vmul.f32 %v4194, %v4194
    %v4201 = vmul.f32 %v4195, %v4195
    %v4202 = vadd.f32 %v4196, %v4197
    %v4203 = vadd.f32 %v4202, %v4198
    %4204 = vadd.xlane.f32.xlu0 %v4203
    %v4205 = vpop.xlane.xlu0 %4204
    %v4206 = vadd.f32 %v4199, %v4200
    %v4207 = vadd.f32 %v4206, %v4201
    %4208 = vadd.xlane.f32.xlu0 %v4207
    %v4209 = vpop.xlane.xlu0 %4208
    %v4210 = vmul.f32 %v4205, %v256
    %v4211 = vmul.f32 %v4209, %v256
    %v4212 = vadd.f32 %v4210, 1e-05
    %v4213 = vadd.f32 %v4211, 1e-05
    %v4214 = vrsqrt.pop %v4212
    %v4215 = vrsqrt.pop %v4213
    %v4216 = vmul.f32 %v4190, %v4214
    %v4217 = vmul.f32 %v4191, %v4214
    %v4218 = vmul.f32 %v4192, %v4214
    %v4219 = vmul.f32 %v4193, %v4215
    %v4220 = vmul.f32 %v4194, %v4215
    %v4221 = vmul.f32 %v4195, %v4215
    %v4223 = vlaneseq
    %v4224 = vshrl.u32 %v4223, 7
    %v4225 = vsub.s32 0, %v4224
    %v4226 = vrot.slane %v4178, %v4225
    %v4227 = vlaneseq
    %v4228 = vshrl.u32 %v4227, 7
    %v4229 = vsub.s32 1, %v4228
    %v4230 = vrot.slane %v4178, %v4229
    %v4231 = vlaneseq
    %v4232 = vshrl.u32 %v4231, 7
    %v4233 = vsub.s32 2, %v4232
    %v4234 = vrot.slane %v4178, %v4233
    %v4238 = vmul.f32 %v4216, %v4226
    %v4239 = vmul.f32 %v4217, %v4230
    %v4240 = vmul.f32 %v4218, %v4234
    %v4241 = vmul.f32 %v4219, %v4226
    %v4242 = vmul.f32 %v4220, %v4230
    %v4243 = vmul.f32 %v4221, %v4234
    %v4245 = vlaneseq
    %v4246 = vshrl.u32 %v4245, 7
    %v4247 = vsub.s32 0, %v4246
    %v4248 = vrot.slane %v4179, %v4247
    %v4249 = vlaneseq
    %v4250 = vshrl.u32 %v4249, 7
    %v4251 = vsub.s32 1, %v4250
    %v4252 = vrot.slane %v4179, %v4251
    %v4253 = vlaneseq
    %v4254 = vshrl.u32 %v4253, 7
    %v4255 = vsub.s32 2, %v4254
    %v4256 = vrot.slane %v4179, %v4255
    %v4260 = vadd.f32 %v4238, %v4248
    %v4261 = vadd.f32 %v4239, %v4252
    %v4262 = vadd.f32 %v4240, %v4256
    %v4263 = vadd.f32 %v4241, %v4248
    %v4264 = vadd.f32 %v4242, %v4252
    %v4265 = vadd.f32 %v4243, %v4256
    %v4266 = vld [vmem:[#allocation20] sm:$0xff]
    %v4267 = vld [vmem:[#allocation20 + $0x8] sm:$0xff]
    %v4268 = vld [vmem:[#allocation20 + $0x10] sm:$0xff]
    %v4269 = vld [vmem:[#allocation20 + $0x18] sm:$0xff]
    %v4270 = vld [vmem:[#allocation20 + $0x20] sm:$0xff]
    %v4271 = vld [vmem:[#allocation20 + $0x28] sm:$0xff]
    %v4272 = vld [vmem:[#allocation20 + $0x30] sm:$0xff]
    %v4273 = vld [vmem:[#allocation20 + $0x38] sm:$0xff]
    %v4274 = vld [vmem:[#allocation20 + $0x40] sm:$0xff]
    %v4275 = vld [vmem:[#allocation20 + $0x48] sm:$0xff]
    %v4276 = vld [vmem:[#allocation20 + $0x50] sm:$0xff]
    %v4277 = vld [vmem:[#allocation20 + $0x58] sm:$0xff]
    %v4278 = vld [vmem:[#allocation20 + $0x60] sm:$0xff]
    %v4279 = vld [vmem:[#allocation20 + $0x68] sm:$0xff]
    %v4280 = vld [vmem:[#allocation20 + $0x70] sm:$0xff]
    %v4281 = vld [vmem:[#allocation20 + $0x78] sm:$0xff]
    %v4282 = vld [vmem:[#allocation20 + $0x80] sm:$0xff]
    %v4283 = vld [vmem:[#allocation20 + $0x88] sm:$0xff]
    %v4284 = vld [vmem:[#allocation20 + $0x90] sm:$0xff]
    %v4285 = vld [vmem:[#allocation20 + $0x98] sm:$0xff]
    %v4286 = vld [vmem:[#allocation20 + $0xa0] sm:$0xff]
    %v4287 = vld [vmem:[#allocation20 + $0xa8] sm:$0xff]
    %v4288 = vld [vmem:[#allocation20 + $0xb0] sm:$0xff]
    %v4289 = vld [vmem:[#allocation20 + $0xb8] sm:$0xff]
    %v4290 = vld [vmem:[#allocation20 + $0xc0] sm:$0xff]
    %v4291 = vld [vmem:[#allocation20 + $0xc8] sm:$0xff]
    %v4292 = vld [vmem:[#allocation20 + $0xd0] sm:$0xff]
    %v4293 = vld [vmem:[#allocation20 + $0xd8] sm:$0xff]
    %v4294 = vld [vmem:[#allocation20 + $0xe0] sm:$0xff]
    %v4295 = vld [vmem:[#allocation20 + $0xe8] sm:$0xff]
    %v4296 = vld [vmem:[#allocation20 + $0xf0] sm:$0xff]
    %v4297 = vld [vmem:[#allocation20 + $0xf8] sm:$0xff]
    %v4298 = vld [vmem:[#allocation20 + $0x100] sm:$0xff]
    %v4299 = vld [vmem:[#allocation20 + $0x108] sm:$0xff]
    %v4300 = vld [vmem:[#allocation20 + $0x110] sm:$0xff]
    %v4301 = vld [vmem:[#allocation20 + $0x118] sm:$0xff]
    %v4302 = vld [vmem:[#allocation20 + $0x120] sm:$0xff]
    %v4303 = vld [vmem:[#allocation20 + $0x128] sm:$0xff]
    %v4304 = vld [vmem:[#allocation20 + $0x130] sm:$0xff]
    %v4305 = vld [vmem:[#allocation20 + $0x138] sm:$0xff]
    %v4306 = vld [vmem:[#allocation20 + $0x140] sm:$0xff]
    %v4307 = vld [vmem:[#allocation20 + $0x148] sm:$0xff]
    %v4308 = vld [vmem:[#allocation20 + $0x150] sm:$0xff]
    %v4309 = vld [vmem:[#allocation20 + $0x158] sm:$0xff]
    %v4310 = vld [vmem:[#allocation20 + $0x160] sm:$0xff]
    %v4311 = vld [vmem:[#allocation20 + $0x168] sm:$0xff]
    %v4312 = vld [vmem:[#allocation20 + $0x170] sm:$0xff]
    %v4313 = vld [vmem:[#allocation20 + $0x178] sm:$0xff]
    %v4314 = vld [vmem:[#allocation20 + $0x180] sm:$0xff]
    %v4315 = vld [vmem:[#allocation20 + $0x188] sm:$0xff]
    %v4316 = vld [vmem:[#allocation20 + $0x190] sm:$0xff]
    %v4317 = vld [vmem:[#allocation20 + $0x198] sm:$0xff]
    %v4318 = vld [vmem:[#allocation20 + $0x1a0] sm:$0xff]
    %v4319 = vld [vmem:[#allocation20 + $0x1a8] sm:$0xff]
    %v4320 = vld [vmem:[#allocation20 + $0x1b0] sm:$0xff]
    %v4321 = vld [vmem:[#allocation20 + $0x1b8] sm:$0xff]
    %v4322 = vld [vmem:[#allocation20 + $0x1c0] sm:$0xff]
    %v4323 = vld [vmem:[#allocation20 + $0x1c8] sm:$0xff]
    %v4324 = vld [vmem:[#allocation20 + $0x1d0] sm:$0xff]
    %v4325 = vld [vmem:[#allocation20 + $0x1d8] sm:$0xff]
    %v4326 = vld [vmem:[#allocation20 + $0x1e0] sm:$0xff]
    %v4327 = vld [vmem:[#allocation20 + $0x1e8] sm:$0xff]
    %v4328 = vld [vmem:[#allocation20 + $0x1f0] sm:$0xff]
    %v4329 = vld [vmem:[#allocation20 + $0x1f8] sm:$0xff]
    %v4330 = vld [vmem:[#allocation20 + $0x200] sm:$0xff]
    %v4331 = vld [vmem:[#allocation20 + $0x208] sm:$0xff]
    %v4332 = vld [vmem:[#allocation20 + $0x210] sm:$0xff]
    %v4333 = vld [vmem:[#allocation20 + $0x218] sm:$0xff]
    %v4334 = vld [vmem:[#allocation20 + $0x220] sm:$0xff]
    %v4335 = vld [vmem:[#allocation20 + $0x228] sm:$0xff]
    %v4336 = vld [vmem:[#allocation20 + $0x230] sm:$0xff]
    %v4337 = vld [vmem:[#allocation20 + $0x238] sm:$0xff]
    %v4338 = vld [vmem:[#allocation20 + $0x240] sm:$0xff]
    %v4339 = vld [vmem:[#allocation20 + $0x248] sm:$0xff]
    %v4340 = vld [vmem:[#allocation20 + $0x250] sm:$0xff]
    %v4341 = vld [vmem:[#allocation20 + $0x258] sm:$0xff]
    %v4342 = vld [vmem:[#allocation20 + $0x260] sm:$0xff]
    %v4343 = vld [vmem:[#allocation20 + $0x268] sm:$0xff]
    %v4344 = vld [vmem:[#allocation20 + $0x270] sm:$0xff]
    %v4345 = vld [vmem:[#allocation20 + $0x278] sm:$0xff]
    %v4346 = vld [vmem:[#allocation20 + $0x280] sm:$0xff]
    %v4347 = vld [vmem:[#allocation20 + $0x288] sm:$0xff]
    %v4348 = vld [vmem:[#allocation20 + $0x290] sm:$0xff]
    %v4349 = vld [vmem:[#allocation20 + $0x298] sm:$0xff]
    %v4350 = vld [vmem:[#allocation20 + $0x2a0] sm:$0xff]
    %v4351 = vld [vmem:[#allocation20 + $0x2a8] sm:$0xff]
    %v4352 = vld [vmem:[#allocation20 + $0x2b0] sm:$0xff]
    %v4353 = vld [vmem:[#allocation20 + $0x2b8] sm:$0xff]
    %v4354 = vld [vmem:[#allocation20 + $0x2c0] sm:$0xff]
    %v4355 = vld [vmem:[#allocation20 + $0x2c8] sm:$0xff]
    %v4356 = vld [vmem:[#allocation20 + $0x2d0] sm:$0xff]
    %v4357 = vld [vmem:[#allocation20 + $0x2d8] sm:$0xff]
    %v4358 = vld [vmem:[#allocation20 + $0x2e0] sm:$0xff]
    %v4359 = vld [vmem:[#allocation20 + $0x2e8] sm:$0xff]
    %v4360 = vld [vmem:[#allocation20 + $0x2f0] sm:$0xff]
    %v4361 = vld [vmem:[#allocation20 + $0x2f8] sm:$0xff]
    %v4362 = vld [vmem:[#allocation20 + $0x300] sm:$0xff]
    %v4363 = vld [vmem:[#allocation20 + $0x308] sm:$0xff]
    %v4364 = vld [vmem:[#allocation20 + $0x310] sm:$0xff]
    %v4365 = vld [vmem:[#allocation20 + $0x318] sm:$0xff]
    %v4366 = vld [vmem:[#allocation20 + $0x320] sm:$0xff]
    %v4367 = vld [vmem:[#allocation20 + $0x328] sm:$0xff]
    %v4368 = vld [vmem:[#allocation20 + $0x330] sm:$0xff]
    %v4369 = vld [vmem:[#allocation20 + $0x338] sm:$0xff]
    %v4370 = vld [vmem:[#allocation20 + $0x340] sm:$0xff]
    %v4371 = vld [vmem:[#allocation20 + $0x348] sm:$0xff]
    %v4372 = vld [vmem:[#allocation20 + $0x350] sm:$0xff]
    %v4373 = vld [vmem:[#allocation20 + $0x358] sm:$0xff]
    %v4374 = vld [vmem:[#allocation20 + $0x360] sm:$0xff]
    %v4375 = vld [vmem:[#allocation20 + $0x368] sm:$0xff]
    %v4376 = vld [vmem:[#allocation20 + $0x370] sm:$0xff]
    %v4377 = vld [vmem:[#allocation20 + $0x378] sm:$0xff]
    %v4378 = vld [vmem:[#allocation20 + $0x380] sm:$0xff]
    %v4379 = vld [vmem:[#allocation20 + $0x388] sm:$0xff]
    %v4380 = vld [vmem:[#allocation20 + $0x390] sm:$0xff]
    %v4381 = vld [vmem:[#allocation20 + $0x398] sm:$0xff]
    %v4382 = vld [vmem:[#allocation20 + $0x3a0] sm:$0xff]
    %v4383 = vld [vmem:[#allocation20 + $0x3a8] sm:$0xff]
    %v4384 = vld [vmem:[#allocation20 + $0x3b0] sm:$0xff]
    %v4385 = vld [vmem:[#allocation20 + $0x3b8] sm:$0xff]
    %v4386 = vld [vmem:[#allocation20 + $0x3c0] sm:$0xff]
    %v4387 = vld [vmem:[#allocation20 + $0x3c8] sm:$0xff]
    %v4388 = vld [vmem:[#allocation20 + $0x3d0] sm:$0xff]
    %v4389 = vld [vmem:[#allocation20 + $0x3d8] sm:$0xff]
    %v4390 = vld [vmem:[#allocation20 + $0x3e0] sm:$0xff]
    %v4391 = vld [vmem:[#allocation20 + $0x3e8] sm:$0xff]
    %v4392 = vld [vmem:[#allocation20 + $0x3f0] sm:$0xff]
    %v4393 = vld [vmem:[#allocation20 + $0x3f8] sm:$0xff]
    %v4394 = vld [vmem:[#allocation20 + $0x400] sm:$0xff]
    %v4395 = vld [vmem:[#allocation20 + $0x408] sm:$0xff]
    %v4396 = vld [vmem:[#allocation20 + $0x410] sm:$0xff]
    %v4397 = vld [vmem:[#allocation20 + $0x418] sm:$0xff]
    %v4398 = vld [vmem:[#allocation20 + $0x420] sm:$0xff]
    %v4399 = vld [vmem:[#allocation20 + $0x428] sm:$0xff]
    %v4400 = vld [vmem:[#allocation20 + $0x430] sm:$0xff]
    %v4401 = vld [vmem:[#allocation20 + $0x438] sm:$0xff]
    %v4402 = vld [vmem:[#allocation20 + $0x440] sm:$0xff]
    %v4403 = vld [vmem:[#allocation20 + $0x448] sm:$0xff]
    %v4404 = vld [vmem:[#allocation20 + $0x450] sm:$0xff]
    %v4405 = vld [vmem:[#allocation20 + $0x458] sm:$0xff]
    %v4406 = vld [vmem:[#allocation20 + $0x460] sm:$0xff]
    %v4407 = vld [vmem:[#allocation20 + $0x468] sm:$0xff]
    %v4408 = vld [vmem:[#allocation20 + $0x470] sm:$0xff]
    %v4409 = vld [vmem:[#allocation20 + $0x478] sm:$0xff]
    %v4410 = vld [vmem:[#allocation20 + $0x480] sm:$0xff]
    %v4411 = vld [vmem:[#allocation20 + $0x488] sm:$0xff]
    %v4412 = vld [vmem:[#allocation20 + $0x490] sm:$0xff]
    %v4413 = vld [vmem:[#allocation20 + $0x498] sm:$0xff]
    %v4414 = vld [vmem:[#allocation20 + $0x4a0] sm:$0xff]
    %v4415 = vld [vmem:[#allocation20 + $0x4a8] sm:$0xff]
    %v4416 = vld [vmem:[#allocation20 + $0x4b0] sm:$0xff]
    %v4417 = vld [vmem:[#allocation20 + $0x4b8] sm:$0xff]
    %v4418 = vld [vmem:[#allocation20 + $0x4c0] sm:$0xff]
    %v4419 = vld [vmem:[#allocation20 + $0x4c8] sm:$0xff]
    %v4420 = vld [vmem:[#allocation20 + $0x4d0] sm:$0xff]
    %v4421 = vld [vmem:[#allocation20 + $0x4d8] sm:$0xff]
    %v4422 = vld [vmem:[#allocation20 + $0x4e0] sm:$0xff]
    %v4423 = vld [vmem:[#allocation20 + $0x4e8] sm:$0xff]
    %v4424 = vld [vmem:[#allocation20 + $0x4f0] sm:$0xff]
    %v4425 = vld [vmem:[#allocation20 + $0x4f8] sm:$0xff]
    %v4426 = vld [vmem:[#allocation20 + $0x500] sm:$0xff]
    %v4427 = vld [vmem:[#allocation20 + $0x508] sm:$0xff]
    %v4428 = vld [vmem:[#allocation20 + $0x510] sm:$0xff]
    %v4429 = vld [vmem:[#allocation20 + $0x518] sm:$0xff]
    %v4430 = vld [vmem:[#allocation20 + $0x520] sm:$0xff]
    %v4431 = vld [vmem:[#allocation20 + $0x528] sm:$0xff]
    %v4432 = vld [vmem:[#allocation20 + $0x530] sm:$0xff]
    %v4433 = vld [vmem:[#allocation20 + $0x538] sm:$0xff]
    %v4434 = vld [vmem:[#allocation20 + $0x540] sm:$0xff]
    %v4435 = vld [vmem:[#allocation20 + $0x548] sm:$0xff]
    %v4436 = vld [vmem:[#allocation20 + $0x550] sm:$0xff]
    %v4437 = vld [vmem:[#allocation20 + $0x558] sm:$0xff]
    %v4438 = vld [vmem:[#allocation20 + $0x560] sm:$0xff]
    %v4439 = vld [vmem:[#allocation20 + $0x568] sm:$0xff]
    %v4440 = vld [vmem:[#allocation20 + $0x570] sm:$0xff]
    %v4441 = vld [vmem:[#allocation20 + $0x578] sm:$0xff]
    %v4442 = vld [vmem:[#allocation20 + $0x580] sm:$0xff]
    %v4443 = vld [vmem:[#allocation20 + $0x588] sm:$0xff]
    %v4444 = vld [vmem:[#allocation20 + $0x590] sm:$0xff]
    %v4445 = vld [vmem:[#allocation20 + $0x598] sm:$0xff]
    %v4446 = vld [vmem:[#allocation20 + $0x5a0] sm:$0xff]
    %v4447 = vld [vmem:[#allocation20 + $0x5a8] sm:$0xff]
    %v4448 = vld [vmem:[#allocation20 + $0x5b0] sm:$0xff]
    %v4449 = vld [vmem:[#allocation20 + $0x5b8] sm:$0xff]
    %v4450 = vld [vmem:[#allocation20 + $0x5c0] sm:$0xff]
    %v4451 = vld [vmem:[#allocation20 + $0x5c8] sm:$0xff]
    %v4452 = vld [vmem:[#allocation20 + $0x5d0] sm:$0xff]
    %v4453 = vld [vmem:[#allocation20 + $0x5d8] sm:$0xff]
    %v4454 = vld [vmem:[#allocation20 + $0x5e0] sm:$0xff]
    %v4455 = vld [vmem:[#allocation20 + $0x5e8] sm:$0xff]
    %v4456 = vld [vmem:[#allocation20 + $0x5f0] sm:$0xff]
    %v4457 = vld [vmem:[#allocation20 + $0x5f8] sm:$0xff]
    %v4458 = vld [vmem:[#allocation20 + $0x600] sm:$0xff]
    %v4459 = vld [vmem:[#allocation20 + $0x608] sm:$0xff]
    %v4460 = vld [vmem:[#allocation20 + $0x610] sm:$0xff]
    %v4461 = vld [vmem:[#allocation20 + $0x618] sm:$0xff]
    %v4462 = vld [vmem:[#allocation20 + $0x620] sm:$0xff]
    %v4463 = vld [vmem:[#allocation20 + $0x628] sm:$0xff]
    %v4464 = vld [vmem:[#allocation20 + $0x630] sm:$0xff]
    %v4465 = vld [vmem:[#allocation20 + $0x638] sm:$0xff]
    %v4466 = vld [vmem:[#allocation20 + $0x640] sm:$0xff]
    %v4467 = vld [vmem:[#allocation20 + $0x648] sm:$0xff]
    %v4468 = vld [vmem:[#allocation20 + $0x650] sm:$0xff]
    %v4469 = vld [vmem:[#allocation20 + $0x658] sm:$0xff]
    %v4470 = vld [vmem:[#allocation20 + $0x660] sm:$0xff]
    %v4471 = vld [vmem:[#allocation20 + $0x668] sm:$0xff]
    %v4472 = vld [vmem:[#allocation20 + $0x670] sm:$0xff]
    %v4473 = vld [vmem:[#allocation20 + $0x678] sm:$0xff]
    %v4474 = vld [vmem:[#allocation20 + $0x680] sm:$0xff]
    %v4475 = vld [vmem:[#allocation20 + $0x688] sm:$0xff]
    %v4476 = vld [vmem:[#allocation20 + $0x690] sm:$0xff]
    %v4477 = vld [vmem:[#allocation20 + $0x698] sm:$0xff]
    %v4478 = vld [vmem:[#allocation20 + $0x6a0] sm:$0xff]
    %v4479 = vld [vmem:[#allocation20 + $0x6a8] sm:$0xff]
    %v4480 = vld [vmem:[#allocation20 + $0x6b0] sm:$0xff]
    %v4481 = vld [vmem:[#allocation20 + $0x6b8] sm:$0xff]
    %v4482 = vld [vmem:[#allocation20 + $0x6c0] sm:$0xff]
    %v4483 = vld [vmem:[#allocation20 + $0x6c8] sm:$0xff]
    %v4484 = vld [vmem:[#allocation20 + $0x6d0] sm:$0xff]
    %v4485 = vld [vmem:[#allocation20 + $0x6d8] sm:$0xff]
    %v4486 = vld [vmem:[#allocation20 + $0x6e0] sm:$0xff]
    %v4487 = vld [vmem:[#allocation20 + $0x6e8] sm:$0xff]
    %v4488 = vld [vmem:[#allocation20 + $0x6f0] sm:$0xff]
    %v4489 = vld [vmem:[#allocation20 + $0x6f8] sm:$0xff]
    %v4490 = vld [vmem:[#allocation20 + $0x700] sm:$0xff]
    %v4491 = vld [vmem:[#allocation20 + $0x708] sm:$0xff]
    %v4492 = vld [vmem:[#allocation20 + $0x710] sm:$0xff]
    %v4493 = vld [vmem:[#allocation20 + $0x718] sm:$0xff]
    %v4494 = vld [vmem:[#allocation20 + $0x720] sm:$0xff]
    %v4495 = vld [vmem:[#allocation20 + $0x728] sm:$0xff]
    %v4496 = vld [vmem:[#allocation20 + $0x730] sm:$0xff]
    %v4497 = vld [vmem:[#allocation20 + $0x738] sm:$0xff]
    %v4498 = vld [vmem:[#allocation20 + $0x740] sm:$0xff]
    %v4499 = vld [vmem:[#allocation20 + $0x748] sm:$0xff]
    %v4500 = vld [vmem:[#allocation20 + $0x750] sm:$0xff]
    %v4501 = vld [vmem:[#allocation20 + $0x758] sm:$0xff]
    %v4502 = vld [vmem:[#allocation20 + $0x760] sm:$0xff]
    %v4503 = vld [vmem:[#allocation20 + $0x768] sm:$0xff]
    %v4504 = vld [vmem:[#allocation20 + $0x770] sm:$0xff]
    %v4505 = vld [vmem:[#allocation20 + $0x778] sm:$0xff]
    %v4506 = vld [vmem:[#allocation20 + $0x780] sm:$0xff]
    %v4507 = vld [vmem:[#allocation20 + $0x788] sm:$0xff]
    %v4508 = vld [vmem:[#allocation20 + $0x790] sm:$0xff]
    %v4509 = vld [vmem:[#allocation20 + $0x798] sm:$0xff]
    %v4510 = vld [vmem:[#allocation20 + $0x7a0] sm:$0xff]
    %v4511 = vld [vmem:[#allocation20 + $0x7a8] sm:$0xff]
    %v4512 = vld [vmem:[#allocation20 + $0x7b0] sm:$0xff]
    %v4513 = vld [vmem:[#allocation20 + $0x7b8] sm:$0xff]
    %v4514 = vld [vmem:[#allocation20 + $0x7c0] sm:$0xff]
    %v4515 = vld [vmem:[#allocation20 + $0x7c8] sm:$0xff]
    %v4516 = vld [vmem:[#allocation20 + $0x7d0] sm:$0xff]
    %v4517 = vld [vmem:[#allocation20 + $0x7d8] sm:$0xff]
    %v4518 = vld [vmem:[#allocation20 + $0x7e0] sm:$0xff]
    %v4519 = vld [vmem:[#allocation20 + $0x7e8] sm:$0xff]
    %v4520 = vld [vmem:[#allocation20 + $0x7f0] sm:$0xff]
    %v4521 = vld [vmem:[#allocation20 + $0x7f8] sm:$0xff]
    %v4522 = vld [vmem:[#allocation20 + $0x800] sm:$0xff]
    %v4523 = vld [vmem:[#allocation20 + $0x808] sm:$0xff]
    %v4524 = vld [vmem:[#allocation20 + $0x810] sm:$0xff]
    %v4525 = vld [vmem:[#allocation20 + $0x818] sm:$0xff]
    %v4526 = vld [vmem:[#allocation20 + $0x820] sm:$0xff]
    %v4527 = vld [vmem:[#allocation20 + $0x828] sm:$0xff]
    %v4528 = vld [vmem:[#allocation20 + $0x830] sm:$0xff]
    %v4529 = vld [vmem:[#allocation20 + $0x838] sm:$0xff]
    %v4530 = vld [vmem:[#allocation20 + $0x840] sm:$0xff]
    %v4531 = vld [vmem:[#allocation20 + $0x848] sm:$0xff]
    %v4532 = vld [vmem:[#allocation20 + $0x850] sm:$0xff]
    %v4533 = vld [vmem:[#allocation20 + $0x858] sm:$0xff]
    %v4534 = vld [vmem:[#allocation20 + $0x860] sm:$0xff]
    %v4535 = vld [vmem:[#allocation20 + $0x868] sm:$0xff]
    %v4536 = vld [vmem:[#allocation20 + $0x870] sm:$0xff]
    %v4537 = vld [vmem:[#allocation20 + $0x878] sm:$0xff]
    %v4538 = vld [vmem:[#allocation20 + $0x880] sm:$0xff]
    %v4539 = vld [vmem:[#allocation20 + $0x888] sm:$0xff]
    %v4540 = vld [vmem:[#allocation20 + $0x890] sm:$0xff]
    %v4541 = vld [vmem:[#allocation20 + $0x898] sm:$0xff]
    %v4542 = vld [vmem:[#allocation20 + $0x8a0] sm:$0xff]
    %v4543 = vld [vmem:[#allocation20 + $0x8a8] sm:$0xff]
    %v4544 = vld [vmem:[#allocation20 + $0x8b0] sm:$0xff]
    %v4545 = vld [vmem:[#allocation20 + $0x8b8] sm:$0xff]
    %v4546 = vld [vmem:[#allocation20 + $0x8c0] sm:$0xff]
    %v4547 = vld [vmem:[#allocation20 + $0x8c8] sm:$0xff]
    %v4548 = vld [vmem:[#allocation20 + $0x8d0] sm:$0xff]
    %v4549 = vld [vmem:[#allocation20 + $0x8d8] sm:$0xff]
    %v4550 = vld [vmem:[#allocation20 + $0x8e0] sm:$0xff]
    %v4551 = vld [vmem:[#allocation20 + $0x8e8] sm:$0xff]
    %v4552 = vld [vmem:[#allocation20 + $0x8f0] sm:$0xff]
    %v4553 = vld [vmem:[#allocation20 + $0x8f8] sm:$0xff]
    %v4554 = vld [vmem:[#allocation20 + $0x900] sm:$0xff]
    %v4555 = vld [vmem:[#allocation20 + $0x908] sm:$0xff]
    %v4556 = vld [vmem:[#allocation20 + $0x910] sm:$0xff]
    %v4557 = vld [vmem:[#allocation20 + $0x918] sm:$0xff]
    %v4558 = vld [vmem:[#allocation20 + $0x920] sm:$0xff]
    %v4559 = vld [vmem:[#allocation20 + $0x928] sm:$0xff]
    %v4560 = vld [vmem:[#allocation20 + $0x930] sm:$0xff]
    %v4561 = vld [vmem:[#allocation20 + $0x938] sm:$0xff]
    %v4562 = vld [vmem:[#allocation20 + $0x940] sm:$0xff]
    %v4563 = vld [vmem:[#allocation20 + $0x948] sm:$0xff]
    %v4564 = vld [vmem:[#allocation20 + $0x950] sm:$0xff]
    %v4565 = vld [vmem:[#allocation20 + $0x958] sm:$0xff]
    %v4566 = vld [vmem:[#allocation20 + $0x960] sm:$0xff]
    %v4567 = vld [vmem:[#allocation20 + $0x968] sm:$0xff]
    %v4568 = vld [vmem:[#allocation20 + $0x970] sm:$0xff]
    %v4569 = vld [vmem:[#allocation20 + $0x978] sm:$0xff]
    %v4570 = vld [vmem:[#allocation20 + $0x980] sm:$0xff]
    %v4571 = vld [vmem:[#allocation20 + $0x988] sm:$0xff]
    %v4572 = vld [vmem:[#allocation20 + $0x990] sm:$0xff]
    %v4573 = vld [vmem:[#allocation20 + $0x998] sm:$0xff]
    %v4574 = vld [vmem:[#allocation20 + $0x9a0] sm:$0xff]
    %v4575 = vld [vmem:[#allocation20 + $0x9a8] sm:$0xff]
    %v4576 = vld [vmem:[#allocation20 + $0x9b0] sm:$0xff]
    %v4577 = vld [vmem:[#allocation20 + $0x9b8] sm:$0xff]
    %v4578 = vld [vmem:[#allocation20 + $0x9c0] sm:$0xff]
    %v4579 = vld [vmem:[#allocation20 + $0x9c8] sm:$0xff]
    %v4580 = vld [vmem:[#allocation20 + $0x9d0] sm:$0xff]
    %v4581 = vld [vmem:[#allocation20 + $0x9d8] sm:$0xff]
    %v4582 = vld [vmem:[#allocation20 + $0x9e0] sm:$0xff]
    %v4583 = vld [vmem:[#allocation20 + $0x9e8] sm:$0xff]
    %v4584 = vld [vmem:[#allocation20 + $0x9f0] sm:$0xff]
    %v4585 = vld [vmem:[#allocation20 + $0x9f8] sm:$0xff]
    %v4586 = vld [vmem:[#allocation20 + $0xa00] sm:$0xff]
    %v4587 = vld [vmem:[#allocation20 + $0xa08] sm:$0xff]
    %v4588 = vld [vmem:[#allocation20 + $0xa10] sm:$0xff]
    %v4589 = vld [vmem:[#allocation20 + $0xa18] sm:$0xff]
    %v4590 = vld [vmem:[#allocation20 + $0xa20] sm:$0xff]
    %v4591 = vld [vmem:[#allocation20 + $0xa28] sm:$0xff]
    %v4592 = vld [vmem:[#allocation20 + $0xa30] sm:$0xff]
    %v4593 = vld [vmem:[#allocation20 + $0xa38] sm:$0xff]
    %v4594 = vld [vmem:[#allocation20 + $0xa40] sm:$0xff]
    %v4595 = vld [vmem:[#allocation20 + $0xa48] sm:$0xff]
    %v4596 = vld [vmem:[#allocation20 + $0xa50] sm:$0xff]
    %v4597 = vld [vmem:[#allocation20 + $0xa58] sm:$0xff]
    %v4598 = vld [vmem:[#allocation20 + $0xa60] sm:$0xff]
    %v4599 = vld [vmem:[#allocation20 + $0xa68] sm:$0xff]
    %v4600 = vld [vmem:[#allocation20 + $0xa70] sm:$0xff]
    %v4601 = vld [vmem:[#allocation20 + $0xa78] sm:$0xff]
    %v4602 = vld [vmem:[#allocation20 + $0xa80] sm:$0xff]
    %v4603 = vld [vmem:[#allocation20 + $0xa88] sm:$0xff]
    %v4604 = vld [vmem:[#allocation20 + $0xa90] sm:$0xff]
    %v4605 = vld [vmem:[#allocation20 + $0xa98] sm:$0xff]
    %v4606 = vld [vmem:[#allocation20 + $0xaa0] sm:$0xff]
    %v4607 = vld [vmem:[#allocation20 + $0xaa8] sm:$0xff]
    %v4608 = vld [vmem:[#allocation20 + $0xab0] sm:$0xff]
    %v4609 = vld [vmem:[#allocation20 + $0xab8] sm:$0xff]
    %v4610 = vld [vmem:[#allocation20 + $0xac0] sm:$0xff]
    %v4611 = vld [vmem:[#allocation20 + $0xac8] sm:$0xff]
    %v4612 = vld [vmem:[#allocation20 + $0xad0] sm:$0xff]
    %v4613 = vld [vmem:[#allocation20 + $0xad8] sm:$0xff]
    %v4614 = vld [vmem:[#allocation20 + $0xae0] sm:$0xff]
    %v4615 = vld [vmem:[#allocation20 + $0xae8] sm:$0xff]
    %v4616 = vld [vmem:[#allocation20 + $0xaf0] sm:$0xff]
    %v4617 = vld [vmem:[#allocation20 + $0xaf8] sm:$0xff]
    %v4618 = vld [vmem:[#allocation20 + $0xb00] sm:$0xff]
    %v4619 = vld [vmem:[#allocation20 + $0xb08] sm:$0xff]
    %v4620 = vld [vmem:[#allocation20 + $0xb10] sm:$0xff]
    %v4621 = vld [vmem:[#allocation20 + $0xb18] sm:$0xff]
    %v4622 = vld [vmem:[#allocation20 + $0xb20] sm:$0xff]
    %v4623 = vld [vmem:[#allocation20 + $0xb28] sm:$0xff]
    %v4624 = vld [vmem:[#allocation20 + $0xb30] sm:$0xff]
    %v4625 = vld [vmem:[#allocation20 + $0xb38] sm:$0xff]
    %v4626 = vld [vmem:[#allocation20 + $0xb40] sm:$0xff]
    %v4627 = vld [vmem:[#allocation20 + $0xb48] sm:$0xff]
    %v4628 = vld [vmem:[#allocation20 + $0xb50] sm:$0xff]
    %v4629 = vld [vmem:[#allocation20 + $0xb58] sm:$0xff]
    %v4630 = vld [vmem:[#allocation20 + $0xb60] sm:$0xff]
    %v4631 = vld [vmem:[#allocation20 + $0xb68] sm:$0xff]
    %v4632 = vld [vmem:[#allocation20 + $0xb70] sm:$0xff]
    %v4633 = vld [vmem:[#allocation20 + $0xb78] sm:$0xff]
    %v4634 = vld [vmem:[#allocation20 + $0xb80] sm:$0xff]
    %v4635 = vld [vmem:[#allocation20 + $0xb88] sm:$0xff]
    %v4636 = vld [vmem:[#allocation20 + $0xb90] sm:$0xff]
    %v4637 = vld [vmem:[#allocation20 + $0xb98] sm:$0xff]
    %v4638 = vld [vmem:[#allocation20 + $0xba0] sm:$0xff]
    %v4639 = vld [vmem:[#allocation20 + $0xba8] sm:$0xff]
    %v4640 = vld [vmem:[#allocation20 + $0xbb0] sm:$0xff]
    %v4641 = vld [vmem:[#allocation20 + $0xbb8] sm:$0xff]
    %v4642 = vld [vmem:[#allocation20 + $0xbc0] sm:$0xff]
    %v4643 = vld [vmem:[#allocation20 + $0xbc8] sm:$0xff]
    %v4644 = vld [vmem:[#allocation20 + $0xbd0] sm:$0xff]
    %v4645 = vld [vmem:[#allocation20 + $0xbd8] sm:$0xff]
    %v4646 = vld [vmem:[#allocation20 + $0xbe0] sm:$0xff]
    %v4647 = vld [vmem:[#allocation20 + $0xbe8] sm:$0xff]
    %v4648 = vld [vmem:[#allocation20 + $0xbf0] sm:$0xff]
    %v4649 = vld [vmem:[#allocation20 + $0xbf8] sm:$0xff]
    %v4650 = vld [vmem:[#allocation20 + $0xc00] sm:$0xff]
    %v4651 = vld [vmem:[#allocation20 + $0xc08] sm:$0xff]
    %v4652 = vld [vmem:[#allocation20 + $0xc10] sm:$0xff]
    %v4653 = vld [vmem:[#allocation20 + $0xc18] sm:$0xff]
    %v4654 = vld [vmem:[#allocation20 + $0xc20] sm:$0xff]
    %v4655 = vld [vmem:[#allocation20 + $0xc28] sm:$0xff]
    %v4656 = vld [vmem:[#allocation20 + $0xc30] sm:$0xff]
    %v4657 = vld [vmem:[#allocation20 + $0xc38] sm:$0xff]
    %v4658 = vld [vmem:[#allocation20 + $0xc40] sm:$0xff]
    %v4659 = vld [vmem:[#allocation20 + $0xc48] sm:$0xff]
    %v4660 = vld [vmem:[#allocation20 + $0xc50] sm:$0xff]
    %v4661 = vld [vmem:[#allocation20 + $0xc58] sm:$0xff]
    %v4662 = vld [vmem:[#allocation20 + $0xc60] sm:$0xff]
    %v4663 = vld [vmem:[#allocation20 + $0xc68] sm:$0xff]
    %v4664 = vld [vmem:[#allocation20 + $0xc70] sm:$0xff]
    %v4665 = vld [vmem:[#allocation20 + $0xc78] sm:$0xff]
    %v4666 = vld [vmem:[#allocation20 + $0xc80] sm:$0xff]
    %v4667 = vld [vmem:[#allocation20 + $0xc88] sm:$0xff]
    %v4668 = vld [vmem:[#allocation20 + $0xc90] sm:$0xff]
    %v4669 = vld [vmem:[#allocation20 + $0xc98] sm:$0xff]
    %v4670 = vld [vmem:[#allocation20 + $0xca0] sm:$0xff]
    %v4671 = vld [vmem:[#allocation20 + $0xca8] sm:$0xff]
    %v4672 = vld [vmem:[#allocation20 + $0xcb0] sm:$0xff]
    %v4673 = vld [vmem:[#allocation20 + $0xcb8] sm:$0xff]
    %v4674 = vld [vmem:[#allocation20 + $0xcc0] sm:$0xff]
    %v4675 = vld [vmem:[#allocation20 + $0xcc8] sm:$0xff]
    %v4676 = vld [vmem:[#allocation20 + $0xcd0] sm:$0xff]
    %v4677 = vld [vmem:[#allocation20 + $0xcd8] sm:$0xff]
    %v4678 = vld [vmem:[#allocation20 + $0xce0] sm:$0xff]
    %v4679 = vld [vmem:[#allocation20 + $0xce8] sm:$0xff]
    %v4680 = vld [vmem:[#allocation20 + $0xcf0] sm:$0xff]
    %v4681 = vld [vmem:[#allocation20 + $0xcf8] sm:$0xff]
    %v4682 = vld [vmem:[#allocation20 + $0xd00] sm:$0xff]
    %v4683 = vld [vmem:[#allocation20 + $0xd08] sm:$0xff]
    %v4684 = vld [vmem:[#allocation20 + $0xd10] sm:$0xff]
    %v4685 = vld [vmem:[#allocation20 + $0xd18] sm:$0xff]
    %v4686 = vld [vmem:[#allocation20 + $0xd20] sm:$0xff]
    %v4687 = vld [vmem:[#allocation20 + $0xd28] sm:$0xff]
    %v4688 = vld [vmem:[#allocation20 + $0xd30] sm:$0xff]
    %v4689 = vld [vmem:[#allocation20 + $0xd38] sm:$0xff]
    %v4690 = vld [vmem:[#allocation20 + $0xd40] sm:$0xff]
    %v4691 = vld [vmem:[#allocation20 + $0xd48] sm:$0xff]
    %v4692 = vld [vmem:[#allocation20 + $0xd50] sm:$0xff]
    %v4693 = vld [vmem:[#allocation20 + $0xd58] sm:$0xff]
    %v4694 = vld [vmem:[#allocation20 + $0xd60] sm:$0xff]
    %v4695 = vld [vmem:[#allocation20 + $0xd68] sm:$0xff]
    %v4696 = vld [vmem:[#allocation20 + $0xd70] sm:$0xff]
    %v4697 = vld [vmem:[#allocation20 + $0xd78] sm:$0xff]
    %v4698 = vld [vmem:[#allocation20 + $0xd80] sm:$0xff]
    %v4699 = vld [vmem:[#allocation20 + $0xd88] sm:$0xff]
    %v4700 = vld [vmem:[#allocation20 + $0xd90] sm:$0xff]
    %v4701 = vld [vmem:[#allocation20 + $0xd98] sm:$0xff]
    %v4702 = vld [vmem:[#allocation20 + $0xda0] sm:$0xff]
    %v4703 = vld [vmem:[#allocation20 + $0xda8] sm:$0xff]
    %v4704 = vld [vmem:[#allocation20 + $0xdb0] sm:$0xff]
    %v4705 = vld [vmem:[#allocation20 + $0xdb8] sm:$0xff]
    %v4706 = vld [vmem:[#allocation20 + $0xdc0] sm:$0xff]
    %v4707 = vld [vmem:[#allocation20 + $0xdc8] sm:$0xff]
    %v4708 = vld [vmem:[#allocation20 + $0xdd0] sm:$0xff]
    %v4709 = vld [vmem:[#allocation20 + $0xdd8] sm:$0xff]
    %v4710 = vld [vmem:[#allocation20 + $0xde0] sm:$0xff]
    %v4711 = vld [vmem:[#allocation20 + $0xde8] sm:$0xff]
    %v4712 = vld [vmem:[#allocation20 + $0xdf0] sm:$0xff]
    %v4713 = vld [vmem:[#allocation20 + $0xdf8] sm:$0xff]
    %v4714 = vld [vmem:[#allocation20 + $0xe00] sm:$0xff]
    %v4715 = vld [vmem:[#allocation20 + $0xe08] sm:$0xff]
    %v4716 = vld [vmem:[#allocation20 + $0xe10] sm:$0xff]
    %v4717 = vld [vmem:[#allocation20 + $0xe18] sm:$0xff]
    %v4718 = vld [vmem:[#allocation20 + $0xe20] sm:$0xff]
    %v4719 = vld [vmem:[#allocation20 + $0xe28] sm:$0xff]
    %v4720 = vld [vmem:[#allocation20 + $0xe30] sm:$0xff]
    %v4721 = vld [vmem:[#allocation20 + $0xe38] sm:$0xff]
    %v4722 = vld [vmem:[#allocation20 + $0xe40] sm:$0xff]
    %v4723 = vld [vmem:[#allocation20 + $0xe48] sm:$0xff]
    %v4724 = vld [vmem:[#allocation20 + $0xe50] sm:$0xff]
    %v4725 = vld [vmem:[#allocation20 + $0xe58] sm:$0xff]
    %v4726 = vld [vmem:[#allocation20 + $0xe60] sm:$0xff]
    %v4727 = vld [vmem:[#allocation20 + $0xe68] sm:$0xff]
    %v4728 = vld [vmem:[#allocation20 + $0xe70] sm:$0xff]
    %v4729 = vld [vmem:[#allocation20 + $0xe78] sm:$0xff]
    %v4730 = vld [vmem:[#allocation20 + $0xe80] sm:$0xff]
    %v4731 = vld [vmem:[#allocation20 + $0xe88] sm:$0xff]
    %v4732 = vld [vmem:[#allocation20 + $0xe90] sm:$0xff]
    %v4733 = vld [vmem:[#allocation20 + $0xe98] sm:$0xff]
    %v4734 = vld [vmem:[#allocation20 + $0xea0] sm:$0xff]
    %v4735 = vld [vmem:[#allocation20 + $0xea8] sm:$0xff]
    %v4736 = vld [vmem:[#allocation20 + $0xeb0] sm:$0xff]
    %v4737 = vld [vmem:[#allocation20 + $0xeb8] sm:$0xff]
    %v4738 = vld [vmem:[#allocation20 + $0xec0] sm:$0xff]
    %v4739 = vld [vmem:[#allocation20 + $0xec8] sm:$0xff]
    %v4740 = vld [vmem:[#allocation20 + $0xed0] sm:$0xff]
    %v4741 = vld [vmem:[#allocation20 + $0xed8] sm:$0xff]
    %v4742 = vld [vmem:[#allocation20 + $0xee0] sm:$0xff]
    %v4743 = vld [vmem:[#allocation20 + $0xee8] sm:$0xff]
    %v4744 = vld [vmem:[#allocation20 + $0xef0] sm:$0xff]
    %v4745 = vld [vmem:[#allocation20 + $0xef8] sm:$0xff]
    %v4746 = vld [vmem:[#allocation20 + $0xf00] sm:$0xff]
    %v4747 = vld [vmem:[#allocation20 + $0xf08] sm:$0xff]
    %v4748 = vld [vmem:[#allocation20 + $0xf10] sm:$0xff]
    %v4749 = vld [vmem:[#allocation20 + $0xf18] sm:$0xff]
    %v4750 = vld [vmem:[#allocation20 + $0xf20] sm:$0xff]
    %v4751 = vld [vmem:[#allocation20 + $0xf28] sm:$0xff]
    %v4752 = vld [vmem:[#allocation20 + $0xf30] sm:$0xff]
    %v4753 = vld [vmem:[#allocation20 + $0xf38] sm:$0xff]
    %v4754 = vld [vmem:[#allocation20 + $0xf40] sm:$0xff]
    %v4755 = vld [vmem:[#allocation20 + $0xf48] sm:$0xff]
    %v4756 = vld [vmem:[#allocation20 + $0xf50] sm:$0xff]
    %v4757 = vld [vmem:[#allocation20 + $0xf58] sm:$0xff]
    %v4758 = vld [vmem:[#allocation20 + $0xf60] sm:$0xff]
    %v4759 = vld [vmem:[#allocation20 + $0xf68] sm:$0xff]
    %v4760 = vld [vmem:[#allocation20 + $0xf70] sm:$0xff]
    %v4761 = vld [vmem:[#allocation20 + $0xf78] sm:$0xff]
    %v4762 = vld [vmem:[#allocation20 + $0xf80] sm:$0xff]
    %v4763 = vld [vmem:[#allocation20 + $0xf88] sm:$0xff]
    %v4764 = vld [vmem:[#allocation20 + $0xf90] sm:$0xff]
    %v4765 = vld [vmem:[#allocation20 + $0xf98] sm:$0xff]
    %v4766 = vld [vmem:[#allocation20 + $0xfa0] sm:$0xff]
    %v4767 = vld [vmem:[#allocation20 + $0xfa8] sm:$0xff]
    %v4768 = vld [vmem:[#allocation20 + $0xfb0] sm:$0xff]
    %v4769 = vld [vmem:[#allocation20 + $0xfb8] sm:$0xff]
    %v4770 = vld [vmem:[#allocation20 + $0xfc0] sm:$0xff]
    %v4771 = vld [vmem:[#allocation20 + $0xfc8] sm:$0xff]
    %v4772 = vld [vmem:[#allocation20 + $0xfd0] sm:$0xff]
    %v4773 = vld [vmem:[#allocation20 + $0xfd8] sm:$0xff]
    %v4774 = vld [vmem:[#allocation20 + $0xfe0] sm:$0xff]
    %v4775 = vld [vmem:[#allocation20 + $0xfe8] sm:$0xff]
    %v4776 = vld [vmem:[#allocation20 + $0xff0] sm:$0xff]
    %v4777 = vld [vmem:[#allocation20 + $0xff8] sm:$0xff]
    %v4778 = vld [vmem:[#allocation20 + $0x1000] sm:$0xff]
    %v4779 = vld [vmem:[#allocation20 + $0x1008] sm:$0xff]
    %v4780 = vld [vmem:[#allocation20 + $0x1010] sm:$0xff]
    %v4781 = vld [vmem:[#allocation20 + $0x1018] sm:$0xff]
    %v4782 = vld [vmem:[#allocation20 + $0x1020] sm:$0xff]
    %v4783 = vld [vmem:[#allocation20 + $0x1028] sm:$0xff]
    %v4784 = vld [vmem:[#allocation20 + $0x1030] sm:$0xff]
    %v4785 = vld [vmem:[#allocation20 + $0x1038] sm:$0xff]
    %v4786 = vld [vmem:[#allocation20 + $0x1040] sm:$0xff]
    %v4787 = vld [vmem:[#allocation20 + $0x1048] sm:$0xff]
    %v4788 = vld [vmem:[#allocation20 + $0x1050] sm:$0xff]
    %v4789 = vld [vmem:[#allocation20 + $0x1058] sm:$0xff]
    %v4790 = vld [vmem:[#allocation20 + $0x1060] sm:$0xff]
    %v4791 = vld [vmem:[#allocation20 + $0x1068] sm:$0xff]
    %v4792 = vld [vmem:[#allocation20 + $0x1070] sm:$0xff]
    %v4793 = vld [vmem:[#allocation20 + $0x1078] sm:$0xff]
    %v4794 = vld [vmem:[#allocation20 + $0x1080] sm:$0xff]
    %v4795 = vld [vmem:[#allocation20 + $0x1088] sm:$0xff]
    %v4796 = vld [vmem:[#allocation20 + $0x1090] sm:$0xff]
    %v4797 = vld [vmem:[#allocation20 + $0x1098] sm:$0xff]
    %v4798 = vld [vmem:[#allocation20 + $0x10a0] sm:$0xff]
    %v4799 = vld [vmem:[#allocation20 + $0x10a8] sm:$0xff]
    %v4800 = vld [vmem:[#allocation20 + $0x10b0] sm:$0xff]
    %v4801 = vld [vmem:[#allocation20 + $0x10b8] sm:$0xff]
    %v4802 = vld [vmem:[#allocation20 + $0x10c0] sm:$0xff]
    %v4803 = vld [vmem:[#allocation20 + $0x10c8] sm:$0xff]
    %v4804 = vld [vmem:[#allocation20 + $0x10d0] sm:$0xff]
    %v4805 = vld [vmem:[#allocation20 + $0x10d8] sm:$0xff]
    %v4806 = vld [vmem:[#allocation20 + $0x10e0] sm:$0xff]
    %v4807 = vld [vmem:[#allocation20 + $0x10e8] sm:$0xff]
    %v4808 = vld [vmem:[#allocation20 + $0x10f0] sm:$0xff]
    %v4809 = vld [vmem:[#allocation20 + $0x10f8] sm:$0xff]
    %v4810 = vld [vmem:[#allocation20 + $0x1100] sm:$0xff]
    %v4811 = vld [vmem:[#allocation20 + $0x1108] sm:$0xff]
    %v4812 = vld [vmem:[#allocation20 + $0x1110] sm:$0xff]
    %v4813 = vld [vmem:[#allocation20 + $0x1118] sm:$0xff]
    %v4814 = vld [vmem:[#allocation20 + $0x1120] sm:$0xff]
    %v4815 = vld [vmem:[#allocation20 + $0x1128] sm:$0xff]
    %v4816 = vld [vmem:[#allocation20 + $0x1130] sm:$0xff]
    %v4817 = vld [vmem:[#allocation20 + $0x1138] sm:$0xff]
    %v4818 = vld [vmem:[#allocation20 + $0x1140] sm:$0xff]
    %v4819 = vld [vmem:[#allocation20 + $0x1148] sm:$0xff]
    %v4820 = vld [vmem:[#allocation20 + $0x1150] sm:$0xff]
    %v4821 = vld [vmem:[#allocation20 + $0x1158] sm:$0xff]
    %v4822 = vld [vmem:[#allocation20 + $0x1160] sm:$0xff]
    %v4823 = vld [vmem:[#allocation20 + $0x1168] sm:$0xff]
    %v4824 = vld [vmem:[#allocation20 + $0x1170] sm:$0xff]
    %v4825 = vld [vmem:[#allocation20 + $0x1178] sm:$0xff]
    %v4826 = vld [vmem:[#allocation20 + $0x1180] sm:$0xff]
    %v4827 = vld [vmem:[#allocation20 + $0x1188] sm:$0xff]
    %v4828 = vld [vmem:[#allocation20 + $0x1190] sm:$0xff]
    %v4829 = vld [vmem:[#allocation20 + $0x1198] sm:$0xff]
    %v4830 = vld [vmem:[#allocation20 + $0x11a0] sm:$0xff]
    %v4831 = vld [vmem:[#allocation20 + $0x11a8] sm:$0xff]
    %v4832 = vld [vmem:[#allocation20 + $0x11b0] sm:$0xff]
    %v4833 = vld [vmem:[#allocation20 + $0x11b8] sm:$0xff]
    %v4834 = vld [vmem:[#allocation20 + $0x11c0] sm:$0xff]
    %v4835 = vld [vmem:[#allocation20 + $0x11c8] sm:$0xff]
    %v4836 = vld [vmem:[#allocation20 + $0x11d0] sm:$0xff]
    %v4837 = vld [vmem:[#allocation20 + $0x11d8] sm:$0xff]
    %v4838 = vld [vmem:[#allocation20 + $0x11e0] sm:$0xff]
    %v4839 = vld [vmem:[#allocation20 + $0x11e8] sm:$0xff]
    %v4840 = vld [vmem:[#allocation20 + $0x11f0] sm:$0xff]
    %v4841 = vld [vmem:[#allocation20 + $0x11f8] sm:$0xff]
    %v4842 = vld [vmem:[#allocation22] sm:$0xff]
    %v4843 = vld [vmem:[#allocation22 + $0x8] sm:$0xf]
    %v4846 = vlaneseq
    %v4847 = vshrl.u32 %v4846, 7
    %v4848 = vsub.s32 0, %v4847
    %v4849 = vrot.slane %v4842, %v4848
    %v4850 = vlaneseq
    %v4851 = vshrl.u32 %v4850, 7
    %v4852 = vsub.s32 1, %v4851
    %v4853 = vrot.slane %v4842, %v4852
    %v4854 = vlaneseq
    %v4855 = vshrl.u32 %v4854, 7
    %v4856 = vsub.s32 2, %v4855
    %v4857 = vrot.slane %v4842, %v4856
    %v4858 = vlaneseq
    %v4859 = vshrl.u32 %v4858, 7
    %v4860 = vsub.s32 3, %v4859
    %v4861 = vrot.slane %v4842, %v4860
    %v4862 = vlaneseq
    %v4863 = vshrl.u32 %v4862, 7
    %v4864 = vsub.s32 4, %v4863
    %v4865 = vrot.slane %v4842, %v4864
    %v4866 = vlaneseq
    %v4867 = vshrl.u32 %v4866, 7
    %v4868 = vsub.s32 5, %v4867
    %v4869 = vrot.slane %v4842, %v4868
    %v4870 = vlaneseq
    %v4871 = vshrl.u32 %v4870, 7
    %v4872 = vsub.s32 6, %v4871
    %v4873 = vrot.slane %v4842, %v4872
    %v4874 = vlaneseq
    %v4875 = vshrl.u32 %v4874, 7
    %v4876 = vsub.s32 7, %v4875
    %v4877 = vrot.slane %v4842, %v4876
    %v4878 = vlaneseq
    %v4879 = vshrl.u32 %v4878, 7
    %v4880 = vsub.s32 0, %v4879
    %v4881 = vrot.slane %v4843, %v4880
    %v4882 = vlaneseq
    %v4883 = vshrl.u32 %v4882, 7
    %v4884 = vsub.s32 1, %v4883
    %v4885 = vrot.slane %v4843, %v4884
    %v4886 = vlaneseq
    %v4887 = vshrl.u32 %v4886, 7
    %v4888 = vsub.s32 2, %v4887
    %v4889 = vrot.slane %v4843, %v4888
    %v4890 = vlaneseq
    %v4891 = vshrl.u32 %v4890, 7
    %v4892 = vsub.s32 3, %v4891
    %v4893 = vrot.slane %v4843, %v4892
    %4906 = vmatprep.subr.mxu0 %v4267
    %4907 = vmatpush1.msra.mxu0 %v4266
    %4908 = vmatprep.subr.mxu0 %v4279
    %4909 = vmatpush1.msra.mxu0 %v4278
    %4910 = vmatprep.subr.mxu0 %v4291
    %4911 = vmatpush1.msra.mxu0 %v4290
    %4912 = vmatprep.subr.mxu0 %v4303
    %4913 = vmatpush1.msra.mxu0 %v4302
    %4914 = vmatprep.subr.mxu0 %v4315
    %4915 = vmatpush1.msra.mxu0 %v4314
    %4916 = vmatprep.subr.mxu0 %v4327
    %4917 = vmatpush1.msra.mxu0 %v4326
    %4918 = vmatprep.subr.mxu0 %v4339
    %4919 = vmatpush1.msra.mxu0 %v4338
    %4920 = vmatprep.subr.mxu0 %v4351
    %4921 = vmatpush1.msra.mxu0 %v4350
    %4922 = vmatprep.subr.mxu0 %v4363
    %4923 = vmatpush1.msra.mxu0 %v4362
    %4924 = vmatprep.subr.mxu0 %v4375
    %4925 = vmatpush1.msra.mxu0 %v4374
    %4926 = vmatprep.subr.mxu0 %v4387
    %4927 = vmatpush1.msra.mxu0 %v4386
    %4928 = vmatprep.subr.mxu0 %v4399
    %4929 = vmatpush1.msra.mxu0 %v4398
    %4930 = vmatprep.subr.mxu0 %v4411
    %4931 = vmatpush1.msra.mxu0 %v4410
    %4932 = vmatprep.subr.mxu0 %v4423
    %4933 = vmatpush1.msra.mxu0 %v4422
    %4934 = vmatprep.subr.mxu0 %v4435
    %4935 = vmatpush1.msra.mxu0 %v4434
    %4936 = vmatprep.subr.mxu0 %v4447
    %4937 = vmatpush1.msra.mxu0 %v4446
    %4938 = vmatprep.subr.mxu0 %v4459
    %4939 = vmatpush1.msra.mxu0 %v4458
    %4940 = vmatprep.subr.mxu0 %v4471
    %4941 = vmatpush1.msra.mxu0 %v4470
    %4942 = vmatprep.subr.mxu0 %v4483
    %4943 = vmatpush1.msra.mxu0 %v4482
    %4944 = vmatprep.subr.mxu0 %v4495
    %4945 = vmatpush1.msra.mxu0 %v4494
    %4946 = vmatprep.subr.mxu0 %v4507
    %4947 = vmatpush1.msra.mxu0 %v4506
    %4948 = vmatprep.subr.mxu0 %v4519
    %4949 = vmatpush1.msra.mxu0 %v4518
    %4950 = vmatprep.subr.mxu0 %v4531
    %4951 = vmatpush1.msra.mxu0 %v4530
    %4952 = vmatprep.subr.mxu0 %v4543
    %4953 = vmatpush1.msra.mxu0 %v4542
    %4954 = vmatprep.subr.mxu0 %v4555
    %4955 = vmatpush1.msra.mxu0 %v4554
    %4956 = vmatprep.subr.mxu0 %v4567
    %4957 = vmatpush1.msra.mxu0 %v4566
    %4958 = vmatprep.subr.mxu0 %v4579
    %4959 = vmatpush1.msra.mxu0 %v4578
    %4960 = vmatprep.subr.mxu0 %v4591
    %4961 = vmatpush1.msra.mxu0 %v4590
    %4962 = vmatprep.subr.mxu0 %v4603
    %4963 = vmatpush1.msra.mxu0 %v4602
    %4964 = vmatprep.subr.mxu0 %v4615
    %4965 = vmatpush1.msra.mxu0 %v4614
    %4966 = vmatprep.subr.mxu0 %v4627
    %4967 = vmatpush1.msra.mxu0 %v4626
    %4968 = vmatprep.subr.mxu0 %v4639
    %4969 = vmatpush1.msra.mxu0 %v4638
    %4970 = vmatprep.mubr.f32.mxu0 %v4261
    %4971 = vmatmul.mubr.f32.gmra.mrb[0].mxu0 %v4260
    %v4972 = vpop.f32.mrb[0].mxu0
    %v4973 = vadd.f32 %v4849, %v4972
    %v4974 = vpop.f32.mrb[0].mxu0
    %v4975 = vadd.f32 %v4853, %v4974
    %4976 = vmatprep.mubr.f32.mxu0 %v4264
    %4977 = vmatmul.mubr.f32.gmra.mrb[0].mxu0 %v4263
    %v4978 = vpop.f32.mrb[0].mxu0
    %v4979 = vadd.f32 %v4849, %v4978
    %v4980 = vpop.f32.mrb[0].mxu0
    %v4981 = vadd.f32 %v4853, %v4980
    %4982 = vdwg.mxu0
    %4983 = vmatprep.subr.mxu0 %v4651
    %4984 = vmatpush1.msra.mxu0 %v4650
    %4985 = vmatprep.subr.mxu0 %v4663
    %4986 = vmatpush1.msra.mxu0 %v4662
    %4987 = vmatprep.subr.mxu0 %v4675
    %4988 = vmatpush1.msra.mxu0 %v4674
    %4989 = vmatprep.subr.mxu0 %v4687
    %4990 = vmatpush1.msra.mxu0 %v4686
    %4991 = vmatprep.subr.mxu0 %v4699
    %4992 = vmatpush1.msra.mxu0 %v4698
    %4993 = vmatprep.subr.mxu0 %v4711
    %4994 = vmatpush1.msra.mxu0 %v4710
    %4995 = vmatprep.subr.mxu0 %v4723
    %4996 = vmatpush1.msra.mxu0 %v4722
    %4997 = vmatprep.subr.mxu0 %v4735
    %4998 = vmatpush1.msra.mxu0 %v4734
    %4999 = vmatprep.subr.mxu0 %v4747
    %5000 = vmatpush1.msra.mxu0 %v4746
    %5001 = vmatprep.subr.mxu0 %v4759
    %5002 = vmatpush1.msra.mxu0 %v4758
    %5003 = vmatprep.subr.mxu0 %v4771
    %5004 = vmatpush1.msra.mxu0 %v4770
    %5005 = vmatprep.subr.mxu0 %v4783
    %5006 = vmatpush1.msra.mxu0 %v4782
    %5007 = vmatprep.subr.mxu0 %v4795
    %5008 = vmatpush1.msra.mxu0 %v4794
    %5009 = vmatprep.subr.mxu0 %v4807
    %5010 = vmatpush1.msra.mxu0 %v4806
    %5011 = vmatprep.subr.mxu0 %v4819
    %5012 = vmatpush1.msra.mxu0 %v4818
    %5013 = vmatprep.subr.mxu0 %v4831
    %5014 = vmatpush1.msra.mxu0 %v4830
    %5015 = vmatprep.subr.mxu0 0.0
    %5016 = vmatpush1.msra.mxu0 0.0
    %5017 = vmatprep.subr.mxu0 0.0
    %5018 = vmatpush1.msra.mxu0 0.0
    %5019 = vmatprep.subr.mxu0 0.0
    %5020 = vmatpush1.msra.mxu0 0.0
    %5021 = vmatprep.subr.mxu0 0.0
    %5022 = vmatpush1.msra.mxu0 0.0
    %5023 = vmatprep.subr.mxu0 0.0
    %5024 = vmatpush1.msra.mxu0 0.0
    %5025 = vmatprep.subr.mxu0 0.0
    %5026 = vmatpush1.msra.mxu0 0.0
    %5027 = vmatprep.subr.mxu0 0.0
    %5028 = vmatpush1.msra.mxu0 0.0
    %5029 = vmatprep.subr.mxu0 0.0
    %5030 = vmatpush1.msra.mxu0 0.0
    %5031 = vmatprep.subr.mxu0 0.0
    %5032 = vmatpush1.msra.mxu0 0.0
    %5033 = vmatprep.subr.mxu0 0.0
    %5034 = vmatpush1.msra.mxu0 0.0
    %5035 = vmatprep.subr.mxu0 0.0
    %5036 = vmatpush1.msra.mxu0 0.0
    %5037 = vmatprep.subr.mxu0 0.0
    %5038 = vmatpush1.msra.mxu0 0.0
    %5039 = vmatprep.subr.mxu0 0.0
    %5040 = vmatpush1.msra.mxu0 0.0
    %5041 = vmatprep.subr.mxu0 0.0
    %5042 = vmatpush1.msra.mxu0 0.0
    %5043 = vmatprep.subr.mxu0 0.0
    %5044 = vmatpush1.msra.mxu0 0.0
    %5045 = vmatprep.subr.mxu0 0.0
    %5046 = vmatpush1.msra.mxu0 0.0
    %5047 = vmatprep.mubr.f32.mxu0 0.0
    %5048 = vmatmul.mubr.f32.gmra.mrb[0].mxu0 %v4262
    %v5049 = vpop.f32.mrb[0].mxu0
    %v5050 = vadd.f32 %v4973, %v5049
    %v5051 = vpop.f32.mrb[0].mxu0
    %v5052 = vadd.f32 %v4975, %v5051
    %5053 = vmatprep.mubr.f32.mxu0 0.0
    %5054 = vmatmul.mubr.f32.gmra.mrb[0].mxu0 %v4265
    %v5055 = vpop.f32.mrb[0].mxu0
    %v5056 = vadd.f32 %v4979, %v5055
    %v5057 = vpop.f32.mrb[0].mxu0
    %v5058 = vadd.f32 %v4981, %v5057
    %5059 = vdwg.mxu0
    %5060 = vmatprep.subr.mxu0 %v4269
    %5061 = vmatpush1.msra.mxu0 %v4268
    %5062 = vmatprep.subr.mxu0 %v4281
    %5063 = vmatpush1.msra.mxu0 %v4280
    %5064 = vmatprep.subr.mxu0 %v4293
    %5065 = vmatpush1.msra.mxu0 %v4292
    %5066 = vmatprep.subr.mxu0 %v4305
    %5067 = vmatpush1.msra.mxu0 %v4304
    %5068 = vmatprep.subr.mxu0 %v4317
    %5069 = vmatpush1.msra.mxu0 %v4316
    %5070 = vmatprep.subr.mxu0 %v4329
    %5071 = vmatpush1.msra.mxu0 %v4328
    %5072 = vmatprep.subr.mxu0 %v4341
    %5073 = vmatpush1.msra.mxu0 %v4340
    %5074 = vmatprep.subr.mxu0 %v4353
    %5075 = vmatpush1.msra.mxu0 %v4352
    %5076 = vmatprep.subr.mxu0 %v4365
    %5077 = vmatpush1.msra.mxu0 %v4364
    %5078 = vmatprep.subr.mxu0 %v4377
    %5079 = vmatpush1.msra.mxu0 %v4376
    %5080 = vmatprep.subr.mxu0 %v4389
    %5081 = vmatpush1.msra.mxu0 %v4388
    %5082 = vmatprep.subr.mxu0 %v4401
    %5083 = vmatpush1.msra.mxu0 %v4400
    %5084 = vmatprep.subr.mxu0 %v4413
    %5085 = vmatpush1.msra.mxu0 %v4412
    %5086 = vmatprep.subr.mxu0 %v4425
    %5087 = vmatpush1.msra.mxu0 %v4424
    %5088 = vmatprep.subr.mxu0 %v4437
    %5089 = vmatpush1.msra.mxu0 %v4436
    %5090 = vmatprep.subr.mxu0 %v4449
    %5091 = vmatpush1.msra.mxu0 %v4448
    %5092 = vmatprep.subr.mxu0 %v4461
    %5093 = vmatpush1.msra.mxu0 %v4460
    %5094 = vmatprep.subr.mxu0 %v4473
    %5095 = vmatpush1.msra.mxu0 %v4472
    %5096 = vmatprep.subr.mxu0 %v4485
    %5097 = vmatpush1.msra.mxu0 %v4484
    %5098 = vmatprep.subr.mxu0 %v4497
    %5099 = vmatpush1.msra.mxu0 %v4496
    %5100 = vmatprep.subr.mxu0 %v4509
    %5101 = vmatpush1.msra.mxu0 %v4508
    %5102 = vmatprep.subr.mxu0 %v4521
    %5103 = vmatpush1.msra.mxu0 %v4520
    %5104 = vmatprep.subr.mxu0 %v4533
    %5105 = vmatpush1.msra.mxu0 %v4532
    %5106 = vmatprep.subr.mxu0 %v4545
    %5107 = vmatpush1.msra.mxu0 %v4544
    %5108 = vmatprep.subr.mxu0 %v4557
    %5109 = vmatpush1.msra.mxu0 %v4556
    %5110 = vmatprep.subr.mxu0 %v4569
    %5111 = vmatpush1.msra.mxu0 %v4568
    %5112 = vmatprep.subr.mxu0 %v4581
    %5113 = vmatpush1.msra.mxu0 %v4580
    %5114 = vmatprep.subr.mxu0 %v4593
    %5115 = vmatpush1.msra.mxu0 %v4592
    %5116 = vmatprep.subr.mxu0 %v4605
    %5117 = vmatpush1.msra.mxu0 %v4604
    %5118 = vmatprep.subr.mxu0 %v4617
    %5119 = vmatpush1.msra.mxu0 %v4616
    %5120 = vmatprep.subr.mxu0 %v4629
    %5121 = vmatpush1.msra.mxu0 %v4628
    %5122 = vmatprep.subr.mxu0 %v4641
    %5123 = vmatpush1.msra.mxu0 %v4640
    %5124 = vmatprep.mubr.f32.mxu0 %v4261
    %5125 = vmatmul.mubr.f32.gmra.mrb[0].mxu0 %v4260
    %v5126 = vpop.f32.mrb[0].mxu0
    %v5127 = vadd.f32 %v4857, %v5126
    %v5128 = vpop.f32.mrb[0].mxu0
    %v5129 = vadd.f32 %v4861, %v5128
    %5130 = vmatprep.mubr.f32.mxu0 %v4264
    %5131 = vmatmul.mubr.f32.gmra.mrb[0].mxu0 %v4263
    %v5132 = vpop.f32.mrb[0].mxu0
    %v5133 = vadd.f32 %v4857, %v5132
    %v5134 = vpop.f32.mrb[0].mxu0
    %v5135 = vadd.f32 %v4861, %v5134
    %5136 = vdwg.mxu0
    %5137 = vmatprep.subr.mxu0 %v4653
    %5138 = vmatpush1.msra.mxu0 %v4652
    %5139 = vmatprep.subr.mxu0 %v4665
    %5140 = vmatpush1.msra.mxu0 %v4664
    %5141 = vmatprep.subr.mxu0 %v4677
    %5142 = vmatpush1.msra.mxu0 %v4676
    %5143 = vmatprep.subr.mxu0 %v4689
    %5144 = vmatpush1.msra.mxu0 %v4688
    %5145 = vmatprep.subr.mxu0 %v4701
    %5146 = vmatpush1.msra.mxu0 %v4700
    %5147 = vmatprep.subr.mxu0 %v4713
    %5148 = vmatpush1.msra.mxu0 %v4712
    %5149 = vmatprep.subr.mxu0 %v4725
    %5150 = vmatpush1.msra.mxu0 %v4724
    %5151 = vmatprep.subr.mxu0 %v4737
    %5152 = vmatpush1.msra.mxu0 %v4736
    %5153 = vmatprep.subr.mxu0 %v4749
    %5154 = vmatpush1.msra.mxu0 %v4748
    %5155 = vmatprep.subr.mxu0 %v4761
    %5156 = vmatpush1.msra.mxu0 %v4760
    %5157 = vmatprep.subr.mxu0 %v4773
    %5158 = vmatpush1.msra.mxu0 %v4772
    %5159 = vmatprep.subr.mxu0 %v4785
    %5160 = vmatpush1.msra.mxu0 %v4784
    %5161 = vmatprep.subr.mxu0 %v4797
    %5162 = vmatpush1.msra.mxu0 %v4796
    %5163 = vmatprep.subr.mxu0 %v4809
    %5164 = vmatpush1.msra.mxu0 %v4808
    %5165 = vmatprep.subr.mxu0 %v4821
    %5166 = vmatpush1.msra.mxu0 %v4820
    %5167 = vmatprep.subr.mxu0 %v4833
    %5168 = vmatpush1.msra.mxu0 %v4832
    %5169 = vmatprep.subr.mxu0 0.0
    %5170 = vmatpush1.msra.mxu0 0.0
    %5171 = vmatprep.subr.mxu0 0.0
    %5172 = vmatpush1.msra.mxu0 0.0
    %5173 = vmatprep.subr.mxu0 0.0
    %5174 = vmatpush1.msra.mxu0 0.0
    %5175 = vmatprep.subr.mxu0 0.0
    %5176 = vmatpush1.msra.mxu0 0.0
    %5177 = vmatprep.subr.mxu0 0.0
    %5178 = vmatpush1.msra.mxu0 0.0
    %5179 = vmatprep.subr.mxu0 0.0
    %5180 = vmatpush1.msra.mxu0 0.0
    %5181 = vmatprep.subr.mxu0 0.0
    %5182 = vmatpush1.msra.mxu0 0.0
    %5183 = vmatprep.subr.mxu0 0.0
    %5184 = vmatpush1.msra.mxu0 0.0
    %5185 = vmatprep.subr.mxu0 0.0
    %5186 = vmatpush1.msra.mxu0 0.0
    %5187 = vmatprep.subr.mxu0 0.0
    %5188 = vmatpush1.msra.mxu0 0.0
    %5189 = vmatprep.subr.mxu0 0.0
    %5190 = vmatpush1.msra.mxu0 0.0
    %5191 = vmatprep.subr.mxu0 0.0
    %5192 = vmatpush1.msra.mxu0 0.0
    %5193 = vmatprep.subr.mxu0 0.0
    %5194 = vmatpush1.msra.mxu0 0.0
    %5195 = vmatprep.subr.mxu0 0.0
    %5196 = vmatpush1.msra.mxu0 0.0
    %5197 = vmatprep.subr.mxu0 0.0
    %5198 = vmatpush1.msra.mxu0 0.0
    %5199 = vmatprep.subr.mxu0 0.0
    %5200 = vmatpush1.msra.mxu0 0.0
    %5201 = vmatprep.mubr.f32.mxu0 0.0
    %5202 = vmatmul.mubr.f32.gmra.mrb[0].mxu0 %v4262
    %v5203 = vpop.f32.mrb[0].mxu0
    %v5204 = vadd.f32 %v5127, %v5203
    %v5205 = vpop.f32.mrb[0].mxu0
    %v5206 = vadd.f32 %v5129, %v5205
    %5207 = vmatprep.mubr.f32.mxu0 0.0
    %5208 = vmatmul.mubr.f32.gmra.mrb[0].mxu0 %v4265
    %v5209 = vpop.f32.mrb[0].mxu0
    %v5210 = vadd.f32 %v5133, %v5209
    %v5211 = vpop.f32.mrb[0].mxu0
    %v5212 = vadd.f32 %v5135, %v5211
    %5213 = vdwg.mxu0
    %5214 = vmatprep.subr.mxu0 %v4271
    %5215 = vmatpush1.msra.mxu0 %v4270
    %5216 = vmatprep.subr.mxu0 %v4283
    %5217 = vmatpush1.msra.mxu0 %v4282
    %5218 = vmatprep.subr.mxu0 %v4295
    %5219 = vmatpush1.msra.mxu0 %v4294
    %5220 = vmatprep.subr.mxu0 %v4307
    %5221 = vmatpush1.msra.mxu0 %v4306
    %5222 = vmatprep.subr.mxu0 %v4319
    %5223 = vmatpush1.msra.mxu0 %v4318
    %5224 = vmatprep.subr.mxu0 %v4331
    %5225 = vmatpush1.msra.mxu0 %v4330
    %5226 = vmatprep.subr.mxu0 %v4343
    %5227 = vmatpush1.msra.mxu0 %v4342
    %5228 = vmatprep.subr.mxu0 %v4355
    %5229 = vmatpush1.msra.mxu0 %v4354
    %5230 = vmatprep.subr.mxu0 %v4367
    %5231 = vmatpush1.msra.mxu0 %v4366
    %5232 = vmatprep.subr.mxu0 %v4379
    %5233 = vmatpush1.msra.mxu0 %v4378
    %5234 = vmatprep.subr.mxu0 %v4391
    %5235 = vmatpush1.msra.mxu0 %v4390
    %5236 = vmatprep.subr.mxu0 %v4403
    %5237 = vmatpush1.msra.mxu0 %v4402
    %5238 = vmatprep.subr.mxu0 %v4415
    %5239 = vmatpush1.msra.mxu0 %v4414
    %5240 = vmatprep.subr.mxu0 %v4427
    %5241 = vmatpush1.msra.mxu0 %v4426
    %5242 = vmatprep.subr.mxu0 %v4439
    %5243 = vmatpush1.msra.mxu0 %v4438
    %5244 = vmatprep.subr.mxu0 %v4451
    %5245 = vmatpush1.msra.mxu0 %v4450
    %5246 = vmatprep.subr.mxu0 %v4463
    %5247 = vmatpush1.msra.mxu0 %v4462
    %5248 = vmatprep.subr.mxu0 %v4475
    %5249 = vmatpush1.msra.mxu0 %v4474
    %5250 = vmatprep.subr.mxu0 %v4487
    %5251 = vmatpush1.msra.mxu0 %v4486
    %5252 = vmatprep.subr.mxu0 %v4499
    %5253 = vmatpush1.msra.mxu0 %v4498
    %5254 = vmatprep.subr.mxu0 %v4511
    %5255 = vmatpush1.msra.mxu0 %v4510
    %5256 = vmatprep.subr.mxu0 %v4523
    %5257 = vmatpush1.msra.mxu0 %v4522
    %5258 = vmatprep.subr.mxu0 %v4535
    %5259 = vmatpush1.msra.mxu0 %v4534
    %5260 = vmatprep.subr.mxu0 %v4547
    %5261 = vmatpush1.msra.mxu0 %v4546
    %5262 = vmatprep.subr.mxu0 %v4559
    %5263 = vmatpush1.msra.mxu0 %v4558
    %5264 = vmatprep.subr.mxu0 %v4571
    %5265 = vmatpush1.msra.mxu0 %v4570
    %5266 = vmatprep.subr.mxu0 %v4583
    %5267 = vmatpush1.msra.mxu0 %v4582
    %5268 = vmatprep.subr.mxu0 %v4595
    %5269 = vmatpush1.msra.mxu0 %v4594
    %5270 = vmatprep.subr.mxu0 %v4607
    %5271 = vmatpush1.msra.mxu0 %v4606
    %5272 = vmatprep.subr.mxu0 %v4619
    %5273 = vmatpush1.msra.mxu0 %v4618
    %5274 = vmatprep.subr.mxu0 %v4631
    %5275 = vmatpush1.msra.mxu0 %v4630
    %5276 = vmatprep.subr.mxu0 %v4643
    %5277 = vmatpush1.msra.mxu0 %v4642
    %5278 = vmatprep.mubr.f32.mxu0 %v4261
    %5279 = vmatmul.mubr.f32.gmra.mrb[0].mxu0 %v4260
    %v5280 = vpop.f32.mrb[0].mxu0
    %v5281 = vadd.f32 %v4865, %v5280
    %v5282 = vpop.f32.mrb[0].mxu0
    %v5283 = vadd.f32 %v4869, %v5282
    %5284 = vmatprep.mubr.f32.mxu0 %v4264
    %5285 = vmatmul.mubr.f32.gmra.mrb[0].mxu0 %v4263
    %v5286 = vpop.f32.mrb[0].mxu0
    %v5287 = vadd.f32 %v4865, %v5286
    %v5288 = vpop.f32.mrb[0].mxu0
    %v5289 = vadd.f32 %v4869, %v5288
    %5290 = vdwg.mxu0
    %5291 = vmatprep.subr.mxu0 %v4655
    %5292 = vmatpush1.msra.mxu0 %v4654
    %5293 = vmatprep.subr.mxu0 %v4667
    %5294 = vmatpush1.msra.mxu0 %v4666
    %5295 = vmatprep.subr.mxu0 %v4679
    %5296 = vmatpush1.msra.mxu0 %v4678
    %5297 = vmatprep.subr.mxu0 %v4691
    %5298 = vmatpush1.msra.mxu0 %v4690
    %5299 = vmatprep.subr.mxu0 %v4703
    %5300 = vmatpush1.msra.mxu0 %v4702
    %5301 = vmatprep.subr.mxu0 %v4715
    %5302 = vmatpush1.msra.mxu0 %v4714
    %5303 = vmatprep.subr.mxu0 %v4727
    %5304 = vmatpush1.msra.mxu0 %v4726
    %5305 = vmatprep.subr.mxu0 %v4739
    %5306 = vmatpush1.msra.mxu0 %v4738
    %5307 = vmatprep.subr.mxu0 %v4751
    %5308 = vmatpush1.msra.mxu0 %v4750
    %5309 = vmatprep.subr.mxu0 %v4763
    %5310 = vmatpush1.msra.mxu0 %v4762
    %5311 = vmatprep.subr.mxu0 %v4775
    %5312 = vmatpush1.msra.mxu0 %v4774
    %5313 = vmatprep.subr.mxu0 %v4787
    %5314 = vmatpush1.msra.mxu0 %v4786
    %5315 = vmatprep.subr.mxu0 %v4799
    %5316 = vmatpush1.msra.mxu0 %v4798
    %5317 = vmatprep.subr.mxu0 %v4811
    %5318 = vmatpush1.msra.mxu0 %v4810
    %5319 = vmatprep.subr.mxu0 %v4823
    %5320 = vmatpush1.msra.mxu0 %v4822
    %5321 = vmatprep.subr.mxu0 %v4835
    %5322 = vmatpush1.msra.mxu0 %v4834
    %5323 = vmatprep.subr.mxu0 0.0
    %5324 = vmatpush1.msra.mxu0 0.0
    %5325 = vmatprep.subr.mxu0 0.0
    %5326 = vmatpush1.msra.mxu0 0.0
    %5327 = vmatprep.subr.mxu0 0.0
    %5328 = vmatpush1.msra.mxu0 0.0
    %5329 = vmatprep.subr.mxu0 0.0
    %5330 = vmatpush1.msra.mxu0 0.0
    %5331 = vmatprep.subr.mxu0 0.0
    %5332 = vmatpush1.msra.mxu0 0.0
    %5333 = vmatprep.subr.mxu0 0.0
    %5334 = vmatpush1.msra.mxu0 0.0
    %5335 = vmatprep.subr.mxu0 0.0
    %5336 = vmatpush1.msra.mxu0 0.0
    %5337 = vmatprep.subr.mxu0 0.0
    %5338 = vmatpush1.msra.mxu0 0.0
    %5339 = vmatprep.subr.mxu0 0.0
    %5340 = vmatpush1.msra.mxu0 0.0
    %5341 = vmatprep.subr.mxu0 0.0
    %5342 = vmatpush1.msra.mxu0 0.0
    %5343 = vmatprep.subr.mxu0 0.0
    %5344 = vmatpush1.msra.mxu0 0.0
    %5345 = vmatprep.subr.mxu0 0.0
    %5346 = vmatpush1.msra.mxu0 0.0
    %5347 = vmatprep.subr.mxu0 0.0
    %5348 = vmatpush1.msra.mxu0 0.0
    %5349 = vmatprep.subr.mxu0 0.0
    %5350 = vmatpush1.msra.mxu0 0.0
    %5351 = vmatprep.subr.mxu0 0.0
    %5352 = vmatpush1.msra.mxu0 0.0
    %5353 = vmatprep.subr.mxu0 0.0
    %5354 = vmatpush1.msra.mxu0 0.0
    %5355 = vmatprep.mubr.f32.mxu0 0.0
    %5356 = vmatmul.mubr.f32.gmra.mrb[0].mxu0 %v4262
    %v5357 = vpop.f32.mrb[0].mxu0
    %v5358 = vadd.f32 %v5281, %v5357
    %v5359 = vpop.f32.mrb[0].mxu0
    %v5360 = vadd.f32 %v5283, %v5359
    %5361 = vmatprep.mubr.f32.mxu0 0.0
    %5362 = vmatmul.mubr.f32.gmra.mrb[0].mxu0 %v4265
    %v5363 = vpop.f32.mrb[0].mxu0
    %v5364 = vadd.f32 %v5287, %v5363
    %v5365 = vpop.f32.mrb[0].mxu0
    %v5366 = vadd.f32 %v5289, %v5365
    %5367 = vdwg.mxu0
    %5368 = vmatprep.subr.mxu0 %v4273
    %5369 = vmatpush1.msra.mxu0 %v4272
    %5370 = vmatprep.subr.mxu0 %v4285
    %5371 = vmatpush1.msra.mxu0 %v4284
    %5372 = vmatprep.subr.mxu0 %v4297
    %5373 = vmatpush1.msra.mxu0 %v4296
    %5374 = vmatprep.subr.mxu0 %v4309
    %5375 = vmatpush1.msra.mxu0 %v4308
    %5376 = vmatprep.subr.mxu0 %v4321
    %5377 = vmatpush1.msra.mxu0 %v4320
    %5378 = vmatprep.subr.mxu0 %v4333
    %5379 = vmatpush1.msra.mxu0 %v4332
    %5380 = vmatprep.subr.mxu0 %v4345
    %5381 = vmatpush1.msra.mxu0 %v4344
    %5382 = vmatprep.subr.mxu0 %v4357
    %5383 = vmatpush1.msra.mxu0 %v4356
    %5384 = vmatprep.subr.mxu0 %v4369
    %5385 = vmatpush1.msra.mxu0 %v4368
    %5386 = vmatprep.subr.mxu0 %v4381
    %5387 = vmatpush1.msra.mxu0 %v4380
    %5388 = vmatprep.subr.mxu0 %v4393
    %5389 = vmatpush1.msra.mxu0 %v4392
    %5390 = vmatprep.subr.mxu0 %v4405
    %5391 = vmatpush1.msra.mxu0 %v4404
    %5392 = vmatprep.subr.mxu0 %v4417
    %5393 = vmatpush1.msra.mxu0 %v4416
    %5394 = vmatprep.subr.mxu0 %v4429
    %5395 = vmatpush1.msra.mxu0 %v4428
    %5396 = vmatprep.subr.mxu0 %v4441
    %5397 = vmatpush1.msra.mxu0 %v4440
    %5398 = vmatprep.subr.mxu0 %v4453
    %5399 = vmatpush1.msra.mxu0 %v4452
    %5400 = vmatprep.subr.mxu0 %v4465
    %5401 = vmatpush1.msra.mxu0 %v4464
    %5402 = vmatprep.subr.mxu0 %v4477
    %5403 = vmatpush1.msra.mxu0 %v4476
    %5404 = vmatprep.subr.mxu0 %v4489
    %5405 = vmatpush1.msra.mxu0 %v4488
    %5406 = vmatprep.subr.mxu0 %v4501
    %5407 = vmatpush1.msra.mxu0 %v4500
    %5408 = vmatprep.subr.mxu0 %v4513
    %5409 = vmatpush1.msra.mxu0 %v4512
    %5410 = vmatprep.subr.mxu0 %v4525
    %5411 = vmatpush1.msra.mxu0 %v4524
    %5412 = vmatprep.subr.mxu0 %v4537
    %5413 = vmatpush1.msra.mxu0 %v4536
    %5414 = vmatprep.subr.mxu0 %v4549
    %5415 = vmatpush1.msra.mxu0 %v4548
    %5416 = vmatprep.subr.mxu0 %v4561
    %5417 = vmatpush1.msra.mxu0 %v4560
    %5418 = vmatprep.subr.mxu0 %v4573
    %5419 = vmatpush1.msra.mxu0 %v4572
    %5420 = vmatprep.subr.mxu0 %v4585
    %5421 = vmatpush1.msra.mxu0 %v4584
    %5422 = vmatprep.subr.mxu0 %v4597
    %5423 = vmatpush1.msra.mxu0 %v4596
    %5424 = vmatprep.subr.mxu0 %v4609
    %5425 = vmatpush1.msra.mxu0 %v4608
    %5426 = vmatprep.subr.mxu0 %v4621
    %5427 = vmatpush1.msra.mxu0 %v4620
    %5428 = vmatprep.subr.mxu0 %v4633
    %5429 = vmatpush1.msra.mxu0 %v4632
    %5430 = vmatprep.subr.mxu0 %v4645
    %5431 = vmatpush1.msra.mxu0 %v4644
    %5432 = vmatprep.mubr.f32.mxu0 %v4261
    %5433 = vmatmul.mubr.f32.gmra.mrb[0].mxu0 %v4260
    %v5434 = vpop.f32.mrb[0].mxu0
    %v5435 = vadd.f32 %v4873, %v5434
    %v5436 = vpop.f32.mrb[0].mxu0
    %v5437 = vadd.f32 %v4877, %v5436
    %5438 = vmatprep.mubr.f32.mxu0 %v4264
    %5439 = vmatmul.mubr.f32.gmra.mrb[0].mxu0 %v4263
    %v5440 = vpop.f32.mrb[0].mxu0
    %v5441 = vadd.f32 %v4873, %v5440
    %v5442 = vpop.f32.mrb[0].mxu0
    %v5443 = vadd.f32 %v4877, %v5442
    %5444 = vdwg.mxu0
    %5445 = vmatprep.subr.mxu0 %v4657
    %5446 = vmatpush1.msra.mxu0 %v4656
    %5447 = vmatprep.subr.mxu0 %v4669
    %5448 = vmatpush1.msra.mxu0 %v4668
    %5449 = vmatprep.subr.mxu0 %v4681
    %5450 = vmatpush1.msra.mxu0 %v4680
    %5451 = vmatprep.subr.mxu0 %v4693
    %5452 = vmatpush1.msra.mxu0 %v4692
    %5453 = vmatprep.subr.mxu0 %v4705
    %5454 = vmatpush1.msra.mxu0 %v4704
    %5455 = vmatprep.subr.mxu0 %v4717
    %5456 = vmatpush1.msra.mxu0 %v4716
    %5457 = vmatprep.subr.mxu0 %v4729
    %5458 = vmatpush1.msra.mxu0 %v4728
    %5459 = vmatprep.subr.mxu0 %v4741
    %5460 = vmatpush1.msra.mxu0 %v4740
    %5461 = vmatprep.subr.mxu0 %v4753
    %5462 = vmatpush1.msra.mxu0 %v4752
    %5463 = vmatprep.subr.mxu0 %v4765
    %5464 = vmatpush1.msra.mxu0 %v4764
    %5465 = vmatprep.subr.mxu0 %v4777
    %5466 = vmatpush1.msra.mxu0 %v4776
    %5467 = vmatprep.subr.mxu0 %v4789
    %5468 = vmatpush1.msra.mxu0 %v4788
    %5469 = vmatprep.subr.mxu0 %v4801
    %5470 = vmatpush1.msra.mxu0 %v4800
    %5471 = vmatprep.subr.mxu0 %v4813
    %5472 = vmatpush1.msra.mxu0 %v4812
    %5473 = vmatprep.subr.mxu0 %v4825
    %5474 = vmatpush1.msra.mxu0 %v4824
    %5475 = vmatprep.subr.mxu0 %v4837
    %5476 = vmatpush1.msra.mxu0 %v4836
    %5477 = vmatprep.subr.mxu0 0.0
    %5478 = vmatpush1.msra.mxu0 0.0
    %5479 = vmatprep.subr.mxu0 0.0
    %5480 = vmatpush1.msra.mxu0 0.0
    %5481 = vmatprep.subr.mxu0 0.0
    %5482 = vmatpush1.msra.mxu0 0.0
    %5483 = vmatprep.subr.mxu0 0.0
    %5484 = vmatpush1.msra.mxu0 0.0
    %5485 = vmatprep.subr.mxu0 0.0
    %5486 = vmatpush1.msra.mxu0 0.0
    %5487 = vmatprep.subr.mxu0 0.0
    %5488 = vmatpush1.msra.mxu0 0.0
    %5489 = vmatprep.subr.mxu0 0.0
    %5490 = vmatpush1.msra.mxu0 0.0
    %5491 = vmatprep.subr.mxu0 0.0
    %5492 = vmatpush1.msra.mxu0 0.0
    %5493 = vmatprep.subr.mxu0 0.0
    %5494 = vmatpush1.msra.mxu0 0.0
    %5495 = vmatprep.subr.mxu0 0.0
    %5496 = vmatpush1.msra.mxu0 0.0
    %5497 = vmatprep.subr.mxu0 0.0
    %5498 = vmatpush1.msra.mxu0 0.0
    %5499 = vmatprep.subr.mxu0 0.0
    %5500 = vmatpush1.msra.mxu0 0.0
    %5501 = vmatprep.subr.mxu0 0.0
    %5502 = vmatpush1.msra.mxu0 0.0
    %5503 = vmatprep.subr.mxu0 0.0
    %5504 = vmatpush1.msra.mxu0 0.0
    %5505 = vmatprep.subr.mxu0 0.0
    %5506 = vmatpush1.msra.mxu0 0.0
    %5507 = vmatprep.subr.mxu0 0.0
    %5508 = vmatpush1.msra.mxu0 0.0
    %5509 = vmatprep.mubr.f32.mxu0 0.0
    %5510 = vmatmul.mubr.f32.gmra.mrb[0].mxu0 %v4262
    %v5511 = vpop.f32.mrb[0].mxu0
    %v5512 = vadd.f32 %v5435, %v5511
    %v5513 = vpop.f32.mrb[0].mxu0
    %v5514 = vadd.f32 %v5437, %v5513
    %5515 = vmatprep.mubr.f32.mxu0 0.0
    %5516 = vmatmul.mubr.f32.gmra.mrb[0].mxu0 %v4265
    %v5517 = vpop.f32.mrb[0].mxu0
    %v5518 = vadd.f32 %v5441, %v5517
    %v5519 = vpop.f32.mrb[0].mxu0
    %v5520 = vadd.f32 %v5443, %v5519
    %5521 = vdwg.mxu0
    %5522 = vmatprep.subr.mxu0 %v4275
    %5523 = vmatpush1.msra.mxu0 %v4274
    %5524 = vmatprep.subr.mxu0 %v4287
    %5525 = vmatpush1.msra.mxu0 %v4286
    %5526 = vmatprep.subr.mxu0 %v4299
    %5527 = vmatpush1.msra.mxu0 %v4298
    %5528 = vmatprep.subr.mxu0 %v4311
    %5529 = vmatpush1.msra.mxu0 %v4310
    %5530 = vmatprep.subr.mxu0 %v4323
    %5531 = vmatpush1.msra.mxu0 %v4322
    %5532 = vmatprep.subr.mxu0 %v4335
    %5533 = vmatpush1.msra.mxu0 %v4334
    %5534 = vmatprep.subr.mxu0 %v4347
    %5535 = vmatpush1.msra.mxu0 %v4346
    %5536 = vmatprep.subr.mxu0 %v4359
    %5537 = vmatpush1.msra.mxu0 %v4358
    %5538 = vmatprep.subr.mxu0 %v4371
    %5539 = vmatpush1.msra.mxu0 %v4370
    %5540 = vmatprep.subr.mxu0 %v4383
    %5541 = vmatpush1.msra.mxu0 %v4382
    %5542 = vmatprep.subr.mxu0 %v4395
    %5543 = vmatpush1.msra.mxu0 %v4394
    %5544 = vmatprep.subr.mxu0 %v4407
    %5545 = vmatpush1.msra.mxu0 %v4406
    %5546 = vmatprep.subr.mxu0 %v4419
    %5547 = vmatpush1.msra.mxu0 %v4418
    %5548 = vmatprep.subr.mxu0 %v4431
    %5549 = vmatpush1.msra.mxu0 %v4430
    %5550 = vmatprep.subr.mxu0 %v4443
    %5551 = vmatpush1.msra.mxu0 %v4442
    %5552 = vmatprep.subr.mxu0 %v4455
    %5553 = vmatpush1.msra.mxu0 %v4454
    %5554 = vmatprep.subr.mxu0 %v4467
    %5555 = vmatpush1.msra.mxu0 %v4466
    %5556 = vmatprep.subr.mxu0 %v4479
    %5557 = vmatpush1.msra.mxu0 %v4478
    %5558 = vmatprep.subr.mxu0 %v4491
    %5559 = vmatpush1.msra.mxu0 %v4490
    %5560 = vmatprep.subr.mxu0 %v4503
    %5561 = vmatpush1.msra.mxu0 %v4502
    %5562 = vmatprep.subr.mxu0 %v4515
    %5563 = vmatpush1.msra.mxu0 %v4514
    %5564 = vmatprep.subr.mxu0 %v4527
    %5565 = vmatpush1.msra.mxu0 %v4526
    %5566 = vmatprep.subr.mxu0 %v4539
    %5567 = vmatpush1.msra.mxu0 %v4538
    %5568 = vmatprep.subr.mxu0 %v4551
    %5569 = vmatpush1.msra.mxu0 %v4550
    %5570 = vmatprep.subr.mxu0 %v4563
    %5571 = vmatpush1.msra.mxu0 %v4562
    %5572 = vmatprep.subr.mxu0 %v4575
    %5573 = vmatpush1.msra.mxu0 %v4574
    %5574 = vmatprep.subr.mxu0 %v4587
    %5575 = vmatpush1.msra.mxu0 %v4586
    %5576 = vmatprep.subr.mxu0 %v4599
    %5577 = vmatpush1.msra.mxu0 %v4598
    %5578 = vmatprep.subr.mxu0 %v4611
    %5579 = vmatpush1.msra.mxu0 %v4610
    %5580 = vmatprep.subr.mxu0 %v4623
    %5581 = vmatpush1.msra.mxu0 %v4622
    %5582 = vmatprep.subr.mxu0 %v4635
    %5583 = vmatpush1.msra.mxu0 %v4634
    %5584 = vmatprep.subr.mxu0 %v4647
    %5585 = vmatpush1.msra.mxu0 %v4646
    %5586 = vmatprep.mubr.f32.mxu0 %v4261
    %5587 = vmatmul.mubr.f32.gmra.mrb[0].mxu0 %v4260
    %v5588 = vpop.f32.mrb[0].mxu0
    %v5589 = vadd.f32 %v4881, %v5588
    %v5590 = vpop.f32.mrb[0].mxu0
    %v5591 = vadd.f32 %v4885, %v5590
    %5592 = vmatprep.mubr.f32.mxu0 %v4264
    %5593 = vmatmul.mubr.f32.gmra.mrb[0].mxu0 %v4263
    %v5594 = vpop.f32.mrb[0].mxu0
    %v5595 = vadd.f32 %v4881, %v5594
    %v5596 = vpop.f32.mrb[0].mxu0
    %v5597 = vadd.f32 %v4885, %v5596
    %5598 = vdwg.mxu0
    %5599 = vmatprep.subr.mxu0 %v4659
    %5600 = vmatpush1.msra.mxu0 %v4658
    %5601 = vmatprep.subr.mxu0 %v4671
    %5602 = vmatpush1.msra.mxu0 %v4670
    %5603 = vmatprep.subr.mxu0 %v4683
    %5604 = vmatpush1.msra.mxu0 %v4682
    %5605 = vmatprep.subr.mxu0 %v4695
    %5606 = vmatpush1.msra.mxu0 %v4694
    %5607 = vmatprep.subr.mxu0 %v4707
    %5608 = vmatpush1.msra.mxu0 %v4706
    %5609 = vmatprep.subr.mxu0 %v4719
    %5610 = vmatpush1.msra.mxu0 %v4718
    %5611 = vmatprep.subr.mxu0 %v4731
    %5612 = vmatpush1.msra.mxu0 %v4730
    %5613 = vmatprep.subr.mxu0 %v4743
    %5614 = vmatpush1.msra.mxu0 %v4742
    %5615 = vmatprep.subr.mxu0 %v4755
    %5616 = vmatpush1.msra.mxu0 %v4754
    %5617 = vmatprep.subr.mxu0 %v4767
    %5618 = vmatpush1.msra.mxu0 %v4766
    %5619 = vmatprep.subr.mxu0 %v4779
    %5620 = vmatpush1.msra.mxu0 %v4778
    %5621 = vmatprep.subr.mxu0 %v4791
    %5622 = vmatpush1.msra.mxu0 %v4790
    %5623 = vmatprep.subr.mxu0 %v4803
    %5624 = vmatpush1.msra.mxu0 %v4802
    %5625 = vmatprep.subr.mxu0 %v4815
    %5626 = vmatpush1.msra.mxu0 %v4814
    %5627 = vmatprep.subr.mxu0 %v4827
    %5628 = vmatpush1.msra.mxu0 %v4826
    %5629 = vmatprep.subr.mxu0 %v4839
    %5630 = vmatpush1.msra.mxu0 %v4838
    %5631 = vmatprep.subr.mxu0 0.0
    %5632 = vmatpush1.msra.mxu0 0.0
    %5633 = vmatprep.subr.mxu0 0.0
    %5634 = vmatpush1.msra.mxu0 0.0
    %5635 = vmatprep.subr.mxu0 0.0
    %5636 = vmatpush1.msra.mxu0 0.0
    %5637 = vmatprep.subr.mxu0 0.0
    %5638 = vmatpush1.msra.mxu0 0.0
    %5639 = vmatprep.subr.mxu0 0.0
    %5640 = vmatpush1.msra.mxu0 0.0
    %5641 = vmatprep.subr.mxu0 0.0
    %5642 = vmatpush1.msra.mxu0 0.0
    %5643 = vmatprep.subr.mxu0 0.0
    %5644 = vmatpush1.msra.mxu0 0.0
    %5645 = vmatprep.subr.mxu0 0.0
    %5646 = vmatpush1.msra.mxu0 0.0
    %5647 = vmatprep.subr.mxu0 0.0
    %5648 = vmatpush1.msra.mxu0 0.0
    %5649 = vmatprep.subr.mxu0 0.0
    %5650 = vmatpush1.msra.mxu0 0.0
    %5651 = vmatprep.subr.mxu0 0.0
    %5652 = vmatpush1.msra.mxu0 0.0
    %5653 = vmatprep.subr.mxu0 0.0
    %5654 = vmatpush1.msra.mxu0 0.0
    %5655 = vmatprep.subr.mxu0 0.0
    %5656 = vmatpush1.msra.mxu0 0.0
    %5657 = vmatprep.subr.mxu0 0.0
    %5658 = vmatpush1.msra.mxu0 0.0
    %5659 = vmatprep.subr.mxu0 0.0
    %5660 = vmatpush1.msra.mxu0 0.0
    %5661 = vmatprep.subr.mxu0 0.0
    %5662 = vmatpush1.msra.mxu0 0.0
    %5663 = vmatprep.mubr.f32.mxu0 0.0
    %5664 = vmatmul.mubr.f32.gmra.mrb[0].mxu0 %v4262
    %v5665 = vpop.f32.mrb[0].mxu0
    %v5666 = vadd.f32 %v5589, %v5665
    %v5667 = vpop.f32.mrb[0].mxu0
    %v5668 = vadd.f32 %v5591, %v5667
    %5669 = vmatprep.mubr.f32.mxu0 0.0
    %5670 = vmatmul.mubr.f32.gmra.mrb[0].mxu0 %v4265
    %v5671 = vpop.f32.mrb[0].mxu0
    %v5672 = vadd.f32 %v5595, %v5671
    %v5673 = vpop.f32.mrb[0].mxu0
    %v5674 = vadd.f32 %v5597, %v5673
    %5675 = vdwg.mxu0
    %5676 = vmatprep.subr.mxu0 %v4277
    %5677 = vmatpush1.msra.mxu0 %v4276
    %5678 = vmatprep.subr.mxu0 %v4289
    %5679 = vmatpush1.msra.mxu0 %v4288
    %5680 = vmatprep.subr.mxu0 %v4301
    %5681 = vmatpush1.msra.mxu0 %v4300
    %5682 = vmatprep.subr.mxu0 %v4313
    %5683 = vmatpush1.msra.mxu0 %v4312
    %5684 = vmatprep.subr.mxu0 %v4325
    %5685 = vmatpush1.msra.mxu0 %v4324
    %5686 = vmatprep.subr.mxu0 %v4337
    %5687 = vmatpush1.msra.mxu0 %v4336
    %5688 = vmatprep.subr.mxu0 %v4349
    %5689 = vmatpush1.msra.mxu0 %v4348
    %5690 = vmatprep.subr.mxu0 %v4361
    %5691 = vmatpush1.msra.mxu0 %v4360
    %5692 = vmatprep.subr.mxu0 %v4373
    %5693 = vmatpush1.msra.mxu0 %v4372
    %5694 = vmatprep.subr.mxu0 %v4385
    %5695 = vmatpush1.msra.mxu0 %v4384
    %5696 = vmatprep.subr.mxu0 %v4397
    %5697 = vmatpush1.msra.mxu0 %v4396
    %5698 = vmatprep.subr.mxu0 %v4409
    %5699 = vmatpush1.msra.mxu0 %v4408
    %5700 = vmatprep.subr.mxu0 %v4421
    %5701 = vmatpush1.msra.mxu0 %v4420
    %5702 = vmatprep.subr.mxu0 %v4433
    %5703 = vmatpush1.msra.mxu0 %v4432
    %5704 = vmatprep.subr.mxu0 %v4445
    %5705 = vmatpush1.msra.mxu0 %v4444
    %5706 = vmatprep.subr.mxu0 %v4457
    %5707 = vmatpush1.msra.mxu0 %v4456
    %5708 = vmatprep.subr.mxu0 %v4469
    %5709 = vmatpush1.msra.mxu0 %v4468
    %5710 = vmatprep.subr.mxu0 %v4481
    %5711 = vmatpush1.msra.mxu0 %v4480
    %5712 = vmatprep.subr.mxu0 %v4493
    %5713 = vmatpush1.msra.mxu0 %v4492
    %5714 = vmatprep.subr.mxu0 %v4505
    %5715 = vmatpush1.msra.mxu0 %v4504
    %5716 = vmatprep.subr.mxu0 %v4517
    %5717 = vmatpush1.msra.mxu0 %v4516
    %5718 = vmatprep.subr.mxu0 %v4529
    %5719 = vmatpush1.msra.mxu0 %v4528
    %5720 = vmatprep.subr.mxu0 %v4541
    %5721 = vmatpush1.msra.mxu0 %v4540
    %5722 = vmatprep.subr.mxu0 %v4553
    %5723 = vmatpush1.msra.mxu0 %v4552
    %5724 = vmatprep.subr.mxu0 %v4565
    %5725 = vmatpush1.msra.mxu0 %v4564
    %5726 = vmatprep.subr.mxu0 %v4577
    %5727 = vmatpush1.msra.mxu0 %v4576
    %5728 = vmatprep.subr.mxu0 %v4589
    %5729 = vmatpush1.msra.mxu0 %v4588
    %5730 = vmatprep.subr.mxu0 %v4601
    %5731 = vmatpush1.msra.mxu0 %v4600
    %5732 = vmatprep.subr.mxu0 %v4613
    %5733 = vmatpush1.msra.mxu0 %v4612
    %5734 = vmatprep.subr.mxu0 %v4625
    %5735 = vmatpush1.msra.mxu0 %v4624
    %5736 = vmatprep.subr.mxu0 %v4637
    %5737 = vmatpush1.msra.mxu0 %v4636
    %5738 = vmatprep.subr.mxu0 %v4649
    %5739 = vmatpush1.msra.mxu0 %v4648
    %5740 = vmatprep.mubr.f32.mxu0 %v4261
    %5741 = vmatmul.mubr.f32.gmra.mrb[0].mxu0 %v4260
    %v5742 = vpop.f32.mrb[0].mxu0
    %v5743 = vadd.f32 %v4889, %v5742
    %v5744 = vpop.f32.mrb[0].mxu0
    %v5745 = vadd.f32 %v4893, %v5744
    %5746 = vmatprep.mubr.f32.mxu0 %v4264
    %5747 = vmatmul.mubr.f32.gmra.mrb[0].mxu0 %v4263
    %v5748 = vpop.f32.mrb[0].mxu0
    %v5749 = vadd.f32 %v4889, %v5748
    %v5750 = vpop.f32.mrb[0].mxu0
    %v5751 = vadd.f32 %v4893, %v5750
    %5752 = vdwg.mxu0
    %5753 = vmatprep.subr.mxu0 %v4661
    %5754 = vmatpush1.msra.mxu0 %v4660
    %5755 = vmatprep.subr.mxu0 %v4673
    %5756 = vmatpush1.msra.mxu0 %v4672
    %5757 = vmatprep.subr.mxu0 %v4685
    %5758 = vmatpush1.msra.mxu0 %v4684
    %5759 = vmatprep.subr.mxu0 %v4697
    %5760 = vmatpush1.msra.mxu0 %v4696
    %5761 = vmatprep.subr.mxu0 %v4709
    %5762 = vmatpush1.msra.mxu0 %v4708
    %5763 = vmatprep.subr.mxu0 %v4721
    %5764 = vmatpush1.msra.mxu0 %v4720
    %5765 = vmatprep.subr.mxu0 %v4733
    %5766 = vmatpush1.msra.mxu0 %v4732
    %5767 = vmatprep.subr.mxu0 %v4745
    %5768 = vmatpush1.msra.mxu0 %v4744
    %5769 = vmatprep.subr.mxu0 %v4757
    %5770 = vmatpush1.msra.mxu0 %v4756
    %5771 = vmatprep.subr.mxu0 %v4769
    %5772 = vmatpush1.msra.mxu0 %v4768
    %5773 = vmatprep.subr.mxu0 %v4781
    %5774 = vmatpush1.msra.mxu0 %v4780
    %5775 = vmatprep.subr.mxu0 %v4793
    %5776 = vmatpush1.msra.mxu0 %v4792
    %5777 = vmatprep.subr.mxu0 %v4805
    %5778 = vmatpush1.msra.mxu0 %v4804
    %5779 = vmatprep.subr.mxu0 %v4817
    %5780 = vmatpush1.msra.mxu0 %v4816
    %5781 = vmatprep.subr.mxu0 %v4829
    %5782 = vmatpush1.msra.mxu0 %v4828
    %5783 = vmatprep.subr.mxu0 %v4841
    %5784 = vmatpush1.msra.mxu0 %v4840
    %5785 = vmatprep.subr.mxu0 0.0
    %5786 = vmatpush1.msra.mxu0 0.0
    %5787 = vmatprep.subr.mxu0 0.0
    %5788 = vmatpush1.msra.mxu0 0.0
    %5789 = vmatprep.subr.mxu0 0.0
    %5790 = vmatpush1.msra.mxu0 0.0
    %5791 = vmatprep.subr.mxu0 0.0
    %5792 = vmatpush1.msra.mxu0 0.0
    %5793 = vmatprep.subr.mxu0 0.0
    %5794 = vmatpush1.msra.mxu0 0.0
    %5795 = vmatprep.subr.mxu0 0.0
    %5796 = vmatpush1.msra.mxu0 0.0
    %5797 = vmatprep.subr.mxu0 0.0
    %5798 = vmatpush1.msra.mxu0 0.0
    %5799 = vmatprep.subr.mxu0 0.0
    %5800 = vmatpush1.msra.mxu0 0.0
    %5801 = vmatprep.subr.mxu0 0.0
    %5802 = vmatpush1.msra.mxu0 0.0
    %5803 = vmatprep.subr.mxu0 0.0
    %5804 = vmatpush1.msra.mxu0 0.0
    %5805 = vmatprep.subr.mxu0 0.0
    %5806 = vmatpush1.msra.mxu0 0.0
    %5807 = vmatprep.subr.mxu0 0.0
    %5808 = vmatpush1.msra.mxu0 0.0
    %5809 = vmatprep.subr.mxu0 0.0
    %5810 = vmatpush1.msra.mxu0 0.0
    %5811 = vmatprep.subr.mxu0 0.0
    %5812 = vmatpush1.msra.mxu0 0.0
    %5813 = vmatprep.subr.mxu0 0.0
    %5814 = vmatpush1.msra.mxu0 0.0
    %5815 = vmatprep.subr.mxu0 0.0
    %5816 = vmatpush1.msra.mxu0 0.0
    %5817 = vmatprep.mubr.f32.mxu0 0.0
    %5818 = vmatmul.mubr.f32.gmra.mrb[0].mxu0 %v4262
    %v5819 = vpop.f32.mrb[0].mxu0
    %v5820 = vadd.f32 %v5743, %v5819
    %v5821 = vpop.f32.mrb[0].mxu0
    %v5822 = vadd.f32 %v5745, %v5821
    %5823 = vmatprep.mubr.f32.mxu0 0.0
    %5824 = vmatmul.mubr.f32.gmra.mrb[0].mxu0 %v4265
    %v5825 = vpop.f32.mrb[0].mxu0
    %v5826 = vadd.f32 %v5749, %v5825
    %v5827 = vpop.f32.mrb[0].mxu0
    %v5828 = vadd.f32 %v5751, %v5827
    %5829 = vdwg.mxu0
    %v5830 = vmax.f32 %v5050, 0.0
    %v5831 = vmax.f32 %v5052, 0.0
    %v5832 = vmax.f32 %v5204, 0.0
    %v5833 = vmax.f32 %v5206, 0.0
    %v5834 = vmax.f32 %v5358, 0.0
    %v5835 = vmax.f32 %v5360, 0.0
    %v5836 = vmax.f32 %v5512, 0.0
    %v5837 = vmax.f32 %v5514, 0.0
    %v5838 = vmax.f32 %v5666, 0.0
    %v5839 = vmax.f32 %v5668, 0.0
    %v5840 = vmax.f32 %v5820, 0.0
    %v5841 = vmax.f32 %v5822, 0.0
    %v5842 = vmax.f32 %v5056, 0.0
    %v5843 = vmax.f32 %v5058, 0.0
    %v5844 = vmax.f32 %v5210, 0.0
    %v5845 = vmax.f32 %v5212, 0.0
    %v5846 = vmax.f32 %v5364, 0.0
    %v5847 = vmax.f32 %v5366, 0.0
    %v5848 = vmax.f32 %v5518, 0.0
    %v5849 = vmax.f32 %v5520, 0.0
    %v5850 = vmax.f32 %v5672, 0.0
    %v5851 = vmax.f32 %v5674, 0.0
    %v5852 = vmax.f32 %v5826, 0.0
    %v5853 = vmax.f32 %v5828, 0.0
    %v5854 = vld [vmem:[#allocation23] sm:$0xff]
    %v5855 = vld [vmem:[#allocation23 + $0x8] sm:$0xff]
    %v5856 = vld [vmem:[#allocation23 + $0x10] sm:$0xff]
    %v5857 = vld [vmem:[#allocation23 + $0x18] sm:$0xff]
    %v5858 = vld [vmem:[#allocation23 + $0x20] sm:$0xff]
    %v5859 = vld [vmem:[#allocation23 + $0x28] sm:$0xff]
    %v5860 = vld [vmem:[#allocation23 + $0x30] sm:$0xff]
    %v5861 = vld [vmem:[#allocation23 + $0x38] sm:$0xff]
    %v5862 = vld [vmem:[#allocation23 + $0x40] sm:$0xff]
    %v5863 = vld [vmem:[#allocation23 + $0x48] sm:$0xff]
    %v5864 = vld [vmem:[#allocation23 + $0x50] sm:$0xff]
    %v5865 = vld [vmem:[#allocation23 + $0x58] sm:$0xff]
    %v5866 = vld [vmem:[#allocation23 + $0x60] sm:$0xff]
    %v5867 = vld [vmem:[#allocation23 + $0x68] sm:$0xff]
    %v5868 = vld [vmem:[#allocation23 + $0x70] sm:$0xff]
    %v5869 = vld [vmem:[#allocation23 + $0x78] sm:$0xff]
    %v5870 = vld [vmem:[#allocation23 + $0x80] sm:$0xff]
    %v5871 = vld [vmem:[#allocation23 + $0x88] sm:$0xff]
    %v5872 = vld [vmem:[#allocation23 + $0x90] sm:$0xff]
    %v5873 = vld [vmem:[#allocation23 + $0x98] sm:$0xff]
    %v5874 = vld [vmem:[#allocation23 + $0xa0] sm:$0xff]
    %v5875 = vld [vmem:[#allocation23 + $0xa8] sm:$0xff]
    %v5876 = vld [vmem:[#allocation23 + $0xb0] sm:$0xff]
    %v5877 = vld [vmem:[#allocation23 + $0xb8] sm:$0xff]
    %v5878 = vld [vmem:[#allocation23 + $0xc0] sm:$0xff]
    %v5879 = vld [vmem:[#allocation23 + $0xc8] sm:$0xff]
    %v5880 = vld [vmem:[#allocation23 + $0xd0] sm:$0xff]
    %v5881 = vld [vmem:[#allocation23 + $0xd8] sm:$0xff]
    %v5882 = vld [vmem:[#allocation23 + $0xe0] sm:$0xff]
    %v5883 = vld [vmem:[#allocation23 + $0xe8] sm:$0xff]
    %v5884 = vld [vmem:[#allocation23 + $0xf0] sm:$0xff]
    %v5885 = vld [vmem:[#allocation23 + $0xf8] sm:$0xff]
    %v5886 = vld [vmem:[#allocation23 + $0x100] sm:$0xff]
    %v5887 = vld [vmem:[#allocation23 + $0x108] sm:$0xff]
    %v5888 = vld [vmem:[#allocation23 + $0x110] sm:$0xff]
    %v5889 = vld [vmem:[#allocation23 + $0x118] sm:$0xff]
    %v5890 = vld [vmem:[#allocation23 + $0x120] sm:$0xff]
    %v5891 = vld [vmem:[#allocation23 + $0x128] sm:$0xff]
    %v5892 = vld [vmem:[#allocation23 + $0x130] sm:$0xff]
    %v5893 = vld [vmem:[#allocation23 + $0x138] sm:$0xff]
    %v5894 = vld [vmem:[#allocation23 + $0x140] sm:$0xff]
    %v5895 = vld [vmem:[#allocation23 + $0x148] sm:$0xff]
    %v5896 = vld [vmem:[#allocation23 + $0x150] sm:$0xff]
    %v5897 = vld [vmem:[#allocation23 + $0x158] sm:$0xff]
    %v5898 = vld [vmem:[#allocation23 + $0x160] sm:$0xff]
    %v5899 = vld [vmem:[#allocation23 + $0x168] sm:$0xff]
    %v5900 = vld [vmem:[#allocation23 + $0x170] sm:$0xff]
    %v5901 = vld [vmem:[#allocation23 + $0x178] sm:$0xff]
    %v5902 = vld [vmem:[#allocation23 + $0x180] sm:$0xff]
    %v5903 = vld [vmem:[#allocation23 + $0x188] sm:$0xff]
    %v5904 = vld [vmem:[#allocation23 + $0x190] sm:$0xff]
    %v5905 = vld [vmem:[#allocation23 + $0x198] sm:$0xff]
    %v5906 = vld [vmem:[#allocation23 + $0x1a0] sm:$0xff]
    %v5907 = vld [vmem:[#allocation23 + $0x1a8] sm:$0xff]
    %v5908 = vld [vmem:[#allocation23 + $0x1b0] sm:$0xff]
    %v5909 = vld [vmem:[#allocation23 + $0x1b8] sm:$0xff]
    %v5910 = vld [vmem:[#allocation23 + $0x1c0] sm:$0xff]
    %v5911 = vld [vmem:[#allocation23 + $0x1c8] sm:$0xff]
    %v5912 = vld [vmem:[#allocation23 + $0x1d0] sm:$0xff]
    %v5913 = vld [vmem:[#allocation23 + $0x1d8] sm:$0xff]
    %v5914 = vld [vmem:[#allocation23 + $0x1e0] sm:$0xff]
    %v5915 = vld [vmem:[#allocation23 + $0x1e8] sm:$0xff]
    %v5916 = vld [vmem:[#allocation23 + $0x1f0] sm:$0xff]
    %v5917 = vld [vmem:[#allocation23 + $0x1f8] sm:$0xff]
    %v5918 = vld [vmem:[#allocation23 + $0x200] sm:$0xff]
    %v5919 = vld [vmem:[#allocation23 + $0x208] sm:$0xff]
    %v5920 = vld [vmem:[#allocation23 + $0x210] sm:$0xff]
    %v5921 = vld [vmem:[#allocation23 + $0x218] sm:$0xff]
    %v5922 = vld [vmem:[#allocation23 + $0x220] sm:$0xff]
    %v5923 = vld [vmem:[#allocation23 + $0x228] sm:$0xff]
    %v5924 = vld [vmem:[#allocation23 + $0x230] sm:$0xff]
    %v5925 = vld [vmem:[#allocation23 + $0x238] sm:$0xff]
    %v5926 = vld [vmem:[#allocation23 + $0x240] sm:$0xff]
    %v5927 = vld [vmem:[#allocation23 + $0x248] sm:$0xff]
    %v5928 = vld [vmem:[#allocation23 + $0x250] sm:$0xff]
    %v5929 = vld [vmem:[#allocation23 + $0x258] sm:$0xff]
    %v5930 = vld [vmem:[#allocation23 + $0x260] sm:$0xff]
    %v5931 = vld [vmem:[#allocation23 + $0x268] sm:$0xff]
    %v5932 = vld [vmem:[#allocation23 + $0x270] sm:$0xff]
    %v5933 = vld [vmem:[#allocation23 + $0x278] sm:$0xff]
    %v5934 = vld [vmem:[#allocation23 + $0x280] sm:$0xff]
    %v5935 = vld [vmem:[#allocation23 + $0x288] sm:$0xff]
    %v5936 = vld [vmem:[#allocation23 + $0x290] sm:$0xff]
    %v5937 = vld [vmem:[#allocation23 + $0x298] sm:$0xff]
    %v5938 = vld [vmem:[#allocation23 + $0x2a0] sm:$0xff]
    %v5939 = vld [vmem:[#allocation23 + $0x2a8] sm:$0xff]
    %v5940 = vld [vmem:[#allocation23 + $0x2b0] sm:$0xff]
    %v5941 = vld [vmem:[#allocation23 + $0x2b8] sm:$0xff]
    %v5942 = vld [vmem:[#allocation23 + $0x2c0] sm:$0xff]
    %v5943 = vld [vmem:[#allocation23 + $0x2c8] sm:$0xff]
    %v5944 = vld [vmem:[#allocation23 + $0x2d0] sm:$0xff]
    %v5945 = vld [vmem:[#allocation23 + $0x2d8] sm:$0xff]
    %v5946 = vld [vmem:[#allocation23 + $0x2e0] sm:$0xff]
    %v5947 = vld [vmem:[#allocation23 + $0x2e8] sm:$0xff]
    %v5948 = vld [vmem:[#allocation23 + $0x2f0] sm:$0xff]
    %v5949 = vld [vmem:[#allocation23 + $0x2f8] sm:$0xff]
    %v5950 = vld [vmem:[#allocation23 + $0x300] sm:$0xff]
    %v5951 = vld [vmem:[#allocation23 + $0x308] sm:$0xff]
    %v5952 = vld [vmem:[#allocation23 + $0x310] sm:$0xff]
    %v5953 = vld [vmem:[#allocation23 + $0x318] sm:$0xff]
    %v5954 = vld [vmem:[#allocation23 + $0x320] sm:$0xff]
    %v5955 = vld [vmem:[#allocation23 + $0x328] sm:$0xff]
    %v5956 = vld [vmem:[#allocation23 + $0x330] sm:$0xff]
    %v5957 = vld [vmem:[#allocation23 + $0x338] sm:$0xff]
    %v5958 = vld [vmem:[#allocation23 + $0x340] sm:$0xff]
    %v5959 = vld [vmem:[#allocation23 + $0x348] sm:$0xff]
    %v5960 = vld [vmem:[#allocation23 + $0x350] sm:$0xff]
    %v5961 = vld [vmem:[#allocation23 + $0x358] sm:$0xff]
    %v5962 = vld [vmem:[#allocation23 + $0x360] sm:$0xff]
    %v5963 = vld [vmem:[#allocation23 + $0x368] sm:$0xff]
    %v5964 = vld [vmem:[#allocation23 + $0x370] sm:$0xff]
    %v5965 = vld [vmem:[#allocation23 + $0x378] sm:$0xff]
    %v5966 = vld [vmem:[#allocation23 + $0x380] sm:$0xff]
    %v5967 = vld [vmem:[#allocation23 + $0x388] sm:$0xff]
    %v5968 = vld [vmem:[#allocation23 + $0x390] sm:$0xff]
    %v5969 = vld [vmem:[#allocation23 + $0x398] sm:$0xff]
    %v5970 = vld [vmem:[#allocation23 + $0x3a0] sm:$0xff]
    %v5971 = vld [vmem:[#allocation23 + $0x3a8] sm:$0xff]
    %v5972 = vld [vmem:[#allocation23 + $0x3b0] sm:$0xff]
    %v5973 = vld [vmem:[#allocation23 + $0x3b8] sm:$0xff]
    %v5974 = vld [vmem:[#allocation23 + $0x3c0] sm:$0xff]
    %v5975 = vld [vmem:[#allocation23 + $0x3c8] sm:$0xff]
    %v5976 = vld [vmem:[#allocation23 + $0x3d0] sm:$0xff]
    %v5977 = vld [vmem:[#allocation23 + $0x3d8] sm:$0xff]
    %v5978 = vld [vmem:[#allocation23 + $0x3e0] sm:$0xff]
    %v5979 = vld [vmem:[#allocation23 + $0x3e8] sm:$0xff]
    %v5980 = vld [vmem:[#allocation23 + $0x3f0] sm:$0xff]
    %v5981 = vld [vmem:[#allocation23 + $0x3f8] sm:$0xff]
    %v5982 = vld [vmem:[#allocation23 + $0x400] sm:$0xff]
    %v5983 = vld [vmem:[#allocation23 + $0x408] sm:$0xff]
    %v5984 = vld [vmem:[#allocation23 + $0x410] sm:$0xff]
    %v5985 = vld [vmem:[#allocation23 + $0x418] sm:$0xff]
    %v5986 = vld [vmem:[#allocation23 + $0x420] sm:$0xff]
    %v5987 = vld [vmem:[#allocation23 + $0x428] sm:$0xff]
    %v5988 = vld [vmem:[#allocation23 + $0x430] sm:$0xff]
    %v5989 = vld [vmem:[#allocation23 + $0x438] sm:$0xff]
    %v5990 = vld [vmem:[#allocation23 + $0x440] sm:$0xff]
    %v5991 = vld [vmem:[#allocation23 + $0x448] sm:$0xff]
    %v5992 = vld [vmem:[#allocation23 + $0x450] sm:$0xff]
    %v5993 = vld [vmem:[#allocation23 + $0x458] sm:$0xff]
    %v5994 = vld [vmem:[#allocation23 + $0x460] sm:$0xff]
    %v5995 = vld [vmem:[#allocation23 + $0x468] sm:$0xff]
    %v5996 = vld [vmem:[#allocation23 + $0x470] sm:$0xff]
    %v5997 = vld [vmem:[#allocation23 + $0x478] sm:$0xff]
    %v5998 = vld [vmem:[#allocation23 + $0x480] sm:$0xff]
    %v5999 = vld [vmem:[#allocation23 + $0x488] sm:$0xff]
    %v6000 = vld [vmem:[#allocation23 + $0x490] sm:$0xff]
    %v6001 = vld [vmem:[#allocation23 + $0x498] sm:$0xff]
    %v6002 = vld [vmem:[#allocation23 + $0x4a0] sm:$0xff]
    %v6003 = vld [vmem:[#allocation23 + $0x4a8] sm:$0xff]
    %v6004 = vld [vmem:[#allocation23 + $0x4b0] sm:$0xff]
    %v6005 = vld [vmem:[#allocation23 + $0x4b8] sm:$0xff]
    %v6006 = vld [vmem:[#allocation23 + $0x4c0] sm:$0xff]
    %v6007 = vld [vmem:[#allocation23 + $0x4c8] sm:$0xff]
    %v6008 = vld [vmem:[#allocation23 + $0x4d0] sm:$0xff]
    %v6009 = vld [vmem:[#allocation23 + $0x4d8] sm:$0xff]
    %v6010 = vld [vmem:[#allocation23 + $0x4e0] sm:$0xff]
    %v6011 = vld [vmem:[#allocation23 + $0x4e8] sm:$0xff]
    %v6012 = vld [vmem:[#allocation23 + $0x4f0] sm:$0xff]
    %v6013 = vld [vmem:[#allocation23 + $0x4f8] sm:$0xff]
    %v6014 = vld [vmem:[#allocation23 + $0x500] sm:$0xff]
    %v6015 = vld [vmem:[#allocation23 + $0x508] sm:$0xff]
    %v6016 = vld [vmem:[#allocation23 + $0x510] sm:$0xff]
    %v6017 = vld [vmem:[#allocation23 + $0x518] sm:$0xff]
    %v6018 = vld [vmem:[#allocation23 + $0x520] sm:$0xff]
    %v6019 = vld [vmem:[#allocation23 + $0x528] sm:$0xff]
    %v6020 = vld [vmem:[#allocation23 + $0x530] sm:$0xff]
    %v6021 = vld [vmem:[#allocation23 + $0x538] sm:$0xff]
    %v6022 = vld [vmem:[#allocation23 + $0x540] sm:$0xff]
    %v6023 = vld [vmem:[#allocation23 + $0x548] sm:$0xff]
    %v6024 = vld [vmem:[#allocation23 + $0x550] sm:$0xff]
    %v6025 = vld [vmem:[#allocation23 + $0x558] sm:$0xff]
    %v6026 = vld [vmem:[#allocation23 + $0x560] sm:$0xff]
    %v6027 = vld [vmem:[#allocation23 + $0x568] sm:$0xff]
    %v6028 = vld [vmem:[#allocation23 + $0x570] sm:$0xff]
    %v6029 = vld [vmem:[#allocation23 + $0x578] sm:$0xff]
    %v6030 = vld [vmem:[#allocation23 + $0x580] sm:$0xff]
    %v6031 = vld [vmem:[#allocation23 + $0x588] sm:$0xff]
    %v6032 = vld [vmem:[#allocation23 + $0x590] sm:$0xff]
    %v6033 = vld [vmem:[#allocation23 + $0x598] sm:$0xff]
    %v6034 = vld [vmem:[#allocation23 + $0x5a0] sm:$0xff]
    %v6035 = vld [vmem:[#allocation23 + $0x5a8] sm:$0xff]
    %v6036 = vld [vmem:[#allocation23 + $0x5b0] sm:$0xff]
    %v6037 = vld [vmem:[#allocation23 + $0x5b8] sm:$0xff]
    %v6038 = vld [vmem:[#allocation23 + $0x5c0] sm:$0xff]
    %v6039 = vld [vmem:[#allocation23 + $0x5c8] sm:$0xff]
    %v6040 = vld [vmem:[#allocation23 + $0x5d0] sm:$0xff]
    %v6041 = vld [vmem:[#allocation23 + $0x5d8] sm:$0xff]
    %v6042 = vld [vmem:[#allocation23 + $0x5e0] sm:$0xff]
    %v6043 = vld [vmem:[#allocation23 + $0x5e8] sm:$0xff]
    %v6044 = vld [vmem:[#allocation23 + $0x5f0] sm:$0xff]
    %v6045 = vld [vmem:[#allocation23 + $0x5f8] sm:$0xff]
    %v6046 = vld [vmem:[#allocation23 + $0x600] sm:$0xff]
    %v6047 = vld [vmem:[#allocation23 + $0x608] sm:$0xff]
    %v6048 = vld [vmem:[#allocation23 + $0x610] sm:$0xff]
    %v6049 = vld [vmem:[#allocation23 + $0x618] sm:$0xff]
    %v6050 = vld [vmem:[#allocation23 + $0x620] sm:$0xff]
    %v6051 = vld [vmem:[#allocation23 + $0x628] sm:$0xff]
    %v6052 = vld [vmem:[#allocation23 + $0x630] sm:$0xff]
    %v6053 = vld [vmem:[#allocation23 + $0x638] sm:$0xff]
    %v6054 = vld [vmem:[#allocation23 + $0x640] sm:$0xff]
    %v6055 = vld [vmem:[#allocation23 + $0x648] sm:$0xff]
    %v6056 = vld [vmem:[#allocation23 + $0x650] sm:$0xff]
    %v6057 = vld [vmem:[#allocation23 + $0x658] sm:$0xff]
    %v6058 = vld [vmem:[#allocation23 + $0x660] sm:$0xff]
    %v6059 = vld [vmem:[#allocation23 + $0x668] sm:$0xff]
    %v6060 = vld [vmem:[#allocation23 + $0x670] sm:$0xff]
    %v6061 = vld [vmem:[#allocation23 + $0x678] sm:$0xff]
    %v6062 = vld [vmem:[#allocation23 + $0x680] sm:$0xff]
    %v6063 = vld [vmem:[#allocation23 + $0x688] sm:$0xff]
    %v6064 = vld [vmem:[#allocation23 + $0x690] sm:$0xff]
    %v6065 = vld [vmem:[#allocation23 + $0x698] sm:$0xff]
    %v6066 = vld [vmem:[#allocation23 + $0x6a0] sm:$0xff]
    %v6067 = vld [vmem:[#allocation23 + $0x6a8] sm:$0xff]
    %v6068 = vld [vmem:[#allocation23 + $0x6b0] sm:$0xff]
    %v6069 = vld [vmem:[#allocation23 + $0x6b8] sm:$0xff]
    %v6070 = vld [vmem:[#allocation23 + $0x6c0] sm:$0xff]
    %v6071 = vld [vmem:[#allocation23 + $0x6c8] sm:$0xff]
    %v6072 = vld [vmem:[#allocation23 + $0x6d0] sm:$0xff]
    %v6073 = vld [vmem:[#allocation23 + $0x6d8] sm:$0xff]
    %v6074 = vld [vmem:[#allocation23 + $0x6e0] sm:$0xff]
    %v6075 = vld [vmem:[#allocation23 + $0x6e8] sm:$0xff]
    %v6076 = vld [vmem:[#allocation23 + $0x6f0] sm:$0xff]
    %v6077 = vld [vmem:[#allocation23 + $0x6f8] sm:$0xff]
    %v6078 = vld [vmem:[#allocation23 + $0x700] sm:$0xff]
    %v6079 = vld [vmem:[#allocation23 + $0x708] sm:$0xff]
    %v6080 = vld [vmem:[#allocation23 + $0x710] sm:$0xff]
    %v6081 = vld [vmem:[#allocation23 + $0x718] sm:$0xff]
    %v6082 = vld [vmem:[#allocation23 + $0x720] sm:$0xff]
    %v6083 = vld [vmem:[#allocation23 + $0x728] sm:$0xff]
    %v6084 = vld [vmem:[#allocation23 + $0x730] sm:$0xff]
    %v6085 = vld [vmem:[#allocation23 + $0x738] sm:$0xff]
    %v6086 = vld [vmem:[#allocation23 + $0x740] sm:$0xff]
    %v6087 = vld [vmem:[#allocation23 + $0x748] sm:$0xff]
    %v6088 = vld [vmem:[#allocation23 + $0x750] sm:$0xff]
    %v6089 = vld [vmem:[#allocation23 + $0x758] sm:$0xff]
    %v6090 = vld [vmem:[#allocation23 + $0x760] sm:$0xff]
    %v6091 = vld [vmem:[#allocation23 + $0x768] sm:$0xff]
    %v6092 = vld [vmem:[#allocation23 + $0x770] sm:$0xff]
    %v6093 = vld [vmem:[#allocation23 + $0x778] sm:$0xff]
    %v6094 = vld [vmem:[#allocation23 + $0x780] sm:$0xff]
    %v6095 = vld [vmem:[#allocation23 + $0x788] sm:$0xff]
    %v6096 = vld [vmem:[#allocation23 + $0x790] sm:$0xff]
    %v6097 = vld [vmem:[#allocation23 + $0x798] sm:$0xff]
    %v6098 = vld [vmem:[#allocation23 + $0x7a0] sm:$0xff]
    %v6099 = vld [vmem:[#allocation23 + $0x7a8] sm:$0xff]
    %v6100 = vld [vmem:[#allocation23 + $0x7b0] sm:$0xff]
    %v6101 = vld [vmem:[#allocation23 + $0x7b8] sm:$0xff]
    %v6102 = vld [vmem:[#allocation23 + $0x7c0] sm:$0xff]
    %v6103 = vld [vmem:[#allocation23 + $0x7c8] sm:$0xff]
    %v6104 = vld [vmem:[#allocation23 + $0x7d0] sm:$0xff]
    %v6105 = vld [vmem:[#allocation23 + $0x7d8] sm:$0xff]
    %v6106 = vld [vmem:[#allocation23 + $0x7e0] sm:$0xff]
    %v6107 = vld [vmem:[#allocation23 + $0x7e8] sm:$0xff]
    %v6108 = vld [vmem:[#allocation23 + $0x7f0] sm:$0xff]
    %v6109 = vld [vmem:[#allocation23 + $0x7f8] sm:$0xff]
    %v6110 = vld [vmem:[#allocation23 + $0x800] sm:$0xff]
    %v6111 = vld [vmem:[#allocation23 + $0x808] sm:$0xff]
    %v6112 = vld [vmem:[#allocation23 + $0x810] sm:$0xff]
    %v6113 = vld [vmem:[#allocation23 + $0x818] sm:$0xff]
    %v6114 = vld [vmem:[#allocation23 + $0x820] sm:$0xff]
    %v6115 = vld [vmem:[#allocation23 + $0x828] sm:$0xff]
    %v6116 = vld [vmem:[#allocation23 + $0x830] sm:$0xff]
    %v6117 = vld [vmem:[#allocation23 + $0x838] sm:$0xff]
    %v6118 = vld [vmem:[#allocation23 + $0x840] sm:$0xff]
    %v6119 = vld [vmem:[#allocation23 + $0x848] sm:$0xff]
    %v6120 = vld [vmem:[#allocation23 + $0x850] sm:$0xff]
    %v6121 = vld [vmem:[#allocation23 + $0x858] sm:$0xff]
    %v6122 = vld [vmem:[#allocation23 + $0x860] sm:$0xff]
    %v6123 = vld [vmem:[#allocation23 + $0x868] sm:$0xff]
    %v6124 = vld [vmem:[#allocation23 + $0x870] sm:$0xff]
    %v6125 = vld [vmem:[#allocation23 + $0x878] sm:$0xff]
    %v6126 = vld [vmem:[#allocation23 + $0x880] sm:$0xff]
    %v6127 = vld [vmem:[#allocation23 + $0x888] sm:$0xff]
    %v6128 = vld [vmem:[#allocation23 + $0x890] sm:$0xff]
    %v6129 = vld [vmem:[#allocation23 + $0x898] sm:$0xff]
    %v6130 = vld [vmem:[#allocation23 + $0x8a0] sm:$0xff]
    %v6131 = vld [vmem:[#allocation23 + $0x8a8] sm:$0xff]
    %v6132 = vld [vmem:[#allocation23 + $0x8b0] sm:$0xff]
    %v6133 = vld [vmem:[#allocation23 + $0x8b8] sm:$0xff]
    %v6134 = vld [vmem:[#allocation23 + $0x8c0] sm:$0xff]
    %v6135 = vld [vmem:[#allocation23 + $0x8c8] sm:$0xff]
    %v6136 = vld [vmem:[#allocation23 + $0x8d0] sm:$0xff]
    %v6137 = vld [vmem:[#allocation23 + $0x8d8] sm:$0xff]
    %v6138 = vld [vmem:[#allocation23 + $0x8e0] sm:$0xff]
    %v6139 = vld [vmem:[#allocation23 + $0x8e8] sm:$0xff]
    %v6140 = vld [vmem:[#allocation23 + $0x8f0] sm:$0xff]
    %v6141 = vld [vmem:[#allocation23 + $0x8f8] sm:$0xff]
    %v6142 = vld [vmem:[#allocation23 + $0x900] sm:$0xff]
    %v6143 = vld [vmem:[#allocation23 + $0x908] sm:$0xff]
    %v6144 = vld [vmem:[#allocation23 + $0x910] sm:$0xff]
    %v6145 = vld [vmem:[#allocation23 + $0x918] sm:$0xff]
    %v6146 = vld [vmem:[#allocation23 + $0x920] sm:$0xff]
    %v6147 = vld [vmem:[#allocation23 + $0x928] sm:$0xff]
    %v6148 = vld [vmem:[#allocation23 + $0x930] sm:$0xff]
    %v6149 = vld [vmem:[#allocation23 + $0x938] sm:$0xff]
    %v6150 = vld [vmem:[#allocation23 + $0x940] sm:$0xff]
    %v6151 = vld [vmem:[#allocation23 + $0x948] sm:$0xff]
    %v6152 = vld [vmem:[#allocation23 + $0x950] sm:$0xff]
    %v6153 = vld [vmem:[#allocation23 + $0x958] sm:$0xff]
    %v6154 = vld [vmem:[#allocation23 + $0x960] sm:$0xff]
    %v6155 = vld [vmem:[#allocation23 + $0x968] sm:$0xff]
    %v6156 = vld [vmem:[#allocation23 + $0x970] sm:$0xff]
    %v6157 = vld [vmem:[#allocation23 + $0x978] sm:$0xff]
    %v6158 = vld [vmem:[#allocation23 + $0x980] sm:$0xff]
    %v6159 = vld [vmem:[#allocation23 + $0x988] sm:$0xff]
    %v6160 = vld [vmem:[#allocation23 + $0x990] sm:$0xff]
    %v6161 = vld [vmem:[#allocation23 + $0x998] sm:$0xff]
    %v6162 = vld [vmem:[#allocation23 + $0x9a0] sm:$0xff]
    %v6163 = vld [vmem:[#allocation23 + $0x9a8] sm:$0xff]
    %v6164 = vld [vmem:[#allocation23 + $0x9b0] sm:$0xff]
    %v6165 = vld [vmem:[#allocation23 + $0x9b8] sm:$0xff]
    %v6166 = vld [vmem:[#allocation23 + $0x9c0] sm:$0xff]
    %v6167 = vld [vmem:[#allocation23 + $0x9c8] sm:$0xff]
    %v6168 = vld [vmem:[#allocation23 + $0x9d0] sm:$0xff]
    %v6169 = vld [vmem:[#allocation23 + $0x9d8] sm:$0xff]
    %v6170 = vld [vmem:[#allocation23 + $0x9e0] sm:$0xff]
    %v6171 = vld [vmem:[#allocation23 + $0x9e8] sm:$0xff]
    %v6172 = vld [vmem:[#allocation23 + $0x9f0] sm:$0xff]
    %v6173 = vld [vmem:[#allocation23 + $0x9f8] sm:$0xff]
    %v6174 = vld [vmem:[#allocation23 + $0xa00] sm:$0xff]
    %v6175 = vld [vmem:[#allocation23 + $0xa08] sm:$0xff]
    %v6176 = vld [vmem:[#allocation23 + $0xa10] sm:$0xff]
    %v6177 = vld [vmem:[#allocation23 + $0xa18] sm:$0xff]
    %v6178 = vld [vmem:[#allocation23 + $0xa20] sm:$0xff]
    %v6179 = vld [vmem:[#allocation23 + $0xa28] sm:$0xff]
    %v6180 = vld [vmem:[#allocation23 + $0xa30] sm:$0xff]
    %v6181 = vld [vmem:[#allocation23 + $0xa38] sm:$0xff]
    %v6182 = vld [vmem:[#allocation23 + $0xa40] sm:$0xff]
    %v6183 = vld [vmem:[#allocation23 + $0xa48] sm:$0xff]
    %v6184 = vld [vmem:[#allocation23 + $0xa50] sm:$0xff]
    %v6185 = vld [vmem:[#allocation23 + $0xa58] sm:$0xff]
    %v6186 = vld [vmem:[#allocation23 + $0xa60] sm:$0xff]
    %v6187 = vld [vmem:[#allocation23 + $0xa68] sm:$0xff]
    %v6188 = vld [vmem:[#allocation23 + $0xa70] sm:$0xff]
    %v6189 = vld [vmem:[#allocation23 + $0xa78] sm:$0xff]
    %v6190 = vld [vmem:[#allocation23 + $0xa80] sm:$0xff]
    %v6191 = vld [vmem:[#allocation23 + $0xa88] sm:$0xff]
    %v6192 = vld [vmem:[#allocation23 + $0xa90] sm:$0xff]
    %v6193 = vld [vmem:[#allocation23 + $0xa98] sm:$0xff]
    %v6194 = vld [vmem:[#allocation23 + $0xaa0] sm:$0xff]
    %v6195 = vld [vmem:[#allocation23 + $0xaa8] sm:$0xff]
    %v6196 = vld [vmem:[#allocation23 + $0xab0] sm:$0xff]
    %v6197 = vld [vmem:[#allocation23 + $0xab8] sm:$0xff]
    %v6198 = vld [vmem:[#allocation23 + $0xac0] sm:$0xff]
    %v6199 = vld [vmem:[#allocation23 + $0xac8] sm:$0xff]
    %v6200 = vld [vmem:[#allocation23 + $0xad0] sm:$0xff]
    %v6201 = vld [vmem:[#allocation23 + $0xad8] sm:$0xff]
    %v6202 = vld [vmem:[#allocation23 + $0xae0] sm:$0xff]
    %v6203 = vld [vmem:[#allocation23 + $0xae8] sm:$0xff]
    %v6204 = vld [vmem:[#allocation23 + $0xaf0] sm:$0xff]
    %v6205 = vld [vmem:[#allocation23 + $0xaf8] sm:$0xff]
    %v6206 = vld [vmem:[#allocation23 + $0xb00] sm:$0xff]
    %v6207 = vld [vmem:[#allocation23 + $0xb08] sm:$0xff]
    %v6208 = vld [vmem:[#allocation23 + $0xb10] sm:$0xff]
    %v6209 = vld [vmem:[#allocation23 + $0xb18] sm:$0xff]
    %v6210 = vld [vmem:[#allocation23 + $0xb20] sm:$0xff]
    %v6211 = vld [vmem:[#allocation23 + $0xb28] sm:$0xff]
    %v6212 = vld [vmem:[#allocation23 + $0xb30] sm:$0xff]
    %v6213 = vld [vmem:[#allocation23 + $0xb38] sm:$0xff]
    %v6214 = vld [vmem:[#allocation23 + $0xb40] sm:$0xff]
    %v6215 = vld [vmem:[#allocation23 + $0xb48] sm:$0xff]
    %v6216 = vld [vmem:[#allocation23 + $0xb50] sm:$0xff]
    %v6217 = vld [vmem:[#allocation23 + $0xb58] sm:$0xff]
    %v6218 = vld [vmem:[#allocation23 + $0xb60] sm:$0xff]
    %v6219 = vld [vmem:[#allocation23 + $0xb68] sm:$0xff]
    %v6220 = vld [vmem:[#allocation23 + $0xb70] sm:$0xff]
    %v6221 = vld [vmem:[#allocation23 + $0xb78] sm:$0xff]
    %v6222 = vld [vmem:[#allocation23 + $0xb80] sm:$0xff]
    %v6223 = vld [vmem:[#allocation23 + $0xb88] sm:$0xff]
    %v6224 = vld [vmem:[#allocation23 + $0xb90] sm:$0xff]
    %v6225 = vld [vmem:[#allocation23 + $0xb98] sm:$0xff]
    %v6226 = vld [vmem:[#allocation23 + $0xba0] sm:$0xff]
    %v6227 = vld [vmem:[#allocation23 + $0xba8] sm:$0xff]
    %v6228 = vld [vmem:[#allocation23 + $0xbb0] sm:$0xff]
    %v6229 = vld [vmem:[#allocation23 + $0xbb8] sm:$0xff]
    %v6230 = vld [vmem:[#allocation23 + $0xbc0] sm:$0xff]
    %v6231 = vld [vmem:[#allocation23 + $0xbc8] sm:$0xff]
    %v6232 = vld [vmem:[#allocation23 + $0xbd0] sm:$0xff]
    %v6233 = vld [vmem:[#allocation23 + $0xbd8] sm:$0xff]
    %v6234 = vld [vmem:[#allocation23 + $0xbe0] sm:$0xff]
    %v6235 = vld [vmem:[#allocation23 + $0xbe8] sm:$0xff]
    %v6236 = vld [vmem:[#allocation23 + $0xbf0] sm:$0xff]
    %v6237 = vld [vmem:[#allocation23 + $0xbf8] sm:$0xff]
    %v6238 = vld [vmem:[#allocation23 + $0xc00] sm:$0xff]
    %v6239 = vld [vmem:[#allocation23 + $0xc08] sm:$0xff]
    %v6240 = vld [vmem:[#allocation23 + $0xc10] sm:$0xff]
    %v6241 = vld [vmem:[#allocation23 + $0xc18] sm:$0xff]
    %v6242 = vld [vmem:[#allocation23 + $0xc20] sm:$0xff]
    %v6243 = vld [vmem:[#allocation23 + $0xc28] sm:$0xff]
    %v6244 = vld [vmem:[#allocation23 + $0xc30] sm:$0xff]
    %v6245 = vld [vmem:[#allocation23 + $0xc38] sm:$0xff]
    %v6246 = vld [vmem:[#allocation23 + $0xc40] sm:$0xff]
    %v6247 = vld [vmem:[#allocation23 + $0xc48] sm:$0xff]
    %v6248 = vld [vmem:[#allocation23 + $0xc50] sm:$0xff]
    %v6249 = vld [vmem:[#allocation23 + $0xc58] sm:$0xff]
    %v6250 = vld [vmem:[#allocation23 + $0xc60] sm:$0xff]
    %v6251 = vld [vmem:[#allocation23 + $0xc68] sm:$0xff]
    %v6252 = vld [vmem:[#allocation23 + $0xc70] sm:$0xff]
    %v6253 = vld [vmem:[#allocation23 + $0xc78] sm:$0xff]
    %v6254 = vld [vmem:[#allocation23 + $0xc80] sm:$0xff]
    %v6255 = vld [vmem:[#allocation23 + $0xc88] sm:$0xff]
    %v6256 = vld [vmem:[#allocation23 + $0xc90] sm:$0xff]
    %v6257 = vld [vmem:[#allocation23 + $0xc98] sm:$0xff]
    %v6258 = vld [vmem:[#allocation23 + $0xca0] sm:$0xff]
    %v6259 = vld [vmem:[#allocation23 + $0xca8] sm:$0xff]
    %v6260 = vld [vmem:[#allocation23 + $0xcb0] sm:$0xff]
    %v6261 = vld [vmem:[#allocation23 + $0xcb8] sm:$0xff]
    %v6262 = vld [vmem:[#allocation23 + $0xcc0] sm:$0xff]
    %v6263 = vld [vmem:[#allocation23 + $0xcc8] sm:$0xff]
    %v6264 = vld [vmem:[#allocation23 + $0xcd0] sm:$0xff]
    %v6265 = vld [vmem:[#allocation23 + $0xcd8] sm:$0xff]
    %v6266 = vld [vmem:[#allocation23 + $0xce0] sm:$0xff]
    %v6267 = vld [vmem:[#allocation23 + $0xce8] sm:$0xff]
    %v6268 = vld [vmem:[#allocation23 + $0xcf0] sm:$0xff]
    %v6269 = vld [vmem:[#allocation23 + $0xcf8] sm:$0xff]
    %v6270 = vld [vmem:[#allocation23 + $0xd00] sm:$0xff]
    %v6271 = vld [vmem:[#allocation23 + $0xd08] sm:$0xff]
    %v6272 = vld [vmem:[#allocation23 + $0xd10] sm:$0xff]
    %v6273 = vld [vmem:[#allocation23 + $0xd18] sm:$0xff]
    %v6274 = vld [vmem:[#allocation23 + $0xd20] sm:$0xff]
    %v6275 = vld [vmem:[#allocation23 + $0xd28] sm:$0xff]
    %v6276 = vld [vmem:[#allocation23 + $0xd30] sm:$0xff]
    %v6277 = vld [vmem:[#allocation23 + $0xd38] sm:$0xff]
    %v6278 = vld [vmem:[#allocation23 + $0xd40] sm:$0xff]
    %v6279 = vld [vmem:[#allocation23 + $0xd48] sm:$0xff]
    %v6280 = vld [vmem:[#allocation23 + $0xd50] sm:$0xff]
    %v6281 = vld [vmem:[#allocation23 + $0xd58] sm:$0xff]
    %v6282 = vld [vmem:[#allocation23 + $0xd60] sm:$0xff]
    %v6283 = vld [vmem:[#allocation23 + $0xd68] sm:$0xff]
    %v6284 = vld [vmem:[#allocation23 + $0xd70] sm:$0xff]
    %v6285 = vld [vmem:[#allocation23 + $0xd78] sm:$0xff]
    %v6286 = vld [vmem:[#allocation23 + $0xd80] sm:$0xff]
    %v6287 = vld [vmem:[#allocation23 + $0xd88] sm:$0xff]
    %v6288 = vld [vmem:[#allocation23 + $0xd90] sm:$0xff]
    %v6289 = vld [vmem:[#allocation23 + $0xd98] sm:$0xff]
    %v6290 = vld [vmem:[#allocation23 + $0xda0] sm:$0xff]
    %v6291 = vld [vmem:[#allocation23 + $0xda8] sm:$0xff]
    %v6292 = vld [vmem:[#allocation23 + $0xdb0] sm:$0xff]
    %v6293 = vld [vmem:[#allocation23 + $0xdb8] sm:$0xff]
    %v6294 = vld [vmem:[#allocation23 + $0xdc0] sm:$0xff]
    %v6295 = vld [vmem:[#allocation23 + $0xdc8] sm:$0xff]
    %v6296 = vld [vmem:[#allocation23 + $0xdd0] sm:$0xff]
    %v6297 = vld [vmem:[#allocation23 + $0xdd8] sm:$0xff]
    %v6298 = vld [vmem:[#allocation23 + $0xde0] sm:$0xff]
    %v6299 = vld [vmem:[#allocation23 + $0xde8] sm:$0xff]
    %v6300 = vld [vmem:[#allocation23 + $0xdf0] sm:$0xff]
    %v6301 = vld [vmem:[#allocation23 + $0xdf8] sm:$0xff]
    %v6302 = vld [vmem:[#allocation23 + $0xe00] sm:$0xff]
    %v6303 = vld [vmem:[#allocation23 + $0xe08] sm:$0xff]
    %v6304 = vld [vmem:[#allocation23 + $0xe10] sm:$0xff]
    %v6305 = vld [vmem:[#allocation23 + $0xe18] sm:$0xff]
    %v6306 = vld [vmem:[#allocation23 + $0xe20] sm:$0xff]
    %v6307 = vld [vmem:[#allocation23 + $0xe28] sm:$0xff]
    %v6308 = vld [vmem:[#allocation23 + $0xe30] sm:$0xff]
    %v6309 = vld [vmem:[#allocation23 + $0xe38] sm:$0xff]
    %v6310 = vld [vmem:[#allocation23 + $0xe40] sm:$0xff]
    %v6311 = vld [vmem:[#allocation23 + $0xe48] sm:$0xff]
    %v6312 = vld [vmem:[#allocation23 + $0xe50] sm:$0xff]
    %v6313 = vld [vmem:[#allocation23 + $0xe58] sm:$0xff]
    %v6314 = vld [vmem:[#allocation23 + $0xe60] sm:$0xff]
    %v6315 = vld [vmem:[#allocation23 + $0xe68] sm:$0xff]
    %v6316 = vld [vmem:[#allocation23 + $0xe70] sm:$0xff]
    %v6317 = vld [vmem:[#allocation23 + $0xe78] sm:$0xff]
    %v6318 = vld [vmem:[#allocation23 + $0xe80] sm:$0xff]
    %v6319 = vld [vmem:[#allocation23 + $0xe88] sm:$0xff]
    %v6320 = vld [vmem:[#allocation23 + $0xe90] sm:$0xff]
    %v6321 = vld [vmem:[#allocation23 + $0xe98] sm:$0xff]
    %v6322 = vld [vmem:[#allocation23 + $0xea0] sm:$0xff]
    %v6323 = vld [vmem:[#allocation23 + $0xea8] sm:$0xff]
    %v6324 = vld [vmem:[#allocation23 + $0xeb0] sm:$0xff]
    %v6325 = vld [vmem:[#allocation23 + $0xeb8] sm:$0xff]
    %v6326 = vld [vmem:[#allocation23 + $0xec0] sm:$0xff]
    %v6327 = vld [vmem:[#allocation23 + $0xec8] sm:$0xff]
    %v6328 = vld [vmem:[#allocation23 + $0xed0] sm:$0xff]
    %v6329 = vld [vmem:[#allocation23 + $0xed8] sm:$0xff]
    %v6330 = vld [vmem:[#allocation23 + $0xee0] sm:$0xff]
    %v6331 = vld [vmem:[#allocation23 + $0xee8] sm:$0xff]
    %v6332 = vld [vmem:[#allocation23 + $0xef0] sm:$0xff]
    %v6333 = vld [vmem:[#allocation23 + $0xef8] sm:$0xff]
    %v6334 = vld [vmem:[#allocation23 + $0xf00] sm:$0xff]
    %v6335 = vld [vmem:[#allocation23 + $0xf08] sm:$0xff]
    %v6336 = vld [vmem:[#allocation23 + $0xf10] sm:$0xff]
    %v6337 = vld [vmem:[#allocation23 + $0xf18] sm:$0xff]
    %v6338 = vld [vmem:[#allocation23 + $0xf20] sm:$0xff]
    %v6339 = vld [vmem:[#allocation23 + $0xf28] sm:$0xff]
    %v6340 = vld [vmem:[#allocation23 + $0xf30] sm:$0xff]
    %v6341 = vld [vmem:[#allocation23 + $0xf38] sm:$0xff]
    %v6342 = vld [vmem:[#allocation23 + $0xf40] sm:$0xff]
    %v6343 = vld [vmem:[#allocation23 + $0xf48] sm:$0xff]
    %v6344 = vld [vmem:[#allocation23 + $0xf50] sm:$0xff]
    %v6345 = vld [vmem:[#allocation23 + $0xf58] sm:$0xff]
    %v6346 = vld [vmem:[#allocation23 + $0xf60] sm:$0xff]
    %v6347 = vld [vmem:[#allocation23 + $0xf68] sm:$0xff]
    %v6348 = vld [vmem:[#allocation23 + $0xf70] sm:$0xff]
    %v6349 = vld [vmem:[#allocation23 + $0xf78] sm:$0xff]
    %v6350 = vld [vmem:[#allocation23 + $0xf80] sm:$0xff]
    %v6351 = vld [vmem:[#allocation23 + $0xf88] sm:$0xff]
    %v6352 = vld [vmem:[#allocation23 + $0xf90] sm:$0xff]
    %v6353 = vld [vmem:[#allocation23 + $0xf98] sm:$0xff]
    %v6354 = vld [vmem:[#allocation23 + $0xfa0] sm:$0xff]
    %v6355 = vld [vmem:[#allocation23 + $0xfa8] sm:$0xff]
    %v6356 = vld [vmem:[#allocation23 + $0xfb0] sm:$0xff]
    %v6357 = vld [vmem:[#allocation23 + $0xfb8] sm:$0xff]
    %v6358 = vld [vmem:[#allocation23 + $0xfc0] sm:$0xff]
    %v6359 = vld [vmem:[#allocation23 + $0xfc8] sm:$0xff]
    %v6360 = vld [vmem:[#allocation23 + $0xfd0] sm:$0xff]
    %v6361 = vld [vmem:[#allocation23 + $0xfd8] sm:$0xff]
    %v6362 = vld [vmem:[#allocation23 + $0xfe0] sm:$0xff]
    %v6363 = vld [vmem:[#allocation23 + $0xfe8] sm:$0xff]
    %v6364 = vld [vmem:[#allocation23 + $0xff0] sm:$0xff]
    %v6365 = vld [vmem:[#allocation23 + $0xff8] sm:$0xff]
    %v6366 = vld [vmem:[#allocation23 + $0x1000] sm:$0xff]
    %v6367 = vld [vmem:[#allocation23 + $0x1008] sm:$0xff]
    %v6368 = vld [vmem:[#allocation23 + $0x1010] sm:$0xff]
    %v6369 = vld [vmem:[#allocation23 + $0x1018] sm:$0xff]
    %v6370 = vld [vmem:[#allocation23 + $0x1020] sm:$0xff]
    %v6371 = vld [vmem:[#allocation23 + $0x1028] sm:$0xff]
    %v6372 = vld [vmem:[#allocation23 + $0x1030] sm:$0xff]
    %v6373 = vld [vmem:[#allocation23 + $0x1038] sm:$0xff]
    %v6374 = vld [vmem:[#allocation23 + $0x1040] sm:$0xff]
    %v6375 = vld [vmem:[#allocation23 + $0x1048] sm:$0xff]
    %v6376 = vld [vmem:[#allocation23 + $0x1050] sm:$0xff]
    %v6377 = vld [vmem:[#allocation23 + $0x1058] sm:$0xff]
    %v6378 = vld [vmem:[#allocation23 + $0x1060] sm:$0xff]
    %v6379 = vld [vmem:[#allocation23 + $0x1068] sm:$0xff]
    %v6380 = vld [vmem:[#allocation23 + $0x1070] sm:$0xff]
    %v6381 = vld [vmem:[#allocation23 + $0x1078] sm:$0xff]
    %v6382 = vld [vmem:[#allocation23 + $0x1080] sm:$0xff]
    %v6383 = vld [vmem:[#allocation23 + $0x1088] sm:$0xff]
    %v6384 = vld [vmem:[#allocation23 + $0x1090] sm:$0xff]
    %v6385 = vld [vmem:[#allocation23 + $0x1098] sm:$0xff]
    %v6386 = vld [vmem:[#allocation23 + $0x10a0] sm:$0xff]
    %v6387 = vld [vmem:[#allocation23 + $0x10a8] sm:$0xff]
    %v6388 = vld [vmem:[#allocation23 + $0x10b0] sm:$0xff]
    %v6389 = vld [vmem:[#allocation23 + $0x10b8] sm:$0xff]
    %v6390 = vld [vmem:[#allocation23 + $0x10c0] sm:$0xff]
    %v6391 = vld [vmem:[#allocation23 + $0x10c8] sm:$0xff]
    %v6392 = vld [vmem:[#allocation23 + $0x10d0] sm:$0xff]
    %v6393 = vld [vmem:[#allocation23 + $0x10d8] sm:$0xff]
    %v6394 = vld [vmem:[#allocation23 + $0x10e0] sm:$0xff]
    %v6395 = vld [vmem:[#allocation23 + $0x10e8] sm:$0xff]
    %v6396 = vld [vmem:[#allocation23 + $0x10f0] sm:$0xff]
    %v6397 = vld [vmem:[#allocation23 + $0x10f8] sm:$0xff]
    %v6398 = vld [vmem:[#allocation23 + $0x1100] sm:$0xff]
    %v6399 = vld [vmem:[#allocation23 + $0x1108] sm:$0xff]
    %v6400 = vld [vmem:[#allocation23 + $0x1110] sm:$0xff]
    %v6401 = vld [vmem:[#allocation23 + $0x1118] sm:$0xff]
    %v6402 = vld [vmem:[#allocation23 + $0x1120] sm:$0xff]
    %v6403 = vld [vmem:[#allocation23 + $0x1128] sm:$0xff]
    %v6404 = vld [vmem:[#allocation23 + $0x1130] sm:$0xff]
    %v6405 = vld [vmem:[#allocation23 + $0x1138] sm:$0xff]
    %v6406 = vld [vmem:[#allocation23 + $0x1140] sm:$0xff]
    %v6407 = vld [vmem:[#allocation23 + $0x1148] sm:$0xff]
    %v6408 = vld [vmem:[#allocation23 + $0x1150] sm:$0xff]
    %v6409 = vld [vmem:[#allocation23 + $0x1158] sm:$0xff]
    %v6410 = vld [vmem:[#allocation23 + $0x1160] sm:$0xff]
    %v6411 = vld [vmem:[#allocation23 + $0x1168] sm:$0xff]
    %v6412 = vld [vmem:[#allocation23 + $0x1170] sm:$0xff]
    %v6413 = vld [vmem:[#allocation23 + $0x1178] sm:$0xff]
    %v6414 = vld [vmem:[#allocation23 + $0x1180] sm:$0xff]
    %v6415 = vld [vmem:[#allocation23 + $0x1188] sm:$0xff]
    %v6416 = vld [vmem:[#allocation23 + $0x1190] sm:$0xff]
    %v6417 = vld [vmem:[#allocation23 + $0x1198] sm:$0xff]
    %v6418 = vld [vmem:[#allocation23 + $0x11a0] sm:$0xff]
    %v6419 = vld [vmem:[#allocation23 + $0x11a8] sm:$0xff]
    %v6420 = vld [vmem:[#allocation23 + $0x11b0] sm:$0xff]
    %v6421 = vld [vmem:[#allocation23 + $0x11b8] sm:$0xff]
    %v6422 = vld [vmem:[#allocation23 + $0x11c0] sm:$0xff]
    %v6423 = vld [vmem:[#allocation23 + $0x11c8] sm:$0xff]
    %v6424 = vld [vmem:[#allocation23 + $0x11d0] sm:$0xff]
    %v6425 = vld [vmem:[#allocation23 + $0x11d8] sm:$0xff]
    %v6426 = vld [vmem:[#allocation23 + $0x11e0] sm:$0xff]
    %v6427 = vld [vmem:[#allocation23 + $0x11e8] sm:$0xff]
    %v6428 = vld [vmem:[#allocation23 + $0x11f0] sm:$0xff]
    %v6429 = vld [vmem:[#allocation23 + $0x11f8] sm:$0xff]
    %v6430 = vld [vmem:[#allocation25] sm:$0x7]
    %v6432 = vlaneseq
    %v6433 = vshrl.u32 %v6432, 7
    %v6434 = vsub.s32 0, %v6433
    %v6435 = vrot.slane %v6430, %v6434
    %v6436 = vlaneseq
    %v6437 = vshrl.u32 %v6436, 7
    %v6438 = vsub.s32 1, %v6437
    %v6439 = vrot.slane %v6430, %v6438
    %v6440 = vlaneseq
    %v6441 = vshrl.u32 %v6440, 7
    %v6442 = vsub.s32 2, %v6441
    %v6443 = vrot.slane %v6430, %v6442
    %6447 = vmatprep.subr.mxu0 %v5855
    %6448 = vmatpush1.msra.mxu0 %v5854
    %6449 = vmatprep.subr.mxu0 %v5858
    %6450 = vmatpush1.msra.mxu0 %v5857
    %6451 = vmatprep.subr.mxu0 %v5861
    %6452 = vmatpush1.msra.mxu0 %v5860
    %6453 = vmatprep.subr.mxu0 %v5864
    %6454 = vmatpush1.msra.mxu0 %v5863
    %6455 = vmatprep.subr.mxu0 %v5867
    %6456 = vmatpush1.msra.mxu0 %v5866
    %6457 = vmatprep.subr.mxu0 %v5870
    %6458 = vmatpush1.msra.mxu0 %v5869
    %6459 = vmatprep.subr.mxu0 %v5873
    %6460 = vmatpush1.msra.mxu0 %v5872
    %6461 = vmatprep.subr.mxu0 %v5876
    %6462 = vmatpush1.msra.mxu0 %v5875
    %6463 = vmatprep.subr.mxu0 %v5879
    %6464 = vmatpush1.msra.mxu0 %v5878
    %6465 = vmatprep.subr.mxu0 %v5882
    %6466 = vmatpush1.msra.mxu0 %v5881
    %6467 = vmatprep.subr.mxu0 %v5885
    %6468 = vmatpush1.msra.mxu0 %v5884
    %6469 = vmatprep.subr.mxu0 %v5888
    %6470 = vmatpush1.msra.mxu0 %v5887
    %6471 = vmatprep.subr.mxu0 %v5891
    %6472 = vmatpush1.msra.mxu0 %v5890
    %6473 = vmatprep.subr.mxu0 %v5894
    %6474 = vmatpush1.msra.mxu0 %v5893
    %6475 = vmatprep.subr.mxu0 %v5897
    %6476 = vmatpush1.msra.mxu0 %v5896
    %6477 = vmatprep.subr.mxu0 %v5900
    %6478 = vmatpush1.msra.mxu0 %v5899
    %6479 = vmatprep.subr.mxu0 %v5903
    %6480 = vmatpush1.msra.mxu0 %v5902
    %6481 = vmatprep.subr.mxu0 %v5906
    %6482 = vmatpush1.msra.mxu0 %v5905
    %6483 = vmatprep.subr.mxu0 %v5909
    %6484 = vmatpush1.msra.mxu0 %v5908
    %6485 = vmatprep.subr.mxu0 %v5912
    %6486 = vmatpush1.msra.mxu0 %v5911
    %6487 = vmatprep.subr.mxu0 %v5915
    %6488 = vmatpush1.msra.mxu0 %v5914
    %6489 = vmatprep.subr.mxu0 %v5918
    %6490 = vmatpush1.msra.mxu0 %v5917
    %6491 = vmatprep.subr.mxu0 %v5921
    %6492 = vmatpush1.msra.mxu0 %v5920
    %6493 = vmatprep.subr.mxu0 %v5924
    %6494 = vmatpush1.msra.mxu0 %v5923
    %6495 = vmatprep.subr.mxu0 %v5927
    %6496 = vmatpush1.msra.mxu0 %v5926
    %6497 = vmatprep.subr.mxu0 %v5930
    %6498 = vmatpush1.msra.mxu0 %v5929
    %6499 = vmatprep.subr.mxu0 %v5933
    %6500 = vmatpush1.msra.mxu0 %v5932
    %6501 = vmatprep.subr.mxu0 %v5936
    %6502 = vmatpush1.msra.mxu0 %v5935
    %6503 = vmatprep.subr.mxu0 %v5939
    %6504 = vmatpush1.msra.mxu0 %v5938
    %6505 = vmatprep.subr.mxu0 %v5942
    %6506 = vmatpush1.msra.mxu0 %v5941
    %6507 = vmatprep.subr.mxu0 %v5945
    %6508 = vmatpush1.msra.mxu0 %v5944
    %6509 = vmatprep.subr.mxu0 %v5948
    %6510 = vmatpush1.msra.mxu0 %v5947
    %6511 = vmatprep.mubr.f32.mxu0 %v5831
    %6512 = vmatmul.mubr.f32.gmra.mrb[0].mxu0 %v5830
    %v6513 = vpop.f32.mrb[0].mxu0
    %v6514 = vadd.f32 %v6435, %v6513
    %v6515 = vpop.f32.mrb[0].mxu0
    %v6516 = vadd.f32 %v6439, %v6515
    %6517 = vmatprep.mubr.f32.mxu0 %v5843
    %6518 = vmatmul.mubr.f32.gmra.mrb[0].mxu0 %v5842
    %v6519 = vpop.f32.mrb[0].mxu0
    %v6520 = vadd.f32 %v6435, %v6519
    %v6521 = vpop.f32.mrb[0].mxu0
    %v6522 = vadd.f32 %v6439, %v6521
    %6523 = vdwg.mxu0
    %6524 = vmatprep.subr.mxu0 %v5951
    %6525 = vmatpush1.msra.mxu0 %v5950
    %6526 = vmatprep.subr.mxu0 %v5954
    %6527 = vmatpush1.msra.mxu0 %v5953
    %6528 = vmatprep.subr.mxu0 %v5957
    %6529 = vmatpush1.msra.mxu0 %v5956
    %6530 = vmatprep.subr.mxu0 %v5960
    %6531 = vmatpush1.msra.mxu0 %v5959
    %6532 = vmatprep.subr.mxu0 %v5963
    %6533 = vmatpush1.msra.mxu0 %v5962
    %6534 = vmatprep.subr.mxu0 %v5966
    %6535 = vmatpush1.msra.mxu0 %v5965
    %6536 = vmatprep.subr.mxu0 %v5969
    %6537 = vmatpush1.msra.mxu0 %v5968
    %6538 = vmatprep.subr.mxu0 %v5972
    %6539 = vmatpush1.msra.mxu0 %v5971
    %6540 = vmatprep.subr.mxu0 %v5975
    %6541 = vmatpush1.msra.mxu0 %v5974
    %6542 = vmatprep.subr.mxu0 %v5978
    %6543 = vmatpush1.msra.mxu0 %v5977
    %6544 = vmatprep.subr.mxu0 %v5981
    %6545 = vmatpush1.msra.mxu0 %v5980
    %6546 = vmatprep.subr.mxu0 %v5984
    %6547 = vmatpush1.msra.mxu0 %v5983
    %6548 = vmatprep.subr.mxu0 %v5987
    %6549 = vmatpush1.msra.mxu0 %v5986
    %6550 = vmatprep.subr.mxu0 %v5990
    %6551 = vmatpush1.msra.mxu0 %v5989
    %6552 = vmatprep.subr.mxu0 %v5993
    %6553 = vmatpush1.msra.mxu0 %v5992
    %6554 = vmatprep.subr.mxu0 %v5996
    %6555 = vmatpush1.msra.mxu0 %v5995
    %6556 = vmatprep.subr.mxu0 %v5999
    %6557 = vmatpush1.msra.mxu0 %v5998
    %6558 = vmatprep.subr.mxu0 %v6002
    %6559 = vmatpush1.msra.mxu0 %v6001
    %6560 = vmatprep.subr.mxu0 %v6005
    %6561 = vmatpush1.msra.mxu0 %v6004
    %6562 = vmatprep.subr.mxu0 %v6008
    %6563 = vmatpush1.msra.mxu0 %v6007
    %6564 = vmatprep.subr.mxu0 %v6011
    %6565 = vmatpush1.msra.mxu0 %v6010
    %6566 = vmatprep.subr.mxu0 %v6014
    %6567 = vmatpush1.msra.mxu0 %v6013
    %6568 = vmatprep.subr.mxu0 %v6017
    %6569 = vmatpush1.msra.mxu0 %v6016
    %6570 = vmatprep.subr.mxu0 %v6020
    %6571 = vmatpush1.msra.mxu0 %v6019
    %6572 = vmatprep.subr.mxu0 %v6023
    %6573 = vmatpush1.msra.mxu0 %v6022
    %6574 = vmatprep.subr.mxu0 %v6026
    %6575 = vmatpush1.msra.mxu0 %v6025
    %6576 = vmatprep.subr.mxu0 %v6029
    %6577 = vmatpush1.msra.mxu0 %v6028
    %6578 = vmatprep.subr.mxu0 %v6032
    %6579 = vmatpush1.msra.mxu0 %v6031
    %6580 = vmatprep.subr.mxu0 %v6035
    %6581 = vmatpush1.msra.mxu0 %v6034
    %6582 = vmatprep.subr.mxu0 %v6038
    %6583 = vmatpush1.msra.mxu0 %v6037
    %6584 = vmatprep.subr.mxu0 %v6041
    %6585 = vmatpush1.msra.mxu0 %v6040
    %6586 = vmatprep.subr.mxu0 %v6044
    %6587 = vmatpush1.msra.mxu0 %v6043
    %6588 = vmatprep.mubr.f32.mxu0 %v5833
    %6589 = vmatmul.mubr.f32.gmra.mrb[0].mxu0 %v5832
    %v6590 = vpop.f32.mrb[0].mxu0
    %v6591 = vadd.f32 %v6514, %v6590
    %v6592 = vpop.f32.mrb[0].mxu0
    %v6593 = vadd.f32 %v6516, %v6592
    %6594 = vmatprep.mubr.f32.mxu0 %v5845
    %6595 = vmatmul.mubr.f32.gmra.mrb[0].mxu0 %v5844
    %v6596 = vpop.f32.mrb[0].mxu0
    %v6597 = vadd.f32 %v6520, %v6596
    %v6598 = vpop.f32.mrb[0].mxu0
    %v6599 = vadd.f32 %v6522, %v6598
    %6600 = vdwg.mxu0
    %6601 = vmatprep.subr.mxu0 %v6047
    %6602 = vmatpush1.msra.mxu0 %v6046
    %6603 = vmatprep.subr.mxu0 %v6050
    %6604 = vmatpush1.msra.mxu0 %v6049
    %6605 = vmatprep.subr.mxu0 %v6053
    %6606 = vmatpush1.msra.mxu0 %v6052
    %6607 = vmatprep.subr.mxu0 %v6056
    %6608 = vmatpush1.msra.mxu0 %v6055
    %6609 = vmatprep.subr.mxu0 %v6059
    %6610 = vmatpush1.msra.mxu0 %v6058
    %6611 = vmatprep.subr.mxu0 %v6062
    %6612 = vmatpush1.msra.mxu0 %v6061
    %6613 = vmatprep.subr.mxu0 %v6065
    %6614 = vmatpush1.msra.mxu0 %v6064
    %6615 = vmatprep.subr.mxu0 %v6068
    %6616 = vmatpush1.msra.mxu0 %v6067
    %6617 = vmatprep.subr.mxu0 %v6071
    %6618 = vmatpush1.msra.mxu0 %v6070
    %6619 = vmatprep.subr.mxu0 %v6074
    %6620 = vmatpush1.msra.mxu0 %v6073
    %6621 = vmatprep.subr.mxu0 %v6077
    %6622 = vmatpush1.msra.mxu0 %v6076
    %6623 = vmatprep.subr.mxu0 %v6080
    %6624 = vmatpush1.msra.mxu0 %v6079
    %6625 = vmatprep.subr.mxu0 %v6083
    %6626 = vmatpush1.msra.mxu0 %v6082
    %6627 = vmatprep.subr.mxu0 %v6086
    %6628 = vmatpush1.msra.mxu0 %v6085
    %6629 = vmatprep.subr.mxu0 %v6089
    %6630 = vmatpush1.msra.mxu0 %v6088
    %6631 = vmatprep.subr.mxu0 %v6092
    %6632 = vmatpush1.msra.mxu0 %v6091
    %6633 = vmatprep.subr.mxu0 %v6095
    %6634 = vmatpush1.msra.mxu0 %v6094
    %6635 = vmatprep.subr.mxu0 %v6098
    %6636 = vmatpush1.msra.mxu0 %v6097
    %6637 = vmatprep.subr.mxu0 %v6101
    %6638 = vmatpush1.msra.mxu0 %v6100
    %6639 = vmatprep.subr.mxu0 %v6104
    %6640 = vmatpush1.msra.mxu0 %v6103
    %6641 = vmatprep.subr.mxu0 %v6107
    %6642 = vmatpush1.msra.mxu0 %v6106
    %6643 = vmatprep.subr.mxu0 %v6110
    %6644 = vmatpush1.msra.mxu0 %v6109
    %6645 = vmatprep.subr.mxu0 %v6113
    %6646 = vmatpush1.msra.mxu0 %v6112
    %6647 = vmatprep.subr.mxu0 %v6116
    %6648 = vmatpush1.msra.mxu0 %v6115
    %6649 = vmatprep.subr.mxu0 %v6119
    %6650 = vmatpush1.msra.mxu0 %v6118
    %6651 = vmatprep.subr.mxu0 %v6122
    %6652 = vmatpush1.msra.mxu0 %v6121
    %6653 = vmatprep.subr.mxu0 %v6125
    %6654 = vmatpush1.msra.mxu0 %v6124
    %6655 = vmatprep.subr.mxu0 %v6128
    %6656 = vmatpush1.msra.mxu0 %v6127
    %6657 = vmatprep.subr.mxu0 %v6131
    %6658 = vmatpush1.msra.mxu0 %v6130
    %6659 = vmatprep.subr.mxu0 %v6134
    %6660 = vmatpush1.msra.mxu0 %v6133
    %6661 = vmatprep.subr.mxu0 %v6137
    %6662 = vmatpush1.msra.mxu0 %v6136
    %6663 = vmatprep.subr.mxu0 %v6140
    %6664 = vmatpush1.msra.mxu0 %v6139
    %6665 = vmatprep.mubr.f32.mxu0 %v5835
    %6666 = vmatmul.mubr.f32.gmra.mrb[0].mxu0 %v5834
    %v6667 = vpop.f32.mrb[0].mxu0
    %v6668 = vadd.f32 %v6591, %v6667
    %v6669 = vpop.f32.mrb[0].mxu0
    %v6670 = vadd.f32 %v6593, %v6669
    %6671 = vmatprep.mubr.f32.mxu0 %v5847
    %6672 = vmatmul.mubr.f32.gmra.mrb[0].mxu0 %v5846
    %v6673 = vpop.f32.mrb[0].mxu0
    %v6674 = vadd.f32 %v6597, %v6673
    %v6675 = vpop.f32.mrb[0].mxu0
    %v6676 = vadd.f32 %v6599, %v6675
    %6677 = vdwg.mxu0
    %6678 = vmatprep.subr.mxu0 %v6143
    %6679 = vmatpush1.msra.mxu0 %v6142
    %6680 = vmatprep.subr.mxu0 %v6146
    %6681 = vmatpush1.msra.mxu0 %v6145
    %6682 = vmatprep.subr.mxu0 %v6149
    %6683 = vmatpush1.msra.mxu0 %v6148
    %6684 = vmatprep.subr.mxu0 %v6152
    %6685 = vmatpush1.msra.mxu0 %v6151
    %6686 = vmatprep.subr.mxu0 %v6155
    %6687 = vmatpush1.msra.mxu0 %v6154
    %6688 = vmatprep.subr.mxu0 %v6158
    %6689 = vmatpush1.msra.mxu0 %v6157
    %6690 = vmatprep.subr.mxu0 %v6161
    %6691 = vmatpush1.msra.mxu0 %v6160
    %6692 = vmatprep.subr.mxu0 %v6164
    %6693 = vmatpush1.msra.mxu0 %v6163
    %6694 = vmatprep.subr.mxu0 %v6167
    %6695 = vmatpush1.msra.mxu0 %v6166
    %6696 = vmatprep.subr.mxu0 %v6170
    %6697 = vmatpush1.msra.mxu0 %v6169
    %6698 = vmatprep.subr.mxu0 %v6173
    %6699 = vmatpush1.msra.mxu0 %v6172
    %6700 = vmatprep.subr.mxu0 %v6176
    %6701 = vmatpush1.msra.mxu0 %v6175
    %6702 = vmatprep.subr.mxu0 %v6179
    %6703 = vmatpush1.msra.mxu0 %v6178
    %6704 = vmatprep.subr.mxu0 %v6182
    %6705 = vmatpush1.msra.mxu0 %v6181
    %6706 = vmatprep.subr.mxu0 %v6185
    %6707 = vmatpush1.msra.mxu0 %v6184
    %6708 = vmatprep.subr.mxu0 %v6188
    %6709 = vmatpush1.msra.mxu0 %v6187
    %6710 = vmatprep.subr.mxu0 %v6191
    %6711 = vmatpush1.msra.mxu0 %v6190
    %6712 = vmatprep.subr.mxu0 %v6194
    %6713 = vmatpush1.msra.mxu0 %v6193
    %6714 = vmatprep.subr.mxu0 %v6197
    %6715 = vmatpush1.msra.mxu0 %v6196
    %6716 = vmatprep.subr.mxu0 %v6200
    %6717 = vmatpush1.msra.mxu0 %v6199
    %6718 = vmatprep.subr.mxu0 %v6203
    %6719 = vmatpush1.msra.mxu0 %v6202
    %6720 = vmatprep.subr.mxu0 %v6206
    %6721 = vmatpush1.msra.mxu0 %v6205
    %6722 = vmatprep.subr.mxu0 %v6209
    %6723 = vmatpush1.msra.mxu0 %v6208
    %6724 = vmatprep.subr.mxu0 %v6212
    %6725 = vmatpush1.msra.mxu0 %v6211
    %6726 = vmatprep.subr.mxu0 %v6215
    %6727 = vmatpush1.msra.mxu0 %v6214
    %6728 = vmatprep.subr.mxu0 %v6218
    %6729 = vmatpush1.msra.mxu0 %v6217
    %6730 = vmatprep.subr.mxu0 %v6221
    %6731 = vmatpush1.msra.mxu0 %v6220
    %6732 = vmatprep.subr.mxu0 %v6224
    %6733 = vmatpush1.msra.mxu0 %v6223
    %6734 = vmatprep.subr.mxu0 %v6227
    %6735 = vmatpush1.msra.mxu0 %v6226
    %6736 = vmatprep.subr.mxu0 %v6230
    %6737 = vmatpush1.msra.mxu0 %v6229
    %6738 = vmatprep.subr.mxu0 %v6233
    %6739 = vmatpush1.msra.mxu0 %v6232
    %6740 = vmatprep.subr.mxu0 %v6236
    %6741 = vmatpush1.msra.mxu0 %v6235
    %6742 = vmatprep.mubr.f32.mxu0 %v5837
    %6743 = vmatmul.mubr.f32.gmra.mrb[0].mxu0 %v5836
    %v6744 = vpop.f32.mrb[0].mxu0
    %v6745 = vadd.f32 %v6668, %v6744
    %v6746 = vpop.f32.mrb[0].mxu0
    %v6747 = vadd.f32 %v6670, %v6746
    %6748 = vmatprep.mubr.f32.mxu0 %v5849
    %6749 = vmatmul.mubr.f32.gmra.mrb[0].mxu0 %v5848
    %v6750 = vpop.f32.mrb[0].mxu0
    %v6751 = vadd.f32 %v6674, %v6750
    %v6752 = vpop.f32.mrb[0].mxu0
    %v6753 = vadd.f32 %v6676, %v6752
    %6754 = vdwg.mxu0
    %6755 = vmatprep.subr.mxu0 %v6239
    %6756 = vmatpush1.msra.mxu0 %v6238
    %6757 = vmatprep.subr.mxu0 %v6242
    %6758 = vmatpush1.msra.mxu0 %v6241
    %6759 = vmatprep.subr.mxu0 %v6245
    %6760 = vmatpush1.msra.mxu0 %v6244
    %6761 = vmatprep.subr.mxu0 %v6248
    %6762 = vmatpush1.msra.mxu0 %v6247
    %6763 = vmatprep.subr.mxu0 %v6251
    %6764 = vmatpush1.msra.mxu0 %v6250
    %6765 = vmatprep.subr.mxu0 %v6254
    %6766 = vmatpush1.msra.mxu0 %v6253
    %6767 = vmatprep.subr.mxu0 %v6257
    %6768 = vmatpush1.msra.mxu0 %v6256
    %6769 = vmatprep.subr.mxu0 %v6260
    %6770 = vmatpush1.msra.mxu0 %v6259
    %6771 = vmatprep.subr.mxu0 %v6263
    %6772 = vmatpush1.msra.mxu0 %v6262
    %6773 = vmatprep.subr.mxu0 %v6266
    %6774 = vmatpush1.msra.mxu0 %v6265
    %6775 = vmatprep.subr.mxu0 %v6269
    %6776 = vmatpush1.msra.mxu0 %v6268
    %6777 = vmatprep.subr.mxu0 %v6272
    %6778 = vmatpush1.msra.mxu0 %v6271
    %6779 = vmatprep.subr.mxu0 %v6275
    %6780 = vmatpush1.msra.mxu0 %v6274
    %6781 = vmatprep.subr.mxu0 %v6278
    %6782 = vmatpush1.msra.mxu0 %v6277
    %6783 = vmatprep.subr.mxu0 %v6281
    %6784 = vmatpush1.msra.mxu0 %v6280
    %6785 = vmatprep.subr.mxu0 %v6284
    %6786 = vmatpush1.msra.mxu0 %v6283
    %6787 = vmatprep.subr.mxu0 %v6287
    %6788 = vmatpush1.msra.mxu0 %v6286
    %6789 = vmatprep.subr.mxu0 %v6290
    %6790 = vmatpush1.msra.mxu0 %v6289
    %6791 = vmatprep.subr.mxu0 %v6293
    %6792 = vmatpush1.msra.mxu0 %v6292
    %6793 = vmatprep.subr.mxu0 %v6296
    %6794 = vmatpush1.msra.mxu0 %v6295
    %6795 = vmatprep.subr.mxu0 %v6299
    %6796 = vmatpush1.msra.mxu0 %v6298
    %6797 = vmatprep.subr.mxu0 %v6302
    %6798 = vmatpush1.msra.mxu0 %v6301
    %6799 = vmatprep.subr.mxu0 %v6305
    %6800 = vmatpush1.msra.mxu0 %v6304
    %6801 = vmatprep.subr.mxu0 %v6308
    %6802 = vmatpush1.msra.mxu0 %v6307
    %6803 = vmatprep.subr.mxu0 %v6311
    %6804 = vmatpush1.msra.mxu0 %v6310
    %6805 = vmatprep.subr.mxu0 %v6314
    %6806 = vmatpush1.msra.mxu0 %v6313
    %6807 = vmatprep.subr.mxu0 %v6317
    %6808 = vmatpush1.msra.mxu0 %v6316
    %6809 = vmatprep.subr.mxu0 %v6320
    %6810 = vmatpush1.msra.mxu0 %v6319
    %6811 = vmatprep.subr.mxu0 %v6323
    %6812 = vmatpush1.msra.mxu0 %v6322
    %6813 = vmatprep.subr.mxu0 %v6326
    %6814 = vmatpush1.msra.mxu0 %v6325
    %6815 = vmatprep.subr.mxu0 %v6329
    %6816 = vmatpush1.msra.mxu0 %v6328
    %6817 = vmatprep.subr.mxu0 %v6332
    %6818 = vmatpush1.msra.mxu0 %v6331
    %6819 = vmatprep.mubr.f32.mxu0 %v5839
    %6820 = vmatmul.mubr.f32.gmra.mrb[0].mxu0 %v5838
    %v6821 = vpop.f32.mrb[0].mxu0
    %v6822 = vadd.f32 %v6745, %v6821
    %v6823 = vpop.f32.mrb[0].mxu0
    %v6824 = vadd.f32 %v6747, %v6823
    %6825 = vmatprep.mubr.f32.mxu0 %v5851
    %6826 = vmatmul.mubr.f32.gmra.mrb[0].mxu0 %v5850
    %v6827 = vpop.f32.mrb[0].mxu0
    %v6828 = vadd.f32 %v6751, %v6827
    %v6829 = vpop.f32.mrb[0].mxu0
    %v6830 = vadd.f32 %v6753, %v6829
    %6831 = vdwg.mxu0
    %6832 = vmatprep.subr.mxu0 %v6335
    %6833 = vmatpush1.msra.mxu0 %v6334
    %6834 = vmatprep.subr.mxu0 %v6338
    %6835 = vmatpush1.msra.mxu0 %v6337
    %6836 = vmatprep.subr.mxu0 %v6341
    %6837 = vmatpush1.msra.mxu0 %v6340
    %6838 = vmatprep.subr.mxu0 %v6344
    %6839 = vmatpush1.msra.mxu0 %v6343
    %6840 = vmatprep.subr.mxu0 %v6347
    %6841 = vmatpush1.msra.mxu0 %v6346
    %6842 = vmatprep.subr.mxu0 %v6350
    %6843 = vmatpush1.msra.mxu0 %v6349
    %6844 = vmatprep.subr.mxu0 %v6353
    %6845 = vmatpush1.msra.mxu0 %v6352
    %6846 = vmatprep.subr.mxu0 %v6356
    %6847 = vmatpush1.msra.mxu0 %v6355
    %6848 = vmatprep.subr.mxu0 %v6359
    %6849 = vmatpush1.msra.mxu0 %v6358
    %6850 = vmatprep.subr.mxu0 %v6362
    %6851 = vmatpush1.msra.mxu0 %v6361
    %6852 = vmatprep.subr.mxu0 %v6365
    %6853 = vmatpush1.msra.mxu0 %v6364
    %6854 = vmatprep.subr.mxu0 %v6368
    %6855 = vmatpush1.msra.mxu0 %v6367
    %6856 = vmatprep.subr.mxu0 %v6371
    %6857 = vmatpush1.msra.mxu0 %v6370
    %6858 = vmatprep.subr.mxu0 %v6374
    %6859 = vmatpush1.msra.mxu0 %v6373
    %6860 = vmatprep.subr.mxu0 %v6377
    %6861 = vmatpush1.msra.mxu0 %v6376
    %6862 = vmatprep.subr.mxu0 %v6380
    %6863 = vmatpush1.msra.mxu0 %v6379
    %6864 = vmatprep.subr.mxu0 %v6383
    %6865 = vmatpush1.msra.mxu0 %v6382
    %6866 = vmatprep.subr.mxu0 %v6386
    %6867 = vmatpush1.msra.mxu0 %v6385
    %6868 = vmatprep.subr.mxu0 %v6389
    %6869 = vmatpush1.msra.mxu0 %v6388
    %6870 = vmatprep.subr.mxu0 %v6392
    %6871 = vmatpush1.msra.mxu0 %v6391
    %6872 = vmatprep.subr.mxu0 %v6395
    %6873 = vmatpush1.msra.mxu0 %v6394
    %6874 = vmatprep.subr.mxu0 %v6398
    %6875 = vmatpush1.msra.mxu0 %v6397
    %6876 = vmatprep.subr.mxu0 %v6401
    %6877 = vmatpush1.msra.mxu0 %v6400
    %6878 = vmatprep.subr.mxu0 %v6404
    %6879 = vmatpush1.msra.mxu0 %v6403
    %6880 = vmatprep.subr.mxu0 %v6407
    %6881 = vmatpush1.msra.mxu0 %v6406
    %6882 = vmatprep.subr.mxu0 %v6410
    %6883 = vmatpush1.msra.mxu0 %v6409
    %6884 = vmatprep.subr.mxu0 %v6413
    %6885 = vmatpush1.msra.mxu0 %v6412
    %6886 = vmatprep.subr.mxu0 %v6416
    %6887 = vmatpush1.msra.mxu0 %v6415
    %6888 = vmatprep.subr.mxu0 %v6419
    %6889 = vmatpush1.msra.mxu0 %v6418
    %6890 = vmatprep.subr.mxu0 %v6422
    %6891 = vmatpush1.msra.mxu0 %v6421
    %6892 = vmatprep.subr.mxu0 %v6425
    %6893 = vmatpush1.msra.mxu0 %v6424
    %6894 = vmatprep.subr.mxu0 %v6428
    %6895 = vmatpush1.msra.mxu0 %v6427
    %6896 = vmatprep.mubr.f32.mxu0 %v5841
    %6897 = vmatmul.mubr.f32.gmra.mrb[0].mxu0 %v5840
    %v6898 = vpop.f32.mrb[0].mxu0
    %v6899 = vadd.f32 %v6822, %v6898
    %v6900 = vpop.f32.mrb[0].mxu0
    %v6901 = vadd.f32 %v6824, %v6900
    %6902 = vmatprep.mubr.f32.mxu0 %v5853
    %6903 = vmatmul.mubr.f32.gmra.mrb[0].mxu0 %v5852
    %v6904 = vpop.f32.mrb[0].mxu0
    %v6905 = vadd.f32 %v6828, %v6904
    %v6906 = vpop.f32.mrb[0].mxu0
    %v6907 = vadd.f32 %v6830, %v6906
    %6908 = vdwg.mxu0
    %6909 = vmatprep.subr.mxu0 0.0
    %6910 = vmatpush1.msra.mxu0 %v5856
    %6911 = vmatprep.subr.mxu0 0.0
    %6912 = vmatpush1.msra.mxu0 %v5859
    %6913 = vmatprep.subr.mxu0 0.0
    %6914 = vmatpush1.msra.mxu0 %v5862
    %6915 = vmatprep.subr.mxu0 0.0
    %6916 = vmatpush1.msra.mxu0 %v5865
    %6917 = vmatprep.subr.mxu0 0.0
    %6918 = vmatpush1.msra.mxu0 %v5868
    %6919 = vmatprep.subr.mxu0 0.0
    %6920 = vmatpush1.msra.mxu0 %v5871
    %6921 = vmatprep.subr.mxu0 0.0
    %6922 = vmatpush1.msra.mxu0 %v5874
    %6923 = vmatprep.subr.mxu0 0.0
    %6924 = vmatpush1.msra.mxu0 %v5877
    %6925 = vmatprep.subr.mxu0 0.0
    %6926 = vmatpush1.msra.mxu0 %v5880
    %6927 = vmatprep.subr.mxu0 0.0
    %6928 = vmatpush1.msra.mxu0 %v5883
    %6929 = vmatprep.subr.mxu0 0.0
    %6930 = vmatpush1.msra.mxu0 %v5886
    %6931 = vmatprep.subr.mxu0 0.0
    %6932 = vmatpush1.msra.mxu0 %v5889
    %6933 = vmatprep.subr.mxu0 0.0
    %6934 = vmatpush1.msra.mxu0 %v5892
    %6935 = vmatprep.subr.mxu0 0.0
    %6936 = vmatpush1.msra.mxu0 %v5895
    %6937 = vmatprep.subr.mxu0 0.0
    %6938 = vmatpush1.msra.mxu0 %v5898
    %6939 = vmatprep.subr.mxu0 0.0
    %6940 = vmatpush1.msra.mxu0 %v5901
    %6941 = vmatprep.subr.mxu0 0.0
    %6942 = vmatpush1.msra.mxu0 %v5904
    %6943 = vmatprep.subr.mxu0 0.0
    %6944 = vmatpush1.msra.mxu0 %v5907
    %6945 = vmatprep.subr.mxu0 0.0
    %6946 = vmatpush1.msra.mxu0 %v5910
    %6947 = vmatprep.subr.mxu0 0.0
    %6948 = vmatpush1.msra.mxu0 %v5913
    %6949 = vmatprep.subr.mxu0 0.0
    %6950 = vmatpush1.msra.mxu0 %v5916
    %6951 = vmatprep.subr.mxu0 0.0
    %6952 = vmatpush1.msra.mxu0 %v5919
    %6953 = vmatprep.subr.mxu0 0.0
    %6954 = vmatpush1.msra.mxu0 %v5922
    %6955 = vmatprep.subr.mxu0 0.0
    %6956 = vmatpush1.msra.mxu0 %v5925
    %6957 = vmatprep.subr.mxu0 0.0
    %6958 = vmatpush1.msra.mxu0 %v5928
    %6959 = vmatprep.subr.mxu0 0.0
    %6960 = vmatpush1.msra.mxu0 %v5931
    %6961 = vmatprep.subr.mxu0 0.0
    %6962 = vmatpush1.msra.mxu0 %v5934
    %6963 = vmatprep.subr.mxu0 0.0
    %6964 = vmatpush1.msra.mxu0 %v5937
    %6965 = vmatprep.subr.mxu0 0.0
    %6966 = vmatpush1.msra.mxu0 %v5940
    %6967 = vmatprep.subr.mxu0 0.0
    %6968 = vmatpush1.msra.mxu0 %v5943
    %6969 = vmatprep.subr.mxu0 0.0
    %6970 = vmatpush1.msra.mxu0 %v5946
    %6971 = vmatprep.subr.mxu0 0.0
    %6972 = vmatpush1.msra.mxu0 %v5949
    %6973 = vmatprep.mubr.f32.mxu0 %v5831
    %6974 = vmatmul.mubr.f32.gmra.mrb[0].mxu0 %v5830
    %v6975 = vpop.f32.mrb[0].mxu0
    %v6976 = vadd.f32 %v6443, %v6975
    %v6977 = vpop.f32.mrb[0].mxu0
    %6978 = vmatprep.mubr.f32.mxu0 %v5843
    %6979 = vmatmul.mubr.f32.gmra.mrb[0].mxu0 %v5842
    %v6980 = vpop.f32.mrb[0].mxu0
    %v6981 = vadd.f32 %v6443, %v6980
    %v6982 = vpop.f32.mrb[0].mxu0
    %6983 = vdwg.mxu0
    %6984 = vmatprep.subr.mxu0 0.0
    %6985 = vmatpush1.msra.mxu0 %v5952
    %6986 = vmatprep.subr.mxu0 0.0
    %6987 = vmatpush1.msra.mxu0 %v5955
    %6988 = vmatprep.subr.mxu0 0.0
    %6989 = vmatpush1.msra.mxu0 %v5958
    %6990 = vmatprep.subr.mxu0 0.0
    %6991 = vmatpush1.msra.mxu0 %v5961
    %6992 = vmatprep.subr.mxu0 0.0
    %6993 = vmatpush1.msra.mxu0 %v5964
    %6994 = vmatprep.subr.mxu0 0.0
    %6995 = vmatpush1.msra.mxu0 %v5967
    %6996 = vmatprep.subr.mxu0 0.0
    %6997 = vmatpush1.msra.mxu0 %v5970
    %6998 = vmatprep.subr.mxu0 0.0
    %6999 = vmatpush1.msra.mxu0 %v5973
    %7000 = vmatprep.subr.mxu0 0.0
    %7001 = vmatpush1.msra.mxu0 %v5976
    %7002 = vmatprep.subr.mxu0 0.0
    %7003 = vmatpush1.msra.mxu0 %v5979
    %7004 = vmatprep.subr.mxu0 0.0
    %7005 = vmatpush1.msra.mxu0 %v5982
    %7006 = vmatprep.subr.mxu0 0.0
    %7007 = vmatpush1.msra.mxu0 %v5985
    %7008 = vmatprep.subr.mxu0 0.0
    %7009 = vmatpush1.msra.mxu0 %v5988
    %7010 = vmatprep.subr.mxu0 0.0
    %7011 = vmatpush1.msra.mxu0 %v5991
    %7012 = vmatprep.subr.mxu0 0.0
    %7013 = vmatpush1.msra.mxu0 %v5994
    %7014 = vmatprep.subr.mxu0 0.0
    %7015 = vmatpush1.msra.mxu0 %v5997
    %7016 = vmatprep.subr.mxu0 0.0
    %7017 = vmatpush1.msra.mxu0 %v6000
    %7018 = vmatprep.subr.mxu0 0.0
    %7019 = vmatpush1.msra.mxu0 %v6003
    %7020 = vmatprep.subr.mxu0 0.0
    %7021 = vmatpush1.msra.mxu0 %v6006
    %7022 = vmatprep.subr.mxu0 0.0
    %7023 = vmatpush1.msra.mxu0 %v6009
    %7024 = vmatprep.subr.mxu0 0.0
    %7025 = vmatpush1.msra.mxu0 %v6012
    %7026 = vmatprep.subr.mxu0 0.0
    %7027 = vmatpush1.msra.mxu0 %v6015
    %7028 = vmatprep.subr.mxu0 0.0
    %7029 = vmatpush1.msra.mxu0 %v6018
    %7030 = vmatprep.subr.mxu0 0.0
    %7031 = vmatpush1.msra.mxu0 %v6021
    %7032 = vmatprep.subr.mxu0 0.0
    %7033 = vmatpush1.msra.mxu0 %v6024
    %7034 = vmatprep.subr.mxu0 0.0
    %7035 = vmatpush1.msra.mxu0 %v6027
    %7036 = vmatprep.subr.mxu0 0.0
    %7037 = vmatpush1.msra.mxu0 %v6030
    %7038 = vmatprep.subr.mxu0 0.0
    %7039 = vmatpush1.msra.mxu0 %v6033
    %7040 = vmatprep.subr.mxu0 0.0
    %7041 = vmatpush1.msra.mxu0 %v6036
    %7042 = vmatprep.subr.mxu0 0.0
    %7043 = vmatpush1.msra.mxu0 %v6039
    %7044 = vmatprep.subr.mxu0 0.0
    %7045 = vmatpush1.msra.mxu0 %v6042
    %7046 = vmatprep.subr.mxu0 0.0
    %7047 = vmatpush1.msra.mxu0 %v6045
    %7048 = vmatprep.mubr.f32.mxu0 %v5833
    %7049 = vmatmul.mubr.f32.gmra.mrb[0].mxu0 %v5832
    %v7050 = vpop.f32.mrb[0].mxu0
    %v7051 = vadd.f32 %v6976, %v7050
    %v7052 = vpop.f32.mrb[0].mxu0
    %7053 = vmatprep.mubr.f32.mxu0 %v5845
    %7054 = vmatmul.mubr.f32.gmra.mrb[0].mxu0 %v5844
    %v7055 = vpop.f32.mrb[0].mxu0
    %v7056 = vadd.f32 %v6981, %v7055
    %v7057 = vpop.f32.mrb[0].mxu0
    %7058 = vdwg.mxu0
    %7059 = vmatprep.subr.mxu0 0.0
    %7060 = vmatpush1.msra.mxu0 %v6048
    %7061 = vmatprep.subr.mxu0 0.0
    %7062 = vmatpush1.msra.mxu0 %v6051
    %7063 = vmatprep.subr.mxu0 0.0
    %7064 = vmatpush1.msra.mxu0 %v6054
    %7065 = vmatprep.subr.mxu0 0.0
    %7066 = vmatpush1.msra.mxu0 %v6057
    %7067 = vmatprep.subr.mxu0 0.0
    %7068 = vmatpush1.msra.mxu0 %v6060
    %7069 = vmatprep.subr.mxu0 0.0
    %7070 = vmatpush1.msra.mxu0 %v6063
    %7071 = vmatprep.subr.mxu0 0.0
    %7072 = vmatpush1.msra.mxu0 %v6066
    %7073 = vmatprep.subr.mxu0 0.0
    %7074 = vmatpush1.msra.mxu0 %v6069
    %7075 = vmatprep.subr.mxu0 0.0
    %7076 = vmatpush1.msra.mxu0 %v6072
    %7077 = vmatprep.subr.mxu0 0.0
    %7078 = vmatpush1.msra.mxu0 %v6075
    %7079 = vmatprep.subr.mxu0 0.0
    %7080 = vmatpush1.msra.mxu0 %v6078
    %7081 = vmatprep.subr.mxu0 0.0
    %7082 = vmatpush1.msra.mxu0 %v6081
    %7083 = vmatprep.subr.mxu0 0.0
    %7084 = vmatpush1.msra.mxu0 %v6084
    %7085 = vmatprep.subr.mxu0 0.0
    %7086 = vmatpush1.msra.mxu0 %v6087
    %7087 = vmatprep.subr.mxu0 0.0
    %7088 = vmatpush1.msra.mxu0 %v6090
    %7089 = vmatprep.subr.mxu0 0.0
    %7090 = vmatpush1.msra.mxu0 %v6093
    %7091 = vmatprep.subr.mxu0 0.0
    %7092 = vmatpush1.msra.mxu0 %v6096
    %7093 = vmatprep.subr.mxu0 0.0
    %7094 = vmatpush1.msra.mxu0 %v6099
    %7095 = vmatprep.subr.mxu0 0.0
    %7096 = vmatpush1.msra.mxu0 %v6102
    %7097 = vmatprep.subr.mxu0 0.0
    %7098 = vmatpush1.msra.mxu0 %v6105
    %7099 = vmatprep.subr.mxu0 0.0
    %7100 = vmatpush1.msra.mxu0 %v6108
    %7101 = vmatprep.subr.mxu0 0.0
    %7102 = vmatpush1.msra.mxu0 %v6111
    %7103 = vmatprep.subr.mxu0 0.0
    %7104 = vmatpush1.msra.mxu0 %v6114
    %7105 = vmatprep.subr.mxu0 0.0
    %7106 = vmatpush1.msra.mxu0 %v6117
    %7107 = vmatprep.subr.mxu0 0.0
    %7108 = vmatpush1.msra.mxu0 %v6120
    %7109 = vmatprep.subr.mxu0 0.0
    %7110 = vmatpush1.msra.mxu0 %v6123
    %7111 = vmatprep.subr.mxu0 0.0
    %7112 = vmatpush1.msra.mxu0 %v6126
    %7113 = vmatprep.subr.mxu0 0.0
    %7114 = vmatpush1.msra.mxu0 %v6129
    %7115 = vmatprep.subr.mxu0 0.0
    %7116 = vmatpush1.msra.mxu0 %v6132
    %7117 = vmatprep.subr.mxu0 0.0
    %7118 = vmatpush1.msra.mxu0 %v6135
    %7119 = vmatprep.subr.mxu0 0.0
    %7120 = vmatpush1.msra.mxu0 %v6138
    %7121 = vmatprep.subr.mxu0 0.0
    %7122 = vmatpush1.msra.mxu0 %v6141
    %7123 = vmatprep.mubr.f32.mxu0 %v5835
    %7124 = vmatmul.mubr.f32.gmra.mrb[0].mxu0 %v5834
    %v7125 = vpop.f32.mrb[0].mxu0
    %v7126 = vadd.f32 %v7051, %v7125
    %v7127 = vpop.f32.mrb[0].mxu0
    %7128 = vmatprep.mubr.f32.mxu0 %v5847
    %7129 = vmatmul.mubr.f32.gmra.mrb[0].mxu0 %v5846
    %v7130 = vpop.f32.mrb[0].mxu0
    %v7131 = vadd.f32 %v7056, %v7130
    %v7132 = vpop.f32.mrb[0].mxu0
    %7133 = vdwg.mxu0
    %7134 = vmatprep.subr.mxu0 0.0
    %7135 = vmatpush1.msra.mxu0 %v6144
    %7136 = vmatprep.subr.mxu0 0.0
    %7137 = vmatpush1.msra.mxu0 %v6147
    %7138 = vmatprep.subr.mxu0 0.0
    %7139 = vmatpush1.msra.mxu0 %v6150
    %7140 = vmatprep.subr.mxu0 0.0
    %7141 = vmatpush1.msra.mxu0 %v6153
    %7142 = vmatprep.subr.mxu0 0.0
    %7143 = vmatpush1.msra.mxu0 %v6156
    %7144 = vmatprep.subr.mxu0 0.0
    %7145 = vmatpush1.msra.mxu0 %v6159
    %7146 = vmatprep.subr.mxu0 0.0
    %7147 = vmatpush1.msra.mxu0 %v6162
    %7148 = vmatprep.subr.mxu0 0.0
    %7149 = vmatpush1.msra.mxu0 %v6165
    %7150 = vmatprep.subr.mxu0 0.0
    %7151 = vmatpush1.msra.mxu0 %v6168
    %7152 = vmatprep.subr.mxu0 0.0
    %7153 = vmatpush1.msra.mxu0 %v6171
    %7154 = vmatprep.subr.mxu0 0.0
    %7155 = vmatpush1.msra.mxu0 %v6174
    %7156 = vmatprep.subr.mxu0 0.0
    %7157 = vmatpush1.msra.mxu0 %v6177
    %7158 = vmatprep.subr.mxu0 0.0
    %7159 = vmatpush1.msra.mxu0 %v6180
    %7160 = vmatprep.subr.mxu0 0.0
    %7161 = vmatpush1.msra.mxu0 %v6183
    %7162 = vmatprep.subr.mxu0 0.0
    %7163 = vmatpush1.msra.mxu0 %v6186
    %7164 = vmatprep.subr.mxu0 0.0
    %7165 = vmatpush1.msra.mxu0 %v6189
    %7166 = vmatprep.subr.mxu0 0.0
    %7167 = vmatpush1.msra.mxu0 %v6192
    %7168 = vmatprep.subr.mxu0 0.0
    %7169 = vmatpush1.msra.mxu0 %v6195
    %7170 = vmatprep.subr.mxu0 0.0
    %7171 = vmatpush1.msra.mxu0 %v6198
    %7172 = vmatprep.subr.mxu0 0.0
    %7173 = vmatpush1.msra.mxu0 %v6201
    %7174 = vmatprep.subr.mxu0 0.0
    %7175 = vmatpush1.msra.mxu0 %v6204
    %7176 = vmatprep.subr.mxu0 0.0
    %7177 = vmatpush1.msra.mxu0 %v6207
    %7178 = vmatprep.subr.mxu0 0.0
    %7179 = vmatpush1.msra.mxu0 %v6210
    %7180 = vmatprep.subr.mxu0 0.0
    %7181 = vmatpush1.msra.mxu0 %v6213
    %7182 = vmatprep.subr.mxu0 0.0
    %7183 = vmatpush1.msra.mxu0 %v6216
    %7184 = vmatprep.subr.mxu0 0.0
    %7185 = vmatpush1.msra.mxu0 %v6219
    %7186 = vmatprep.subr.mxu0 0.0
    %7187 = vmatpush1.msra.mxu0 %v6222
    %7188 = vmatprep.subr.mxu0 0.0
    %7189 = vmatpush1.msra.mxu0 %v6225
    %7190 = vmatprep.subr.mxu0 0.0
    %7191 = vmatpush1.msra.mxu0 %v6228
    %7192 = vmatprep.subr.mxu0 0.0
    %7193 = vmatpush1.msra.mxu0 %v6231
    %7194 = vmatprep.subr.mxu0 0.0
    %7195 = vmatpush1.msra.mxu0 %v6234
    %7196 = vmatprep.subr.mxu0 0.0
    %7197 = vmatpush1.msra.mxu0 %v6237
    %7198 = vmatprep.mubr.f32.mxu0 %v5837
    %7199 = vmatmul.mubr.f32.gmra.mrb[0].mxu0 %v5836
    %v7200 = vpop.f32.mrb[0].mxu0
    %v7201 = vadd.f32 %v7126, %v7200
    %v7202 = vpop.f32.mrb[0].mxu0
    %7203 = vmatprep.mubr.f32.mxu0 %v5849
    %7204 = vmatmul.mubr.f32.gmra.mrb[0].mxu0 %v5848
    %v7205 = vpop.f32.mrb[0].mxu0
    %v7206 = vadd.f32 %v7131, %v7205
    %v7207 = vpop.f32.mrb[0].mxu0
    %7208 = vdwg.mxu0
    %7209 = vmatprep.subr.mxu0 0.0
    %7210 = vmatpush1.msra.mxu0 %v6240
    %7211 = vmatprep.subr.mxu0 0.0
    %7212 = vmatpush1.msra.mxu0 %v6243
    %7213 = vmatprep.subr.mxu0 0.0
    %7214 = vmatpush1.msra.mxu0 %v6246
    %7215 = vmatprep.subr.mxu0 0.0
    %7216 = vmatpush1.msra.mxu0 %v6249
    %7217 = vmatprep.subr.mxu0 0.0
    %7218 = vmatpush1.msra.mxu0 %v6252
    %7219 = vmatprep.subr.mxu0 0.0
    %7220 = vmatpush1.msra.mxu0 %v6255
    %7221 = vmatprep.subr.mxu0 0.0
    %7222 = vmatpush1.msra.mxu0 %v6258
    %7223 = vmatprep.subr.mxu0 0.0
    %7224 = vmatpush1.msra.mxu0 %v6261
    %7225 = vmatprep.subr.mxu0 0.0
    %7226 = vmatpush1.msra.mxu0 %v6264
    %7227 = vmatprep.subr.mxu0 0.0
    %7228 = vmatpush1.msra.mxu0 %v6267
    %7229 = vmatprep.subr.mxu0 0.0
    %7230 = vmatpush1.msra.mxu0 %v6270
    %7231 = vmatprep.subr.mxu0 0.0
    %7232 = vmatpush1.msra.mxu0 %v6273
    %7233 = vmatprep.subr.mxu0 0.0
    %7234 = vmatpush1.msra.mxu0 %v6276
    %7235 = vmatprep.subr.mxu0 0.0
    %7236 = vmatpush1.msra.mxu0 %v6279
    %7237 = vmatprep.subr.mxu0 0.0
    %7238 = vmatpush1.msra.mxu0 %v6282
    %7239 = vmatprep.subr.mxu0 0.0
    %7240 = vmatpush1.msra.mxu0 %v6285
    %7241 = vmatprep.subr.mxu0 0.0
    %7242 = vmatpush1.msra.mxu0 %v6288
    %7243 = vmatprep.subr.mxu0 0.0
    %7244 = vmatpush1.msra.mxu0 %v6291
    %7245 = vmatprep.subr.mxu0 0.0
    %7246 = vmatpush1.msra.mxu0 %v6294
    %7247 = vmatprep.subr.mxu0 0.0
    %7248 = vmatpush1.msra.mxu0 %v6297
    %7249 = vmatprep.subr.mxu0 0.0
    %7250 = vmatpush1.msra.mxu0 %v6300
    %7251 = vmatprep.subr.mxu0 0.0
    %7252 = vmatpush1.msra.mxu0 %v6303
    %7253 = vmatprep.subr.mxu0 0.0
    %7254 = vmatpush1.msra.mxu0 %v6306
    %7255 = vmatprep.subr.mxu0 0.0
    %7256 = vmatpush1.msra.mxu0 %v6309
    %7257 = vmatprep.subr.mxu0 0.0
    %7258 = vmatpush1.msra.mxu0 %v6312
    %7259 = vmatprep.subr.mxu0 0.0
    %7260 = vmatpush1.msra.mxu0 %v6315
    %7261 = vmatprep.subr.mxu0 0.0
    %7262 = vmatpush1.msra.mxu0 %v6318
    %7263 = vmatprep.subr.mxu0 0.0
    %7264 = vmatpush1.msra.mxu0 %v6321
    %7265 = vmatprep.subr.mxu0 0.0
    %7266 = vmatpush1.msra.mxu0 %v6324
    %7267 = vmatprep.subr.mxu0 0.0
    %7268 = vmatpush1.msra.mxu0 %v6327
    %7269 = vmatprep.subr.mxu0 0.0
    %7270 = vmatpush1.msra.mxu0 %v6330
    %7271 = vmatprep.subr.mxu0 0.0
    %7272 = vmatpush1.msra.mxu0 %v6333
    %7273 = vmatprep.mubr.f32.mxu0 %v5839
    %7274 = vmatmul.mubr.f32.gmra.mrb[0].mxu0 %v5838
    %v7275 = vpop.f32.mrb[0].mxu0
    %v7276 = vadd.f32 %v7201, %v7275
    %v7277 = vpop.f32.mrb[0].mxu0
    %7278 = vmatprep.mubr.f32.mxu0 %v5851
    %7279 = vmatmul.mubr.f32.gmra.mrb[0].mxu0 %v5850
    %v7280 = vpop.f32.mrb[0].mxu0
    %v7281 = vadd.f32 %v7206, %v7280
    %v7282 = vpop.f32.mrb[0].mxu0
    %7283 = vdwg.mxu0
    %7284 = vmatprep.subr.mxu0 0.0
    %7285 = vmatpush1.msra.mxu0 %v6336
    %7286 = vmatprep.subr.mxu0 0.0
    %7287 = vmatpush1.msra.mxu0 %v6339
    %7288 = vmatprep.subr.mxu0 0.0
    %7289 = vmatpush1.msra.mxu0 %v6342
    %7290 = vmatprep.subr.mxu0 0.0
    %7291 = vmatpush1.msra.mxu0 %v6345
    %7292 = vmatprep.subr.mxu0 0.0
    %7293 = vmatpush1.msra.mxu0 %v6348
    %7294 = vmatprep.subr.mxu0 0.0
    %7295 = vmatpush1.msra.mxu0 %v6351
    %7296 = vmatprep.subr.mxu0 0.0
    %7297 = vmatpush1.msra.mxu0 %v6354
    %7298 = vmatprep.subr.mxu0 0.0
    %7299 = vmatpush1.msra.mxu0 %v6357
    %7300 = vmatprep.subr.mxu0 0.0
    %7301 = vmatpush1.msra.mxu0 %v6360
    %7302 = vmatprep.subr.mxu0 0.0
    %7303 = vmatpush1.msra.mxu0 %v6363
    %7304 = vmatprep.subr.mxu0 0.0
    %7305 = vmatpush1.msra.mxu0 %v6366
    %7306 = vmatprep.subr.mxu0 0.0
    %7307 = vmatpush1.msra.mxu0 %v6369
    %7308 = vmatprep.subr.mxu0 0.0
    %7309 = vmatpush1.msra.mxu0 %v6372
    %7310 = vmatprep.subr.mxu0 0.0
    %7311 = vmatpush1.msra.mxu0 %v6375
    %7312 = vmatprep.subr.mxu0 0.0
    %7313 = vmatpush1.msra.mxu0 %v6378
    %7314 = vmatprep.subr.mxu0 0.0
    %7315 = vmatpush1.msra.mxu0 %v6381
    %7316 = vmatprep.subr.mxu0 0.0
    %7317 = vmatpush1.msra.mxu0 %v6384
    %7318 = vmatprep.subr.mxu0 0.0
    %7319 = vmatpush1.msra.mxu0 %v6387
    %7320 = vmatprep.subr.mxu0 0.0
    %7321 = vmatpush1.msra.mxu0 %v6390
    %7322 = vmatprep.subr.mxu0 0.0
    %7323 = vmatpush1.msra.mxu0 %v6393
    %7324 = vmatprep.subr.mxu0 0.0
    %7325 = vmatpush1.msra.mxu0 %v6396
    %7326 = vmatprep.subr.mxu0 0.0
    %7327 = vmatpush1.msra.mxu0 %v6399
    %7328 = vmatprep.subr.mxu0 0.0
    %7329 = vmatpush1.msra.mxu0 %v6402
    %7330 = vmatprep.subr.mxu0 0.0
    %7331 = vmatpush1.msra.mxu0 %v6405
    %7332 = vmatprep.subr.mxu0 0.0
    %7333 = vmatpush1.msra.mxu0 %v6408
    %7334 = vmatprep.subr.mxu0 0.0
    %7335 = vmatpush1.msra.mxu0 %v6411
    %7336 = vmatprep.subr.mxu0 0.0
    %7337 = vmatpush1.msra.mxu0 %v6414
    %7338 = vmatprep.subr.mxu0 0.0
    %7339 = vmatpush1.msra.mxu0 %v6417
    %7340 = vmatprep.subr.mxu0 0.0
    %7341 = vmatpush1.msra.mxu0 %v6420
    %7342 = vmatprep.subr.mxu0 0.0
    %7343 = vmatpush1.msra.mxu0 %v6423
    %7344 = vmatprep.subr.mxu0 0.0
    %7345 = vmatpush1.msra.mxu0 %v6426
    %7346 = vmatprep.subr.mxu0 0.0
    %7347 = vmatpush1.msra.mxu0 %v6429
    %7348 = vmatprep.mubr.f32.mxu0 %v5841
    %7349 = vmatmul.mubr.f32.gmra.mrb[0].mxu0 %v5840
    %v7350 = vpop.f32.mrb[0].mxu0
    %v7351 = vadd.f32 %v7276, %v7350
    %v7352 = vpop.f32.mrb[0].mxu0
    %7353 = vmatprep.mubr.f32.mxu0 %v5853
    %7354 = vmatmul.mubr.f32.gmra.mrb[0].mxu0 %v5852
    %v7355 = vpop.f32.mrb[0].mxu0
    %v7356 = vadd.f32 %v7281, %v7355
    %v7357 = vpop.f32.mrb[0].mxu0
    %7358 = vdwg.mxu0
    %v7359 = vadd.f32 %v4260, %v6899
    %v7360 = vadd.f32 %v4261, %v6901
    %v7361 = vadd.f32 %v4262, %v7351
    %v7362 = vadd.f32 %v4263, %v6905
    %v7363 = vadd.f32 %v4264, %v6907
    %v7364 = vadd.f32 %v4265, %v7356
    %7365 = vst [vmem:[#allocation26] sm:$0xff] %v7359
    %7366 = vst [vmem:[#allocation26 + $0x8] sm:$0xff] %v7360
    %7367 = vst [vmem:[#allocation26 + $0x10] sm:$0xff] %v7361
    %7368 = vst [vmem:[#allocation26 + $0x18] sm:$0xff] %v7362
    %7369 = vst [vmem:[#allocation26 + $0x20] sm:$0xff] %v7363
    %7370 = vst [vmem:[#allocation26 + $0x28] sm:$0xff] %v7364
    // Predicated region
    $region122: #{tpu_custom_call.1} parent=1 // pred_check
      _
    $region123: #{tpu_custom_call.1} parent=1 // pred_check_branch
      %7372 = sbr.rel (0) target = $region125
    $region124: #{tpu_custom_call.1} parent=1 // pred_region
      %s7374 = ssub.s32 768, 768
      %7375 = vsyncadd [#allocation4], %s7374
      %s7376 = sshll.u32 [#allocation26], 4
      %s7377 = int_to_ptr.vmem [resolvable:$true] %s7376
      %7382 = dma.vmem_to_hbm [thread:$0]  %s7377, 768, %s15, [#allocation4], 384, 384, 24
    $region125: #{tpu_custom_call.1} parent=1 // pred_fallthru
      _
    // Predicated region
    $region126: #{tpu_custom_call.1} parent=1 // pred_check
      _
    $region127: #{tpu_custom_call.1} parent=1 // pred_check_branch
      %7384 = sbr.rel (0) target = $region129
    $region128: #{tpu_custom_call.1} parent=1 // pred_region
      %7385 = dma.done [#allocation4], 768
    $region129: #{tpu_custom_call.1} parent=1 // pred_fallthru
      _
    %7386 = vsyncpa [#allocation3], 1
    %7387 = vsyncpa [#allocation6], 1
    %7388 = vsyncpa [#allocation9], 1
    %7389 = vsyncpa [#allocation12], 1
    %7390 = vsyncpa [#allocation15], 1
    %7391 = vsyncpa [#allocation18], 1
    %7392 = vsyncpa [#allocation21], 1
    %7393 = vsyncpa [#allocation24], 1
    %7394 = vsyncpa [#allocation4], 1

</llo_original>
